<compile_context>
chip_gen: v7x
topology: tpu7x:2x2x1
jax: 0.10.0
libtpu: 0.0.40
codegen_flags: <defaults>
</compile_context>

<pallas_src>
import functools

import jax
import jax.numpy as jnp
from jax.experimental import pallas as pl
from jax.experimental.pallas import tpu as pltpu


# ----------------------------------------------------------------------------
# Pallas kernel: conv1 -> bn1 -> relu -> conv2(grouped) -> bn2 -> +residual -> relu
# One grid step == `NB` images of the batch (batch fused into the matmul M dim).
# ----------------------------------------------------------------------------
def _basic_block_kernel(xpad_ref,   # (NB, H+2, W+2, Cin)  zero-padded input, NHWC, f32
                        w1_ref,     # (9, Cin, C2)         conv1 weights (mxu dtype)
                        s1_ref,     # (1, C2)              folded BN1 scale (f32)
                        b1_ref,     # (1, C2)              folded BN1 bias  (f32)
                        w2_ref,     # (9, C2) depthwise  OR  (9, C2, C2) block-diag
                        s2_ref,     # (1, C2)
                        b2_ref,     # (1, C2)
                        out_ref,    # (NB, H, W, C2)
                        mid_ref):   # scratch (NB, H+2, W+2, C2) f32: padded conv1 act.
    NB, Hp, Wp, Cin = xpad_ref.shape
    H, W = Hp - 2, Wp - 2
    C2 = out_ref.shape[-1]
    M = NB * H * W
    mxu_dtype = w1_ref.dtype

    # ---- conv1 (3x3, pad=1, stride=1): 9 shifted-window MXU matmuls.
    #      Operands are cast to the MXU dtype (bf16 by default); f32 accumulation.
    acc1 = jnp.zeros((M, C2), jnp.float32)
    for k in range(9):
        dy, dx = divmod(k, 3)
        patch = xpad_ref[:, dy:dy + H, dx:dx + W, :].reshape(M, Cin).astype(mxu_dtype)
        acc1 += jnp.dot(patch, w1_ref[k], preferred_element_type=jnp.float32)

    # ---- bn1 (folded) + relu, f32 on the VPU ----
    mid = jnp.maximum(acc1 * s1_ref[...] + b1_ref[...], 0.0)

    # ---- stage conv1 activation into a zero-padded scratch.
    #      Only the 1-pixel border is cleared (interior fully overwritten below);
    #      cleared every step so megacore sharding of the grid axis stays correct.
    mid_ref[:, 0:1, :, :] = jnp.zeros((NB, 1, Wp, C2), jnp.float32)
    mid_ref[:, H + 1:H + 2, :, :] = jnp.zeros((NB, 1, Wp, C2), jnp.float32)
    mid_ref[:, :, 0:1, :] = jnp.zeros((NB, Hp, 1, C2), jnp.float32)
    mid_ref[:, :, W + 1:W + 2, :] = jnp.zeros((NB, Hp, 1, C2), jnp.float32)
    mid_ref[:, 1:H + 1, 1:W + 1, :] = mid.reshape(NB, H, W, C2)

    # ---- conv2 (grouped 3x3) ----
    if len(w2_ref.shape) == 2:
        # cg == 1 (ResNeXt default here) => depthwise conv: pure VPU
        # multiply-accumulate, no second MXU pass, no G x wasted MACs.
        acc2 = jnp.zeros((NB, H, W, C2), jnp.float32)
        for k in range(9):
            dy, dx = divmod(k, 3)
            wk = w2_ref[k:k + 1, :].reshape(1, 1, 1, C2)
            acc2 += mid_ref[:, dy:dy + H, dx:dx + W, :] * wk
    else:
        # general grouped conv (cg > 1) via block-diagonal dense weights on the MXU.
        acc2f = jnp.zeros((M, C2), jnp.float32)
        for k in range(9):
            dy, dx = divmod(k, 3)
            patch = mid_ref[:, dy:dy + H, dx:dx + W, :].reshape(M, C2).astype(mxu_dtype)
            acc2f += jnp.dot(patch, w2_ref[k], preferred_element_type=jnp.float32)
        acc2 = acc2f.reshape(NB, H, W, C2)

    # ---- bn2 (folded) + identity residual + relu.
    #      Residual comes from the interior of the padded input already in VMEM,
    #      so x is DMA'd only once per step.
    residual = xpad_ref[:, 1:H + 1, 1:W + 1, :]
    s2 = s2_ref[...].reshape(1, 1, 1, C2)
    b2 = b2_ref[...].reshape(1, 1, 1, C2)
    out_ref[...] = jnp.maximum(acc2 * s2 + b2 + residual, 0.0)


def _fold_bn(gamma, beta, mean, var, eps=1e-5):
    scale = gamma / jnp.sqrt(var + eps)
    bias = beta - mean * scale
    return scale, bias


# ----------------------------------------------------------------------------
# Wrapper: parameter preprocessing (glue) + pallas_call
# ----------------------------------------------------------------------------
@functools.partial(jax.jit, static_argnames=("num_group", "mxu_dtype", "images_per_step"))
def basic_block_forward(x_nchw, params, num_group, mxu_dtype=jnp.bfloat16,
                        images_per_step=None):
    x = jnp.transpose(x_nchw, (0, 2, 3, 1)).astype(jnp.float32)  # NCHW -> NHWC
    N, H, W, Cin = x.shape
    C2 = params["w1"].shape[0]
    if Cin != C2:
        raise ValueError("identity residual requires inplanes == planes * expansion * 2")

    G = num_group
    cg = C2 // G
    depthwise = (cg == 1)

    NB = N if images_per_step is None else images_per_step
    assert N % NB == 0, "images_per_step must divide the batch size"

    # conv1 weights: (C2, Cin, 3, 3) -> (9, Cin, C2), tap index k = dy*3 + dx.
    # Cast to the MXU dtype (bf16 halves weight DMA and uses the fast MXU path).
    w1k = jnp.transpose(params["w1"], (2, 3, 1, 0)).reshape(9, Cin, C2).astype(mxu_dtype)

    if depthwise:
        # grouped conv with 1 channel per group: per-channel taps, f32 (VPU math).
        w2x = jnp.transpose(params["w2"][:, 0], (1, 2, 0)).reshape(9, C2)
        w2x = w2x.astype(jnp.float32)
        w2_spec = pl.BlockSpec((9, C2), lambda n: (0, 0))
    else:
        # general grouped conv: block-diagonal dense weights, built fully
        # vectorized (no Python loop of .at[].set scatters).
        w2t = jnp.transpose(params["w2"], (2, 3, 0, 1))            # (3,3,C2out,cg)
        i_idx = jnp.arange(C2)
        picked = w2t[:, :, :, i_idx % cg]                          # (3,3,C2out,C2in)
        same_group = (i_idx[None, :] // cg) == (i_idx[:, None] // cg)
        dense = picked * same_group[None, None, :, :].astype(w2t.dtype)
        w2x = jnp.transpose(dense, (0, 1, 3, 2)).reshape(9, C2, C2).astype(mxu_dtype)
        w2_spec = pl.BlockSpec((9, C2, C2), lambda n: (0, 0, 0))

    # Fold BatchNorm (running-stats / inference mode) into scale & bias.
    s1, b1 = _fold_bn(params["g1"], params["b1"], params["m1"], params["v1"])
    s2, b2 = _fold_bn(params["g2"], params["b2"], params["m2"], params["v2"])
    s1 = s1.reshape(1, C2)
    b1 = b1.reshape(1, C2)
    s2 = s2.reshape(1, C2)
    b2 = b2.reshape(1, C2)

    xpad = jnp.pad(x, ((0, 0), (1, 1), (1, 1), (0, 0)))

    # Advisory cost estimate for the XLA scheduler.
    itemsize_mxu = jnp.dtype(mxu_dtype).itemsize
    flops = (2 * 9 * N * H * W * Cin * C2
             + 2 * 9 * N * H * W * C2 * (1 if depthwise else C2)
             + 8 * N * H * W * C2)
    bytes_accessed = (xpad.size * 4
                      + 9 * Cin * C2 * itemsize_mxu
                      + (9 * C2 * 4 if depthwise else 9 * C2 * C2 * itemsize_mxu)
                      + 4 * C2 * 4
                      + N * H * W * C2 * 4)
    cost = pl.CostEstimate(flops=int(flops), transcendentals=0,
                           bytes_accessed=int(bytes_accessed))

    out_nhwc = pl.pallas_call(
        _basic_block_kernel,
        out_shape=jax.ShapeDtypeStruct((N, H, W, C2), jnp.float32),
        grid_spec=pltpu.PrefetchScalarGridSpec(
            num_scalar_prefetch=0,
            grid=(N // NB,),
            in_specs=[
                pl.BlockSpec((NB, H + 2, W + 2, Cin), lambda n: (n, 0, 0, 0)),
                pl.BlockSpec((9, Cin, C2), lambda n: (0, 0, 0)),
                pl.BlockSpec((1, C2), lambda n: (0, 0)),
                pl.BlockSpec((1, C2), lambda n: (0, 0)),
                w2_spec,
                pl.BlockSpec((1, C2), lambda n: (0, 0)),
                pl.BlockSpec((1, C2), lambda n: (0, 0)),
            ],
            out_specs=pl.BlockSpec((NB, H, W, C2), lambda n: (n, 0, 0, 0)),
            scratch_shapes=[pltpu.VMEM((NB, H + 2, W + 2, C2), jnp.float32)],
        ),
        compiler_params=pltpu.CompilerParams(
            dimension_semantics=("parallel",)),
        cost_estimate=cost,
    )(xpad, w1k, s1, b1, w2x, s2, b2)

    return jnp.transpose(out_nhwc, (0, 3, 1, 2))  # back to NCHW


# ----------------------------------------------------------------------------
# Pure-JAX reference (for correctness check)
# ----------------------------------------------------------------------------
def basic_block_reference(x, p, num_group):
    def conv(v, w, groups=1):
        return jax.lax.conv_general_dilated(
            v, w, (1, 1), ((1, 1), (1, 1)),
            dimension_numbers=("NCHW", "OIHW", "NCHW"),
            feature_group_count=groups)

    def bn(v, g, b, m, var):
        inv = 1.0 / jnp.sqrt(var + 1e-5)
        return (v - m[None, :, None, None]) * (g * inv)[None, :, None, None] \
            + b[None, :, None, None]

    out = jax.nn.relu(bn(conv(x, p["w1"]), p["g1"], p["b1"], p["m1"], p["v1"]))
    out = bn(conv(out, p["w2"], num_group), p["g2"], p["b2"], p["m2"], p["v2"])
    return jax.nn.relu(out + x)


if __name__ == "__main__":
    # Small config: inplanes=32, planes=16 (so planes*2 == inplanes, identity
    # residual), stride=1, downsample=None, num_group=32 (module default) => the
    # grouped conv has one channel per group (depthwise path).
    N, Cin, H, W = 2, 32, 16, 16
    planes = 16
    C2 = planes * 2
    num_group = 32
    cg = C2 // num_group

    key = jax.random.PRNGKey(0)
    ks = jax.random.split(key, 11)
    params = {
        "w1": jax.random.normal(ks[0], (C2, Cin, 3, 3), jnp.float32) * 0.1,
        "g1": 1.0 + 0.1 * jax.random.normal(ks[1], (C2,), jnp.float32),
        "b1": 0.1 * jax.random.normal(ks[2], (C2,), jnp.float32),
        "m1": 0.1 * jax.random.normal(ks[3], (C2,), jnp.float32),
        "v1": jax.random.uniform(ks[4], (C2,), jnp.float32, 0.5, 1.5),
        "w2": jax.random.normal(ks[5], (C2, cg, 3, 3), jnp.float32) * 0.3,
        "g2": 1.0 + 0.1 * jax.random.normal(ks[6], (C2,), jnp.float32),
        "b2": 0.1 * jax.random.normal(ks[7], (C2,), jnp.float32),
        "m2": 0.1 * jax.random.normal(ks[8], (C2,), jnp.float32),
        "v2": jax.random.uniform(ks[9], (C2,), jnp.float32, 0.5, 1.5),
    }
    x = jax.random.normal(ks[10], (N, Cin, H, W), jnp.float32)

    ref = jax.block_until_ready(basic_block_reference(x, params, num_group))

    # 1) exact-math variant (f32 MXU operands): tight tolerance vs reference.
    out_f32 = jax.block_until_ready(
        basic_block_forward(x, params, num_group=num_group, mxu_dtype=jnp.float32))
    assert out_f32.shape == (N, C2, H, W)
    err_f32 = float(jnp.max(jnp.abs(out_f32 - ref)))
    assert err_f32 < 1e-3, f"f32 mismatch vs reference: max_err={err_f32}"

    # 2) multi-step grid path (one image per step) exercises the pipelined grid.
    out_grid = jax.block_until_ready(
        basic_block_forward(x, params, num_group=num_group, mxu_dtype=jnp.float32,
                            images_per_step=1))
    err_grid = float(jnp.max(jnp.abs(out_grid - ref)))
    assert err_grid < 1e-3, f"grid-path mismatch vs reference: max_err={err_grid}"

    # 3) performance variant (default: bf16 MXU operands, f32 accumulation).
    #    Tolerance accounts for bf16 rounding of the conv1 operands (K = 9*Cin).
    out_bf16 = jax.block_until_ready(
        basic_block_forward(x, params, num_group=num_group))
    diff = out_bf16 - ref
    err_abs = float(jnp.max(jnp.abs(diff)))
    err_rel = float(jnp.sqrt(jnp.sum(diff * diff)) / jnp.sqrt(jnp.sum(ref * ref)))
    assert err_rel < 2e-2, f"bf16 relative mismatch vs reference: {err_rel}"
    assert err_abs < 0.25, f"bf16 abs mismatch vs reference: {err_abs}"

    print("KERNEL_OK")
</pallas_src>

<mosaic_0001>
module attributes {stable_mosaic.version = 11 : i64} {
  func.func @_basic_block_kernel(%arg0: i32, %arg1: memref<2x18x18x32xf32, #tpu.memory_space<vmem>>, %arg2: memref<9x32x32xf32, #tpu.memory_space<vmem>>, %arg3: memref<1x32xf32, #tpu.memory_space<vmem>>, %arg4: memref<1x32xf32, #tpu.memory_space<vmem>>, %arg5: memref<9x32xf32, #tpu.memory_space<vmem>>, %arg6: memref<1x32xf32, #tpu.memory_space<vmem>>, %arg7: memref<1x32xf32, #tpu.memory_space<vmem>>, %arg8: memref<2x16x16x32xf32, #tpu.memory_space<vmem>>, %arg9: memref<2x18x18x32xf32, #tpu.memory_space<vmem>>) attributes {dimension_semantics = [#tpu.dimension_semantics<parallel>], iteration_bounds = array<i64: 1>, scalar_prefetch = 0 : i64, scratch_operands = 1 : i64, tpu.core_type = #tpu.core_type<tc>, window_params = [{transform_indices = @transform_0, window_bounds = array<i64: 2, 18, 18, 32>}, {pipeline_mode = #tpu.pipeline_mode<synchronous>, transform_indices = @transform_1, window_bounds = array<i64: 9, 32, 32>}, {pipeline_mode = #tpu.pipeline_mode<synchronous>, transform_indices = @transform_2, window_bounds = array<i64: 1, 32>}, {pipeline_mode = #tpu.pipeline_mode<synchronous>, transform_indices = @transform_3, window_bounds = array<i64: 1, 32>}, {pipeline_mode = #tpu.pipeline_mode<synchronous>, transform_indices = @transform_4, window_bounds = array<i64: 9, 32>}, {pipeline_mode = #tpu.pipeline_mode<synchronous>, transform_indices = @transform_5, window_bounds = array<i64: 1, 32>}, {pipeline_mode = #tpu.pipeline_mode<synchronous>, transform_indices = @transform_6, window_bounds = array<i64: 1, 32>}, {transform_indices = @transform_7, window_bounds = array<i64: 2, 16, 16, 32>}]} {
    %cst = arith.constant 0.000000e+00 : f32
    %0 = vector.broadcast %cst : f32 to vector<512x32xf32>
    %c0 = arith.constant 0 : index
    %c0_0 = arith.constant 0 : index
    %c0_1 = arith.constant 0 : index
    %c0_2 = arith.constant 0 : index
    %1 = vector.load %arg1[%c0, %c0_0, %c0_1, %c0_2] : memref<2x18x18x32xf32, #tpu.memory_space<vmem>>, vector<2x16x16x32xf32>
    %2 = vector.shape_cast %1 : vector<2x16x16x32xf32> to vector<512x32xf32>
    %c0_3 = arith.constant 0 : index
    %c0_4 = arith.constant 0 : index
    %c0_5 = arith.constant 0 : index
    %3 = vector.load %arg2[%c0_3, %c0_4, %c0_5] : memref<9x32x32xf32, #tpu.memory_space<vmem>>, vector<1x32x32xf32>
    %4 = vector.shape_cast %3 : vector<1x32x32xf32> to vector<32x32xf32>
    %cst_6 = arith.constant dense<0.000000e+00> : vector<512x32xf32>
    %5 = tpu.matmul %2, %4, %cst_6 {dimension_numbers = #tpu.dot_dimension_numbers<[1], [0], [0], [1], [0, 0, 1, 1], [], []>} : vector<512x32xf32>, vector<32x32xf32>, vector<512x32xf32> -> vector<512x32xf32>
    %6 = arith.addf %0, %5 : vector<512x32xf32>
    %c0_7 = arith.constant 0 : index
    %c0_8 = arith.constant 0 : index
    %c1 = arith.constant 1 : index
    %c0_9 = arith.constant 0 : index
    %7 = vector.load %arg1[%c0_7, %c0_8, %c1, %c0_9] : memref<2x18x18x32xf32, #tpu.memory_space<vmem>>, vector<2x16x16x32xf32>
    %8 = vector.shape_cast %7 : vector<2x16x16x32xf32> to vector<512x32xf32>
    %c1_10 = arith.constant 1 : index
    %c0_11 = arith.constant 0 : index
    %c0_12 = arith.constant 0 : index
    %9 = vector.load %arg2[%c1_10, %c0_11, %c0_12] : memref<9x32x32xf32, #tpu.memory_space<vmem>>, vector<1x32x32xf32>
    %10 = vector.shape_cast %9 : vector<1x32x32xf32> to vector<32x32xf32>
    %cst_13 = arith.constant dense<0.000000e+00> : vector<512x32xf32>
    %11 = tpu.matmul %8, %10, %cst_13 {dimension_numbers = #tpu.dot_dimension_numbers<[1], [0], [0], [1], [0, 0, 1, 1], [], []>} : vector<512x32xf32>, vector<32x32xf32>, vector<512x32xf32> -> vector<512x32xf32>
    %12 = arith.addf %6, %11 : vector<512x32xf32>
    %c0_14 = arith.constant 0 : index
    %c0_15 = arith.constant 0 : index
    %c2 = arith.constant 2 : index
    %c0_16 = arith.constant 0 : index
    %13 = vector.load %arg1[%c0_14, %c0_15, %c2, %c0_16] : memref<2x18x18x32xf32, #tpu.memory_space<vmem>>, vector<2x16x16x32xf32>
    %14 = vector.shape_cast %13 : vector<2x16x16x32xf32> to vector<512x32xf32>
    %c2_17 = arith.constant 2 : index
    %c0_18 = arith.constant 0 : index
    %c0_19 = arith.constant 0 : index
    %15 = vector.load %arg2[%c2_17, %c0_18, %c0_19] : memref<9x32x32xf32, #tpu.memory_space<vmem>>, vector<1x32x32xf32>
    %16 = vector.shape_cast %15 : vector<1x32x32xf32> to vector<32x32xf32>
    %cst_20 = arith.constant dense<0.000000e+00> : vector<512x32xf32>
    %17 = tpu.matmul %14, %16, %cst_20 {dimension_numbers = #tpu.dot_dimension_numbers<[1], [0], [0], [1], [0, 0, 1, 1], [], []>} : vector<512x32xf32>, vector<32x32xf32>, vector<512x32xf32> -> vector<512x32xf32>
    %18 = arith.addf %12, %17 : vector<512x32xf32>
    %c0_21 = arith.constant 0 : index
    %c1_22 = arith.constant 1 : index
    %c0_23 = arith.constant 0 : index
    %c0_24 = arith.constant 0 : index
    %19 = vector.load %arg1[%c0_21, %c1_22, %c0_23, %c0_24] : memref<2x18x18x32xf32, #tpu.memory_space<vmem>>, vector<2x16x16x32xf32>
    %20 = vector.shape_cast %19 : vector<2x16x16x32xf32> to vector<512x32xf32>
    %c3 = arith.constant 3 : index
    %c0_25 = arith.constant 0 : index
    %c0_26 = arith.constant 0 : index
    %21 = vector.load %arg2[%c3, %c0_25, %c0_26] : memref<9x32x32xf32, #tpu.memory_space<vmem>>, vector<1x32x32xf32>
    %22 = vector.shape_cast %21 : vector<1x32x32xf32> to vector<32x32xf32>
    %cst_27 = arith.constant dense<0.000000e+00> : vector<512x32xf32>
    %23 = tpu.matmul %20, %22, %cst_27 {dimension_numbers = #tpu.dot_dimension_numbers<[1], [0], [0], [1], [0, 0, 1, 1], [], []>} : vector<512x32xf32>, vector<32x32xf32>, vector<512x32xf32> -> vector<512x32xf32>
    %24 = arith.addf %18, %23 : vector<512x32xf32>
    %c0_28 = arith.constant 0 : index
    %c1_29 = arith.constant 1 : index
    %c1_30 = arith.constant 1 : index
    %c0_31 = arith.constant 0 : index
    %25 = vector.load %arg1[%c0_28, %c1_29, %c1_30, %c0_31] : memref<2x18x18x32xf32, #tpu.memory_space<vmem>>, vector<2x16x16x32xf32>
    %26 = vector.shape_cast %25 : vector<2x16x16x32xf32> to vector<512x32xf32>
    %c4 = arith.constant 4 : index
    %c0_32 = arith.constant 0 : index
    %c0_33 = arith.constant 0 : index
    %27 = vector.load %arg2[%c4, %c0_32, %c0_33] : memref<9x32x32xf32, #tpu.memory_space<vmem>>, vector<1x32x32xf32>
    %28 = vector.shape_cast %27 : vector<1x32x32xf32> to vector<32x32xf32>
    %cst_34 = arith.constant dense<0.000000e+00> : vector<512x32xf32>
    %29 = tpu.matmul %26, %28, %cst_34 {dimension_numbers = #tpu.dot_dimension_numbers<[1], [0], [0], [1], [0, 0, 1, 1], [], []>} : vector<512x32xf32>, vector<32x32xf32>, vector<512x32xf32> -> vector<512x32xf32>
    %30 = arith.addf %24, %29 : vector<512x32xf32>
    %c0_35 = arith.constant 0 : index
    %c1_36 = arith.constant 1 : index
    %c2_37 = arith.constant 2 : index
    %c0_38 = arith.constant 0 : index
    %31 = vector.load %arg1[%c0_35, %c1_36, %c2_37, %c0_38] : memref<2x18x18x32xf32, #tpu.memory_space<vmem>>, vector<2x16x16x32xf32>
    %32 = vector.shape_cast %31 : vector<2x16x16x32xf32> to vector<512x32xf32>
    %c5 = arith.constant 5 : index
    %c0_39 = arith.constant 0 : index
    %c0_40 = arith.constant 0 : index
    %33 = vector.load %arg2[%c5, %c0_39, %c0_40] : memref<9x32x32xf32, #tpu.memory_space<vmem>>, vector<1x32x32xf32>
    %34 = vector.shape_cast %33 : vector<1x32x32xf32> to vector<32x32xf32>
    %cst_41 = arith.constant dense<0.000000e+00> : vector<512x32xf32>
    %35 = tpu.matmul %32, %34, %cst_41 {dimension_numbers = #tpu.dot_dimension_numbers<[1], [0], [0], [1], [0, 0, 1, 1], [], []>} : vector<512x32xf32>, vector<32x32xf32>, vector<512x32xf32> -> vector<512x32xf32>
    %36 = arith.addf %30, %35 : vector<512x32xf32>
    %c0_42 = arith.constant 0 : index
    %c2_43 = arith.constant 2 : index
    %c0_44 = arith.constant 0 : index
    %c0_45 = arith.constant 0 : index
    %37 = vector.load %arg1[%c0_42, %c2_43, %c0_44, %c0_45] : memref<2x18x18x32xf32, #tpu.memory_space<vmem>>, vector<2x16x16x32xf32>
    %38 = vector.shape_cast %37 : vector<2x16x16x32xf32> to vector<512x32xf32>
    %c6 = arith.constant 6 : index
    %c0_46 = arith.constant 0 : index
    %c0_47 = arith.constant 0 : index
    %39 = vector.load %arg2[%c6, %c0_46, %c0_47] : memref<9x32x32xf32, #tpu.memory_space<vmem>>, vector<1x32x32xf32>
    %40 = vector.shape_cast %39 : vector<1x32x32xf32> to vector<32x32xf32>
    %cst_48 = arith.constant dense<0.000000e+00> : vector<512x32xf32>
    %41 = tpu.matmul %38, %40, %cst_48 {dimension_numbers = #tpu.dot_dimension_numbers<[1], [0], [0], [1], [0, 0, 1, 1], [], []>} : vector<512x32xf32>, vector<32x32xf32>, vector<512x32xf32> -> vector<512x32xf32>
    %42 = arith.addf %36, %41 : vector<512x32xf32>
    %c0_49 = arith.constant 0 : index
    %c2_50 = arith.constant 2 : index
    %c1_51 = arith.constant 1 : index
    %c0_52 = arith.constant 0 : index
    %43 = vector.load %arg1[%c0_49, %c2_50, %c1_51, %c0_52] : memref<2x18x18x32xf32, #tpu.memory_space<vmem>>, vector<2x16x16x32xf32>
    %44 = vector.shape_cast %43 : vector<2x16x16x32xf32> to vector<512x32xf32>
    %c7 = arith.constant 7 : index
    %c0_53 = arith.constant 0 : index
    %c0_54 = arith.constant 0 : index
    %45 = vector.load %arg2[%c7, %c0_53, %c0_54] : memref<9x32x32xf32, #tpu.memory_space<vmem>>, vector<1x32x32xf32>
    %46 = vector.shape_cast %45 : vector<1x32x32xf32> to vector<32x32xf32>
    %cst_55 = arith.constant dense<0.000000e+00> : vector<512x32xf32>
    %47 = tpu.matmul %44, %46, %cst_55 {dimension_numbers = #tpu.dot_dimension_numbers<[1], [0], [0], [1], [0, 0, 1, 1], [], []>} : vector<512x32xf32>, vector<32x32xf32>, vector<512x32xf32> -> vector<512x32xf32>
    %48 = arith.addf %42, %47 : vector<512x32xf32>
    %c0_56 = arith.constant 0 : index
    %c2_57 = arith.constant 2 : index
    %c2_58 = arith.constant 2 : index
    %c0_59 = arith.constant 0 : index
    %49 = vector.load %arg1[%c0_56, %c2_57, %c2_58, %c0_59] : memref<2x18x18x32xf32, #tpu.memory_space<vmem>>, vector<2x16x16x32xf32>
    %50 = vector.shape_cast %49 : vector<2x16x16x32xf32> to vector<512x32xf32>
    %c8 = arith.constant 8 : index
    %c0_60 = arith.constant 0 : index
    %c0_61 = arith.constant 0 : index
    %51 = vector.load %arg2[%c8, %c0_60, %c0_61] : memref<9x32x32xf32, #tpu.memory_space<vmem>>, vector<1x32x32xf32>
    %52 = vector.shape_cast %51 : vector<1x32x32xf32> to vector<32x32xf32>
    %cst_62 = arith.constant dense<0.000000e+00> : vector<512x32xf32>
    %53 = tpu.matmul %50, %52, %cst_62 {dimension_numbers = #tpu.dot_dimension_numbers<[1], [0], [0], [1], [0, 0, 1, 1], [], []>} : vector<512x32xf32>, vector<32x32xf32>, vector<512x32xf32> -> vector<512x32xf32>
    %54 = arith.addf %48, %53 : vector<512x32xf32>
    %c0_63 = arith.constant 0 : index
    %c0_64 = arith.constant 0 : index
    %55 = vector.load %arg3[%c0_63, %c0_64] : memref<1x32xf32, #tpu.memory_space<vmem>>, vector<1x32xf32>
    %56 = vector.broadcast %55 : vector<1x32xf32> to vector<512x32xf32>
    %57 = arith.mulf %54, %56 : vector<512x32xf32>
    %c0_65 = arith.constant 0 : index
    %c0_66 = arith.constant 0 : index
    %58 = vector.load %arg4[%c0_65, %c0_66] : memref<1x32xf32, #tpu.memory_space<vmem>>, vector<1x32xf32>
    %59 = vector.broadcast %58 : vector<1x32xf32> to vector<512x32xf32>
    %60 = arith.addf %57, %59 : vector<512x32xf32>
    %cst_67 = arith.constant 0.000000e+00 : f32
    %61 = vector.broadcast %cst_67 : f32 to vector<512x32xf32>
    %62 = arith.maximumf %60, %61 : vector<512x32xf32>
    %cst_68 = arith.constant 0.000000e+00 : f32
    %63 = vector.broadcast %cst_68 : f32 to vector<2x1x18x32xf32>
    %c0_69 = arith.constant 0 : index
    %c0_70 = arith.constant 0 : index
    %c0_71 = arith.constant 0 : index
    %c0_72 = arith.constant 0 : index
    %64 = vector.load %arg9[%c0_69, %c0_70, %c0_71, %c0_72] : memref<2x18x18x32xf32, #tpu.memory_space<vmem>>, vector<2x1x18x32xf32>
    tpu.vector_store %arg9[%c0_69, %c0_70, %c0_71, %c0_72], %63 {strides = array<i32>} : memref<2x18x18x32xf32, #tpu.memory_space<vmem>>, vector<2x1x18x32xf32>,
    %cst_73 = arith.constant 0.000000e+00 : f32
    %65 = vector.broadcast %cst_73 : f32 to vector<2x1x18x32xf32>
    %c0_74 = arith.constant 0 : index
    %c17 = arith.constant 17 : index
    %c0_75 = arith.constant 0 : index
    %c0_76 = arith.constant 0 : index
    %66 = vector.load %arg9[%c0_74, %c17, %c0_75, %c0_76] : memref<2x18x18x32xf32, #tpu.memory_space<vmem>>, vector<2x1x18x32xf32>
    tpu.vector_store %arg9[%c0_74, %c17, %c0_75, %c0_76], %65 {strides = array<i32>} : memref<2x18x18x32xf32, #tpu.memory_space<vmem>>, vector<2x1x18x32xf32>,
    %cst_77 = arith.constant 0.000000e+00 : f32
    %67 = vector.broadcast %cst_77 : f32 to vector<2x18x1x32xf32>
    %c0_78 = arith.constant 0 : index
    %c0_79 = arith.constant 0 : index
    %c0_80 = arith.constant 0 : index
    %c0_81 = arith.constant 0 : index
    %68 = vector.load %arg9[%c0_78, %c0_79, %c0_80, %c0_81] : memref<2x18x18x32xf32, #tpu.memory_space<vmem>>, vector<2x18x1x32xf32>
    tpu.vector_store %arg9[%c0_78, %c0_79, %c0_80, %c0_81], %67 {strides = array<i32>} : memref<2x18x18x32xf32, #tpu.memory_space<vmem>>, vector<2x18x1x32xf32>,
    %cst_82 = arith.constant 0.000000e+00 : f32
    %69 = vector.broadcast %cst_82 : f32 to vector<2x18x1x32xf32>
    %c0_83 = arith.constant 0 : index
    %c0_84 = arith.constant 0 : index
    %c17_85 = arith.constant 17 : index
    %c0_86 = arith.constant 0 : index
    %70 = vector.load %arg9[%c0_83, %c0_84, %c17_85, %c0_86] : memref<2x18x18x32xf32, #tpu.memory_space<vmem>>, vector<2x18x1x32xf32>
    tpu.vector_store %arg9[%c0_83, %c0_84, %c17_85, %c0_86], %69 {strides = array<i32>} : memref<2x18x18x32xf32, #tpu.memory_space<vmem>>, vector<2x18x1x32xf32>,
    %71 = vector.shape_cast %62 : vector<512x32xf32> to vector<2x16x16x32xf32>
    %c0_87 = arith.constant 0 : index
    %c1_88 = arith.constant 1 : index
    %c1_89 = arith.constant 1 : index
    %c0_90 = arith.constant 0 : index
    %72 = vector.load %arg9[%c0_87, %c1_88, %c1_89, %c0_90] : memref<2x18x18x32xf32, #tpu.memory_space<vmem>>, vector<2x16x16x32xf32>
    tpu.vector_store %arg9[%c0_87, %c1_88, %c1_89, %c0_90], %71 {strides = array<i32>} : memref<2x18x18x32xf32, #tpu.memory_space<vmem>>, vector<2x16x16x32xf32>,
    %cst_91 = arith.constant 0.000000e+00 : f32
    %73 = vector.broadcast %cst_91 : f32 to vector<2x16x16x32xf32>
    %c0_92 = arith.constant 0 : index
    %c0_93 = arith.constant 0 : index
    %74 = vector.load %arg5[%c0_92, %c0_93] : memref<9x32xf32, #tpu.memory_space<vmem>>, vector<1x32xf32>
    %75 = vector.shape_cast %74 : vector<1x32xf32> to vector<1x1x1x32xf32>
    %c0_94 = arith.constant 0 : index
    %c0_95 = arith.constant 0 : index
    %c0_96 = arith.constant 0 : index
    %c0_97 = arith.constant 0 : index
    %76 = vector.load %arg9[%c0_94, %c0_95, %c0_96, %c0_97] : memref<2x18x18x32xf32, #tpu.memory_space<vmem>>, vector<2x16x16x32xf32>
    %77 = vector.broadcast %75 : vector<1x1x1x32xf32> to vector<2x16x16x32xf32>
    %78 = arith.mulf %76, %77 : vector<2x16x16x32xf32>
    %79 = arith.addf %73, %78 : vector<2x16x16x32xf32>
    %c1_98 = arith.constant 1 : index
    %c0_99 = arith.constant 0 : index
    %80 = vector.load %arg5[%c1_98, %c0_99] : memref<9x32xf32, #tpu.memory_space<vmem>>, vector<1x32xf32>
    %81 = vector.shape_cast %80 : vector<1x32xf32> to vector<1x1x1x32xf32>
    %c0_100 = arith.constant 0 : index
    %c0_101 = arith.constant 0 : index
    %c1_102 = arith.constant 1 : index
    %c0_103 = arith.constant 0 : index
    %82 = vector.load %arg9[%c0_100, %c0_101, %c1_102, %c0_103] : memref<2x18x18x32xf32, #tpu.memory_space<vmem>>, vector<2x16x16x32xf32>
    %83 = vector.broadcast %81 : vector<1x1x1x32xf32> to vector<2x16x16x32xf32>
    %84 = arith.mulf %82, %83 : vector<2x16x16x32xf32>
    %85 = arith.addf %79, %84 : vector<2x16x16x32xf32>
    %c2_104 = arith.constant 2 : index
    %c0_105 = arith.constant 0 : index
    %86 = vector.load %arg5[%c2_104, %c0_105] : memref<9x32xf32, #tpu.memory_space<vmem>>, vector<1x32xf32>
    %87 = vector.shape_cast %86 : vector<1x32xf32> to vector<1x1x1x32xf32>
    %c0_106 = arith.constant 0 : index
    %c0_107 = arith.constant 0 : index
    %c2_108 = arith.constant 2 : index
    %c0_109 = arith.constant 0 : index
    %88 = vector.load %arg9[%c0_106, %c0_107, %c2_108, %c0_109] : memref<2x18x18x32xf32, #tpu.memory_space<vmem>>, vector<2x16x16x32xf32>
    %89 = vector.broadcast %87 : vector<1x1x1x32xf32> to vector<2x16x16x32xf32>
    %90 = arith.mulf %88, %89 : vector<2x16x16x32xf32>
    %91 = arith.addf %85, %90 : vector<2x16x16x32xf32>
    %c3_110 = arith.constant 3 : index
    %c0_111 = arith.constant 0 : index
    %92 = vector.load %arg5[%c3_110, %c0_111] : memref<9x32xf32, #tpu.memory_space<vmem>>, vector<1x32xf32>
    %93 = vector.shape_cast %92 : vector<1x32xf32> to vector<1x1x1x32xf32>
    %c0_112 = arith.constant 0 : index
    %c1_113 = arith.constant 1 : index
    %c0_114 = arith.constant 0 : index
    %c0_115 = arith.constant 0 : index
    %94 = vector.load %arg9[%c0_112, %c1_113, %c0_114, %c0_115] : memref<2x18x18x32xf32, #tpu.memory_space<vmem>>, vector<2x16x16x32xf32>
    %95 = vector.broadcast %93 : vector<1x1x1x32xf32> to vector<2x16x16x32xf32>
    %96 = arith.mulf %94, %95 : vector<2x16x16x32xf32>
    %97 = arith.addf %91, %96 : vector<2x16x16x32xf32>
    %c4_116 = arith.constant 4 : index
    %c0_117 = arith.constant 0 : index
    %98 = vector.load %arg5[%c4_116, %c0_117] : memref<9x32xf32, #tpu.memory_space<vmem>>, vector<1x32xf32>
    %99 = vector.shape_cast %98 : vector<1x32xf32> to vector<1x1x1x32xf32>
    %c0_118 = arith.constant 0 : index
    %c1_119 = arith.constant 1 : index
    %c1_120 = arith.constant 1 : index
    %c0_121 = arith.constant 0 : index
    %100 = vector.load %arg9[%c0_118, %c1_119, %c1_120, %c0_121] : memref<2x18x18x32xf32, #tpu.memory_space<vmem>>, vector<2x16x16x32xf32>
    %101 = vector.broadcast %99 : vector<1x1x1x32xf32> to vector<2x16x16x32xf32>
    %102 = arith.mulf %100, %101 : vector<2x16x16x32xf32>
    %103 = arith.addf %97, %102 : vector<2x16x16x32xf32>
    %c5_122 = arith.constant 5 : index
    %c0_123 = arith.constant 0 : index
    %104 = vector.load %arg5[%c5_122, %c0_123] : memref<9x32xf32, #tpu.memory_space<vmem>>, vector<1x32xf32>
    %105 = vector.shape_cast %104 : vector<1x32xf32> to vector<1x1x1x32xf32>
    %c0_124 = arith.constant 0 : index
    %c1_125 = arith.constant 1 : index
    %c2_126 = arith.constant 2 : index
    %c0_127 = arith.constant 0 : index
    %106 = vector.load %arg9[%c0_124, %c1_125, %c2_126, %c0_127] : memref<2x18x18x32xf32, #tpu.memory_space<vmem>>, vector<2x16x16x32xf32>
    %107 = vector.broadcast %105 : vector<1x1x1x32xf32> to vector<2x16x16x32xf32>
    %108 = arith.mulf %106, %107 : vector<2x16x16x32xf32>
    %109 = arith.addf %103, %108 : vector<2x16x16x32xf32>
    %c6_128 = arith.constant 6 : index
    %c0_129 = arith.constant 0 : index
    %110 = vector.load %arg5[%c6_128, %c0_129] : memref<9x32xf32, #tpu.memory_space<vmem>>, vector<1x32xf32>
    %111 = vector.shape_cast %110 : vector<1x32xf32> to vector<1x1x1x32xf32>
    %c0_130 = arith.constant 0 : index
    %c2_131 = arith.constant 2 : index
    %c0_132 = arith.constant 0 : index
    %c0_133 = arith.constant 0 : index
    %112 = vector.load %arg9[%c0_130, %c2_131, %c0_132, %c0_133] : memref<2x18x18x32xf32, #tpu.memory_space<vmem>>, vector<2x16x16x32xf32>
    %113 = vector.broadcast %111 : vector<1x1x1x32xf32> to vector<2x16x16x32xf32>
    %114 = arith.mulf %112, %113 : vector<2x16x16x32xf32>
    %115 = arith.addf %109, %114 : vector<2x16x16x32xf32>
    %c7_134 = arith.constant 7 : index
    %c0_135 = arith.constant 0 : index
    %116 = vector.load %arg5[%c7_134, %c0_135] : memref<9x32xf32, #tpu.memory_space<vmem>>, vector<1x32xf32>
    %117 = vector.shape_cast %116 : vector<1x32xf32> to vector<1x1x1x32xf32>
    %c0_136 = arith.constant 0 : index
    %c2_137 = arith.constant 2 : index
    %c1_138 = arith.constant 1 : index
    %c0_139 = arith.constant 0 : index
    %118 = vector.load %arg9[%c0_136, %c2_137, %c1_138, %c0_139] : memref<2x18x18x32xf32, #tpu.memory_space<vmem>>, vector<2x16x16x32xf32>
    %119 = vector.broadcast %117 : vector<1x1x1x32xf32> to vector<2x16x16x32xf32>
    %120 = arith.mulf %118, %119 : vector<2x16x16x32xf32>
    %121 = arith.addf %115, %120 : vector<2x16x16x32xf32>
    %c8_140 = arith.constant 8 : index
    %c0_141 = arith.constant 0 : index
    %122 = vector.load %arg5[%c8_140, %c0_141] : memref<9x32xf32, #tpu.memory_space<vmem>>, vector<1x32xf32>
    %123 = vector.shape_cast %122 : vector<1x32xf32> to vector<1x1x1x32xf32>
    %c0_142 = arith.constant 0 : index
    %c2_143 = arith.constant 2 : index
    %c2_144 = arith.constant 2 : index
    %c0_145 = arith.constant 0 : index
    %124 = vector.load %arg9[%c0_142, %c2_143, %c2_144, %c0_145] : memref<2x18x18x32xf32, #tpu.memory_space<vmem>>, vector<2x16x16x32xf32>
    %125 = vector.broadcast %123 : vector<1x1x1x32xf32> to vector<2x16x16x32xf32>
    %126 = arith.mulf %124, %125 : vector<2x16x16x32xf32>
    %127 = arith.addf %121, %126 : vector<2x16x16x32xf32>
    %c0_146 = arith.constant 0 : index
    %c1_147 = arith.constant 1 : index
    %c1_148 = arith.constant 1 : index
    %c0_149 = arith.constant 0 : index
    %128 = vector.load %arg1[%c0_146, %c1_147, %c1_148, %c0_149] : memref<2x18x18x32xf32, #tpu.memory_space<vmem>>, vector<2x16x16x32xf32>
    %c0_150 = arith.constant 0 : index
    %c0_151 = arith.constant 0 : index
    %129 = vector.load %arg6[%c0_150, %c0_151] : memref<1x32xf32, #tpu.memory_space<vmem>>, vector<1x32xf32>
    %130 = vector.shape_cast %129 : vector<1x32xf32> to vector<1x1x1x32xf32>
    %c0_152 = arith.constant 0 : index
    %c0_153 = arith.constant 0 : index
    %131 = vector.load %arg7[%c0_152, %c0_153] : memref<1x32xf32, #tpu.memory_space<vmem>>, vector<1x32xf32>
    %132 = vector.shape_cast %131 : vector<1x32xf32> to vector<1x1x1x32xf32>
    %133 = vector.broadcast %130 : vector<1x1x1x32xf32> to vector<2x16x16x32xf32>
    %134 = arith.mulf %127, %133 : vector<2x16x16x32xf32>
    %135 = vector.broadcast %132 : vector<1x1x1x32xf32> to vector<2x16x16x32xf32>
    %136 = arith.addf %134, %135 : vector<2x16x16x32xf32>
    %137 = arith.addf %136, %128 : vector<2x16x16x32xf32>
    %cst_154 = arith.constant 0.000000e+00 : f32
    %138 = vector.broadcast %cst_154 : f32 to vector<2x16x16x32xf32>
    %139 = arith.maximumf %137, %138 : vector<2x16x16x32xf32>
    %c0_155 = arith.constant 0 : index
    %c0_156 = arith.constant 0 : index
    %c0_157 = arith.constant 0 : index
    %c0_158 = arith.constant 0 : index
    %140 = vector.load %arg8[%c0_155, %c0_156, %c0_157, %c0_158] : memref<2x16x16x32xf32, #tpu.memory_space<vmem>>, vector<2x16x16x32xf32>
    tpu.vector_store %arg8[%c0_155, %c0_156, %c0_157, %c0_158], %139 {strides = array<i32>} : memref<2x16x16x32xf32, #tpu.memory_space<vmem>>, vector<2x16x16x32xf32>,
    return
  }
  func.func @transform_0(%arg0: i32) -> (i32, i32, i32, i32) {
    %c0_i32 = arith.constant 0 : i32
    %c0_i32_0 = arith.constant 0 : i32
    %c0_i32_1 = arith.constant 0 : i32
    %c0_i32_2 = arith.constant 0 : i32
    return %arg0, %c0_i32, %c0_i32_0, %c0_i32_1 : i32, i32, i32, i32
  }
  func.func @transform_1(%arg0: i32) -> (i32, i32, i32) {
    %c0_i32 = arith.constant 0 : i32
    %c0_i32_0 = arith.constant 0 : i32
    %c0_i32_1 = arith.constant 0 : i32
    %c0_i32_2 = arith.constant 0 : i32
    return %c0_i32, %c0_i32_0, %c0_i32_1 : i32, i32, i32
  }
  func.func @transform_2(%arg0: i32) -> (i32, i32) {
    %c0_i32 = arith.constant 0 : i32
    %c0_i32_0 = arith.constant 0 : i32
    %c0_i32_1 = arith.constant 0 : i32
    return %c0_i32, %c0_i32_0 : i32, i32
  }
  func.func @transform_3(%arg0: i32) -> (i32, i32) {
    %c0_i32 = arith.constant 0 : i32
    %c0_i32_0 = arith.constant 0 : i32
    %c0_i32_1 = arith.constant 0 : i32
    return %c0_i32, %c0_i32_0 : i32, i32
  }
  func.func @transform_4(%arg0: i32) -> (i32, i32) {
    %c0_i32 = arith.constant 0 : i32
    %c0_i32_0 = arith.constant 0 : i32
    %c0_i32_1 = arith.constant 0 : i32
    return %c0_i32, %c0_i32_0 : i32, i32
  }
  func.func @transform_5(%arg0: i32) -> (i32, i32) {
    %c0_i32 = arith.constant 0 : i32
    %c0_i32_0 = arith.constant 0 : i32
    %c0_i32_1 = arith.constant 0 : i32
    return %c0_i32, %c0_i32_0 : i32, i32
  }
  func.func @transform_6(%arg0: i32) -> (i32, i32) {
    %c0_i32 = arith.constant 0 : i32
    %c0_i32_0 = arith.constant 0 : i32
    %c0_i32_1 = arith.constant 0 : i32
    return %c0_i32, %c0_i32_0 : i32, i32
  }
  func.func @transform_7(%arg0: i32) -> (i32, i32, i32, i32) {
    %c0_i32 = arith.constant 0 : i32
    %c0_i32_0 = arith.constant 0 : i32
    %c0_i32_1 = arith.constant 0 : i32
    %c0_i32_2 = arith.constant 0 : i32
    return %arg0, %c0_i32, %c0_i32_0, %c0_i32_1 : i32, i32, i32, i32
  }
}

</mosaic_0001>

<llo_original>
// kernel: basic_block_forward.1
$region0: #{basic_block_forward.1}
  #allocation0 [shape = 'u32[]', space=smem, size = 0x4, offset = 0x4, fixed_abs, tag = 'smem constant byte address 0x4 - core index']
  #allocation1 [shape = 'u32[144,128]{1,0:T(1,128)}', space=vmem, size = 0x12000, scoped, tag = 'internal scratch']
  #allocation2 [shape = 'f32[2,18,18,32]{3,2,1,0:T(8,128)}', space=vmem, size = 0x6c000, scoped, tag = 'scratch operand']
  %s0 = inlined_call_operand.vmem [shape: f32[2,18,18,32], index: 0, kind: input, shape index: {}]
  %s1 = inlined_call_operand.vmem [shape: f32[9,32,32], index: 1, kind: input, shape index: {}]
  %s2 = inlined_call_operand.vmem [shape: f32[1,32], index: 2, kind: input, shape index: {}]
  %s3 = inlined_call_operand.vmem [shape: f32[1,32], index: 3, kind: input, shape index: {}]
  %s4 = inlined_call_operand.vmem [shape: f32[9,32], index: 4, kind: input, shape index: {}]
  %s5 = inlined_call_operand.vmem [shape: f32[1,32], index: 5, kind: input, shape index: {}]
  %s6 = inlined_call_operand.vmem [shape: f32[1,32], index: 6, kind: input, shape index: {}]
  %s7 = inlined_call_operand.hbm [shape: f32[2,16,16,32], index: 7, kind: output, shape index: {}]
  %s8 = sld [smem:[#allocation0]]
  $region38: #{basic_block_forward.1} parent=0
    _
  %s10 = ssub.s32 1, %s8
  %s11 = scalar_select 0, %s10, %s8
  $region1: #{basic_block_forward.1} parent=0
    #allocation3 [shape = 'u8[262144]{0}', space=vmem, size = 0x40000, scoped, tag = 'output window, operand 0, single buffered']
    #allocation4 [shape = 's32[1]{0}', space=sflag, size = 0x4, scoped, tag = 'scoped memory for basic_block_forward.1']
    %12 = vsyncpa [#allocation4], 0
    // Predicated region
    $region2: #{basic_block_forward.1} parent=1 // pred_check
      _
    $region3: #{basic_block_forward.1} parent=1 // pred_check_branch
      %14 = sbr.rel (0) target = $region5
    $region4: #{basic_block_forward.1} parent=1 // pred_region
      _
    $region5: #{basic_block_forward.1} parent=1 // pred_fallthru
      _
    // Predicated region
    $region6: #{basic_block_forward.1} parent=1 // pred_check
      _
    $region7: #{basic_block_forward.1} parent=1 // pred_check_branch
      %16 = sbr.rel (0) target = $region9
    $region8: #{basic_block_forward.1} parent=1 // pred_region
      _
    $region9: #{basic_block_forward.1} parent=1 // pred_fallthru
      _
    // Predicated region
    $region10: #{basic_block_forward.1} parent=1 // pred_check
      _
    $region11: #{basic_block_forward.1} parent=1 // pred_check_branch
      %18 = sbr.rel (0) target = $region13
    $region12: #{basic_block_forward.1} parent=1 // pred_region
      _
    $region13: #{basic_block_forward.1} parent=1 // pred_fallthru
      _
    // Predicated region
    $region14: #{basic_block_forward.1} parent=1 // pred_check
      _
    $region15: #{basic_block_forward.1} parent=1 // pred_check_branch
      %20 = sbr.rel (0) target = $region17
    $region16: #{basic_block_forward.1} parent=1 // pred_region
      _
    $region17: #{basic_block_forward.1} parent=1 // pred_fallthru
      _
    // Predicated region
    $region18: #{basic_block_forward.1} parent=1 // pred_check
      _
    $region19: #{basic_block_forward.1} parent=1 // pred_check_branch
      %22 = sbr.rel (0) target = $region21
    $region20: #{basic_block_forward.1} parent=1 // pred_region
      _
    $region21: #{basic_block_forward.1} parent=1 // pred_fallthru
      _
    // Predicated region
    $region22: #{basic_block_forward.1} parent=1 // pred_check
      _
    $region23: #{basic_block_forward.1} parent=1 // pred_check_branch
      %24 = sbr.rel (0) target = $region25
    $region24: #{basic_block_forward.1} parent=1 // pred_region
      _
    $region25: #{basic_block_forward.1} parent=1 // pred_fallthru
      _
    // Predicated region
    $region26: #{basic_block_forward.1} parent=1 // pred_check
      _
    $region27: #{basic_block_forward.1} parent=1 // pred_check_branch
      %26 = sbr.rel (0) target = $region29
    $region28: #{basic_block_forward.1} parent=1 // pred_region
      _
    $region29: #{basic_block_forward.1} parent=1 // pred_fallthru
      _
    %v27 = vld [vmem:[%s0] sm:$0xff]
    %v28 = vld [vmem:[%s0 + $0x8] sm:$0xff]
    %v29 = vld [vmem:[%s0 + $0x18] sm:$0xff]
    %v30 = vld [vmem:[%s0 + $0x20] sm:$0xff]
    %v31 = vld [vmem:[%s0 + $0x30] sm:$0xff]
    %v32 = vld [vmem:[%s0 + $0x38] sm:$0xff]
    %v33 = vld [vmem:[%s0 + $0x48] sm:$0xff]
    %v34 = vld [vmem:[%s0 + $0x50] sm:$0xff]
    %v35 = vld [vmem:[%s0 + $0x60] sm:$0xff]
    %v36 = vld [vmem:[%s0 + $0x68] sm:$0xff]
    %v37 = vld [vmem:[%s0 + $0x78] sm:$0xff]
    %v38 = vld [vmem:[%s0 + $0x80] sm:$0xff]
    %v39 = vld [vmem:[%s0 + $0x90] sm:$0xff]
    %v40 = vld [vmem:[%s0 + $0x98] sm:$0xff]
    %v41 = vld [vmem:[%s0 + $0xa8] sm:$0xff]
    %v42 = vld [vmem:[%s0 + $0xb0] sm:$0xff]
    %v43 = vld [vmem:[%s0 + $0xc0] sm:$0xff]
    %v44 = vld [vmem:[%s0 + $0xc8] sm:$0xff]
    %v45 = vld [vmem:[%s0 + $0xd8] sm:$0xff]
    %v46 = vld [vmem:[%s0 + $0xe0] sm:$0xff]
    %v47 = vld [vmem:[%s0 + $0xf0] sm:$0xff]
    %v48 = vld [vmem:[%s0 + $0xf8] sm:$0xff]
    %v49 = vld [vmem:[%s0 + $0x108] sm:$0xff]
    %v50 = vld [vmem:[%s0 + $0x110] sm:$0xff]
    %v51 = vld [vmem:[%s0 + $0x120] sm:$0xff]
    %v52 = vld [vmem:[%s0 + $0x128] sm:$0xff]
    %v53 = vld [vmem:[%s0 + $0x138] sm:$0xff]
    %v54 = vld [vmem:[%s0 + $0x140] sm:$0xff]
    %v55 = vld [vmem:[%s0 + $0x150] sm:$0xff]
    %v56 = vld [vmem:[%s0 + $0x158] sm:$0xff]
    %v57 = vld [vmem:[%s0 + $0x168] sm:$0xff]
    %v58 = vld [vmem:[%s0 + $0x170] sm:$0xff]
    %v59 = vld [vmem:[%s0 + $0x1b0] sm:$0xff]
    %v60 = vld [vmem:[%s0 + $0x1b8] sm:$0xff]
    %v61 = vld [vmem:[%s0 + $0x1c8] sm:$0xff]
    %v62 = vld [vmem:[%s0 + $0x1d0] sm:$0xff]
    %v63 = vld [vmem:[%s0 + $0x1e0] sm:$0xff]
    %v64 = vld [vmem:[%s0 + $0x1e8] sm:$0xff]
    %v65 = vld [vmem:[%s0 + $0x1f8] sm:$0xff]
    %v66 = vld [vmem:[%s0 + $0x200] sm:$0xff]
    %v67 = vld [vmem:[%s0 + $0x210] sm:$0xff]
    %v68 = vld [vmem:[%s0 + $0x218] sm:$0xff]
    %v69 = vld [vmem:[%s0 + $0x228] sm:$0xff]
    %v70 = vld [vmem:[%s0 + $0x230] sm:$0xff]
    %v71 = vld [vmem:[%s0 + $0x240] sm:$0xff]
    %v72 = vld [vmem:[%s0 + $0x248] sm:$0xff]
    %v73 = vld [vmem:[%s0 + $0x258] sm:$0xff]
    %v74 = vld [vmem:[%s0 + $0x260] sm:$0xff]
    %v75 = vld [vmem:[%s0 + $0x270] sm:$0xff]
    %v76 = vld [vmem:[%s0 + $0x278] sm:$0xff]
    %v77 = vld [vmem:[%s0 + $0x288] sm:$0xff]
    %v78 = vld [vmem:[%s0 + $0x290] sm:$0xff]
    %v79 = vld [vmem:[%s0 + $0x2a0] sm:$0xff]
    %v80 = vld [vmem:[%s0 + $0x2a8] sm:$0xff]
    %v81 = vld [vmem:[%s0 + $0x2b8] sm:$0xff]
    %v82 = vld [vmem:[%s0 + $0x2c0] sm:$0xff]
    %v83 = vld [vmem:[%s0 + $0x2d0] sm:$0xff]
    %v84 = vld [vmem:[%s0 + $0x2d8] sm:$0xff]
    %v85 = vld [vmem:[%s0 + $0x2e8] sm:$0xff]
    %v86 = vld [vmem:[%s0 + $0x2f0] sm:$0xff]
    %v87 = vld [vmem:[%s0 + $0x300] sm:$0xff]
    %v88 = vld [vmem:[%s0 + $0x308] sm:$0xff]
    %v89 = vld [vmem:[%s0 + $0x318] sm:$0xff]
    %v90 = vld [vmem:[%s0 + $0x320] sm:$0xff]
    %v91 = vld [vmem:[%s1] sm:$0xff]
    %v92 = vld [vmem:[%s1 + $0x8] sm:$0xff]
    %v93 = vld [vmem:[%s1 + $0x10] sm:$0xff]
    %v94 = vld [vmem:[%s1 + $0x18] sm:$0xff]
    %v95 = vld [vmem:[%s0 + $0x1] sm:$0xff]
    %v96 = vld [vmem:[%s0 + $0x9] sm:$0xff]
    %v97 = vld [vmem:[%s0 + $0x19] sm:$0xff]
    %v98 = vld [vmem:[%s0 + $0x21] sm:$0xff]
    %v99 = vld [vmem:[%s0 + $0x31] sm:$0xff]
    %v100 = vld [vmem:[%s0 + $0x39] sm:$0xff]
    %v101 = vld [vmem:[%s0 + $0x49] sm:$0xff]
    %v102 = vld [vmem:[%s0 + $0x51] sm:$0xff]
    %v103 = vld [vmem:[%s0 + $0x61] sm:$0xff]
    %v104 = vld [vmem:[%s0 + $0x69] sm:$0xff]
    %v105 = vld [vmem:[%s0 + $0x79] sm:$0xff]
    %v106 = vld [vmem:[%s0 + $0x81] sm:$0xff]
    %v107 = vld [vmem:[%s0 + $0x91] sm:$0xff]
    %v108 = vld [vmem:[%s0 + $0x99] sm:$0xff]
    %v109 = vld [vmem:[%s0 + $0xa9] sm:$0xff]
    %v110 = vld [vmem:[%s0 + $0xb1] sm:$0xff]
    %v111 = vld [vmem:[%s0 + $0xc1] sm:$0xff]
    %v112 = vld [vmem:[%s0 + $0xc9] sm:$0xff]
    %v113 = vld [vmem:[%s0 + $0xd9] sm:$0xff]
    %v114 = vld [vmem:[%s0 + $0xe1] sm:$0xff]
    %v115 = vld [vmem:[%s0 + $0xf1] sm:$0xff]
    %v116 = vld [vmem:[%s0 + $0xf9] sm:$0xff]
    %v117 = vld [vmem:[%s0 + $0x109] sm:$0xff]
    %v118 = vld [vmem:[%s0 + $0x111] sm:$0xff]
    %v119 = vld [vmem:[%s0 + $0x121] sm:$0xff]
    %v120 = vld [vmem:[%s0 + $0x129] sm:$0xff]
    %v121 = vld [vmem:[%s0 + $0x139] sm:$0xff]
    %v122 = vld [vmem:[%s0 + $0x141] sm:$0xff]
    %v123 = vld [vmem:[%s0 + $0x151] sm:$0xff]
    %v124 = vld [vmem:[%s0 + $0x159] sm:$0xff]
    %v125 = vld [vmem:[%s0 + $0x169] sm:$0xff]
    %v126 = vld [vmem:[%s0 + $0x171] sm:$0xff]
    %v127 = vld [vmem:[%s0 + $0x1b1] sm:$0xff]
    %v128 = vld [vmem:[%s0 + $0x1b9] sm:$0xff]
    %v129 = vld [vmem:[%s0 + $0x1c9] sm:$0xff]
    %v130 = vld [vmem:[%s0 + $0x1d1] sm:$0xff]
    %v131 = vld [vmem:[%s0 + $0x1e1] sm:$0xff]
    %v132 = vld [vmem:[%s0 + $0x1e9] sm:$0xff]
    %v133 = vld [vmem:[%s0 + $0x1f9] sm:$0xff]
    %v134 = vld [vmem:[%s0 + $0x201] sm:$0xff]
    %v135 = vld [vmem:[%s0 + $0x211] sm:$0xff]
    %v136 = vld [vmem:[%s0 + $0x219] sm:$0xff]
    %v137 = vld [vmem:[%s0 + $0x229] sm:$0xff]
    %v138 = vld [vmem:[%s0 + $0x231] sm:$0xff]
    %v139 = vld [vmem:[%s0 + $0x241] sm:$0xff]
    %v140 = vld [vmem:[%s0 + $0x249] sm:$0xff]
    %v141 = vld [vmem:[%s0 + $0x259] sm:$0xff]
    %v142 = vld [vmem:[%s0 + $0x261] sm:$0xff]
    %v143 = vld [vmem:[%s0 + $0x271] sm:$0xff]
    %v144 = vld [vmem:[%s0 + $0x279] sm:$0xff]
    %v145 = vld [vmem:[%s0 + $0x289] sm:$0xff]
    %v146 = vld [vmem:[%s0 + $0x291] sm:$0xff]
    %v147 = vld [vmem:[%s0 + $0x2a1] sm:$0xff]
    %v148 = vld [vmem:[%s0 + $0x2a9] sm:$0xff]
    %v149 = vld [vmem:[%s0 + $0x2b9] sm:$0xff]
    %v150 = vld [vmem:[%s0 + $0x2c1] sm:$0xff]
    %v151 = vld [vmem:[%s0 + $0x2d1] sm:$0xff]
    %v152 = vld [vmem:[%s0 + $0x2d9] sm:$0xff]
    %v153 = vld [vmem:[%s0 + $0x2e9] sm:$0xff]
    %v154 = vld [vmem:[%s0 + $0x2f1] sm:$0xff]
    %v155 = vld [vmem:[%s0 + $0x301] sm:$0xff]
    %v156 = vld [vmem:[%s0 + $0x309] sm:$0xff]
    %v157 = vld [vmem:[%s0 + $0x319] sm:$0xff]
    %v158 = vld [vmem:[%s0 + $0x321] sm:$0xff]
    %s159 = scalar_lea.vmem %s1, 32
    %v160 = vld [vmem:[%s159] sm:$0xff]
    %v161 = vld [vmem:[%s159 + $0x8] sm:$0xff]
    %v162 = vld [vmem:[%s159 + $0x10] sm:$0xff]
    %v163 = vld [vmem:[%s159 + $0x18] sm:$0xff]
    %vm164 = vcmask 261120
    %v166 = vsel %vm164, %v95, 0
    %v169 = vsel %vm164, %v96, 0
    %v172 = vsel %vm164, %v97, 0
    %v175 = vsel %vm164, %v98, 0
    %v178 = vsel %vm164, %v99, 0
    %v181 = vsel %vm164, %v100, 0
    %v184 = vsel %vm164, %v101, 0
    %v187 = vsel %vm164, %v102, 0
    %v190 = vsel %vm164, %v103, 0
    %v193 = vsel %vm164, %v104, 0
    %v196 = vsel %vm164, %v105, 0
    %v199 = vsel %vm164, %v106, 0
    %v202 = vsel %vm164, %v107, 0
    %v205 = vsel %vm164, %v108, 0
    %v208 = vsel %vm164, %v109, 0
    %v211 = vsel %vm164, %v110, 0
    %v214 = vsel %vm164, %v111, 0
    %v217 = vsel %vm164, %v112, 0
    %v220 = vsel %vm164, %v113, 0
    %v223 = vsel %vm164, %v114, 0
    %v226 = vsel %vm164, %v115, 0
    %v229 = vsel %vm164, %v116, 0
    %v232 = vsel %vm164, %v117, 0
    %v235 = vsel %vm164, %v118, 0
    %v238 = vsel %vm164, %v119, 0
    %v241 = vsel %vm164, %v120, 0
    %v244 = vsel %vm164, %v121, 0
    %v247 = vsel %vm164, %v122, 0
    %v250 = vsel %vm164, %v123, 0
    %v253 = vsel %vm164, %v124, 0
    %v256 = vsel %vm164, %v125, 0
    %v259 = vsel %vm164, %v126, 0
    %v262 = vsel %vm164, %v127, 0
    %v265 = vsel %vm164, %v128, 0
    %v268 = vsel %vm164, %v129, 0
    %v271 = vsel %vm164, %v130, 0
    %v274 = vsel %vm164, %v131, 0
    %v277 = vsel %vm164, %v132, 0
    %v280 = vsel %vm164, %v133, 0
    %v283 = vsel %vm164, %v134, 0
    %v286 = vsel %vm164, %v135, 0
    %v289 = vsel %vm164, %v136, 0
    %v292 = vsel %vm164, %v137, 0
    %v295 = vsel %vm164, %v138, 0
    %v298 = vsel %vm164, %v139, 0
    %v301 = vsel %vm164, %v140, 0
    %v304 = vsel %vm164, %v141, 0
    %v307 = vsel %vm164, %v142, 0
    %v310 = vsel %vm164, %v143, 0
    %v313 = vsel %vm164, %v144, 0
    %v316 = vsel %vm164, %v145, 0
    %v319 = vsel %vm164, %v146, 0
    %v322 = vsel %vm164, %v147, 0
    %v325 = vsel %vm164, %v148, 0
    %v328 = vsel %vm164, %v149, 0
    %v331 = vsel %vm164, %v150, 0
    %v334 = vsel %vm164, %v151, 0
    %v337 = vsel %vm164, %v152, 0
    %v340 = vsel %vm164, %v153, 0
    %v343 = vsel %vm164, %v154, 0
    %v346 = vsel %vm164, %v155, 0
    %v349 = vsel %vm164, %v156, 0
    %v352 = vsel %vm164, %v157, 0
    %v355 = vsel %vm164, %v158, 0
    %357 = vmatprep.subr.mxu0 0.0
    %358 = vmatpush1.msra.mxu0 %v160
    %359 = vmatprep.subr.mxu0 0.0
    %360 = vmatpush1.msra.mxu0 %v161
    %361 = vmatprep.subr.mxu0 0.0
    %362 = vmatpush1.msra.mxu0 %v162
    %363 = vmatprep.subr.mxu0 0.0
    %364 = vmatpush1.msra.mxu0 %v163
    %365 = vmatprep.subr.mxu0 0.0
    %366 = vmatpush1.msra.mxu0 0.0
    %367 = vmatprep.subr.mxu0 0.0
    %368 = vmatpush1.msra.mxu0 0.0
    %369 = vmatprep.subr.mxu0 0.0
    %370 = vmatpush1.msra.mxu0 0.0
    %371 = vmatprep.subr.mxu0 0.0
    %372 = vmatpush1.msra.mxu0 0.0
    %373 = vmatprep.subr.mxu0 0.0
    %374 = vmatpush1.msra.mxu0 0.0
    %375 = vmatprep.subr.mxu0 0.0
    %376 = vmatpush1.msra.mxu0 0.0
    %377 = vmatprep.subr.mxu0 0.0
    %378 = vmatpush1.msra.mxu0 0.0
    %379 = vmatprep.subr.mxu0 0.0
    %380 = vmatpush1.msra.mxu0 0.0
    %381 = vmatprep.subr.mxu0 0.0
    %382 = vmatpush1.msra.mxu0 0.0
    %383 = vmatprep.subr.mxu0 0.0
    %384 = vmatpush1.msra.mxu0 0.0
    %385 = vmatprep.subr.mxu0 0.0
    %386 = vmatpush1.msra.mxu0 0.0
    %387 = vmatprep.subr.mxu0 0.0
    %388 = vmatpush1.msra.mxu0 0.0
    %389 = vmatprep.subr.mxu0 0.0
    %390 = vmatpush1.msra.mxu0 0.0
    %391 = vmatprep.subr.mxu0 0.0
    %392 = vmatpush1.msra.mxu0 0.0
    %393 = vmatprep.subr.mxu0 0.0
    %394 = vmatpush1.msra.mxu0 0.0
    %395 = vmatprep.subr.mxu0 0.0
    %396 = vmatpush1.msra.mxu0 0.0
    %397 = vmatprep.subr.mxu0 0.0
    %398 = vmatpush1.msra.mxu0 0.0
    %399 = vmatprep.subr.mxu0 0.0
    %400 = vmatpush1.msra.mxu0 0.0
    %401 = vmatprep.subr.mxu0 0.0
    %402 = vmatpush1.msra.mxu0 0.0
    %403 = vmatprep.subr.mxu0 0.0
    %404 = vmatpush1.msra.mxu0 0.0
    %405 = vmatprep.subr.mxu0 0.0
    %406 = vmatpush1.msra.mxu0 0.0
    %407 = vmatprep.subr.mxu0 0.0
    %408 = vmatpush1.msra.mxu0 0.0
    %409 = vmatprep.subr.mxu0 0.0
    %410 = vmatpush1.msra.mxu0 0.0
    %411 = vmatprep.subr.mxu0 0.0
    %412 = vmatpush1.msra.mxu0 0.0
    %413 = vmatprep.subr.mxu0 0.0
    %414 = vmatpush1.msra.mxu0 0.0
    %415 = vmatprep.subr.mxu0 0.0
    %416 = vmatpush1.msra.mxu0 0.0
    %417 = vmatprep.subr.mxu0 0.0
    %418 = vmatpush1.msra.mxu0 0.0
    %419 = vmatprep.subr.mxu0 0.0
    %420 = vmatpush1.msra.mxu0 0.0
    %421 = vmatprep.mubr.f32.mxu0 0.0
    %422 = vmatmul.mubr.f32.gmra.mrb[0].mxu0 %v166
    %v423 = vpop.f32.mrb[0].mxu0
    %v424 = vadd.f32 0.0, %v423
    %v425 = vpop.f32.mrb[0].mxu0
    %426 = vmatprep.mubr.f32.mxu0 0.0
    %427 = vmatmul.mubr.f32.gmra.mrb[0].mxu0 %v169
    %v428 = vpop.f32.mrb[0].mxu0
    %v429 = vadd.f32 0.0, %v428
    %v430 = vpop.f32.mrb[0].mxu0
    %431 = vmatprep.mubr.f32.mxu0 0.0
    %432 = vmatmul.mubr.f32.gmra.mrb[0].mxu0 %v172
    %v433 = vpop.f32.mrb[0].mxu0
    %v434 = vadd.f32 0.0, %v433
    %v435 = vpop.f32.mrb[0].mxu0
    %436 = vmatprep.mubr.f32.mxu0 0.0
    %437 = vmatmul.mubr.f32.gmra.mrb[0].mxu0 %v175
    %v438 = vpop.f32.mrb[0].mxu0
    %v439 = vadd.f32 0.0, %v438
    %v440 = vpop.f32.mrb[0].mxu0
    %441 = vmatprep.mubr.f32.mxu0 0.0
    %442 = vmatmul.mubr.f32.gmra.mrb[0].mxu0 %v178
    %v443 = vpop.f32.mrb[0].mxu0
    %v444 = vadd.f32 0.0, %v443
    %v445 = vpop.f32.mrb[0].mxu0
    %446 = vmatprep.mubr.f32.mxu0 0.0
    %447 = vmatmul.mubr.f32.gmra.mrb[0].mxu0 %v181
    %v448 = vpop.f32.mrb[0].mxu0
    %v449 = vadd.f32 0.0, %v448
    %v450 = vpop.f32.mrb[0].mxu0
    %451 = vmatprep.mubr.f32.mxu0 0.0
    %452 = vmatmul.mubr.f32.gmra.mrb[0].mxu0 %v184
    %v453 = vpop.f32.mrb[0].mxu0
    %v454 = vadd.f32 0.0, %v453
    %v455 = vpop.f32.mrb[0].mxu0
    %456 = vmatprep.mubr.f32.mxu0 0.0
    %457 = vmatmul.mubr.f32.gmra.mrb[0].mxu0 %v187
    %v458 = vpop.f32.mrb[0].mxu0
    %v459 = vadd.f32 0.0, %v458
    %v460 = vpop.f32.mrb[0].mxu0
    %461 = vmatprep.mubr.f32.mxu0 0.0
    %462 = vmatmul.mubr.f32.gmra.mrb[0].mxu0 %v190
    %v463 = vpop.f32.mrb[0].mxu0
    %v464 = vadd.f32 0.0, %v463
    %v465 = vpop.f32.mrb[0].mxu0
    %466 = vmatprep.mubr.f32.mxu0 0.0
    %467 = vmatmul.mubr.f32.gmra.mrb[0].mxu0 %v193
    %v468 = vpop.f32.mrb[0].mxu0
    %v469 = vadd.f32 0.0, %v468
    %v470 = vpop.f32.mrb[0].mxu0
    %471 = vmatprep.mubr.f32.mxu0 0.0
    %472 = vmatmul.mubr.f32.gmra.mrb[0].mxu0 %v196
    %v473 = vpop.f32.mrb[0].mxu0
    %v474 = vadd.f32 0.0, %v473
    %v475 = vpop.f32.mrb[0].mxu0
    %476 = vmatprep.mubr.f32.mxu0 0.0
    %477 = vmatmul.mubr.f32.gmra.mrb[0].mxu0 %v199
    %v478 = vpop.f32.mrb[0].mxu0
    %v479 = vadd.f32 0.0, %v478
    %v480 = vpop.f32.mrb[0].mxu0
    %481 = vmatprep.mubr.f32.mxu0 0.0
    %482 = vmatmul.mubr.f32.gmra.mrb[0].mxu0 %v202
    %v483 = vpop.f32.mrb[0].mxu0
    %v484 = vadd.f32 0.0, %v483
    %v485 = vpop.f32.mrb[0].mxu0
    %486 = vmatprep.mubr.f32.mxu0 0.0
    %487 = vmatmul.mubr.f32.gmra.mrb[0].mxu0 %v205
    %v488 = vpop.f32.mrb[0].mxu0
    %v489 = vadd.f32 0.0, %v488
    %v490 = vpop.f32.mrb[0].mxu0
    %491 = vmatprep.mubr.f32.mxu0 0.0
    %492 = vmatmul.mubr.f32.gmra.mrb[0].mxu0 %v208
    %v493 = vpop.f32.mrb[0].mxu0
    %v494 = vadd.f32 0.0, %v493
    %v495 = vpop.f32.mrb[0].mxu0
    %496 = vmatprep.mubr.f32.mxu0 0.0
    %497 = vmatmul.mubr.f32.gmra.mrb[0].mxu0 %v211
    %v498 = vpop.f32.mrb[0].mxu0
    %v499 = vadd.f32 0.0, %v498
    %v500 = vpop.f32.mrb[0].mxu0
    %501 = vmatprep.mubr.f32.mxu0 0.0
    %502 = vmatmul.mubr.f32.gmra.mrb[0].mxu0 %v214
    %v503 = vpop.f32.mrb[0].mxu0
    %v504 = vadd.f32 0.0, %v503
    %v505 = vpop.f32.mrb[0].mxu0
    %506 = vmatprep.mubr.f32.mxu0 0.0
    %507 = vmatmul.mubr.f32.gmra.mrb[0].mxu0 %v217
    %v508 = vpop.f32.mrb[0].mxu0
    %v509 = vadd.f32 0.0, %v508
    %v510 = vpop.f32.mrb[0].mxu0
    %511 = vmatprep.mubr.f32.mxu0 0.0
    %512 = vmatmul.mubr.f32.gmra.mrb[0].mxu0 %v220
    %v513 = vpop.f32.mrb[0].mxu0
    %v514 = vadd.f32 0.0, %v513
    %v515 = vpop.f32.mrb[0].mxu0
    %516 = vmatprep.mubr.f32.mxu0 0.0
    %517 = vmatmul.mubr.f32.gmra.mrb[0].mxu0 %v223
    %v518 = vpop.f32.mrb[0].mxu0
    %v519 = vadd.f32 0.0, %v518
    %v520 = vpop.f32.mrb[0].mxu0
    %521 = vmatprep.mubr.f32.mxu0 0.0
    %522 = vmatmul.mubr.f32.gmra.mrb[0].mxu0 %v226
    %v523 = vpop.f32.mrb[0].mxu0
    %v524 = vadd.f32 0.0, %v523
    %v525 = vpop.f32.mrb[0].mxu0
    %526 = vmatprep.mubr.f32.mxu0 0.0
    %527 = vmatmul.mubr.f32.gmra.mrb[0].mxu0 %v229
    %v528 = vpop.f32.mrb[0].mxu0
    %v529 = vadd.f32 0.0, %v528
    %v530 = vpop.f32.mrb[0].mxu0
    %531 = vmatprep.mubr.f32.mxu0 0.0
    %532 = vmatmul.mubr.f32.gmra.mrb[0].mxu0 %v232
    %v533 = vpop.f32.mrb[0].mxu0
    %v534 = vadd.f32 0.0, %v533
    %v535 = vpop.f32.mrb[0].mxu0
    %536 = vmatprep.mubr.f32.mxu0 0.0
    %537 = vmatmul.mubr.f32.gmra.mrb[0].mxu0 %v235
    %v538 = vpop.f32.mrb[0].mxu0
    %v539 = vadd.f32 0.0, %v538
    %v540 = vpop.f32.mrb[0].mxu0
    %541 = vmatprep.mubr.f32.mxu0 0.0
    %542 = vmatmul.mubr.f32.gmra.mrb[0].mxu0 %v238
    %v543 = vpop.f32.mrb[0].mxu0
    %v544 = vadd.f32 0.0, %v543
    %v545 = vpop.f32.mrb[0].mxu0
    %546 = vmatprep.mubr.f32.mxu0 0.0
    %547 = vmatmul.mubr.f32.gmra.mrb[0].mxu0 %v241
    %v548 = vpop.f32.mrb[0].mxu0
    %v549 = vadd.f32 0.0, %v548
    %v550 = vpop.f32.mrb[0].mxu0
    %551 = vmatprep.mubr.f32.mxu0 0.0
    %552 = vmatmul.mubr.f32.gmra.mrb[0].mxu0 %v244
    %v553 = vpop.f32.mrb[0].mxu0
    %v554 = vadd.f32 0.0, %v553
    %v555 = vpop.f32.mrb[0].mxu0
    %556 = vmatprep.mubr.f32.mxu0 0.0
    %557 = vmatmul.mubr.f32.gmra.mrb[0].mxu0 %v247
    %v558 = vpop.f32.mrb[0].mxu0
    %v559 = vadd.f32 0.0, %v558
    %v560 = vpop.f32.mrb[0].mxu0
    %561 = vmatprep.mubr.f32.mxu0 0.0
    %562 = vmatmul.mubr.f32.gmra.mrb[0].mxu0 %v250
    %v563 = vpop.f32.mrb[0].mxu0
    %v564 = vadd.f32 0.0, %v563
    %v565 = vpop.f32.mrb[0].mxu0
    %566 = vmatprep.mubr.f32.mxu0 0.0
    %567 = vmatmul.mubr.f32.gmra.mrb[0].mxu0 %v253
    %v568 = vpop.f32.mrb[0].mxu0
    %v569 = vadd.f32 0.0, %v568
    %v570 = vpop.f32.mrb[0].mxu0
    %571 = vmatprep.mubr.f32.mxu0 0.0
    %572 = vmatmul.mubr.f32.gmra.mrb[0].mxu0 %v256
    %v573 = vpop.f32.mrb[0].mxu0
    %v574 = vadd.f32 0.0, %v573
    %v575 = vpop.f32.mrb[0].mxu0
    %576 = vmatprep.mubr.f32.mxu0 0.0
    %577 = vmatmul.mubr.f32.gmra.mrb[0].mxu0 %v259
    %v578 = vpop.f32.mrb[0].mxu0
    %v579 = vadd.f32 0.0, %v578
    %v580 = vpop.f32.mrb[0].mxu0
    %581 = vmatprep.mubr.f32.mxu0 0.0
    %582 = vmatmul.mubr.f32.gmra.mrb[0].mxu0 %v262
    %v583 = vpop.f32.mrb[0].mxu0
    %v584 = vadd.f32 0.0, %v583
    %v585 = vpop.f32.mrb[0].mxu0
    %586 = vmatprep.mubr.f32.mxu0 0.0
    %587 = vmatmul.mubr.f32.gmra.mrb[0].mxu0 %v265
    %v588 = vpop.f32.mrb[0].mxu0
    %v589 = vadd.f32 0.0, %v588
    %v590 = vpop.f32.mrb[0].mxu0
    %591 = vmatprep.mubr.f32.mxu0 0.0
    %592 = vmatmul.mubr.f32.gmra.mrb[0].mxu0 %v268
    %v593 = vpop.f32.mrb[0].mxu0
    %v594 = vadd.f32 0.0, %v593
    %v595 = vpop.f32.mrb[0].mxu0
    %596 = vmatprep.mubr.f32.mxu0 0.0
    %597 = vmatmul.mubr.f32.gmra.mrb[0].mxu0 %v271
    %v598 = vpop.f32.mrb[0].mxu0
    %v599 = vadd.f32 0.0, %v598
    %v600 = vpop.f32.mrb[0].mxu0
    %601 = vmatprep.mubr.f32.mxu0 0.0
    %602 = vmatmul.mubr.f32.gmra.mrb[0].mxu0 %v274
    %v603 = vpop.f32.mrb[0].mxu0
    %v604 = vadd.f32 0.0, %v603
    %v605 = vpop.f32.mrb[0].mxu0
    %606 = vmatprep.mubr.f32.mxu0 0.0
    %607 = vmatmul.mubr.f32.gmra.mrb[0].mxu0 %v277
    %v608 = vpop.f32.mrb[0].mxu0
    %v609 = vadd.f32 0.0, %v608
    %v610 = vpop.f32.mrb[0].mxu0
    %611 = vmatprep.mubr.f32.mxu0 0.0
    %612 = vmatmul.mubr.f32.gmra.mrb[0].mxu0 %v280
    %v613 = vpop.f32.mrb[0].mxu0
    %v614 = vadd.f32 0.0, %v613
    %v615 = vpop.f32.mrb[0].mxu0
    %616 = vmatprep.mubr.f32.mxu0 0.0
    %617 = vmatmul.mubr.f32.gmra.mrb[0].mxu0 %v283
    %v618 = vpop.f32.mrb[0].mxu0
    %v619 = vadd.f32 0.0, %v618
    %v620 = vpop.f32.mrb[0].mxu0
    %621 = vmatprep.mubr.f32.mxu0 0.0
    %622 = vmatmul.mubr.f32.gmra.mrb[0].mxu0 %v286
    %v623 = vpop.f32.mrb[0].mxu0
    %v624 = vadd.f32 0.0, %v623
    %v625 = vpop.f32.mrb[0].mxu0
    %626 = vmatprep.mubr.f32.mxu0 0.0
    %627 = vmatmul.mubr.f32.gmra.mrb[0].mxu0 %v289
    %v628 = vpop.f32.mrb[0].mxu0
    %v629 = vadd.f32 0.0, %v628
    %v630 = vpop.f32.mrb[0].mxu0
    %631 = vmatprep.mubr.f32.mxu0 0.0
    %632 = vmatmul.mubr.f32.gmra.mrb[0].mxu0 %v292
    %v633 = vpop.f32.mrb[0].mxu0
    %v634 = vadd.f32 0.0, %v633
    %v635 = vpop.f32.mrb[0].mxu0
    %636 = vmatprep.mubr.f32.mxu0 0.0
    %637 = vmatmul.mubr.f32.gmra.mrb[0].mxu0 %v295
    %v638 = vpop.f32.mrb[0].mxu0
    %v639 = vadd.f32 0.0, %v638
    %v640 = vpop.f32.mrb[0].mxu0
    %641 = vmatprep.mubr.f32.mxu0 0.0
    %642 = vmatmul.mubr.f32.gmra.mrb[0].mxu0 %v298
    %v643 = vpop.f32.mrb[0].mxu0
    %v644 = vadd.f32 0.0, %v643
    %v645 = vpop.f32.mrb[0].mxu0
    %646 = vmatprep.mubr.f32.mxu0 0.0
    %647 = vmatmul.mubr.f32.gmra.mrb[0].mxu0 %v301
    %v648 = vpop.f32.mrb[0].mxu0
    %v649 = vadd.f32 0.0, %v648
    %v650 = vpop.f32.mrb[0].mxu0
    %651 = vmatprep.mubr.f32.mxu0 0.0
    %652 = vmatmul.mubr.f32.gmra.mrb[0].mxu0 %v304
    %v653 = vpop.f32.mrb[0].mxu0
    %v654 = vadd.f32 0.0, %v653
    %v655 = vpop.f32.mrb[0].mxu0
    %656 = vmatprep.mubr.f32.mxu0 0.0
    %657 = vmatmul.mubr.f32.gmra.mrb[0].mxu0 %v307
    %v658 = vpop.f32.mrb[0].mxu0
    %v659 = vadd.f32 0.0, %v658
    %v660 = vpop.f32.mrb[0].mxu0
    %661 = vmatprep.mubr.f32.mxu0 0.0
    %662 = vmatmul.mubr.f32.gmra.mrb[0].mxu0 %v310
    %v663 = vpop.f32.mrb[0].mxu0
    %v664 = vadd.f32 0.0, %v663
    %v665 = vpop.f32.mrb[0].mxu0
    %666 = vmatprep.mubr.f32.mxu0 0.0
    %667 = vmatmul.mubr.f32.gmra.mrb[0].mxu0 %v313
    %v668 = vpop.f32.mrb[0].mxu0
    %v669 = vadd.f32 0.0, %v668
    %v670 = vpop.f32.mrb[0].mxu0
    %671 = vmatprep.mubr.f32.mxu0 0.0
    %672 = vmatmul.mubr.f32.gmra.mrb[0].mxu0 %v316
    %v673 = vpop.f32.mrb[0].mxu0
    %v674 = vadd.f32 0.0, %v673
    %v675 = vpop.f32.mrb[0].mxu0
    %676 = vmatprep.mubr.f32.mxu0 0.0
    %677 = vmatmul.mubr.f32.gmra.mrb[0].mxu0 %v319
    %v678 = vpop.f32.mrb[0].mxu0
    %v679 = vadd.f32 0.0, %v678
    %v680 = vpop.f32.mrb[0].mxu0
    %681 = vmatprep.mubr.f32.mxu0 0.0
    %682 = vmatmul.mubr.f32.gmra.mrb[0].mxu0 %v322
    %v683 = vpop.f32.mrb[0].mxu0
    %v684 = vadd.f32 0.0, %v683
    %v685 = vpop.f32.mrb[0].mxu0
    %686 = vmatprep.mubr.f32.mxu0 0.0
    %687 = vmatmul.mubr.f32.gmra.mrb[0].mxu0 %v325
    %v688 = vpop.f32.mrb[0].mxu0
    %v689 = vadd.f32 0.0, %v688
    %v690 = vpop.f32.mrb[0].mxu0
    %691 = vmatprep.mubr.f32.mxu0 0.0
    %692 = vmatmul.mubr.f32.gmra.mrb[0].mxu0 %v328
    %v693 = vpop.f32.mrb[0].mxu0
    %v694 = vadd.f32 0.0, %v693
    %v695 = vpop.f32.mrb[0].mxu0
    %696 = vmatprep.mubr.f32.mxu0 0.0
    %697 = vmatmul.mubr.f32.gmra.mrb[0].mxu0 %v331
    %v698 = vpop.f32.mrb[0].mxu0
    %v699 = vadd.f32 0.0, %v698
    %v700 = vpop.f32.mrb[0].mxu0
    %701 = vmatprep.mubr.f32.mxu0 0.0
    %702 = vmatmul.mubr.f32.gmra.mrb[0].mxu0 %v334
    %v703 = vpop.f32.mrb[0].mxu0
    %v704 = vadd.f32 0.0, %v703
    %v705 = vpop.f32.mrb[0].mxu0
    %706 = vmatprep.mubr.f32.mxu0 0.0
    %707 = vmatmul.mubr.f32.gmra.mrb[0].mxu0 %v337
    %v708 = vpop.f32.mrb[0].mxu0
    %v709 = vadd.f32 0.0, %v708
    %v710 = vpop.f32.mrb[0].mxu0
    %711 = vmatprep.mubr.f32.mxu0 0.0
    %712 = vmatmul.mubr.f32.gmra.mrb[0].mxu0 %v340
    %v713 = vpop.f32.mrb[0].mxu0
    %v714 = vadd.f32 0.0, %v713
    %v715 = vpop.f32.mrb[0].mxu0
    %716 = vmatprep.mubr.f32.mxu0 0.0
    %717 = vmatmul.mubr.f32.gmra.mrb[0].mxu0 %v343
    %v718 = vpop.f32.mrb[0].mxu0
    %v719 = vadd.f32 0.0, %v718
    %v720 = vpop.f32.mrb[0].mxu0
    %721 = vmatprep.mubr.f32.mxu0 0.0
    %722 = vmatmul.mubr.f32.gmra.mrb[0].mxu0 %v346
    %v723 = vpop.f32.mrb[0].mxu0
    %v724 = vadd.f32 0.0, %v723
    %v725 = vpop.f32.mrb[0].mxu0
    %726 = vmatprep.mubr.f32.mxu0 0.0
    %727 = vmatmul.mubr.f32.gmra.mrb[0].mxu0 %v349
    %v728 = vpop.f32.mrb[0].mxu0
    %v729 = vadd.f32 0.0, %v728
    %v730 = vpop.f32.mrb[0].mxu0
    %731 = vmatprep.mubr.f32.mxu0 0.0
    %732 = vmatmul.mubr.f32.gmra.mrb[0].mxu0 %v352
    %v733 = vpop.f32.mrb[0].mxu0
    %v734 = vadd.f32 0.0, %v733
    %v735 = vpop.f32.mrb[0].mxu0
    %736 = vmatprep.mubr.f32.mxu0 0.0
    %737 = vmatmul.mubr.f32.gmra.mrb[0].mxu0 %v355
    %v738 = vpop.f32.mrb[0].mxu0
    %v739 = vadd.f32 0.0, %v738
    %v740 = vpop.f32.mrb[0].mxu0
    %741 = vdwg.mxu0
    %v743 = vsel %vm164, %v27, 0
    %v746 = vsel %vm164, %v28, 0
    %v749 = vsel %vm164, %v29, 0
    %v752 = vsel %vm164, %v30, 0
    %v755 = vsel %vm164, %v31, 0
    %v758 = vsel %vm164, %v32, 0
    %v761 = vsel %vm164, %v33, 0
    %v764 = vsel %vm164, %v34, 0
    %v767 = vsel %vm164, %v35, 0
    %v770 = vsel %vm164, %v36, 0
    %v773 = vsel %vm164, %v37, 0
    %v776 = vsel %vm164, %v38, 0
    %v779 = vsel %vm164, %v39, 0
    %v782 = vsel %vm164, %v40, 0
    %v785 = vsel %vm164, %v41, 0
    %v788 = vsel %vm164, %v42, 0
    %v791 = vsel %vm164, %v43, 0
    %v794 = vsel %vm164, %v44, 0
    %v797 = vsel %vm164, %v45, 0
    %v800 = vsel %vm164, %v46, 0
    %v803 = vsel %vm164, %v47, 0
    %v806 = vsel %vm164, %v48, 0
    %v809 = vsel %vm164, %v49, 0
    %v812 = vsel %vm164, %v50, 0
    %v815 = vsel %vm164, %v51, 0
    %v818 = vsel %vm164, %v52, 0
    %v821 = vsel %vm164, %v53, 0
    %v824 = vsel %vm164, %v54, 0
    %v827 = vsel %vm164, %v55, 0
    %v830 = vsel %vm164, %v56, 0
    %v833 = vsel %vm164, %v57, 0
    %v836 = vsel %vm164, %v58, 0
    %v839 = vsel %vm164, %v59, 0
    %v842 = vsel %vm164, %v60, 0
    %v845 = vsel %vm164, %v61, 0
    %v848 = vsel %vm164, %v62, 0
    %v851 = vsel %vm164, %v63, 0
    %v854 = vsel %vm164, %v64, 0
    %v857 = vsel %vm164, %v65, 0
    %v860 = vsel %vm164, %v66, 0
    %v863 = vsel %vm164, %v67, 0
    %v866 = vsel %vm164, %v68, 0
    %v869 = vsel %vm164, %v69, 0
    %v872 = vsel %vm164, %v70, 0
    %v875 = vsel %vm164, %v71, 0
    %v878 = vsel %vm164, %v72, 0
    %v881 = vsel %vm164, %v73, 0
    %v884 = vsel %vm164, %v74, 0
    %v887 = vsel %vm164, %v75, 0
    %v890 = vsel %vm164, %v76, 0
    %v893 = vsel %vm164, %v77, 0
    %v896 = vsel %vm164, %v78, 0
    %v899 = vsel %vm164, %v79, 0
    %v902 = vsel %vm164, %v80, 0
    %v905 = vsel %vm164, %v81, 0
    %v908 = vsel %vm164, %v82, 0
    %v911 = vsel %vm164, %v83, 0
    %v914 = vsel %vm164, %v84, 0
    %v917 = vsel %vm164, %v85, 0
    %v920 = vsel %vm164, %v86, 0
    %v923 = vsel %vm164, %v87, 0
    %v926 = vsel %vm164, %v88, 0
    %v929 = vsel %vm164, %v89, 0
    %v932 = vsel %vm164, %v90, 0
    %934 = vmatprep.subr.mxu0 0.0
    %935 = vmatpush1.msra.mxu0 %v91
    %936 = vmatprep.subr.mxu0 0.0
    %937 = vmatpush1.msra.mxu0 %v92
    %938 = vmatprep.subr.mxu0 0.0
    %939 = vmatpush1.msra.mxu0 %v93
    %940 = vmatprep.subr.mxu0 0.0
    %941 = vmatpush1.msra.mxu0 %v94
    %942 = vmatprep.subr.mxu0 0.0
    %943 = vmatpush1.msra.mxu0 0.0
    %944 = vmatprep.subr.mxu0 0.0
    %945 = vmatpush1.msra.mxu0 0.0
    %946 = vmatprep.subr.mxu0 0.0
    %947 = vmatpush1.msra.mxu0 0.0
    %948 = vmatprep.subr.mxu0 0.0
    %949 = vmatpush1.msra.mxu0 0.0
    %950 = vmatprep.subr.mxu0 0.0
    %951 = vmatpush1.msra.mxu0 0.0
    %952 = vmatprep.subr.mxu0 0.0
    %953 = vmatpush1.msra.mxu0 0.0
    %954 = vmatprep.subr.mxu0 0.0
    %955 = vmatpush1.msra.mxu0 0.0
    %956 = vmatprep.subr.mxu0 0.0
    %957 = vmatpush1.msra.mxu0 0.0
    %958 = vmatprep.subr.mxu0 0.0
    %959 = vmatpush1.msra.mxu0 0.0
    %960 = vmatprep.subr.mxu0 0.0
    %961 = vmatpush1.msra.mxu0 0.0
    %962 = vmatprep.subr.mxu0 0.0
    %963 = vmatpush1.msra.mxu0 0.0
    %964 = vmatprep.subr.mxu0 0.0
    %965 = vmatpush1.msra.mxu0 0.0
    %966 = vmatprep.subr.mxu0 0.0
    %967 = vmatpush1.msra.mxu0 0.0
    %968 = vmatprep.subr.mxu0 0.0
    %969 = vmatpush1.msra.mxu0 0.0
    %970 = vmatprep.subr.mxu0 0.0
    %971 = vmatpush1.msra.mxu0 0.0
    %972 = vmatprep.subr.mxu0 0.0
    %973 = vmatpush1.msra.mxu0 0.0
    %974 = vmatprep.subr.mxu0 0.0
    %975 = vmatpush1.msra.mxu0 0.0
    %976 = vmatprep.subr.mxu0 0.0
    %977 = vmatpush1.msra.mxu0 0.0
    %978 = vmatprep.subr.mxu0 0.0
    %979 = vmatpush1.msra.mxu0 0.0
    %980 = vmatprep.subr.mxu0 0.0
    %981 = vmatpush1.msra.mxu0 0.0
    %982 = vmatprep.subr.mxu0 0.0
    %983 = vmatpush1.msra.mxu0 0.0
    %984 = vmatprep.subr.mxu0 0.0
    %985 = vmatpush1.msra.mxu0 0.0
    %986 = vmatprep.subr.mxu0 0.0
    %987 = vmatpush1.msra.mxu0 0.0
    %988 = vmatprep.subr.mxu0 0.0
    %989 = vmatpush1.msra.mxu0 0.0
    %990 = vmatprep.subr.mxu0 0.0
    %991 = vmatpush1.msra.mxu0 0.0
    %992 = vmatprep.subr.mxu0 0.0
    %993 = vmatpush1.msra.mxu0 0.0
    %994 = vmatprep.subr.mxu0 0.0
    %995 = vmatpush1.msra.mxu0 0.0
    %996 = vmatprep.subr.mxu0 0.0
    %997 = vmatpush1.msra.mxu0 0.0
    %998 = vmatprep.mubr.f32.mxu0 0.0
    %999 = vmatmul.mubr.f32.gmra.mrb[0].mxu0 %v743
    %v1000 = vpop.f32.mrb[0].mxu0
    %v1001 = vadd.f32 %v424, %v1000
    %v1002 = vpop.f32.mrb[0].mxu0
    %1003 = vmatprep.mubr.f32.mxu0 0.0
    %1004 = vmatmul.mubr.f32.gmra.mrb[0].mxu0 %v746
    %v1005 = vpop.f32.mrb[0].mxu0
    %v1006 = vadd.f32 %v429, %v1005
    %v1007 = vpop.f32.mrb[0].mxu0
    %1008 = vmatprep.mubr.f32.mxu0 0.0
    %1009 = vmatmul.mubr.f32.gmra.mrb[0].mxu0 %v749
    %v1010 = vpop.f32.mrb[0].mxu0
    %v1011 = vadd.f32 %v434, %v1010
    %v1012 = vpop.f32.mrb[0].mxu0
    %1013 = vmatprep.mubr.f32.mxu0 0.0
    %1014 = vmatmul.mubr.f32.gmra.mrb[0].mxu0 %v752
    %v1015 = vpop.f32.mrb[0].mxu0
    %v1016 = vadd.f32 %v439, %v1015
    %v1017 = vpop.f32.mrb[0].mxu0
    %1018 = vmatprep.mubr.f32.mxu0 0.0
    %1019 = vmatmul.mubr.f32.gmra.mrb[0].mxu0 %v755
    %v1020 = vpop.f32.mrb[0].mxu0
    %v1021 = vadd.f32 %v444, %v1020
    %v1022 = vpop.f32.mrb[0].mxu0
    %1023 = vmatprep.mubr.f32.mxu0 0.0
    %1024 = vmatmul.mubr.f32.gmra.mrb[0].mxu0 %v758
    %v1025 = vpop.f32.mrb[0].mxu0
    %v1026 = vadd.f32 %v449, %v1025
    %v1027 = vpop.f32.mrb[0].mxu0
    %1028 = vmatprep.mubr.f32.mxu0 0.0
    %1029 = vmatmul.mubr.f32.gmra.mrb[0].mxu0 %v761
    %v1030 = vpop.f32.mrb[0].mxu0
    %v1031 = vadd.f32 %v454, %v1030
    %v1032 = vpop.f32.mrb[0].mxu0
    %1033 = vmatprep.mubr.f32.mxu0 0.0
    %1034 = vmatmul.mubr.f32.gmra.mrb[0].mxu0 %v764
    %v1035 = vpop.f32.mrb[0].mxu0
    %v1036 = vadd.f32 %v459, %v1035
    %v1037 = vpop.f32.mrb[0].mxu0
    %1038 = vmatprep.mubr.f32.mxu0 0.0
    %1039 = vmatmul.mubr.f32.gmra.mrb[0].mxu0 %v767
    %v1040 = vpop.f32.mrb[0].mxu0
    %v1041 = vadd.f32 %v464, %v1040
    %v1042 = vpop.f32.mrb[0].mxu0
    %1043 = vmatprep.mubr.f32.mxu0 0.0
    %1044 = vmatmul.mubr.f32.gmra.mrb[0].mxu0 %v770
    %v1045 = vpop.f32.mrb[0].mxu0
    %v1046 = vadd.f32 %v469, %v1045
    %v1047 = vpop.f32.mrb[0].mxu0
    %1048 = vmatprep.mubr.f32.mxu0 0.0
    %1049 = vmatmul.mubr.f32.gmra.mrb[0].mxu0 %v773
    %v1050 = vpop.f32.mrb[0].mxu0
    %v1051 = vadd.f32 %v474, %v1050
    %v1052 = vpop.f32.mrb[0].mxu0
    %1053 = vmatprep.mubr.f32.mxu0 0.0
    %1054 = vmatmul.mubr.f32.gmra.mrb[0].mxu0 %v776
    %v1055 = vpop.f32.mrb[0].mxu0
    %v1056 = vadd.f32 %v479, %v1055
    %v1057 = vpop.f32.mrb[0].mxu0
    %1058 = vmatprep.mubr.f32.mxu0 0.0
    %1059 = vmatmul.mubr.f32.gmra.mrb[0].mxu0 %v779
    %v1060 = vpop.f32.mrb[0].mxu0
    %v1061 = vadd.f32 %v484, %v1060
    %v1062 = vpop.f32.mrb[0].mxu0
    %1063 = vmatprep.mubr.f32.mxu0 0.0
    %1064 = vmatmul.mubr.f32.gmra.mrb[0].mxu0 %v782
    %v1065 = vpop.f32.mrb[0].mxu0
    %v1066 = vadd.f32 %v489, %v1065
    %v1067 = vpop.f32.mrb[0].mxu0
    %1068 = vmatprep.mubr.f32.mxu0 0.0
    %1069 = vmatmul.mubr.f32.gmra.mrb[0].mxu0 %v785
    %v1070 = vpop.f32.mrb[0].mxu0
    %v1071 = vadd.f32 %v494, %v1070
    %v1072 = vpop.f32.mrb[0].mxu0
    %1073 = vmatprep.mubr.f32.mxu0 0.0
    %1074 = vmatmul.mubr.f32.gmra.mrb[0].mxu0 %v788
    %v1075 = vpop.f32.mrb[0].mxu0
    %v1076 = vadd.f32 %v499, %v1075
    %v1077 = vpop.f32.mrb[0].mxu0
    %1078 = vmatprep.mubr.f32.mxu0 0.0
    %1079 = vmatmul.mubr.f32.gmra.mrb[0].mxu0 %v791
    %v1080 = vpop.f32.mrb[0].mxu0
    %v1081 = vadd.f32 %v504, %v1080
    %v1082 = vpop.f32.mrb[0].mxu0
    %1083 = vmatprep.mubr.f32.mxu0 0.0
    %1084 = vmatmul.mubr.f32.gmra.mrb[0].mxu0 %v794
    %v1085 = vpop.f32.mrb[0].mxu0
    %v1086 = vadd.f32 %v509, %v1085
    %v1087 = vpop.f32.mrb[0].mxu0
    %1088 = vmatprep.mubr.f32.mxu0 0.0
    %1089 = vmatmul.mubr.f32.gmra.mrb[0].mxu0 %v797
    %v1090 = vpop.f32.mrb[0].mxu0
    %v1091 = vadd.f32 %v514, %v1090
    %v1092 = vpop.f32.mrb[0].mxu0
    %1093 = vmatprep.mubr.f32.mxu0 0.0
    %1094 = vmatmul.mubr.f32.gmra.mrb[0].mxu0 %v800
    %v1095 = vpop.f32.mrb[0].mxu0
    %v1096 = vadd.f32 %v519, %v1095
    %v1097 = vpop.f32.mrb[0].mxu0
    %1098 = vmatprep.mubr.f32.mxu0 0.0
    %1099 = vmatmul.mubr.f32.gmra.mrb[0].mxu0 %v803
    %v1100 = vpop.f32.mrb[0].mxu0
    %v1101 = vadd.f32 %v524, %v1100
    %v1102 = vpop.f32.mrb[0].mxu0
    %1103 = vmatprep.mubr.f32.mxu0 0.0
    %1104 = vmatmul.mubr.f32.gmra.mrb[0].mxu0 %v806
    %v1105 = vpop.f32.mrb[0].mxu0
    %v1106 = vadd.f32 %v529, %v1105
    %v1107 = vpop.f32.mrb[0].mxu0
    %1108 = vmatprep.mubr.f32.mxu0 0.0
    %1109 = vmatmul.mubr.f32.gmra.mrb[0].mxu0 %v809
    %v1110 = vpop.f32.mrb[0].mxu0
    %v1111 = vadd.f32 %v534, %v1110
    %v1112 = vpop.f32.mrb[0].mxu0
    %1113 = vmatprep.mubr.f32.mxu0 0.0
    %1114 = vmatmul.mubr.f32.gmra.mrb[0].mxu0 %v812
    %v1115 = vpop.f32.mrb[0].mxu0
    %v1116 = vadd.f32 %v539, %v1115
    %v1117 = vpop.f32.mrb[0].mxu0
    %1118 = vmatprep.mubr.f32.mxu0 0.0
    %1119 = vmatmul.mubr.f32.gmra.mrb[0].mxu0 %v815
    %v1120 = vpop.f32.mrb[0].mxu0
    %v1121 = vadd.f32 %v544, %v1120
    %v1122 = vpop.f32.mrb[0].mxu0
    %1123 = vmatprep.mubr.f32.mxu0 0.0
    %1124 = vmatmul.mubr.f32.gmra.mrb[0].mxu0 %v818
    %v1125 = vpop.f32.mrb[0].mxu0
    %v1126 = vadd.f32 %v549, %v1125
    %v1127 = vpop.f32.mrb[0].mxu0
    %1128 = vmatprep.mubr.f32.mxu0 0.0
    %1129 = vmatmul.mubr.f32.gmra.mrb[0].mxu0 %v821
    %v1130 = vpop.f32.mrb[0].mxu0
    %v1131 = vadd.f32 %v554, %v1130
    %v1132 = vpop.f32.mrb[0].mxu0
    %1133 = vmatprep.mubr.f32.mxu0 0.0
    %1134 = vmatmul.mubr.f32.gmra.mrb[0].mxu0 %v824
    %v1135 = vpop.f32.mrb[0].mxu0
    %v1136 = vadd.f32 %v559, %v1135
    %v1137 = vpop.f32.mrb[0].mxu0
    %1138 = vmatprep.mubr.f32.mxu0 0.0
    %1139 = vmatmul.mubr.f32.gmra.mrb[0].mxu0 %v827
    %v1140 = vpop.f32.mrb[0].mxu0
    %v1141 = vadd.f32 %v564, %v1140
    %v1142 = vpop.f32.mrb[0].mxu0
    %1143 = vmatprep.mubr.f32.mxu0 0.0
    %1144 = vmatmul.mubr.f32.gmra.mrb[0].mxu0 %v830
    %v1145 = vpop.f32.mrb[0].mxu0
    %v1146 = vadd.f32 %v569, %v1145
    %v1147 = vpop.f32.mrb[0].mxu0
    %1148 = vmatprep.mubr.f32.mxu0 0.0
    %1149 = vmatmul.mubr.f32.gmra.mrb[0].mxu0 %v833
    %v1150 = vpop.f32.mrb[0].mxu0
    %v1151 = vadd.f32 %v574, %v1150
    %v1152 = vpop.f32.mrb[0].mxu0
    %1153 = vmatprep.mubr.f32.mxu0 0.0
    %1154 = vmatmul.mubr.f32.gmra.mrb[0].mxu0 %v836
    %v1155 = vpop.f32.mrb[0].mxu0
    %v1156 = vadd.f32 %v579, %v1155
    %v1157 = vpop.f32.mrb[0].mxu0
    %1158 = vmatprep.mubr.f32.mxu0 0.0
    %1159 = vmatmul.mubr.f32.gmra.mrb[0].mxu0 %v839
    %v1160 = vpop.f32.mrb[0].mxu0
    %v1161 = vadd.f32 %v584, %v1160
    %v1162 = vpop.f32.mrb[0].mxu0
    %1163 = vmatprep.mubr.f32.mxu0 0.0
    %1164 = vmatmul.mubr.f32.gmra.mrb[0].mxu0 %v842
    %v1165 = vpop.f32.mrb[0].mxu0
    %v1166 = vadd.f32 %v589, %v1165
    %v1167 = vpop.f32.mrb[0].mxu0
    %1168 = vmatprep.mubr.f32.mxu0 0.0
    %1169 = vmatmul.mubr.f32.gmra.mrb[0].mxu0 %v845
    %v1170 = vpop.f32.mrb[0].mxu0
    %v1171 = vadd.f32 %v594, %v1170
    %v1172 = vpop.f32.mrb[0].mxu0
    %1173 = vmatprep.mubr.f32.mxu0 0.0
    %1174 = vmatmul.mubr.f32.gmra.mrb[0].mxu0 %v848
    %v1175 = vpop.f32.mrb[0].mxu0
    %v1176 = vadd.f32 %v599, %v1175
    %v1177 = vpop.f32.mrb[0].mxu0
    %1178 = vmatprep.mubr.f32.mxu0 0.0
    %1179 = vmatmul.mubr.f32.gmra.mrb[0].mxu0 %v851
    %v1180 = vpop.f32.mrb[0].mxu0
    %v1181 = vadd.f32 %v604, %v1180
    %v1182 = vpop.f32.mrb[0].mxu0
    %1183 = vmatprep.mubr.f32.mxu0 0.0
    %1184 = vmatmul.mubr.f32.gmra.mrb[0].mxu0 %v854
    %v1185 = vpop.f32.mrb[0].mxu0
    %v1186 = vadd.f32 %v609, %v1185
    %v1187 = vpop.f32.mrb[0].mxu0
    %1188 = vmatprep.mubr.f32.mxu0 0.0
    %1189 = vmatmul.mubr.f32.gmra.mrb[0].mxu0 %v857
    %v1190 = vpop.f32.mrb[0].mxu0
    %v1191 = vadd.f32 %v614, %v1190
    %v1192 = vpop.f32.mrb[0].mxu0
    %1193 = vmatprep.mubr.f32.mxu0 0.0
    %1194 = vmatmul.mubr.f32.gmra.mrb[0].mxu0 %v860
    %v1195 = vpop.f32.mrb[0].mxu0
    %v1196 = vadd.f32 %v619, %v1195
    %v1197 = vpop.f32.mrb[0].mxu0
    %1198 = vmatprep.mubr.f32.mxu0 0.0
    %1199 = vmatmul.mubr.f32.gmra.mrb[0].mxu0 %v863
    %v1200 = vpop.f32.mrb[0].mxu0
    %v1201 = vadd.f32 %v624, %v1200
    %v1202 = vpop.f32.mrb[0].mxu0
    %1203 = vmatprep.mubr.f32.mxu0 0.0
    %1204 = vmatmul.mubr.f32.gmra.mrb[0].mxu0 %v866
    %v1205 = vpop.f32.mrb[0].mxu0
    %v1206 = vadd.f32 %v629, %v1205
    %v1207 = vpop.f32.mrb[0].mxu0
    %1208 = vmatprep.mubr.f32.mxu0 0.0
    %1209 = vmatmul.mubr.f32.gmra.mrb[0].mxu0 %v869
    %v1210 = vpop.f32.mrb[0].mxu0
    %v1211 = vadd.f32 %v634, %v1210
    %v1212 = vpop.f32.mrb[0].mxu0
    %1213 = vmatprep.mubr.f32.mxu0 0.0
    %1214 = vmatmul.mubr.f32.gmra.mrb[0].mxu0 %v872
    %v1215 = vpop.f32.mrb[0].mxu0
    %v1216 = vadd.f32 %v639, %v1215
    %v1217 = vpop.f32.mrb[0].mxu0
    %1218 = vmatprep.mubr.f32.mxu0 0.0
    %1219 = vmatmul.mubr.f32.gmra.mrb[0].mxu0 %v875
    %v1220 = vpop.f32.mrb[0].mxu0
    %v1221 = vadd.f32 %v644, %v1220
    %v1222 = vpop.f32.mrb[0].mxu0
    %1223 = vmatprep.mubr.f32.mxu0 0.0
    %1224 = vmatmul.mubr.f32.gmra.mrb[0].mxu0 %v878
    %v1225 = vpop.f32.mrb[0].mxu0
    %v1226 = vadd.f32 %v649, %v1225
    %v1227 = vpop.f32.mrb[0].mxu0
    %1228 = vmatprep.mubr.f32.mxu0 0.0
    %1229 = vmatmul.mubr.f32.gmra.mrb[0].mxu0 %v881
    %v1230 = vpop.f32.mrb[0].mxu0
    %v1231 = vadd.f32 %v654, %v1230
    %v1232 = vpop.f32.mrb[0].mxu0
    %1233 = vmatprep.mubr.f32.mxu0 0.0
    %1234 = vmatmul.mubr.f32.gmra.mrb[0].mxu0 %v884
    %v1235 = vpop.f32.mrb[0].mxu0
    %v1236 = vadd.f32 %v659, %v1235
    %v1237 = vpop.f32.mrb[0].mxu0
    %1238 = vmatprep.mubr.f32.mxu0 0.0
    %1239 = vmatmul.mubr.f32.gmra.mrb[0].mxu0 %v887
    %v1240 = vpop.f32.mrb[0].mxu0
    %v1241 = vadd.f32 %v664, %v1240
    %v1242 = vpop.f32.mrb[0].mxu0
    %1243 = vmatprep.mubr.f32.mxu0 0.0
    %1244 = vmatmul.mubr.f32.gmra.mrb[0].mxu0 %v890
    %v1245 = vpop.f32.mrb[0].mxu0
    %v1246 = vadd.f32 %v669, %v1245
    %v1247 = vpop.f32.mrb[0].mxu0
    %1248 = vmatprep.mubr.f32.mxu0 0.0
    %1249 = vmatmul.mubr.f32.gmra.mrb[0].mxu0 %v893
    %v1250 = vpop.f32.mrb[0].mxu0
    %v1251 = vadd.f32 %v674, %v1250
    %v1252 = vpop.f32.mrb[0].mxu0
    %1253 = vmatprep.mubr.f32.mxu0 0.0
    %1254 = vmatmul.mubr.f32.gmra.mrb[0].mxu0 %v896
    %v1255 = vpop.f32.mrb[0].mxu0
    %v1256 = vadd.f32 %v679, %v1255
    %v1257 = vpop.f32.mrb[0].mxu0
    %1258 = vmatprep.mubr.f32.mxu0 0.0
    %1259 = vmatmul.mubr.f32.gmra.mrb[0].mxu0 %v899
    %v1260 = vpop.f32.mrb[0].mxu0
    %v1261 = vadd.f32 %v684, %v1260
    %v1262 = vpop.f32.mrb[0].mxu0
    %1263 = vmatprep.mubr.f32.mxu0 0.0
    %1264 = vmatmul.mubr.f32.gmra.mrb[0].mxu0 %v902
    %v1265 = vpop.f32.mrb[0].mxu0
    %v1266 = vadd.f32 %v689, %v1265
    %v1267 = vpop.f32.mrb[0].mxu0
    %1268 = vmatprep.mubr.f32.mxu0 0.0
    %1269 = vmatmul.mubr.f32.gmra.mrb[0].mxu0 %v905
    %v1270 = vpop.f32.mrb[0].mxu0
    %v1271 = vadd.f32 %v694, %v1270
    %v1272 = vpop.f32.mrb[0].mxu0
    %1273 = vmatprep.mubr.f32.mxu0 0.0
    %1274 = vmatmul.mubr.f32.gmra.mrb[0].mxu0 %v908
    %v1275 = vpop.f32.mrb[0].mxu0
    %v1276 = vadd.f32 %v699, %v1275
    %v1277 = vpop.f32.mrb[0].mxu0
    %1278 = vmatprep.mubr.f32.mxu0 0.0
    %1279 = vmatmul.mubr.f32.gmra.mrb[0].mxu0 %v911
    %v1280 = vpop.f32.mrb[0].mxu0
    %v1281 = vadd.f32 %v704, %v1280
    %v1282 = vpop.f32.mrb[0].mxu0
    %1283 = vmatprep.mubr.f32.mxu0 0.0
    %1284 = vmatmul.mubr.f32.gmra.mrb[0].mxu0 %v914
    %v1285 = vpop.f32.mrb[0].mxu0
    %v1286 = vadd.f32 %v709, %v1285
    %v1287 = vpop.f32.mrb[0].mxu0
    %1288 = vmatprep.mubr.f32.mxu0 0.0
    %1289 = vmatmul.mubr.f32.gmra.mrb[0].mxu0 %v917
    %v1290 = vpop.f32.mrb[0].mxu0
    %v1291 = vadd.f32 %v714, %v1290
    %v1292 = vpop.f32.mrb[0].mxu0
    %1293 = vmatprep.mubr.f32.mxu0 0.0
    %1294 = vmatmul.mubr.f32.gmra.mrb[0].mxu0 %v920
    %v1295 = vpop.f32.mrb[0].mxu0
    %v1296 = vadd.f32 %v719, %v1295
    %v1297 = vpop.f32.mrb[0].mxu0
    %1298 = vmatprep.mubr.f32.mxu0 0.0
    %1299 = vmatmul.mubr.f32.gmra.mrb[0].mxu0 %v923
    %v1300 = vpop.f32.mrb[0].mxu0
    %v1301 = vadd.f32 %v724, %v1300
    %v1302 = vpop.f32.mrb[0].mxu0
    %1303 = vmatprep.mubr.f32.mxu0 0.0
    %1304 = vmatmul.mubr.f32.gmra.mrb[0].mxu0 %v926
    %v1305 = vpop.f32.mrb[0].mxu0
    %v1306 = vadd.f32 %v729, %v1305
    %v1307 = vpop.f32.mrb[0].mxu0
    %1308 = vmatprep.mubr.f32.mxu0 0.0
    %1309 = vmatmul.mubr.f32.gmra.mrb[0].mxu0 %v929
    %v1310 = vpop.f32.mrb[0].mxu0
    %v1311 = vadd.f32 %v734, %v1310
    %v1312 = vpop.f32.mrb[0].mxu0
    %1313 = vmatprep.mubr.f32.mxu0 0.0
    %1314 = vmatmul.mubr.f32.gmra.mrb[0].mxu0 %v932
    %v1315 = vpop.f32.mrb[0].mxu0
    %v1316 = vadd.f32 %v739, %v1315
    %v1317 = vpop.f32.mrb[0].mxu0
    %1318 = vdwg.mxu0
    %v1319 = vld [vmem:[%s0 + $0x2] sm:$0xff]
    %v1320 = vld [vmem:[%s0 + $0xa] sm:$0xff]
    %v1321 = vld [vmem:[%s0 + $0x1a] sm:$0xff]
    %v1322 = vld [vmem:[%s0 + $0x22] sm:$0xff]
    %v1323 = vld [vmem:[%s0 + $0x32] sm:$0xff]
    %v1324 = vld [vmem:[%s0 + $0x3a] sm:$0xff]
    %v1325 = vld [vmem:[%s0 + $0x4a] sm:$0xff]
    %v1326 = vld [vmem:[%s0 + $0x52] sm:$0xff]
    %v1327 = vld [vmem:[%s0 + $0x62] sm:$0xff]
    %v1328 = vld [vmem:[%s0 + $0x6a] sm:$0xff]
    %v1329 = vld [vmem:[%s0 + $0x7a] sm:$0xff]
    %v1330 = vld [vmem:[%s0 + $0x82] sm:$0xff]
    %v1331 = vld [vmem:[%s0 + $0x92] sm:$0xff]
    %v1332 = vld [vmem:[%s0 + $0x9a] sm:$0xff]
    %v1333 = vld [vmem:[%s0 + $0xaa] sm:$0xff]
    %v1334 = vld [vmem:[%s0 + $0xb2] sm:$0xff]
    %v1335 = vld [vmem:[%s0 + $0xc2] sm:$0xff]
    %v1336 = vld [vmem:[%s0 + $0xca] sm:$0xff]
    %v1337 = vld [vmem:[%s0 + $0xda] sm:$0xff]
    %v1338 = vld [vmem:[%s0 + $0xe2] sm:$0xff]
    %v1339 = vld [vmem:[%s0 + $0xf2] sm:$0xff]
    %v1340 = vld [vmem:[%s0 + $0xfa] sm:$0xff]
    %v1341 = vld [vmem:[%s0 + $0x10a] sm:$0xff]
    %v1342 = vld [vmem:[%s0 + $0x112] sm:$0xff]
    %v1343 = vld [vmem:[%s0 + $0x122] sm:$0xff]
    %v1344 = vld [vmem:[%s0 + $0x12a] sm:$0xff]
    %v1345 = vld [vmem:[%s0 + $0x13a] sm:$0xff]
    %v1346 = vld [vmem:[%s0 + $0x142] sm:$0xff]
    %v1347 = vld [vmem:[%s0 + $0x152] sm:$0xff]
    %v1348 = vld [vmem:[%s0 + $0x15a] sm:$0xff]
    %v1349 = vld [vmem:[%s0 + $0x16a] sm:$0xff]
    %v1350 = vld [vmem:[%s0 + $0x172] sm:$0xff]
    %v1351 = vld [vmem:[%s0 + $0x1b2] sm:$0xff]
    %v1352 = vld [vmem:[%s0 + $0x1ba] sm:$0xff]
    %v1353 = vld [vmem:[%s0 + $0x1ca] sm:$0xff]
    %v1354 = vld [vmem:[%s0 + $0x1d2] sm:$0xff]
    %v1355 = vld [vmem:[%s0 + $0x1e2] sm:$0xff]
    %v1356 = vld [vmem:[%s0 + $0x1ea] sm:$0xff]
    %v1357 = vld [vmem:[%s0 + $0x1fa] sm:$0xff]
    %v1358 = vld [vmem:[%s0 + $0x202] sm:$0xff]
    %v1359 = vld [vmem:[%s0 + $0x212] sm:$0xff]
    %v1360 = vld [vmem:[%s0 + $0x21a] sm:$0xff]
    %v1361 = vld [vmem:[%s0 + $0x22a] sm:$0xff]
    %v1362 = vld [vmem:[%s0 + $0x232] sm:$0xff]
    %v1363 = vld [vmem:[%s0 + $0x242] sm:$0xff]
    %v1364 = vld [vmem:[%s0 + $0x24a] sm:$0xff]
    %v1365 = vld [vmem:[%s0 + $0x25a] sm:$0xff]
    %v1366 = vld [vmem:[%s0 + $0x262] sm:$0xff]
    %v1367 = vld [vmem:[%s0 + $0x272] sm:$0xff]
    %v1368 = vld [vmem:[%s0 + $0x27a] sm:$0xff]
    %v1369 = vld [vmem:[%s0 + $0x28a] sm:$0xff]
    %v1370 = vld [vmem:[%s0 + $0x292] sm:$0xff]
    %v1371 = vld [vmem:[%s0 + $0x2a2] sm:$0xff]
    %v1372 = vld [vmem:[%s0 + $0x2aa] sm:$0xff]
    %v1373 = vld [vmem:[%s0 + $0x2ba] sm:$0xff]
    %v1374 = vld [vmem:[%s0 + $0x2c2] sm:$0xff]
    %v1375 = vld [vmem:[%s0 + $0x2d2] sm:$0xff]
    %v1376 = vld [vmem:[%s0 + $0x2da] sm:$0xff]
    %v1377 = vld [vmem:[%s0 + $0x2ea] sm:$0xff]
    %v1378 = vld [vmem:[%s0 + $0x2f2] sm:$0xff]
    %v1379 = vld [vmem:[%s0 + $0x302] sm:$0xff]
    %v1380 = vld [vmem:[%s0 + $0x30a] sm:$0xff]
    %v1381 = vld [vmem:[%s0 + $0x31a] sm:$0xff]
    %v1382 = vld [vmem:[%s0 + $0x322] sm:$0xff]
    %s1383 = scalar_lea.vmem %s1, 64
    %v1384 = vld [vmem:[%s1383] sm:$0xff]
    %v1385 = vld [vmem:[%s1383 + $0x8] sm:$0xff]
    %v1386 = vld [vmem:[%s1383 + $0x10] sm:$0xff]
    %v1387 = vld [vmem:[%s1383 + $0x18] sm:$0xff]
    %v1389 = vsel %vm164, %v1319, 0
    %v1392 = vsel %vm164, %v1320, 0
    %v1395 = vsel %vm164, %v1321, 0
    %v1398 = vsel %vm164, %v1322, 0
    %v1401 = vsel %vm164, %v1323, 0
    %v1404 = vsel %vm164, %v1324, 0
    %v1407 = vsel %vm164, %v1325, 0
    %v1410 = vsel %vm164, %v1326, 0
    %v1413 = vsel %vm164, %v1327, 0
    %v1416 = vsel %vm164, %v1328, 0
    %v1419 = vsel %vm164, %v1329, 0
    %v1422 = vsel %vm164, %v1330, 0
    %v1425 = vsel %vm164, %v1331, 0
    %v1428 = vsel %vm164, %v1332, 0
    %v1431 = vsel %vm164, %v1333, 0
    %v1434 = vsel %vm164, %v1334, 0
    %v1437 = vsel %vm164, %v1335, 0
    %v1440 = vsel %vm164, %v1336, 0
    %v1443 = vsel %vm164, %v1337, 0
    %v1446 = vsel %vm164, %v1338, 0
    %v1449 = vsel %vm164, %v1339, 0
    %v1452 = vsel %vm164, %v1340, 0
    %v1455 = vsel %vm164, %v1341, 0
    %v1458 = vsel %vm164, %v1342, 0
    %v1461 = vsel %vm164, %v1343, 0
    %v1464 = vsel %vm164, %v1344, 0
    %v1467 = vsel %vm164, %v1345, 0
    %v1470 = vsel %vm164, %v1346, 0
    %v1473 = vsel %vm164, %v1347, 0
    %v1476 = vsel %vm164, %v1348, 0
    %v1479 = vsel %vm164, %v1349, 0
    %v1482 = vsel %vm164, %v1350, 0
    %v1485 = vsel %vm164, %v1351, 0
    %v1488 = vsel %vm164, %v1352, 0
    %v1491 = vsel %vm164, %v1353, 0
    %v1494 = vsel %vm164, %v1354, 0
    %v1497 = vsel %vm164, %v1355, 0
    %v1500 = vsel %vm164, %v1356, 0
    %v1503 = vsel %vm164, %v1357, 0
    %v1506 = vsel %vm164, %v1358, 0
    %v1509 = vsel %vm164, %v1359, 0
    %v1512 = vsel %vm164, %v1360, 0
    %v1515 = vsel %vm164, %v1361, 0
    %v1518 = vsel %vm164, %v1362, 0
    %v1521 = vsel %vm164, %v1363, 0
    %v1524 = vsel %vm164, %v1364, 0
    %v1527 = vsel %vm164, %v1365, 0
    %v1530 = vsel %vm164, %v1366, 0
    %v1533 = vsel %vm164, %v1367, 0
    %v1536 = vsel %vm164, %v1368, 0
    %v1539 = vsel %vm164, %v1369, 0
    %v1542 = vsel %vm164, %v1370, 0
    %v1545 = vsel %vm164, %v1371, 0
    %v1548 = vsel %vm164, %v1372, 0
    %v1551 = vsel %vm164, %v1373, 0
    %v1554 = vsel %vm164, %v1374, 0
    %v1557 = vsel %vm164, %v1375, 0
    %v1560 = vsel %vm164, %v1376, 0
    %v1563 = vsel %vm164, %v1377, 0
    %v1566 = vsel %vm164, %v1378, 0
    %v1569 = vsel %vm164, %v1379, 0
    %v1572 = vsel %vm164, %v1380, 0
    %v1575 = vsel %vm164, %v1381, 0
    %v1578 = vsel %vm164, %v1382, 0
    %1580 = vmatprep.subr.mxu0 0.0
    %1581 = vmatpush1.msra.mxu0 %v1384
    %1582 = vmatprep.subr.mxu0 0.0
    %1583 = vmatpush1.msra.mxu0 %v1385
    %1584 = vmatprep.subr.mxu0 0.0
    %1585 = vmatpush1.msra.mxu0 %v1386
    %1586 = vmatprep.subr.mxu0 0.0
    %1587 = vmatpush1.msra.mxu0 %v1387
    %1588 = vmatprep.subr.mxu0 0.0
    %1589 = vmatpush1.msra.mxu0 0.0
    %1590 = vmatprep.subr.mxu0 0.0
    %1591 = vmatpush1.msra.mxu0 0.0
    %1592 = vmatprep.subr.mxu0 0.0
    %1593 = vmatpush1.msra.mxu0 0.0
    %1594 = vmatprep.subr.mxu0 0.0
    %1595 = vmatpush1.msra.mxu0 0.0
    %1596 = vmatprep.subr.mxu0 0.0
    %1597 = vmatpush1.msra.mxu0 0.0
    %1598 = vmatprep.subr.mxu0 0.0
    %1599 = vmatpush1.msra.mxu0 0.0
    %1600 = vmatprep.subr.mxu0 0.0
    %1601 = vmatpush1.msra.mxu0 0.0
    %1602 = vmatprep.subr.mxu0 0.0
    %1603 = vmatpush1.msra.mxu0 0.0
    %1604 = vmatprep.subr.mxu0 0.0
    %1605 = vmatpush1.msra.mxu0 0.0
    %1606 = vmatprep.subr.mxu0 0.0
    %1607 = vmatpush1.msra.mxu0 0.0
    %1608 = vmatprep.subr.mxu0 0.0
    %1609 = vmatpush1.msra.mxu0 0.0
    %1610 = vmatprep.subr.mxu0 0.0
    %1611 = vmatpush1.msra.mxu0 0.0
    %1612 = vmatprep.subr.mxu0 0.0
    %1613 = vmatpush1.msra.mxu0 0.0
    %1614 = vmatprep.subr.mxu0 0.0
    %1615 = vmatpush1.msra.mxu0 0.0
    %1616 = vmatprep.subr.mxu0 0.0
    %1617 = vmatpush1.msra.mxu0 0.0
    %1618 = vmatprep.subr.mxu0 0.0
    %1619 = vmatpush1.msra.mxu0 0.0
    %1620 = vmatprep.subr.mxu0 0.0
    %1621 = vmatpush1.msra.mxu0 0.0
    %1622 = vmatprep.subr.mxu0 0.0
    %1623 = vmatpush1.msra.mxu0 0.0
    %1624 = vmatprep.subr.mxu0 0.0
    %1625 = vmatpush1.msra.mxu0 0.0
    %1626 = vmatprep.subr.mxu0 0.0
    %1627 = vmatpush1.msra.mxu0 0.0
    %1628 = vmatprep.subr.mxu0 0.0
    %1629 = vmatpush1.msra.mxu0 0.0
    %1630 = vmatprep.subr.mxu0 0.0
    %1631 = vmatpush1.msra.mxu0 0.0
    %1632 = vmatprep.subr.mxu0 0.0
    %1633 = vmatpush1.msra.mxu0 0.0
    %1634 = vmatprep.subr.mxu0 0.0
    %1635 = vmatpush1.msra.mxu0 0.0
    %1636 = vmatprep.subr.mxu0 0.0
    %1637 = vmatpush1.msra.mxu0 0.0
    %1638 = vmatprep.subr.mxu0 0.0
    %1639 = vmatpush1.msra.mxu0 0.0
    %1640 = vmatprep.subr.mxu0 0.0
    %1641 = vmatpush1.msra.mxu0 0.0
    %1642 = vmatprep.subr.mxu0 0.0
    %1643 = vmatpush1.msra.mxu0 0.0
    %1644 = vmatprep.mubr.f32.mxu0 0.0
    %1645 = vmatmul.mubr.f32.gmra.mrb[0].mxu0 %v1389
    %v1646 = vpop.f32.mrb[0].mxu0
    %v1647 = vadd.f32 0.0, %v1646
    %v1648 = vpop.f32.mrb[0].mxu0
    %1649 = vmatprep.mubr.f32.mxu0 0.0
    %1650 = vmatmul.mubr.f32.gmra.mrb[0].mxu0 %v1392
    %v1651 = vpop.f32.mrb[0].mxu0
    %v1652 = vadd.f32 0.0, %v1651
    %v1653 = vpop.f32.mrb[0].mxu0
    %1654 = vmatprep.mubr.f32.mxu0 0.0
    %1655 = vmatmul.mubr.f32.gmra.mrb[0].mxu0 %v1395
    %v1656 = vpop.f32.mrb[0].mxu0
    %v1657 = vadd.f32 0.0, %v1656
    %v1658 = vpop.f32.mrb[0].mxu0
    %1659 = vmatprep.mubr.f32.mxu0 0.0
    %1660 = vmatmul.mubr.f32.gmra.mrb[0].mxu0 %v1398
    %v1661 = vpop.f32.mrb[0].mxu0
    %v1662 = vadd.f32 0.0, %v1661
    %v1663 = vpop.f32.mrb[0].mxu0
    %1664 = vmatprep.mubr.f32.mxu0 0.0
    %1665 = vmatmul.mubr.f32.gmra.mrb[0].mxu0 %v1401
    %v1666 = vpop.f32.mrb[0].mxu0
    %v1667 = vadd.f32 0.0, %v1666
    %v1668 = vpop.f32.mrb[0].mxu0
    %1669 = vmatprep.mubr.f32.mxu0 0.0
    %1670 = vmatmul.mubr.f32.gmra.mrb[0].mxu0 %v1404
    %v1671 = vpop.f32.mrb[0].mxu0
    %v1672 = vadd.f32 0.0, %v1671
    %v1673 = vpop.f32.mrb[0].mxu0
    %1674 = vmatprep.mubr.f32.mxu0 0.0
    %1675 = vmatmul.mubr.f32.gmra.mrb[0].mxu0 %v1407
    %v1676 = vpop.f32.mrb[0].mxu0
    %v1677 = vadd.f32 0.0, %v1676
    %v1678 = vpop.f32.mrb[0].mxu0
    %1679 = vmatprep.mubr.f32.mxu0 0.0
    %1680 = vmatmul.mubr.f32.gmra.mrb[0].mxu0 %v1410
    %v1681 = vpop.f32.mrb[0].mxu0
    %v1682 = vadd.f32 0.0, %v1681
    %v1683 = vpop.f32.mrb[0].mxu0
    %1684 = vmatprep.mubr.f32.mxu0 0.0
    %1685 = vmatmul.mubr.f32.gmra.mrb[0].mxu0 %v1413
    %v1686 = vpop.f32.mrb[0].mxu0
    %v1687 = vadd.f32 0.0, %v1686
    %v1688 = vpop.f32.mrb[0].mxu0
    %1689 = vmatprep.mubr.f32.mxu0 0.0
    %1690 = vmatmul.mubr.f32.gmra.mrb[0].mxu0 %v1416
    %v1691 = vpop.f32.mrb[0].mxu0
    %v1692 = vadd.f32 0.0, %v1691
    %v1693 = vpop.f32.mrb[0].mxu0
    %1694 = vmatprep.mubr.f32.mxu0 0.0
    %1695 = vmatmul.mubr.f32.gmra.mrb[0].mxu0 %v1419
    %v1696 = vpop.f32.mrb[0].mxu0
    %v1697 = vadd.f32 0.0, %v1696
    %v1698 = vpop.f32.mrb[0].mxu0
    %1699 = vmatprep.mubr.f32.mxu0 0.0
    %1700 = vmatmul.mubr.f32.gmra.mrb[0].mxu0 %v1422
    %v1701 = vpop.f32.mrb[0].mxu0
    %v1702 = vadd.f32 0.0, %v1701
    %v1703 = vpop.f32.mrb[0].mxu0
    %1704 = vmatprep.mubr.f32.mxu0 0.0
    %1705 = vmatmul.mubr.f32.gmra.mrb[0].mxu0 %v1425
    %v1706 = vpop.f32.mrb[0].mxu0
    %v1707 = vadd.f32 0.0, %v1706
    %v1708 = vpop.f32.mrb[0].mxu0
    %1709 = vmatprep.mubr.f32.mxu0 0.0
    %1710 = vmatmul.mubr.f32.gmra.mrb[0].mxu0 %v1428
    %v1711 = vpop.f32.mrb[0].mxu0
    %v1712 = vadd.f32 0.0, %v1711
    %v1713 = vpop.f32.mrb[0].mxu0
    %1714 = vmatprep.mubr.f32.mxu0 0.0
    %1715 = vmatmul.mubr.f32.gmra.mrb[0].mxu0 %v1431
    %v1716 = vpop.f32.mrb[0].mxu0
    %v1717 = vadd.f32 0.0, %v1716
    %v1718 = vpop.f32.mrb[0].mxu0
    %1719 = vmatprep.mubr.f32.mxu0 0.0
    %1720 = vmatmul.mubr.f32.gmra.mrb[0].mxu0 %v1434
    %v1721 = vpop.f32.mrb[0].mxu0
    %v1722 = vadd.f32 0.0, %v1721
    %v1723 = vpop.f32.mrb[0].mxu0
    %1724 = vmatprep.mubr.f32.mxu0 0.0
    %1725 = vmatmul.mubr.f32.gmra.mrb[0].mxu0 %v1437
    %v1726 = vpop.f32.mrb[0].mxu0
    %v1727 = vadd.f32 0.0, %v1726
    %v1728 = vpop.f32.mrb[0].mxu0
    %1729 = vmatprep.mubr.f32.mxu0 0.0
    %1730 = vmatmul.mubr.f32.gmra.mrb[0].mxu0 %v1440
    %v1731 = vpop.f32.mrb[0].mxu0
    %v1732 = vadd.f32 0.0, %v1731
    %v1733 = vpop.f32.mrb[0].mxu0
    %1734 = vmatprep.mubr.f32.mxu0 0.0
    %1735 = vmatmul.mubr.f32.gmra.mrb[0].mxu0 %v1443
    %v1736 = vpop.f32.mrb[0].mxu0
    %v1737 = vadd.f32 0.0, %v1736
    %v1738 = vpop.f32.mrb[0].mxu0
    %1739 = vmatprep.mubr.f32.mxu0 0.0
    %1740 = vmatmul.mubr.f32.gmra.mrb[0].mxu0 %v1446
    %v1741 = vpop.f32.mrb[0].mxu0
    %v1742 = vadd.f32 0.0, %v1741
    %v1743 = vpop.f32.mrb[0].mxu0
    %1744 = vmatprep.mubr.f32.mxu0 0.0
    %1745 = vmatmul.mubr.f32.gmra.mrb[0].mxu0 %v1449
    %v1746 = vpop.f32.mrb[0].mxu0
    %v1747 = vadd.f32 0.0, %v1746
    %v1748 = vpop.f32.mrb[0].mxu0
    %1749 = vmatprep.mubr.f32.mxu0 0.0
    %1750 = vmatmul.mubr.f32.gmra.mrb[0].mxu0 %v1452
    %v1751 = vpop.f32.mrb[0].mxu0
    %v1752 = vadd.f32 0.0, %v1751
    %v1753 = vpop.f32.mrb[0].mxu0
    %1754 = vmatprep.mubr.f32.mxu0 0.0
    %1755 = vmatmul.mubr.f32.gmra.mrb[0].mxu0 %v1455
    %v1756 = vpop.f32.mrb[0].mxu0
    %v1757 = vadd.f32 0.0, %v1756
    %v1758 = vpop.f32.mrb[0].mxu0
    %1759 = vmatprep.mubr.f32.mxu0 0.0
    %1760 = vmatmul.mubr.f32.gmra.mrb[0].mxu0 %v1458
    %v1761 = vpop.f32.mrb[0].mxu0
    %v1762 = vadd.f32 0.0, %v1761
    %v1763 = vpop.f32.mrb[0].mxu0
    %1764 = vmatprep.mubr.f32.mxu0 0.0
    %1765 = vmatmul.mubr.f32.gmra.mrb[0].mxu0 %v1461
    %v1766 = vpop.f32.mrb[0].mxu0
    %v1767 = vadd.f32 0.0, %v1766
    %v1768 = vpop.f32.mrb[0].mxu0
    %1769 = vmatprep.mubr.f32.mxu0 0.0
    %1770 = vmatmul.mubr.f32.gmra.mrb[0].mxu0 %v1464
    %v1771 = vpop.f32.mrb[0].mxu0
    %v1772 = vadd.f32 0.0, %v1771
    %v1773 = vpop.f32.mrb[0].mxu0
    %1774 = vmatprep.mubr.f32.mxu0 0.0
    %1775 = vmatmul.mubr.f32.gmra.mrb[0].mxu0 %v1467
    %v1776 = vpop.f32.mrb[0].mxu0
    %v1777 = vadd.f32 0.0, %v1776
    %v1778 = vpop.f32.mrb[0].mxu0
    %1779 = vmatprep.mubr.f32.mxu0 0.0
    %1780 = vmatmul.mubr.f32.gmra.mrb[0].mxu0 %v1470
    %v1781 = vpop.f32.mrb[0].mxu0
    %v1782 = vadd.f32 0.0, %v1781
    %v1783 = vpop.f32.mrb[0].mxu0
    %1784 = vmatprep.mubr.f32.mxu0 0.0
    %1785 = vmatmul.mubr.f32.gmra.mrb[0].mxu0 %v1473
    %v1786 = vpop.f32.mrb[0].mxu0
    %v1787 = vadd.f32 0.0, %v1786
    %v1788 = vpop.f32.mrb[0].mxu0
    %1789 = vmatprep.mubr.f32.mxu0 0.0
    %1790 = vmatmul.mubr.f32.gmra.mrb[0].mxu0 %v1476
    %v1791 = vpop.f32.mrb[0].mxu0
    %v1792 = vadd.f32 0.0, %v1791
    %v1793 = vpop.f32.mrb[0].mxu0
    %1794 = vmatprep.mubr.f32.mxu0 0.0
    %1795 = vmatmul.mubr.f32.gmra.mrb[0].mxu0 %v1479
    %v1796 = vpop.f32.mrb[0].mxu0
    %v1797 = vadd.f32 0.0, %v1796
    %v1798 = vpop.f32.mrb[0].mxu0
    %1799 = vmatprep.mubr.f32.mxu0 0.0
    %1800 = vmatmul.mubr.f32.gmra.mrb[0].mxu0 %v1482
    %v1801 = vpop.f32.mrb[0].mxu0
    %v1802 = vadd.f32 0.0, %v1801
    %v1803 = vpop.f32.mrb[0].mxu0
    %1804 = vmatprep.mubr.f32.mxu0 0.0
    %1805 = vmatmul.mubr.f32.gmra.mrb[0].mxu0 %v1485
    %v1806 = vpop.f32.mrb[0].mxu0
    %v1807 = vadd.f32 0.0, %v1806
    %v1808 = vpop.f32.mrb[0].mxu0
    %1809 = vmatprep.mubr.f32.mxu0 0.0
    %1810 = vmatmul.mubr.f32.gmra.mrb[0].mxu0 %v1488
    %v1811 = vpop.f32.mrb[0].mxu0
    %v1812 = vadd.f32 0.0, %v1811
    %v1813 = vpop.f32.mrb[0].mxu0
    %1814 = vmatprep.mubr.f32.mxu0 0.0
    %1815 = vmatmul.mubr.f32.gmra.mrb[0].mxu0 %v1491
    %v1816 = vpop.f32.mrb[0].mxu0
    %v1817 = vadd.f32 0.0, %v1816
    %v1818 = vpop.f32.mrb[0].mxu0
    %1819 = vmatprep.mubr.f32.mxu0 0.0
    %1820 = vmatmul.mubr.f32.gmra.mrb[0].mxu0 %v1494
    %v1821 = vpop.f32.mrb[0].mxu0
    %v1822 = vadd.f32 0.0, %v1821
    %v1823 = vpop.f32.mrb[0].mxu0
    %1824 = vmatprep.mubr.f32.mxu0 0.0
    %1825 = vmatmul.mubr.f32.gmra.mrb[0].mxu0 %v1497
    %v1826 = vpop.f32.mrb[0].mxu0
    %v1827 = vadd.f32 0.0, %v1826
    %v1828 = vpop.f32.mrb[0].mxu0
    %1829 = vmatprep.mubr.f32.mxu0 0.0
    %1830 = vmatmul.mubr.f32.gmra.mrb[0].mxu0 %v1500
    %v1831 = vpop.f32.mrb[0].mxu0
    %v1832 = vadd.f32 0.0, %v1831
    %v1833 = vpop.f32.mrb[0].mxu0
    %1834 = vmatprep.mubr.f32.mxu0 0.0
    %1835 = vmatmul.mubr.f32.gmra.mrb[0].mxu0 %v1503
    %v1836 = vpop.f32.mrb[0].mxu0
    %v1837 = vadd.f32 0.0, %v1836
    %v1838 = vpop.f32.mrb[0].mxu0
    %1839 = vmatprep.mubr.f32.mxu0 0.0
    %1840 = vmatmul.mubr.f32.gmra.mrb[0].mxu0 %v1506
    %v1841 = vpop.f32.mrb[0].mxu0
    %v1842 = vadd.f32 0.0, %v1841
    %v1843 = vpop.f32.mrb[0].mxu0
    %1844 = vmatprep.mubr.f32.mxu0 0.0
    %1845 = vmatmul.mubr.f32.gmra.mrb[0].mxu0 %v1509
    %v1846 = vpop.f32.mrb[0].mxu0
    %v1847 = vadd.f32 0.0, %v1846
    %v1848 = vpop.f32.mrb[0].mxu0
    %1849 = vmatprep.mubr.f32.mxu0 0.0
    %1850 = vmatmul.mubr.f32.gmra.mrb[0].mxu0 %v1512
    %v1851 = vpop.f32.mrb[0].mxu0
    %v1852 = vadd.f32 0.0, %v1851
    %v1853 = vpop.f32.mrb[0].mxu0
    %1854 = vmatprep.mubr.f32.mxu0 0.0
    %1855 = vmatmul.mubr.f32.gmra.mrb[0].mxu0 %v1515
    %v1856 = vpop.f32.mrb[0].mxu0
    %v1857 = vadd.f32 0.0, %v1856
    %v1858 = vpop.f32.mrb[0].mxu0
    %1859 = vmatprep.mubr.f32.mxu0 0.0
    %1860 = vmatmul.mubr.f32.gmra.mrb[0].mxu0 %v1518
    %v1861 = vpop.f32.mrb[0].mxu0
    %v1862 = vadd.f32 0.0, %v1861
    %v1863 = vpop.f32.mrb[0].mxu0
    %1864 = vmatprep.mubr.f32.mxu0 0.0
    %1865 = vmatmul.mubr.f32.gmra.mrb[0].mxu0 %v1521
    %v1866 = vpop.f32.mrb[0].mxu0
    %v1867 = vadd.f32 0.0, %v1866
    %v1868 = vpop.f32.mrb[0].mxu0
    %1869 = vmatprep.mubr.f32.mxu0 0.0
    %1870 = vmatmul.mubr.f32.gmra.mrb[0].mxu0 %v1524
    %v1871 = vpop.f32.mrb[0].mxu0
    %v1872 = vadd.f32 0.0, %v1871
    %v1873 = vpop.f32.mrb[0].mxu0
    %1874 = vmatprep.mubr.f32.mxu0 0.0
    %1875 = vmatmul.mubr.f32.gmra.mrb[0].mxu0 %v1527
    %v1876 = vpop.f32.mrb[0].mxu0
    %v1877 = vadd.f32 0.0, %v1876
    %v1878 = vpop.f32.mrb[0].mxu0
    %1879 = vmatprep.mubr.f32.mxu0 0.0
    %1880 = vmatmul.mubr.f32.gmra.mrb[0].mxu0 %v1530
    %v1881 = vpop.f32.mrb[0].mxu0
    %v1882 = vadd.f32 0.0, %v1881
    %v1883 = vpop.f32.mrb[0].mxu0
    %1884 = vmatprep.mubr.f32.mxu0 0.0
    %1885 = vmatmul.mubr.f32.gmra.mrb[0].mxu0 %v1533
    %v1886 = vpop.f32.mrb[0].mxu0
    %v1887 = vadd.f32 0.0, %v1886
    %v1888 = vpop.f32.mrb[0].mxu0
    %1889 = vmatprep.mubr.f32.mxu0 0.0
    %1890 = vmatmul.mubr.f32.gmra.mrb[0].mxu0 %v1536
    %v1891 = vpop.f32.mrb[0].mxu0
    %v1892 = vadd.f32 0.0, %v1891
    %v1893 = vpop.f32.mrb[0].mxu0
    %1894 = vmatprep.mubr.f32.mxu0 0.0
    %1895 = vmatmul.mubr.f32.gmra.mrb[0].mxu0 %v1539
    %v1896 = vpop.f32.mrb[0].mxu0
    %v1897 = vadd.f32 0.0, %v1896
    %v1898 = vpop.f32.mrb[0].mxu0
    %1899 = vmatprep.mubr.f32.mxu0 0.0
    %1900 = vmatmul.mubr.f32.gmra.mrb[0].mxu0 %v1542
    %v1901 = vpop.f32.mrb[0].mxu0
    %v1902 = vadd.f32 0.0, %v1901
    %v1903 = vpop.f32.mrb[0].mxu0
    %1904 = vmatprep.mubr.f32.mxu0 0.0
    %1905 = vmatmul.mubr.f32.gmra.mrb[0].mxu0 %v1545
    %v1906 = vpop.f32.mrb[0].mxu0
    %v1907 = vadd.f32 0.0, %v1906
    %v1908 = vpop.f32.mrb[0].mxu0
    %1909 = vmatprep.mubr.f32.mxu0 0.0
    %1910 = vmatmul.mubr.f32.gmra.mrb[0].mxu0 %v1548
    %v1911 = vpop.f32.mrb[0].mxu0
    %v1912 = vadd.f32 0.0, %v1911
    %v1913 = vpop.f32.mrb[0].mxu0
    %1914 = vmatprep.mubr.f32.mxu0 0.0
    %1915 = vmatmul.mubr.f32.gmra.mrb[0].mxu0 %v1551
    %v1916 = vpop.f32.mrb[0].mxu0
    %v1917 = vadd.f32 0.0, %v1916
    %v1918 = vpop.f32.mrb[0].mxu0
    %1919 = vmatprep.mubr.f32.mxu0 0.0
    %1920 = vmatmul.mubr.f32.gmra.mrb[0].mxu0 %v1554
    %v1921 = vpop.f32.mrb[0].mxu0
    %v1922 = vadd.f32 0.0, %v1921
    %v1923 = vpop.f32.mrb[0].mxu0
    %1924 = vmatprep.mubr.f32.mxu0 0.0
    %1925 = vmatmul.mubr.f32.gmra.mrb[0].mxu0 %v1557
    %v1926 = vpop.f32.mrb[0].mxu0
    %v1927 = vadd.f32 0.0, %v1926
    %v1928 = vpop.f32.mrb[0].mxu0
    %1929 = vmatprep.mubr.f32.mxu0 0.0
    %1930 = vmatmul.mubr.f32.gmra.mrb[0].mxu0 %v1560
    %v1931 = vpop.f32.mrb[0].mxu0
    %v1932 = vadd.f32 0.0, %v1931
    %v1933 = vpop.f32.mrb[0].mxu0
    %1934 = vmatprep.mubr.f32.mxu0 0.0
    %1935 = vmatmul.mubr.f32.gmra.mrb[0].mxu0 %v1563
    %v1936 = vpop.f32.mrb[0].mxu0
    %v1937 = vadd.f32 0.0, %v1936
    %v1938 = vpop.f32.mrb[0].mxu0
    %1939 = vmatprep.mubr.f32.mxu0 0.0
    %1940 = vmatmul.mubr.f32.gmra.mrb[0].mxu0 %v1566
    %v1941 = vpop.f32.mrb[0].mxu0
    %v1942 = vadd.f32 0.0, %v1941
    %v1943 = vpop.f32.mrb[0].mxu0
    %1944 = vmatprep.mubr.f32.mxu0 0.0
    %1945 = vmatmul.mubr.f32.gmra.mrb[0].mxu0 %v1569
    %v1946 = vpop.f32.mrb[0].mxu0
    %v1947 = vadd.f32 0.0, %v1946
    %v1948 = vpop.f32.mrb[0].mxu0
    %1949 = vmatprep.mubr.f32.mxu0 0.0
    %1950 = vmatmul.mubr.f32.gmra.mrb[0].mxu0 %v1572
    %v1951 = vpop.f32.mrb[0].mxu0
    %v1952 = vadd.f32 0.0, %v1951
    %v1953 = vpop.f32.mrb[0].mxu0
    %1954 = vmatprep.mubr.f32.mxu0 0.0
    %1955 = vmatmul.mubr.f32.gmra.mrb[0].mxu0 %v1575
    %v1956 = vpop.f32.mrb[0].mxu0
    %v1957 = vadd.f32 0.0, %v1956
    %v1958 = vpop.f32.mrb[0].mxu0
    %1959 = vmatprep.mubr.f32.mxu0 0.0
    %1960 = vmatmul.mubr.f32.gmra.mrb[0].mxu0 %v1578
    %v1961 = vpop.f32.mrb[0].mxu0
    %v1962 = vadd.f32 0.0, %v1961
    %v1963 = vpop.f32.mrb[0].mxu0
    %1964 = vdwg.mxu0
    %v1965 = vadd.f32 %v1001, %v1647
    %v1966 = vadd.f32 %v1006, %v1652
    %v1967 = vadd.f32 %v1011, %v1657
    %v1968 = vadd.f32 %v1016, %v1662
    %v1969 = vadd.f32 %v1021, %v1667
    %v1970 = vadd.f32 %v1026, %v1672
    %v1971 = vadd.f32 %v1031, %v1677
    %v1972 = vadd.f32 %v1036, %v1682
    %v1973 = vadd.f32 %v1041, %v1687
    %v1974 = vadd.f32 %v1046, %v1692
    %v1975 = vadd.f32 %v1051, %v1697
    %v1976 = vadd.f32 %v1056, %v1702
    %v1977 = vadd.f32 %v1061, %v1707
    %v1978 = vadd.f32 %v1066, %v1712
    %v1979 = vadd.f32 %v1071, %v1717
    %v1980 = vadd.f32 %v1076, %v1722
    %v1981 = vadd.f32 %v1081, %v1727
    %v1982 = vadd.f32 %v1086, %v1732
    %v1983 = vadd.f32 %v1091, %v1737
    %v1984 = vadd.f32 %v1096, %v1742
    %v1985 = vadd.f32 %v1101, %v1747
    %v1986 = vadd.f32 %v1106, %v1752
    %v1987 = vadd.f32 %v1111, %v1757
    %v1988 = vadd.f32 %v1116, %v1762
    %v1989 = vadd.f32 %v1121, %v1767
    %v1990 = vadd.f32 %v1126, %v1772
    %v1991 = vadd.f32 %v1131, %v1777
    %v1992 = vadd.f32 %v1136, %v1782
    %v1993 = vadd.f32 %v1141, %v1787
    %v1994 = vadd.f32 %v1146, %v1792
    %v1995 = vadd.f32 %v1151, %v1797
    %v1996 = vadd.f32 %v1156, %v1802
    %v1997 = vadd.f32 %v1161, %v1807
    %v1998 = vadd.f32 %v1166, %v1812
    %v1999 = vadd.f32 %v1171, %v1817
    %v2000 = vadd.f32 %v1176, %v1822
    %v2001 = vadd.f32 %v1181, %v1827
    %v2002 = vadd.f32 %v1186, %v1832
    %v2003 = vadd.f32 %v1191, %v1837
    %v2004 = vadd.f32 %v1196, %v1842
    %v2005 = vadd.f32 %v1201, %v1847
    %v2006 = vadd.f32 %v1206, %v1852
    %v2007 = vadd.f32 %v1211, %v1857
    %v2008 = vadd.f32 %v1216, %v1862
    %v2009 = vadd.f32 %v1221, %v1867
    %v2010 = vadd.f32 %v1226, %v1872
    %v2011 = vadd.f32 %v1231, %v1877
    %v2012 = vadd.f32 %v1236, %v1882
    %v2013 = vadd.f32 %v1241, %v1887
    %v2014 = vadd.f32 %v1246, %v1892
    %v2015 = vadd.f32 %v1251, %v1897
    %v2016 = vadd.f32 %v1256, %v1902
    %v2017 = vadd.f32 %v1261, %v1907
    %v2018 = vadd.f32 %v1266, %v1912
    %v2019 = vadd.f32 %v1271, %v1917
    %v2020 = vadd.f32 %v1276, %v1922
    %v2021 = vadd.f32 %v1281, %v1927
    %v2022 = vadd.f32 %v1286, %v1932
    %v2023 = vadd.f32 %v1291, %v1937
    %v2024 = vadd.f32 %v1296, %v1942
    %v2025 = vadd.f32 %v1301, %v1947
    %v2026 = vadd.f32 %v1306, %v1952
    %v2027 = vadd.f32 %v1311, %v1957
    %v2028 = vadd.f32 %v1316, %v1962
    %s2029 = scalar_lea.vmem %s0, 24
    %v2030 = vld [vmem:[%s2029] sm:$0xff]
    %v2031 = vld [vmem:[%s2029 + $0x8] sm:$0xff]
    %v2032 = vld [vmem:[%s2029 + $0x18] sm:$0xff]
    %v2033 = vld [vmem:[%s2029 + $0x20] sm:$0xff]
    %v2034 = vld [vmem:[%s2029 + $0x30] sm:$0xff]
    %v2035 = vld [vmem:[%s2029 + $0x38] sm:$0xff]
    %v2036 = vld [vmem:[%s2029 + $0x48] sm:$0xff]
    %v2037 = vld [vmem:[%s2029 + $0x50] sm:$0xff]
    %v2038 = vld [vmem:[%s2029 + $0x60] sm:$0xff]
    %v2039 = vld [vmem:[%s2029 + $0x68] sm:$0xff]
    %v2040 = vld [vmem:[%s2029 + $0x78] sm:$0xff]
    %v2041 = vld [vmem:[%s2029 + $0x80] sm:$0xff]
    %v2042 = vld [vmem:[%s2029 + $0x90] sm:$0xff]
    %v2043 = vld [vmem:[%s2029 + $0x98] sm:$0xff]
    %v2044 = vld [vmem:[%s2029 + $0xa8] sm:$0xff]
    %v2045 = vld [vmem:[%s2029 + $0xb0] sm:$0xff]
    %v2046 = vld [vmem:[%s2029 + $0xc0] sm:$0xff]
    %v2047 = vld [vmem:[%s2029 + $0xc8] sm:$0xff]
    %v2048 = vld [vmem:[%s2029 + $0xd8] sm:$0xff]
    %v2049 = vld [vmem:[%s2029 + $0xe0] sm:$0xff]
    %v2050 = vld [vmem:[%s2029 + $0xf0] sm:$0xff]
    %v2051 = vld [vmem:[%s2029 + $0xf8] sm:$0xff]
    %v2052 = vld [vmem:[%s2029 + $0x108] sm:$0xff]
    %v2053 = vld [vmem:[%s2029 + $0x110] sm:$0xff]
    %v2054 = vld [vmem:[%s2029 + $0x120] sm:$0xff]
    %v2055 = vld [vmem:[%s2029 + $0x128] sm:$0xff]
    %v2056 = vld [vmem:[%s2029 + $0x138] sm:$0xff]
    %v2057 = vld [vmem:[%s2029 + $0x140] sm:$0xff]
    %v2058 = vld [vmem:[%s2029 + $0x150] sm:$0xff]
    %v2059 = vld [vmem:[%s2029 + $0x158] sm:$0xff]
    %v2060 = vld [vmem:[%s2029 + $0x168] sm:$0xff]
    %v2061 = vld [vmem:[%s2029 + $0x170] sm:$0xff]
    %v2062 = vld [vmem:[%s2029 + $0x1b0] sm:$0xff]
    %v2063 = vld [vmem:[%s2029 + $0x1b8] sm:$0xff]
    %v2064 = vld [vmem:[%s2029 + $0x1c8] sm:$0xff]
    %v2065 = vld [vmem:[%s2029 + $0x1d0] sm:$0xff]
    %v2066 = vld [vmem:[%s2029 + $0x1e0] sm:$0xff]
    %v2067 = vld [vmem:[%s2029 + $0x1e8] sm:$0xff]
    %v2068 = vld [vmem:[%s2029 + $0x1f8] sm:$0xff]
    %v2069 = vld [vmem:[%s2029 + $0x200] sm:$0xff]
    %v2070 = vld [vmem:[%s2029 + $0x210] sm:$0xff]
    %v2071 = vld [vmem:[%s2029 + $0x218] sm:$0xff]
    %v2072 = vld [vmem:[%s2029 + $0x228] sm:$0xff]
    %v2073 = vld [vmem:[%s2029 + $0x230] sm:$0xff]
    %v2074 = vld [vmem:[%s2029 + $0x240] sm:$0xff]
    %v2075 = vld [vmem:[%s2029 + $0x248] sm:$0xff]
    %v2076 = vld [vmem:[%s2029 + $0x258] sm:$0xff]
    %v2077 = vld [vmem:[%s2029 + $0x260] sm:$0xff]
    %v2078 = vld [vmem:[%s2029 + $0x270] sm:$0xff]
    %v2079 = vld [vmem:[%s2029 + $0x278] sm:$0xff]
    %v2080 = vld [vmem:[%s2029 + $0x288] sm:$0xff]
    %v2081 = vld [vmem:[%s2029 + $0x290] sm:$0xff]
    %v2082 = vld [vmem:[%s2029 + $0x2a0] sm:$0xff]
    %v2083 = vld [vmem:[%s2029 + $0x2a8] sm:$0xff]
    %v2084 = vld [vmem:[%s2029 + $0x2b8] sm:$0xff]
    %v2085 = vld [vmem:[%s2029 + $0x2c0] sm:$0xff]
    %v2086 = vld [vmem:[%s2029 + $0x2d0] sm:$0xff]
    %v2087 = vld [vmem:[%s2029 + $0x2d8] sm:$0xff]
    %v2088 = vld [vmem:[%s2029 + $0x2e8] sm:$0xff]
    %v2089 = vld [vmem:[%s2029 + $0x2f0] sm:$0xff]
    %v2090 = vld [vmem:[%s2029 + $0x300] sm:$0xff]
    %v2091 = vld [vmem:[%s2029 + $0x308] sm:$0xff]
    %v2092 = vld [vmem:[%s2029 + $0x318] sm:$0xff]
    %v2093 = vld [vmem:[%s2029 + $0x320] sm:$0xff]
    %s2094 = scalar_lea.vmem %s1, 96
    %v2095 = vld [vmem:[%s2094] sm:$0xff]
    %v2096 = vld [vmem:[%s2094 + $0x8] sm:$0xff]
    %v2097 = vld [vmem:[%s2094 + $0x10] sm:$0xff]
    %v2098 = vld [vmem:[%s2094 + $0x18] sm:$0xff]
    %v2100 = vsel %vm164, %v2030, 0
    %v2103 = vsel %vm164, %v2031, 0
    %v2106 = vsel %vm164, %v2032, 0
    %v2109 = vsel %vm164, %v2033, 0
    %v2112 = vsel %vm164, %v2034, 0
    %v2115 = vsel %vm164, %v2035, 0
    %v2118 = vsel %vm164, %v2036, 0
    %v2121 = vsel %vm164, %v2037, 0
    %v2124 = vsel %vm164, %v2038, 0
    %v2127 = vsel %vm164, %v2039, 0
    %v2130 = vsel %vm164, %v2040, 0
    %v2133 = vsel %vm164, %v2041, 0
    %v2136 = vsel %vm164, %v2042, 0
    %v2139 = vsel %vm164, %v2043, 0
    %v2142 = vsel %vm164, %v2044, 0
    %v2145 = vsel %vm164, %v2045, 0
    %v2148 = vsel %vm164, %v2046, 0
    %v2151 = vsel %vm164, %v2047, 0
    %v2154 = vsel %vm164, %v2048, 0
    %v2157 = vsel %vm164, %v2049, 0
    %v2160 = vsel %vm164, %v2050, 0
    %v2163 = vsel %vm164, %v2051, 0
    %v2166 = vsel %vm164, %v2052, 0
    %v2169 = vsel %vm164, %v2053, 0
    %v2172 = vsel %vm164, %v2054, 0
    %v2175 = vsel %vm164, %v2055, 0
    %v2178 = vsel %vm164, %v2056, 0
    %v2181 = vsel %vm164, %v2057, 0
    %v2184 = vsel %vm164, %v2058, 0
    %v2187 = vsel %vm164, %v2059, 0
    %v2190 = vsel %vm164, %v2060, 0
    %v2193 = vsel %vm164, %v2061, 0
    %v2196 = vsel %vm164, %v2062, 0
    %v2199 = vsel %vm164, %v2063, 0
    %v2202 = vsel %vm164, %v2064, 0
    %v2205 = vsel %vm164, %v2065, 0
    %v2208 = vsel %vm164, %v2066, 0
    %v2211 = vsel %vm164, %v2067, 0
    %v2214 = vsel %vm164, %v2068, 0
    %v2217 = vsel %vm164, %v2069, 0
    %v2220 = vsel %vm164, %v2070, 0
    %v2223 = vsel %vm164, %v2071, 0
    %v2226 = vsel %vm164, %v2072, 0
    %v2229 = vsel %vm164, %v2073, 0
    %v2232 = vsel %vm164, %v2074, 0
    %v2235 = vsel %vm164, %v2075, 0
    %v2238 = vsel %vm164, %v2076, 0
    %v2241 = vsel %vm164, %v2077, 0
    %v2244 = vsel %vm164, %v2078, 0
    %v2247 = vsel %vm164, %v2079, 0
    %v2250 = vsel %vm164, %v2080, 0
    %v2253 = vsel %vm164, %v2081, 0
    %v2256 = vsel %vm164, %v2082, 0
    %v2259 = vsel %vm164, %v2083, 0
    %v2262 = vsel %vm164, %v2084, 0
    %v2265 = vsel %vm164, %v2085, 0
    %v2268 = vsel %vm164, %v2086, 0
    %v2271 = vsel %vm164, %v2087, 0
    %v2274 = vsel %vm164, %v2088, 0
    %v2277 = vsel %vm164, %v2089, 0
    %v2280 = vsel %vm164, %v2090, 0
    %v2283 = vsel %vm164, %v2091, 0
    %v2286 = vsel %vm164, %v2092, 0
    %v2289 = vsel %vm164, %v2093, 0
    %2291 = vmatprep.subr.mxu0 0.0
    %2292 = vmatpush1.msra.mxu0 %v2095
    %2293 = vmatprep.subr.mxu0 0.0
    %2294 = vmatpush1.msra.mxu0 %v2096
    %2295 = vmatprep.subr.mxu0 0.0
    %2296 = vmatpush1.msra.mxu0 %v2097
    %2297 = vmatprep.subr.mxu0 0.0
    %2298 = vmatpush1.msra.mxu0 %v2098
    %2299 = vmatprep.subr.mxu0 0.0
    %2300 = vmatpush1.msra.mxu0 0.0
    %2301 = vmatprep.subr.mxu0 0.0
    %2302 = vmatpush1.msra.mxu0 0.0
    %2303 = vmatprep.subr.mxu0 0.0
    %2304 = vmatpush1.msra.mxu0 0.0
    %2305 = vmatprep.subr.mxu0 0.0
    %2306 = vmatpush1.msra.mxu0 0.0
    %2307 = vmatprep.subr.mxu0 0.0
    %2308 = vmatpush1.msra.mxu0 0.0
    %2309 = vmatprep.subr.mxu0 0.0
    %2310 = vmatpush1.msra.mxu0 0.0
    %2311 = vmatprep.subr.mxu0 0.0
    %2312 = vmatpush1.msra.mxu0 0.0
    %2313 = vmatprep.subr.mxu0 0.0
    %2314 = vmatpush1.msra.mxu0 0.0
    %2315 = vmatprep.subr.mxu0 0.0
    %2316 = vmatpush1.msra.mxu0 0.0
    %2317 = vmatprep.subr.mxu0 0.0
    %2318 = vmatpush1.msra.mxu0 0.0
    %2319 = vmatprep.subr.mxu0 0.0
    %2320 = vmatpush1.msra.mxu0 0.0
    %2321 = vmatprep.subr.mxu0 0.0
    %2322 = vmatpush1.msra.mxu0 0.0
    %2323 = vmatprep.subr.mxu0 0.0
    %2324 = vmatpush1.msra.mxu0 0.0
    %2325 = vmatprep.subr.mxu0 0.0
    %2326 = vmatpush1.msra.mxu0 0.0
    %2327 = vmatprep.subr.mxu0 0.0
    %2328 = vmatpush1.msra.mxu0 0.0
    %2329 = vmatprep.subr.mxu0 0.0
    %2330 = vmatpush1.msra.mxu0 0.0
    %2331 = vmatprep.subr.mxu0 0.0
    %2332 = vmatpush1.msra.mxu0 0.0
    %2333 = vmatprep.subr.mxu0 0.0
    %2334 = vmatpush1.msra.mxu0 0.0
    %2335 = vmatprep.subr.mxu0 0.0
    %2336 = vmatpush1.msra.mxu0 0.0
    %2337 = vmatprep.subr.mxu0 0.0
    %2338 = vmatpush1.msra.mxu0 0.0
    %2339 = vmatprep.subr.mxu0 0.0
    %2340 = vmatpush1.msra.mxu0 0.0
    %2341 = vmatprep.subr.mxu0 0.0
    %2342 = vmatpush1.msra.mxu0 0.0
    %2343 = vmatprep.subr.mxu0 0.0
    %2344 = vmatpush1.msra.mxu0 0.0
    %2345 = vmatprep.subr.mxu0 0.0
    %2346 = vmatpush1.msra.mxu0 0.0
    %2347 = vmatprep.subr.mxu0 0.0
    %2348 = vmatpush1.msra.mxu0 0.0
    %2349 = vmatprep.subr.mxu0 0.0
    %2350 = vmatpush1.msra.mxu0 0.0
    %2351 = vmatprep.subr.mxu0 0.0
    %2352 = vmatpush1.msra.mxu0 0.0
    %2353 = vmatprep.subr.mxu0 0.0
    %2354 = vmatpush1.msra.mxu0 0.0
    %2355 = vmatprep.mubr.f32.mxu0 0.0
    %2356 = vmatmul.mubr.f32.gmra.mrb[0].mxu0 %v2100
    %v2357 = vpop.f32.mrb[0].mxu0
    %v2358 = vadd.f32 0.0, %v2357
    %v2359 = vpop.f32.mrb[0].mxu0
    %2360 = vmatprep.mubr.f32.mxu0 0.0
    %2361 = vmatmul.mubr.f32.gmra.mrb[0].mxu0 %v2103
    %v2362 = vpop.f32.mrb[0].mxu0
    %v2363 = vadd.f32 0.0, %v2362
    %v2364 = vpop.f32.mrb[0].mxu0
    %2365 = vmatprep.mubr.f32.mxu0 0.0
    %2366 = vmatmul.mubr.f32.gmra.mrb[0].mxu0 %v2106
    %v2367 = vpop.f32.mrb[0].mxu0
    %v2368 = vadd.f32 0.0, %v2367
    %v2369 = vpop.f32.mrb[0].mxu0
    %2370 = vmatprep.mubr.f32.mxu0 0.0
    %2371 = vmatmul.mubr.f32.gmra.mrb[0].mxu0 %v2109
    %v2372 = vpop.f32.mrb[0].mxu0
    %v2373 = vadd.f32 0.0, %v2372
    %v2374 = vpop.f32.mrb[0].mxu0
    %2375 = vmatprep.mubr.f32.mxu0 0.0
    %2376 = vmatmul.mubr.f32.gmra.mrb[0].mxu0 %v2112
    %v2377 = vpop.f32.mrb[0].mxu0
    %v2378 = vadd.f32 0.0, %v2377
    %v2379 = vpop.f32.mrb[0].mxu0
    %2380 = vmatprep.mubr.f32.mxu0 0.0
    %2381 = vmatmul.mubr.f32.gmra.mrb[0].mxu0 %v2115
    %v2382 = vpop.f32.mrb[0].mxu0
    %v2383 = vadd.f32 0.0, %v2382
    %v2384 = vpop.f32.mrb[0].mxu0
    %2385 = vmatprep.mubr.f32.mxu0 0.0
    %2386 = vmatmul.mubr.f32.gmra.mrb[0].mxu0 %v2118
    %v2387 = vpop.f32.mrb[0].mxu0
    %v2388 = vadd.f32 0.0, %v2387
    %v2389 = vpop.f32.mrb[0].mxu0
    %2390 = vmatprep.mubr.f32.mxu0 0.0
    %2391 = vmatmul.mubr.f32.gmra.mrb[0].mxu0 %v2121
    %v2392 = vpop.f32.mrb[0].mxu0
    %v2393 = vadd.f32 0.0, %v2392
    %v2394 = vpop.f32.mrb[0].mxu0
    %2395 = vmatprep.mubr.f32.mxu0 0.0
    %2396 = vmatmul.mubr.f32.gmra.mrb[0].mxu0 %v2124
    %v2397 = vpop.f32.mrb[0].mxu0
    %v2398 = vadd.f32 0.0, %v2397
    %v2399 = vpop.f32.mrb[0].mxu0
    %2400 = vmatprep.mubr.f32.mxu0 0.0
    %2401 = vmatmul.mubr.f32.gmra.mrb[0].mxu0 %v2127
    %v2402 = vpop.f32.mrb[0].mxu0
    %v2403 = vadd.f32 0.0, %v2402
    %v2404 = vpop.f32.mrb[0].mxu0
    %2405 = vmatprep.mubr.f32.mxu0 0.0
    %2406 = vmatmul.mubr.f32.gmra.mrb[0].mxu0 %v2130
    %v2407 = vpop.f32.mrb[0].mxu0
    %v2408 = vadd.f32 0.0, %v2407
    %v2409 = vpop.f32.mrb[0].mxu0
    %2410 = vmatprep.mubr.f32.mxu0 0.0
    %2411 = vmatmul.mubr.f32.gmra.mrb[0].mxu0 %v2133
    %v2412 = vpop.f32.mrb[0].mxu0
    %v2413 = vadd.f32 0.0, %v2412
    %v2414 = vpop.f32.mrb[0].mxu0
    %2415 = vmatprep.mubr.f32.mxu0 0.0
    %2416 = vmatmul.mubr.f32.gmra.mrb[0].mxu0 %v2136
    %v2417 = vpop.f32.mrb[0].mxu0
    %v2418 = vadd.f32 0.0, %v2417
    %v2419 = vpop.f32.mrb[0].mxu0
    %2420 = vmatprep.mubr.f32.mxu0 0.0
    %2421 = vmatmul.mubr.f32.gmra.mrb[0].mxu0 %v2139
    %v2422 = vpop.f32.mrb[0].mxu0
    %v2423 = vadd.f32 0.0, %v2422
    %v2424 = vpop.f32.mrb[0].mxu0
    %2425 = vmatprep.mubr.f32.mxu0 0.0
    %2426 = vmatmul.mubr.f32.gmra.mrb[0].mxu0 %v2142
    %v2427 = vpop.f32.mrb[0].mxu0
    %v2428 = vadd.f32 0.0, %v2427
    %v2429 = vpop.f32.mrb[0].mxu0
    %2430 = vmatprep.mubr.f32.mxu0 0.0
    %2431 = vmatmul.mubr.f32.gmra.mrb[0].mxu0 %v2145
    %v2432 = vpop.f32.mrb[0].mxu0
    %v2433 = vadd.f32 0.0, %v2432
    %v2434 = vpop.f32.mrb[0].mxu0
    %2435 = vmatprep.mubr.f32.mxu0 0.0
    %2436 = vmatmul.mubr.f32.gmra.mrb[0].mxu0 %v2148
    %v2437 = vpop.f32.mrb[0].mxu0
    %v2438 = vadd.f32 0.0, %v2437
    %v2439 = vpop.f32.mrb[0].mxu0
    %2440 = vmatprep.mubr.f32.mxu0 0.0
    %2441 = vmatmul.mubr.f32.gmra.mrb[0].mxu0 %v2151
    %v2442 = vpop.f32.mrb[0].mxu0
    %v2443 = vadd.f32 0.0, %v2442
    %v2444 = vpop.f32.mrb[0].mxu0
    %2445 = vmatprep.mubr.f32.mxu0 0.0
    %2446 = vmatmul.mubr.f32.gmra.mrb[0].mxu0 %v2154
    %v2447 = vpop.f32.mrb[0].mxu0
    %v2448 = vadd.f32 0.0, %v2447
    %v2449 = vpop.f32.mrb[0].mxu0
    %2450 = vmatprep.mubr.f32.mxu0 0.0
    %2451 = vmatmul.mubr.f32.gmra.mrb[0].mxu0 %v2157
    %v2452 = vpop.f32.mrb[0].mxu0
    %v2453 = vadd.f32 0.0, %v2452
    %v2454 = vpop.f32.mrb[0].mxu0
    %2455 = vmatprep.mubr.f32.mxu0 0.0
    %2456 = vmatmul.mubr.f32.gmra.mrb[0].mxu0 %v2160
    %v2457 = vpop.f32.mrb[0].mxu0
    %v2458 = vadd.f32 0.0, %v2457
    %v2459 = vpop.f32.mrb[0].mxu0
    %2460 = vmatprep.mubr.f32.mxu0 0.0
    %2461 = vmatmul.mubr.f32.gmra.mrb[0].mxu0 %v2163
    %v2462 = vpop.f32.mrb[0].mxu0
    %v2463 = vadd.f32 0.0, %v2462
    %v2464 = vpop.f32.mrb[0].mxu0
    %2465 = vmatprep.mubr.f32.mxu0 0.0
    %2466 = vmatmul.mubr.f32.gmra.mrb[0].mxu0 %v2166
    %v2467 = vpop.f32.mrb[0].mxu0
    %v2468 = vadd.f32 0.0, %v2467
    %v2469 = vpop.f32.mrb[0].mxu0
    %2470 = vmatprep.mubr.f32.mxu0 0.0
    %2471 = vmatmul.mubr.f32.gmra.mrb[0].mxu0 %v2169
    %v2472 = vpop.f32.mrb[0].mxu0
    %v2473 = vadd.f32 0.0, %v2472
    %v2474 = vpop.f32.mrb[0].mxu0
    %2475 = vmatprep.mubr.f32.mxu0 0.0
    %2476 = vmatmul.mubr.f32.gmra.mrb[0].mxu0 %v2172
    %v2477 = vpop.f32.mrb[0].mxu0
    %v2478 = vadd.f32 0.0, %v2477
    %v2479 = vpop.f32.mrb[0].mxu0
    %2480 = vmatprep.mubr.f32.mxu0 0.0
    %2481 = vmatmul.mubr.f32.gmra.mrb[0].mxu0 %v2175
    %v2482 = vpop.f32.mrb[0].mxu0
    %v2483 = vadd.f32 0.0, %v2482
    %v2484 = vpop.f32.mrb[0].mxu0
    %2485 = vmatprep.mubr.f32.mxu0 0.0
    %2486 = vmatmul.mubr.f32.gmra.mrb[0].mxu0 %v2178
    %v2487 = vpop.f32.mrb[0].mxu0
    %v2488 = vadd.f32 0.0, %v2487
    %v2489 = vpop.f32.mrb[0].mxu0
    %2490 = vmatprep.mubr.f32.mxu0 0.0
    %2491 = vmatmul.mubr.f32.gmra.mrb[0].mxu0 %v2181
    %v2492 = vpop.f32.mrb[0].mxu0
    %v2493 = vadd.f32 0.0, %v2492
    %v2494 = vpop.f32.mrb[0].mxu0
    %2495 = vmatprep.mubr.f32.mxu0 0.0
    %2496 = vmatmul.mubr.f32.gmra.mrb[0].mxu0 %v2184
    %v2497 = vpop.f32.mrb[0].mxu0
    %v2498 = vadd.f32 0.0, %v2497
    %v2499 = vpop.f32.mrb[0].mxu0
    %2500 = vmatprep.mubr.f32.mxu0 0.0
    %2501 = vmatmul.mubr.f32.gmra.mrb[0].mxu0 %v2187
    %v2502 = vpop.f32.mrb[0].mxu0
    %v2503 = vadd.f32 0.0, %v2502
    %v2504 = vpop.f32.mrb[0].mxu0
    %2505 = vmatprep.mubr.f32.mxu0 0.0
    %2506 = vmatmul.mubr.f32.gmra.mrb[0].mxu0 %v2190
    %v2507 = vpop.f32.mrb[0].mxu0
    %v2508 = vadd.f32 0.0, %v2507
    %v2509 = vpop.f32.mrb[0].mxu0
    %2510 = vmatprep.mubr.f32.mxu0 0.0
    %2511 = vmatmul.mubr.f32.gmra.mrb[0].mxu0 %v2193
    %v2512 = vpop.f32.mrb[0].mxu0
    %v2513 = vadd.f32 0.0, %v2512
    %v2514 = vpop.f32.mrb[0].mxu0
    %2515 = vmatprep.mubr.f32.mxu0 0.0
    %2516 = vmatmul.mubr.f32.gmra.mrb[0].mxu0 %v2196
    %v2517 = vpop.f32.mrb[0].mxu0
    %v2518 = vadd.f32 0.0, %v2517
    %v2519 = vpop.f32.mrb[0].mxu0
    %2520 = vmatprep.mubr.f32.mxu0 0.0
    %2521 = vmatmul.mubr.f32.gmra.mrb[0].mxu0 %v2199
    %v2522 = vpop.f32.mrb[0].mxu0
    %v2523 = vadd.f32 0.0, %v2522
    %v2524 = vpop.f32.mrb[0].mxu0
    %2525 = vmatprep.mubr.f32.mxu0 0.0
    %2526 = vmatmul.mubr.f32.gmra.mrb[0].mxu0 %v2202
    %v2527 = vpop.f32.mrb[0].mxu0
    %v2528 = vadd.f32 0.0, %v2527
    %v2529 = vpop.f32.mrb[0].mxu0
    %2530 = vmatprep.mubr.f32.mxu0 0.0
    %2531 = vmatmul.mubr.f32.gmra.mrb[0].mxu0 %v2205
    %v2532 = vpop.f32.mrb[0].mxu0
    %v2533 = vadd.f32 0.0, %v2532
    %v2534 = vpop.f32.mrb[0].mxu0
    %2535 = vmatprep.mubr.f32.mxu0 0.0
    %2536 = vmatmul.mubr.f32.gmra.mrb[0].mxu0 %v2208
    %v2537 = vpop.f32.mrb[0].mxu0
    %v2538 = vadd.f32 0.0, %v2537
    %v2539 = vpop.f32.mrb[0].mxu0
    %2540 = vmatprep.mubr.f32.mxu0 0.0
    %2541 = vmatmul.mubr.f32.gmra.mrb[0].mxu0 %v2211
    %v2542 = vpop.f32.mrb[0].mxu0
    %v2543 = vadd.f32 0.0, %v2542
    %v2544 = vpop.f32.mrb[0].mxu0
    %2545 = vmatprep.mubr.f32.mxu0 0.0
    %2546 = vmatmul.mubr.f32.gmra.mrb[0].mxu0 %v2214
    %v2547 = vpop.f32.mrb[0].mxu0
    %v2548 = vadd.f32 0.0, %v2547
    %v2549 = vpop.f32.mrb[0].mxu0
    %2550 = vmatprep.mubr.f32.mxu0 0.0
    %2551 = vmatmul.mubr.f32.gmra.mrb[0].mxu0 %v2217
    %v2552 = vpop.f32.mrb[0].mxu0
    %v2553 = vadd.f32 0.0, %v2552
    %v2554 = vpop.f32.mrb[0].mxu0
    %2555 = vmatprep.mubr.f32.mxu0 0.0
    %2556 = vmatmul.mubr.f32.gmra.mrb[0].mxu0 %v2220
    %v2557 = vpop.f32.mrb[0].mxu0
    %v2558 = vadd.f32 0.0, %v2557
    %v2559 = vpop.f32.mrb[0].mxu0
    %2560 = vmatprep.mubr.f32.mxu0 0.0
    %2561 = vmatmul.mubr.f32.gmra.mrb[0].mxu0 %v2223
    %v2562 = vpop.f32.mrb[0].mxu0
    %v2563 = vadd.f32 0.0, %v2562
    %v2564 = vpop.f32.mrb[0].mxu0
    %2565 = vmatprep.mubr.f32.mxu0 0.0
    %2566 = vmatmul.mubr.f32.gmra.mrb[0].mxu0 %v2226
    %v2567 = vpop.f32.mrb[0].mxu0
    %v2568 = vadd.f32 0.0, %v2567
    %v2569 = vpop.f32.mrb[0].mxu0
    %2570 = vmatprep.mubr.f32.mxu0 0.0
    %2571 = vmatmul.mubr.f32.gmra.mrb[0].mxu0 %v2229
    %v2572 = vpop.f32.mrb[0].mxu0
    %v2573 = vadd.f32 0.0, %v2572
    %v2574 = vpop.f32.mrb[0].mxu0
    %2575 = vmatprep.mubr.f32.mxu0 0.0
    %2576 = vmatmul.mubr.f32.gmra.mrb[0].mxu0 %v2232
    %v2577 = vpop.f32.mrb[0].mxu0
    %v2578 = vadd.f32 0.0, %v2577
    %v2579 = vpop.f32.mrb[0].mxu0
    %2580 = vmatprep.mubr.f32.mxu0 0.0
    %2581 = vmatmul.mubr.f32.gmra.mrb[0].mxu0 %v2235
    %v2582 = vpop.f32.mrb[0].mxu0
    %v2583 = vadd.f32 0.0, %v2582
    %v2584 = vpop.f32.mrb[0].mxu0
    %2585 = vmatprep.mubr.f32.mxu0 0.0
    %2586 = vmatmul.mubr.f32.gmra.mrb[0].mxu0 %v2238
    %v2587 = vpop.f32.mrb[0].mxu0
    %v2588 = vadd.f32 0.0, %v2587
    %v2589 = vpop.f32.mrb[0].mxu0
    %2590 = vmatprep.mubr.f32.mxu0 0.0
    %2591 = vmatmul.mubr.f32.gmra.mrb[0].mxu0 %v2241
    %v2592 = vpop.f32.mrb[0].mxu0
    %v2593 = vadd.f32 0.0, %v2592
    %v2594 = vpop.f32.mrb[0].mxu0
    %2595 = vmatprep.mubr.f32.mxu0 0.0
    %2596 = vmatmul.mubr.f32.gmra.mrb[0].mxu0 %v2244
    %v2597 = vpop.f32.mrb[0].mxu0
    %v2598 = vadd.f32 0.0, %v2597
    %v2599 = vpop.f32.mrb[0].mxu0
    %2600 = vmatprep.mubr.f32.mxu0 0.0
    %2601 = vmatmul.mubr.f32.gmra.mrb[0].mxu0 %v2247
    %v2602 = vpop.f32.mrb[0].mxu0
    %v2603 = vadd.f32 0.0, %v2602
    %v2604 = vpop.f32.mrb[0].mxu0
    %2605 = vmatprep.mubr.f32.mxu0 0.0
    %2606 = vmatmul.mubr.f32.gmra.mrb[0].mxu0 %v2250
    %v2607 = vpop.f32.mrb[0].mxu0
    %v2608 = vadd.f32 0.0, %v2607
    %v2609 = vpop.f32.mrb[0].mxu0
    %2610 = vmatprep.mubr.f32.mxu0 0.0
    %2611 = vmatmul.mubr.f32.gmra.mrb[0].mxu0 %v2253
    %v2612 = vpop.f32.mrb[0].mxu0
    %v2613 = vadd.f32 0.0, %v2612
    %v2614 = vpop.f32.mrb[0].mxu0
    %2615 = vmatprep.mubr.f32.mxu0 0.0
    %2616 = vmatmul.mubr.f32.gmra.mrb[0].mxu0 %v2256
    %v2617 = vpop.f32.mrb[0].mxu0
    %v2618 = vadd.f32 0.0, %v2617
    %v2619 = vpop.f32.mrb[0].mxu0
    %2620 = vmatprep.mubr.f32.mxu0 0.0
    %2621 = vmatmul.mubr.f32.gmra.mrb[0].mxu0 %v2259
    %v2622 = vpop.f32.mrb[0].mxu0
    %v2623 = vadd.f32 0.0, %v2622
    %v2624 = vpop.f32.mrb[0].mxu0
    %2625 = vmatprep.mubr.f32.mxu0 0.0
    %2626 = vmatmul.mubr.f32.gmra.mrb[0].mxu0 %v2262
    %v2627 = vpop.f32.mrb[0].mxu0
    %v2628 = vadd.f32 0.0, %v2627
    %v2629 = vpop.f32.mrb[0].mxu0
    %2630 = vmatprep.mubr.f32.mxu0 0.0
    %2631 = vmatmul.mubr.f32.gmra.mrb[0].mxu0 %v2265
    %v2632 = vpop.f32.mrb[0].mxu0
    %v2633 = vadd.f32 0.0, %v2632
    %v2634 = vpop.f32.mrb[0].mxu0
    %2635 = vmatprep.mubr.f32.mxu0 0.0
    %2636 = vmatmul.mubr.f32.gmra.mrb[0].mxu0 %v2268
    %v2637 = vpop.f32.mrb[0].mxu0
    %v2638 = vadd.f32 0.0, %v2637
    %v2639 = vpop.f32.mrb[0].mxu0
    %2640 = vmatprep.mubr.f32.mxu0 0.0
    %2641 = vmatmul.mubr.f32.gmra.mrb[0].mxu0 %v2271
    %v2642 = vpop.f32.mrb[0].mxu0
    %v2643 = vadd.f32 0.0, %v2642
    %v2644 = vpop.f32.mrb[0].mxu0
    %2645 = vmatprep.mubr.f32.mxu0 0.0
    %2646 = vmatmul.mubr.f32.gmra.mrb[0].mxu0 %v2274
    %v2647 = vpop.f32.mrb[0].mxu0
    %v2648 = vadd.f32 0.0, %v2647
    %v2649 = vpop.f32.mrb[0].mxu0
    %2650 = vmatprep.mubr.f32.mxu0 0.0
    %2651 = vmatmul.mubr.f32.gmra.mrb[0].mxu0 %v2277
    %v2652 = vpop.f32.mrb[0].mxu0
    %v2653 = vadd.f32 0.0, %v2652
    %v2654 = vpop.f32.mrb[0].mxu0
    %2655 = vmatprep.mubr.f32.mxu0 0.0
    %2656 = vmatmul.mubr.f32.gmra.mrb[0].mxu0 %v2280
    %v2657 = vpop.f32.mrb[0].mxu0
    %v2658 = vadd.f32 0.0, %v2657
    %v2659 = vpop.f32.mrb[0].mxu0
    %2660 = vmatprep.mubr.f32.mxu0 0.0
    %2661 = vmatmul.mubr.f32.gmra.mrb[0].mxu0 %v2283
    %v2662 = vpop.f32.mrb[0].mxu0
    %v2663 = vadd.f32 0.0, %v2662
    %v2664 = vpop.f32.mrb[0].mxu0
    %2665 = vmatprep.mubr.f32.mxu0 0.0
    %2666 = vmatmul.mubr.f32.gmra.mrb[0].mxu0 %v2286
    %v2667 = vpop.f32.mrb[0].mxu0
    %v2668 = vadd.f32 0.0, %v2667
    %v2669 = vpop.f32.mrb[0].mxu0
    %2670 = vmatprep.mubr.f32.mxu0 0.0
    %2671 = vmatmul.mubr.f32.gmra.mrb[0].mxu0 %v2289
    %v2672 = vpop.f32.mrb[0].mxu0
    %v2673 = vadd.f32 0.0, %v2672
    %v2674 = vpop.f32.mrb[0].mxu0
    %2675 = vdwg.mxu0
    %v2676 = vadd.f32 %v1965, %v2358
    %v2677 = vadd.f32 %v1966, %v2363
    %v2678 = vadd.f32 %v1967, %v2368
    %v2679 = vadd.f32 %v1968, %v2373
    %v2680 = vadd.f32 %v1969, %v2378
    %v2681 = vadd.f32 %v1970, %v2383
    %v2682 = vadd.f32 %v1971, %v2388
    %v2683 = vadd.f32 %v1972, %v2393
    %v2684 = vadd.f32 %v1973, %v2398
    %v2685 = vadd.f32 %v1974, %v2403
    %v2686 = vadd.f32 %v1975, %v2408
    %v2687 = vadd.f32 %v1976, %v2413
    %v2688 = vadd.f32 %v1977, %v2418
    %v2689 = vadd.f32 %v1978, %v2423
    %v2690 = vadd.f32 %v1979, %v2428
    %v2691 = vadd.f32 %v1980, %v2433
    %v2692 = vadd.f32 %v1981, %v2438
    %v2693 = vadd.f32 %v1982, %v2443
    %v2694 = vadd.f32 %v1983, %v2448
    %v2695 = vadd.f32 %v1984, %v2453
    %v2696 = vadd.f32 %v1985, %v2458
    %v2697 = vadd.f32 %v1986, %v2463
    %v2698 = vadd.f32 %v1987, %v2468
    %v2699 = vadd.f32 %v1988, %v2473
    %v2700 = vadd.f32 %v1989, %v2478
    %v2701 = vadd.f32 %v1990, %v2483
    %v2702 = vadd.f32 %v1991, %v2488
    %v2703 = vadd.f32 %v1992, %v2493
    %v2704 = vadd.f32 %v1993, %v2498
    %v2705 = vadd.f32 %v1994, %v2503
    %v2706 = vadd.f32 %v1995, %v2508
    %v2707 = vadd.f32 %v1996, %v2513
    %v2708 = vadd.f32 %v1997, %v2518
    %v2709 = vadd.f32 %v1998, %v2523
    %v2710 = vadd.f32 %v1999, %v2528
    %v2711 = vadd.f32 %v2000, %v2533
    %v2712 = vadd.f32 %v2001, %v2538
    %v2713 = vadd.f32 %v2002, %v2543
    %v2714 = vadd.f32 %v2003, %v2548
    %v2715 = vadd.f32 %v2004, %v2553
    %v2716 = vadd.f32 %v2005, %v2558
    %v2717 = vadd.f32 %v2006, %v2563
    %v2718 = vadd.f32 %v2007, %v2568
    %v2719 = vadd.f32 %v2008, %v2573
    %v2720 = vadd.f32 %v2009, %v2578
    %v2721 = vadd.f32 %v2010, %v2583
    %v2722 = vadd.f32 %v2011, %v2588
    %v2723 = vadd.f32 %v2012, %v2593
    %v2724 = vadd.f32 %v2013, %v2598
    %v2725 = vadd.f32 %v2014, %v2603
    %v2726 = vadd.f32 %v2015, %v2608
    %v2727 = vadd.f32 %v2016, %v2613
    %v2728 = vadd.f32 %v2017, %v2618
    %v2729 = vadd.f32 %v2018, %v2623
    %v2730 = vadd.f32 %v2019, %v2628
    %v2731 = vadd.f32 %v2020, %v2633
    %v2732 = vadd.f32 %v2021, %v2638
    %v2733 = vadd.f32 %v2022, %v2643
    %v2734 = vadd.f32 %v2023, %v2648
    %v2735 = vadd.f32 %v2024, %v2653
    %v2736 = vadd.f32 %v2025, %v2658
    %v2737 = vadd.f32 %v2026, %v2663
    %v2738 = vadd.f32 %v2027, %v2668
    %v2739 = vadd.f32 %v2028, %v2673
    %v2740 = vld [vmem:[%s2029 + $0x1] sm:$0xff]
    %v2741 = vld [vmem:[%s2029 + $0x9] sm:$0xff]
    %v2742 = vld [vmem:[%s2029 + $0x19] sm:$0xff]
    %v2743 = vld [vmem:[%s2029 + $0x21] sm:$0xff]
    %v2744 = vld [vmem:[%s2029 + $0x31] sm:$0xff]
    %v2745 = vld [vmem:[%s2029 + $0x39] sm:$0xff]
    %v2746 = vld [vmem:[%s2029 + $0x49] sm:$0xff]
    %v2747 = vld [vmem:[%s2029 + $0x51] sm:$0xff]
    %v2748 = vld [vmem:[%s2029 + $0x61] sm:$0xff]
    %v2749 = vld [vmem:[%s2029 + $0x69] sm:$0xff]
    %v2750 = vld [vmem:[%s2029 + $0x79] sm:$0xff]
    %v2751 = vld [vmem:[%s2029 + $0x81] sm:$0xff]
    %v2752 = vld [vmem:[%s2029 + $0x91] sm:$0xff]
    %v2753 = vld [vmem:[%s2029 + $0x99] sm:$0xff]
    %v2754 = vld [vmem:[%s2029 + $0xa9] sm:$0xff]
    %v2755 = vld [vmem:[%s2029 + $0xb1] sm:$0xff]
    %v2756 = vld [vmem:[%s2029 + $0xc1] sm:$0xff]
    %v2757 = vld [vmem:[%s2029 + $0xc9] sm:$0xff]
    %v2758 = vld [vmem:[%s2029 + $0xd9] sm:$0xff]
    %v2759 = vld [vmem:[%s2029 + $0xe1] sm:$0xff]
    %v2760 = vld [vmem:[%s2029 + $0xf1] sm:$0xff]
    %v2761 = vld [vmem:[%s2029 + $0xf9] sm:$0xff]
    %v2762 = vld [vmem:[%s2029 + $0x109] sm:$0xff]
    %v2763 = vld [vmem:[%s2029 + $0x111] sm:$0xff]
    %v2764 = vld [vmem:[%s2029 + $0x121] sm:$0xff]
    %v2765 = vld [vmem:[%s2029 + $0x129] sm:$0xff]
    %v2766 = vld [vmem:[%s2029 + $0x139] sm:$0xff]
    %v2767 = vld [vmem:[%s2029 + $0x141] sm:$0xff]
    %v2768 = vld [vmem:[%s2029 + $0x151] sm:$0xff]
    %v2769 = vld [vmem:[%s2029 + $0x159] sm:$0xff]
    %v2770 = vld [vmem:[%s2029 + $0x169] sm:$0xff]
    %v2771 = vld [vmem:[%s2029 + $0x171] sm:$0xff]
    %v2772 = vld [vmem:[%s2029 + $0x1b1] sm:$0xff]
    %v2773 = vld [vmem:[%s2029 + $0x1b9] sm:$0xff]
    %v2774 = vld [vmem:[%s2029 + $0x1c9] sm:$0xff]
    %v2775 = vld [vmem:[%s2029 + $0x1d1] sm:$0xff]
    %v2776 = vld [vmem:[%s2029 + $0x1e1] sm:$0xff]
    %v2777 = vld [vmem:[%s2029 + $0x1e9] sm:$0xff]
    %v2778 = vld [vmem:[%s2029 + $0x1f9] sm:$0xff]
    %v2779 = vld [vmem:[%s2029 + $0x201] sm:$0xff]
    %v2780 = vld [vmem:[%s2029 + $0x211] sm:$0xff]
    %v2781 = vld [vmem:[%s2029 + $0x219] sm:$0xff]
    %v2782 = vld [vmem:[%s2029 + $0x229] sm:$0xff]
    %v2783 = vld [vmem:[%s2029 + $0x231] sm:$0xff]
    %v2784 = vld [vmem:[%s2029 + $0x241] sm:$0xff]
    %v2785 = vld [vmem:[%s2029 + $0x249] sm:$0xff]
    %v2786 = vld [vmem:[%s2029 + $0x259] sm:$0xff]
    %v2787 = vld [vmem:[%s2029 + $0x261] sm:$0xff]
    %v2788 = vld [vmem:[%s2029 + $0x271] sm:$0xff]
    %v2789 = vld [vmem:[%s2029 + $0x279] sm:$0xff]
    %v2790 = vld [vmem:[%s2029 + $0x289] sm:$0xff]
    %v2791 = vld [vmem:[%s2029 + $0x291] sm:$0xff]
    %v2792 = vld [vmem:[%s2029 + $0x2a1] sm:$0xff]
    %v2793 = vld [vmem:[%s2029 + $0x2a9] sm:$0xff]
    %v2794 = vld [vmem:[%s2029 + $0x2b9] sm:$0xff]
    %v2795 = vld [vmem:[%s2029 + $0x2c1] sm:$0xff]
    %v2796 = vld [vmem:[%s2029 + $0x2d1] sm:$0xff]
    %v2797 = vld [vmem:[%s2029 + $0x2d9] sm:$0xff]
    %v2798 = vld [vmem:[%s2029 + $0x2e9] sm:$0xff]
    %v2799 = vld [vmem:[%s2029 + $0x2f1] sm:$0xff]
    %v2800 = vld [vmem:[%s2029 + $0x301] sm:$0xff]
    %v2801 = vld [vmem:[%s2029 + $0x309] sm:$0xff]
    %v2802 = vld [vmem:[%s2029 + $0x319] sm:$0xff]
    %v2803 = vld [vmem:[%s2029 + $0x321] sm:$0xff]
    %s2804 = scalar_lea.vmem %s1, 128
    %v2805 = vld [vmem:[%s2804] sm:$0xff]
    %v2806 = vld [vmem:[%s2804 + $0x8] sm:$0xff]
    %v2807 = vld [vmem:[%s2804 + $0x10] sm:$0xff]
    %v2808 = vld [vmem:[%s2804 + $0x18] sm:$0xff]
    %v2810 = vsel %vm164, %v2740, 0
    %v2813 = vsel %vm164, %v2741, 0
    %v2816 = vsel %vm164, %v2742, 0
    %v2819 = vsel %vm164, %v2743, 0
    %v2822 = vsel %vm164, %v2744, 0
    %v2825 = vsel %vm164, %v2745, 0
    %v2828 = vsel %vm164, %v2746, 0
    %v2831 = vsel %vm164, %v2747, 0
    %v2834 = vsel %vm164, %v2748, 0
    %v2837 = vsel %vm164, %v2749, 0
    %v2840 = vsel %vm164, %v2750, 0
    %v2843 = vsel %vm164, %v2751, 0
    %v2846 = vsel %vm164, %v2752, 0
    %v2849 = vsel %vm164, %v2753, 0
    %v2852 = vsel %vm164, %v2754, 0
    %v2855 = vsel %vm164, %v2755, 0
    %v2858 = vsel %vm164, %v2756, 0
    %v2861 = vsel %vm164, %v2757, 0
    %v2864 = vsel %vm164, %v2758, 0
    %v2867 = vsel %vm164, %v2759, 0
    %v2870 = vsel %vm164, %v2760, 0
    %v2873 = vsel %vm164, %v2761, 0
    %v2876 = vsel %vm164, %v2762, 0
    %v2879 = vsel %vm164, %v2763, 0
    %v2882 = vsel %vm164, %v2764, 0
    %v2885 = vsel %vm164, %v2765, 0
    %v2888 = vsel %vm164, %v2766, 0
    %v2891 = vsel %vm164, %v2767, 0
    %v2894 = vsel %vm164, %v2768, 0
    %v2897 = vsel %vm164, %v2769, 0
    %v2900 = vsel %vm164, %v2770, 0
    %v2903 = vsel %vm164, %v2771, 0
    %v2906 = vsel %vm164, %v2772, 0
    %v2909 = vsel %vm164, %v2773, 0
    %v2912 = vsel %vm164, %v2774, 0
    %v2915 = vsel %vm164, %v2775, 0
    %v2918 = vsel %vm164, %v2776, 0
    %v2921 = vsel %vm164, %v2777, 0
    %v2924 = vsel %vm164, %v2778, 0
    %v2927 = vsel %vm164, %v2779, 0
    %v2930 = vsel %vm164, %v2780, 0
    %v2933 = vsel %vm164, %v2781, 0
    %v2936 = vsel %vm164, %v2782, 0
    %v2939 = vsel %vm164, %v2783, 0
    %v2942 = vsel %vm164, %v2784, 0
    %v2945 = vsel %vm164, %v2785, 0
    %v2948 = vsel %vm164, %v2786, 0
    %v2951 = vsel %vm164, %v2787, 0
    %v2954 = vsel %vm164, %v2788, 0
    %v2957 = vsel %vm164, %v2789, 0
    %v2960 = vsel %vm164, %v2790, 0
    %v2963 = vsel %vm164, %v2791, 0
    %v2966 = vsel %vm164, %v2792, 0
    %v2969 = vsel %vm164, %v2793, 0
    %v2972 = vsel %vm164, %v2794, 0
    %v2975 = vsel %vm164, %v2795, 0
    %v2978 = vsel %vm164, %v2796, 0
    %v2981 = vsel %vm164, %v2797, 0
    %v2984 = vsel %vm164, %v2798, 0
    %v2987 = vsel %vm164, %v2799, 0
    %v2990 = vsel %vm164, %v2800, 0
    %v2993 = vsel %vm164, %v2801, 0
    %v2996 = vsel %vm164, %v2802, 0
    %v2999 = vsel %vm164, %v2803, 0
    %3001 = vmatprep.subr.mxu0 0.0
    %3002 = vmatpush1.msra.mxu0 %v2805
    %3003 = vmatprep.subr.mxu0 0.0
    %3004 = vmatpush1.msra.mxu0 %v2806
    %3005 = vmatprep.subr.mxu0 0.0
    %3006 = vmatpush1.msra.mxu0 %v2807
    %3007 = vmatprep.subr.mxu0 0.0
    %3008 = vmatpush1.msra.mxu0 %v2808
    %3009 = vmatprep.subr.mxu0 0.0
    %3010 = vmatpush1.msra.mxu0 0.0
    %3011 = vmatprep.subr.mxu0 0.0
    %3012 = vmatpush1.msra.mxu0 0.0
    %3013 = vmatprep.subr.mxu0 0.0
    %3014 = vmatpush1.msra.mxu0 0.0
    %3015 = vmatprep.subr.mxu0 0.0
    %3016 = vmatpush1.msra.mxu0 0.0
    %3017 = vmatprep.subr.mxu0 0.0
    %3018 = vmatpush1.msra.mxu0 0.0
    %3019 = vmatprep.subr.mxu0 0.0
    %3020 = vmatpush1.msra.mxu0 0.0
    %3021 = vmatprep.subr.mxu0 0.0
    %3022 = vmatpush1.msra.mxu0 0.0
    %3023 = vmatprep.subr.mxu0 0.0
    %3024 = vmatpush1.msra.mxu0 0.0
    %3025 = vmatprep.subr.mxu0 0.0
    %3026 = vmatpush1.msra.mxu0 0.0
    %3027 = vmatprep.subr.mxu0 0.0
    %3028 = vmatpush1.msra.mxu0 0.0
    %3029 = vmatprep.subr.mxu0 0.0
    %3030 = vmatpush1.msra.mxu0 0.0
    %3031 = vmatprep.subr.mxu0 0.0
    %3032 = vmatpush1.msra.mxu0 0.0
    %3033 = vmatprep.subr.mxu0 0.0
    %3034 = vmatpush1.msra.mxu0 0.0
    %3035 = vmatprep.subr.mxu0 0.0
    %3036 = vmatpush1.msra.mxu0 0.0
    %3037 = vmatprep.subr.mxu0 0.0
    %3038 = vmatpush1.msra.mxu0 0.0
    %3039 = vmatprep.subr.mxu0 0.0
    %3040 = vmatpush1.msra.mxu0 0.0
    %3041 = vmatprep.subr.mxu0 0.0
    %3042 = vmatpush1.msra.mxu0 0.0
    %3043 = vmatprep.subr.mxu0 0.0
    %3044 = vmatpush1.msra.mxu0 0.0
    %3045 = vmatprep.subr.mxu0 0.0
    %3046 = vmatpush1.msra.mxu0 0.0
    %3047 = vmatprep.subr.mxu0 0.0
    %3048 = vmatpush1.msra.mxu0 0.0
    %3049 = vmatprep.subr.mxu0 0.0
    %3050 = vmatpush1.msra.mxu0 0.0
    %3051 = vmatprep.subr.mxu0 0.0
    %3052 = vmatpush1.msra.mxu0 0.0
    %3053 = vmatprep.subr.mxu0 0.0
    %3054 = vmatpush1.msra.mxu0 0.0
    %3055 = vmatprep.subr.mxu0 0.0
    %3056 = vmatpush1.msra.mxu0 0.0
    %3057 = vmatprep.subr.mxu0 0.0
    %3058 = vmatpush1.msra.mxu0 0.0
    %3059 = vmatprep.subr.mxu0 0.0
    %3060 = vmatpush1.msra.mxu0 0.0
    %3061 = vmatprep.subr.mxu0 0.0
    %3062 = vmatpush1.msra.mxu0 0.0
    %3063 = vmatprep.subr.mxu0 0.0
    %3064 = vmatpush1.msra.mxu0 0.0
    %3065 = vmatprep.mubr.f32.mxu0 0.0
    %3066 = vmatmul.mubr.f32.gmra.mrb[0].mxu0 %v2810
    %v3067 = vpop.f32.mrb[0].mxu0
    %v3068 = vadd.f32 0.0, %v3067
    %v3069 = vpop.f32.mrb[0].mxu0
    %3070 = vmatprep.mubr.f32.mxu0 0.0
    %3071 = vmatmul.mubr.f32.gmra.mrb[0].mxu0 %v2813
    %v3072 = vpop.f32.mrb[0].mxu0
    %v3073 = vadd.f32 0.0, %v3072
    %v3074 = vpop.f32.mrb[0].mxu0
    %3075 = vmatprep.mubr.f32.mxu0 0.0
    %3076 = vmatmul.mubr.f32.gmra.mrb[0].mxu0 %v2816
    %v3077 = vpop.f32.mrb[0].mxu0
    %v3078 = vadd.f32 0.0, %v3077
    %v3079 = vpop.f32.mrb[0].mxu0
    %3080 = vmatprep.mubr.f32.mxu0 0.0
    %3081 = vmatmul.mubr.f32.gmra.mrb[0].mxu0 %v2819
    %v3082 = vpop.f32.mrb[0].mxu0
    %v3083 = vadd.f32 0.0, %v3082
    %v3084 = vpop.f32.mrb[0].mxu0
    %3085 = vmatprep.mubr.f32.mxu0 0.0
    %3086 = vmatmul.mubr.f32.gmra.mrb[0].mxu0 %v2822
    %v3087 = vpop.f32.mrb[0].mxu0
    %v3088 = vadd.f32 0.0, %v3087
    %v3089 = vpop.f32.mrb[0].mxu0
    %3090 = vmatprep.mubr.f32.mxu0 0.0
    %3091 = vmatmul.mubr.f32.gmra.mrb[0].mxu0 %v2825
    %v3092 = vpop.f32.mrb[0].mxu0
    %v3093 = vadd.f32 0.0, %v3092
    %v3094 = vpop.f32.mrb[0].mxu0
    %3095 = vmatprep.mubr.f32.mxu0 0.0
    %3096 = vmatmul.mubr.f32.gmra.mrb[0].mxu0 %v2828
    %v3097 = vpop.f32.mrb[0].mxu0
    %v3098 = vadd.f32 0.0, %v3097
    %v3099 = vpop.f32.mrb[0].mxu0
    %3100 = vmatprep.mubr.f32.mxu0 0.0
    %3101 = vmatmul.mubr.f32.gmra.mrb[0].mxu0 %v2831
    %v3102 = vpop.f32.mrb[0].mxu0
    %v3103 = vadd.f32 0.0, %v3102
    %v3104 = vpop.f32.mrb[0].mxu0
    %3105 = vmatprep.mubr.f32.mxu0 0.0
    %3106 = vmatmul.mubr.f32.gmra.mrb[0].mxu0 %v2834
    %v3107 = vpop.f32.mrb[0].mxu0
    %v3108 = vadd.f32 0.0, %v3107
    %v3109 = vpop.f32.mrb[0].mxu0
    %3110 = vmatprep.mubr.f32.mxu0 0.0
    %3111 = vmatmul.mubr.f32.gmra.mrb[0].mxu0 %v2837
    %v3112 = vpop.f32.mrb[0].mxu0
    %v3113 = vadd.f32 0.0, %v3112
    %v3114 = vpop.f32.mrb[0].mxu0
    %3115 = vmatprep.mubr.f32.mxu0 0.0
    %3116 = vmatmul.mubr.f32.gmra.mrb[0].mxu0 %v2840
    %v3117 = vpop.f32.mrb[0].mxu0
    %v3118 = vadd.f32 0.0, %v3117
    %v3119 = vpop.f32.mrb[0].mxu0
    %3120 = vmatprep.mubr.f32.mxu0 0.0
    %3121 = vmatmul.mubr.f32.gmra.mrb[0].mxu0 %v2843
    %v3122 = vpop.f32.mrb[0].mxu0
    %v3123 = vadd.f32 0.0, %v3122
    %v3124 = vpop.f32.mrb[0].mxu0
    %3125 = vmatprep.mubr.f32.mxu0 0.0
    %3126 = vmatmul.mubr.f32.gmra.mrb[0].mxu0 %v2846
    %v3127 = vpop.f32.mrb[0].mxu0
    %v3128 = vadd.f32 0.0, %v3127
    %v3129 = vpop.f32.mrb[0].mxu0
    %3130 = vmatprep.mubr.f32.mxu0 0.0
    %3131 = vmatmul.mubr.f32.gmra.mrb[0].mxu0 %v2849
    %v3132 = vpop.f32.mrb[0].mxu0
    %v3133 = vadd.f32 0.0, %v3132
    %v3134 = vpop.f32.mrb[0].mxu0
    %3135 = vmatprep.mubr.f32.mxu0 0.0
    %3136 = vmatmul.mubr.f32.gmra.mrb[0].mxu0 %v2852
    %v3137 = vpop.f32.mrb[0].mxu0
    %v3138 = vadd.f32 0.0, %v3137
    %v3139 = vpop.f32.mrb[0].mxu0
    %3140 = vmatprep.mubr.f32.mxu0 0.0
    %3141 = vmatmul.mubr.f32.gmra.mrb[0].mxu0 %v2855
    %v3142 = vpop.f32.mrb[0].mxu0
    %v3143 = vadd.f32 0.0, %v3142
    %v3144 = vpop.f32.mrb[0].mxu0
    %3145 = vmatprep.mubr.f32.mxu0 0.0
    %3146 = vmatmul.mubr.f32.gmra.mrb[0].mxu0 %v2858
    %v3147 = vpop.f32.mrb[0].mxu0
    %v3148 = vadd.f32 0.0, %v3147
    %v3149 = vpop.f32.mrb[0].mxu0
    %3150 = vmatprep.mubr.f32.mxu0 0.0
    %3151 = vmatmul.mubr.f32.gmra.mrb[0].mxu0 %v2861
    %v3152 = vpop.f32.mrb[0].mxu0
    %v3153 = vadd.f32 0.0, %v3152
    %v3154 = vpop.f32.mrb[0].mxu0
    %3155 = vmatprep.mubr.f32.mxu0 0.0
    %3156 = vmatmul.mubr.f32.gmra.mrb[0].mxu0 %v2864
    %v3157 = vpop.f32.mrb[0].mxu0
    %v3158 = vadd.f32 0.0, %v3157
    %v3159 = vpop.f32.mrb[0].mxu0
    %3160 = vmatprep.mubr.f32.mxu0 0.0
    %3161 = vmatmul.mubr.f32.gmra.mrb[0].mxu0 %v2867
    %v3162 = vpop.f32.mrb[0].mxu0
    %v3163 = vadd.f32 0.0, %v3162
    %v3164 = vpop.f32.mrb[0].mxu0
    %3165 = vmatprep.mubr.f32.mxu0 0.0
    %3166 = vmatmul.mubr.f32.gmra.mrb[0].mxu0 %v2870
    %v3167 = vpop.f32.mrb[0].mxu0
    %v3168 = vadd.f32 0.0, %v3167
    %v3169 = vpop.f32.mrb[0].mxu0
    %3170 = vmatprep.mubr.f32.mxu0 0.0
    %3171 = vmatmul.mubr.f32.gmra.mrb[0].mxu0 %v2873
    %v3172 = vpop.f32.mrb[0].mxu0
    %v3173 = vadd.f32 0.0, %v3172
    %v3174 = vpop.f32.mrb[0].mxu0
    %3175 = vmatprep.mubr.f32.mxu0 0.0
    %3176 = vmatmul.mubr.f32.gmra.mrb[0].mxu0 %v2876
    %v3177 = vpop.f32.mrb[0].mxu0
    %v3178 = vadd.f32 0.0, %v3177
    %v3179 = vpop.f32.mrb[0].mxu0
    %3180 = vmatprep.mubr.f32.mxu0 0.0
    %3181 = vmatmul.mubr.f32.gmra.mrb[0].mxu0 %v2879
    %v3182 = vpop.f32.mrb[0].mxu0
    %v3183 = vadd.f32 0.0, %v3182
    %v3184 = vpop.f32.mrb[0].mxu0
    %3185 = vmatprep.mubr.f32.mxu0 0.0
    %3186 = vmatmul.mubr.f32.gmra.mrb[0].mxu0 %v2882
    %v3187 = vpop.f32.mrb[0].mxu0
    %v3188 = vadd.f32 0.0, %v3187
    %v3189 = vpop.f32.mrb[0].mxu0
    %3190 = vmatprep.mubr.f32.mxu0 0.0
    %3191 = vmatmul.mubr.f32.gmra.mrb[0].mxu0 %v2885
    %v3192 = vpop.f32.mrb[0].mxu0
    %v3193 = vadd.f32 0.0, %v3192
    %v3194 = vpop.f32.mrb[0].mxu0
    %3195 = vmatprep.mubr.f32.mxu0 0.0
    %3196 = vmatmul.mubr.f32.gmra.mrb[0].mxu0 %v2888
    %v3197 = vpop.f32.mrb[0].mxu0
    %v3198 = vadd.f32 0.0, %v3197
    %v3199 = vpop.f32.mrb[0].mxu0
    %3200 = vmatprep.mubr.f32.mxu0 0.0
    %3201 = vmatmul.mubr.f32.gmra.mrb[0].mxu0 %v2891
    %v3202 = vpop.f32.mrb[0].mxu0
    %v3203 = vadd.f32 0.0, %v3202
    %v3204 = vpop.f32.mrb[0].mxu0
    %3205 = vmatprep.mubr.f32.mxu0 0.0
    %3206 = vmatmul.mubr.f32.gmra.mrb[0].mxu0 %v2894
    %v3207 = vpop.f32.mrb[0].mxu0
    %v3208 = vadd.f32 0.0, %v3207
    %v3209 = vpop.f32.mrb[0].mxu0
    %3210 = vmatprep.mubr.f32.mxu0 0.0
    %3211 = vmatmul.mubr.f32.gmra.mrb[0].mxu0 %v2897
    %v3212 = vpop.f32.mrb[0].mxu0
    %v3213 = vadd.f32 0.0, %v3212
    %v3214 = vpop.f32.mrb[0].mxu0
    %3215 = vmatprep.mubr.f32.mxu0 0.0
    %3216 = vmatmul.mubr.f32.gmra.mrb[0].mxu0 %v2900
    %v3217 = vpop.f32.mrb[0].mxu0
    %v3218 = vadd.f32 0.0, %v3217
    %v3219 = vpop.f32.mrb[0].mxu0
    %3220 = vmatprep.mubr.f32.mxu0 0.0
    %3221 = vmatmul.mubr.f32.gmra.mrb[0].mxu0 %v2903
    %v3222 = vpop.f32.mrb[0].mxu0
    %v3223 = vadd.f32 0.0, %v3222
    %v3224 = vpop.f32.mrb[0].mxu0
    %3225 = vmatprep.mubr.f32.mxu0 0.0
    %3226 = vmatmul.mubr.f32.gmra.mrb[0].mxu0 %v2906
    %v3227 = vpop.f32.mrb[0].mxu0
    %v3228 = vadd.f32 0.0, %v3227
    %v3229 = vpop.f32.mrb[0].mxu0
    %3230 = vmatprep.mubr.f32.mxu0 0.0
    %3231 = vmatmul.mubr.f32.gmra.mrb[0].mxu0 %v2909
    %v3232 = vpop.f32.mrb[0].mxu0
    %v3233 = vadd.f32 0.0, %v3232
    %v3234 = vpop.f32.mrb[0].mxu0
    %3235 = vmatprep.mubr.f32.mxu0 0.0
    %3236 = vmatmul.mubr.f32.gmra.mrb[0].mxu0 %v2912
    %v3237 = vpop.f32.mrb[0].mxu0
    %v3238 = vadd.f32 0.0, %v3237
    %v3239 = vpop.f32.mrb[0].mxu0
    %3240 = vmatprep.mubr.f32.mxu0 0.0
    %3241 = vmatmul.mubr.f32.gmra.mrb[0].mxu0 %v2915
    %v3242 = vpop.f32.mrb[0].mxu0
    %v3243 = vadd.f32 0.0, %v3242
    %v3244 = vpop.f32.mrb[0].mxu0
    %3245 = vmatprep.mubr.f32.mxu0 0.0
    %3246 = vmatmul.mubr.f32.gmra.mrb[0].mxu0 %v2918
    %v3247 = vpop.f32.mrb[0].mxu0
    %v3248 = vadd.f32 0.0, %v3247
    %v3249 = vpop.f32.mrb[0].mxu0
    %3250 = vmatprep.mubr.f32.mxu0 0.0
    %3251 = vmatmul.mubr.f32.gmra.mrb[0].mxu0 %v2921
    %v3252 = vpop.f32.mrb[0].mxu0
    %v3253 = vadd.f32 0.0, %v3252
    %v3254 = vpop.f32.mrb[0].mxu0
    %3255 = vmatprep.mubr.f32.mxu0 0.0
    %3256 = vmatmul.mubr.f32.gmra.mrb[0].mxu0 %v2924
    %v3257 = vpop.f32.mrb[0].mxu0
    %v3258 = vadd.f32 0.0, %v3257
    %v3259 = vpop.f32.mrb[0].mxu0
    %3260 = vmatprep.mubr.f32.mxu0 0.0
    %3261 = vmatmul.mubr.f32.gmra.mrb[0].mxu0 %v2927
    %v3262 = vpop.f32.mrb[0].mxu0
    %v3263 = vadd.f32 0.0, %v3262
    %v3264 = vpop.f32.mrb[0].mxu0
    %3265 = vmatprep.mubr.f32.mxu0 0.0
    %3266 = vmatmul.mubr.f32.gmra.mrb[0].mxu0 %v2930
    %v3267 = vpop.f32.mrb[0].mxu0
    %v3268 = vadd.f32 0.0, %v3267
    %v3269 = vpop.f32.mrb[0].mxu0
    %3270 = vmatprep.mubr.f32.mxu0 0.0
    %3271 = vmatmul.mubr.f32.gmra.mrb[0].mxu0 %v2933
    %v3272 = vpop.f32.mrb[0].mxu0
    %v3273 = vadd.f32 0.0, %v3272
    %v3274 = vpop.f32.mrb[0].mxu0
    %3275 = vmatprep.mubr.f32.mxu0 0.0
    %3276 = vmatmul.mubr.f32.gmra.mrb[0].mxu0 %v2936
    %v3277 = vpop.f32.mrb[0].mxu0
    %v3278 = vadd.f32 0.0, %v3277
    %v3279 = vpop.f32.mrb[0].mxu0
    %3280 = vmatprep.mubr.f32.mxu0 0.0
    %3281 = vmatmul.mubr.f32.gmra.mrb[0].mxu0 %v2939
    %v3282 = vpop.f32.mrb[0].mxu0
    %v3283 = vadd.f32 0.0, %v3282
    %v3284 = vpop.f32.mrb[0].mxu0
    %3285 = vmatprep.mubr.f32.mxu0 0.0
    %3286 = vmatmul.mubr.f32.gmra.mrb[0].mxu0 %v2942
    %v3287 = vpop.f32.mrb[0].mxu0
    %v3288 = vadd.f32 0.0, %v3287
    %v3289 = vpop.f32.mrb[0].mxu0
    %3290 = vmatprep.mubr.f32.mxu0 0.0
    %3291 = vmatmul.mubr.f32.gmra.mrb[0].mxu0 %v2945
    %v3292 = vpop.f32.mrb[0].mxu0
    %v3293 = vadd.f32 0.0, %v3292
    %v3294 = vpop.f32.mrb[0].mxu0
    %3295 = vmatprep.mubr.f32.mxu0 0.0
    %3296 = vmatmul.mubr.f32.gmra.mrb[0].mxu0 %v2948
    %v3297 = vpop.f32.mrb[0].mxu0
    %v3298 = vadd.f32 0.0, %v3297
    %v3299 = vpop.f32.mrb[0].mxu0
    %3300 = vmatprep.mubr.f32.mxu0 0.0
    %3301 = vmatmul.mubr.f32.gmra.mrb[0].mxu0 %v2951
    %v3302 = vpop.f32.mrb[0].mxu0
    %v3303 = vadd.f32 0.0, %v3302
    %v3304 = vpop.f32.mrb[0].mxu0
    %3305 = vmatprep.mubr.f32.mxu0 0.0
    %3306 = vmatmul.mubr.f32.gmra.mrb[0].mxu0 %v2954
    %v3307 = vpop.f32.mrb[0].mxu0
    %v3308 = vadd.f32 0.0, %v3307
    %v3309 = vpop.f32.mrb[0].mxu0
    %3310 = vmatprep.mubr.f32.mxu0 0.0
    %3311 = vmatmul.mubr.f32.gmra.mrb[0].mxu0 %v2957
    %v3312 = vpop.f32.mrb[0].mxu0
    %v3313 = vadd.f32 0.0, %v3312
    %v3314 = vpop.f32.mrb[0].mxu0
    %3315 = vmatprep.mubr.f32.mxu0 0.0
    %3316 = vmatmul.mubr.f32.gmra.mrb[0].mxu0 %v2960
    %v3317 = vpop.f32.mrb[0].mxu0
    %v3318 = vadd.f32 0.0, %v3317
    %v3319 = vpop.f32.mrb[0].mxu0
    %3320 = vmatprep.mubr.f32.mxu0 0.0
    %3321 = vmatmul.mubr.f32.gmra.mrb[0].mxu0 %v2963
    %v3322 = vpop.f32.mrb[0].mxu0
    %v3323 = vadd.f32 0.0, %v3322
    %v3324 = vpop.f32.mrb[0].mxu0
    %3325 = vmatprep.mubr.f32.mxu0 0.0
    %3326 = vmatmul.mubr.f32.gmra.mrb[0].mxu0 %v2966
    %v3327 = vpop.f32.mrb[0].mxu0
    %v3328 = vadd.f32 0.0, %v3327
    %v3329 = vpop.f32.mrb[0].mxu0
    %3330 = vmatprep.mubr.f32.mxu0 0.0
    %3331 = vmatmul.mubr.f32.gmra.mrb[0].mxu0 %v2969
    %v3332 = vpop.f32.mrb[0].mxu0
    %v3333 = vadd.f32 0.0, %v3332
    %v3334 = vpop.f32.mrb[0].mxu0
    %3335 = vmatprep.mubr.f32.mxu0 0.0
    %3336 = vmatmul.mubr.f32.gmra.mrb[0].mxu0 %v2972
    %v3337 = vpop.f32.mrb[0].mxu0
    %v3338 = vadd.f32 0.0, %v3337
    %v3339 = vpop.f32.mrb[0].mxu0
    %3340 = vmatprep.mubr.f32.mxu0 0.0
    %3341 = vmatmul.mubr.f32.gmra.mrb[0].mxu0 %v2975
    %v3342 = vpop.f32.mrb[0].mxu0
    %v3343 = vadd.f32 0.0, %v3342
    %v3344 = vpop.f32.mrb[0].mxu0
    %3345 = vmatprep.mubr.f32.mxu0 0.0
    %3346 = vmatmul.mubr.f32.gmra.mrb[0].mxu0 %v2978
    %v3347 = vpop.f32.mrb[0].mxu0
    %v3348 = vadd.f32 0.0, %v3347
    %v3349 = vpop.f32.mrb[0].mxu0
    %3350 = vmatprep.mubr.f32.mxu0 0.0
    %3351 = vmatmul.mubr.f32.gmra.mrb[0].mxu0 %v2981
    %v3352 = vpop.f32.mrb[0].mxu0
    %v3353 = vadd.f32 0.0, %v3352
    %v3354 = vpop.f32.mrb[0].mxu0
    %3355 = vmatprep.mubr.f32.mxu0 0.0
    %3356 = vmatmul.mubr.f32.gmra.mrb[0].mxu0 %v2984
    %v3357 = vpop.f32.mrb[0].mxu0
    %v3358 = vadd.f32 0.0, %v3357
    %v3359 = vpop.f32.mrb[0].mxu0
    %3360 = vmatprep.mubr.f32.mxu0 0.0
    %3361 = vmatmul.mubr.f32.gmra.mrb[0].mxu0 %v2987
    %v3362 = vpop.f32.mrb[0].mxu0
    %v3363 = vadd.f32 0.0, %v3362
    %v3364 = vpop.f32.mrb[0].mxu0
    %3365 = vmatprep.mubr.f32.mxu0 0.0
    %3366 = vmatmul.mubr.f32.gmra.mrb[0].mxu0 %v2990
    %v3367 = vpop.f32.mrb[0].mxu0
    %v3368 = vadd.f32 0.0, %v3367
    %v3369 = vpop.f32.mrb[0].mxu0
    %3370 = vmatprep.mubr.f32.mxu0 0.0
    %3371 = vmatmul.mubr.f32.gmra.mrb[0].mxu0 %v2993
    %v3372 = vpop.f32.mrb[0].mxu0
    %v3373 = vadd.f32 0.0, %v3372
    %v3374 = vpop.f32.mrb[0].mxu0
    %3375 = vmatprep.mubr.f32.mxu0 0.0
    %3376 = vmatmul.mubr.f32.gmra.mrb[0].mxu0 %v2996
    %v3377 = vpop.f32.mrb[0].mxu0
    %v3378 = vadd.f32 0.0, %v3377
    %v3379 = vpop.f32.mrb[0].mxu0
    %3380 = vmatprep.mubr.f32.mxu0 0.0
    %3381 = vmatmul.mubr.f32.gmra.mrb[0].mxu0 %v2999
    %v3382 = vpop.f32.mrb[0].mxu0
    %v3383 = vadd.f32 0.0, %v3382
    %v3384 = vpop.f32.mrb[0].mxu0
    %3385 = vdwg.mxu0
    %v3386 = vadd.f32 %v2676, %v3068
    %v3387 = vadd.f32 %v2677, %v3073
    %v3388 = vadd.f32 %v2678, %v3078
    %v3389 = vadd.f32 %v2679, %v3083
    %v3390 = vadd.f32 %v2680, %v3088
    %v3391 = vadd.f32 %v2681, %v3093
    %v3392 = vadd.f32 %v2682, %v3098
    %v3393 = vadd.f32 %v2683, %v3103
    %v3394 = vadd.f32 %v2684, %v3108
    %v3395 = vadd.f32 %v2685, %v3113
    %v3396 = vadd.f32 %v2686, %v3118
    %v3397 = vadd.f32 %v2687, %v3123
    %v3398 = vadd.f32 %v2688, %v3128
    %v3399 = vadd.f32 %v2689, %v3133
    %v3400 = vadd.f32 %v2690, %v3138
    %v3401 = vadd.f32 %v2691, %v3143
    %v3402 = vadd.f32 %v2692, %v3148
    %v3403 = vadd.f32 %v2693, %v3153
    %v3404 = vadd.f32 %v2694, %v3158
    %v3405 = vadd.f32 %v2695, %v3163
    %v3406 = vadd.f32 %v2696, %v3168
    %v3407 = vadd.f32 %v2697, %v3173
    %v3408 = vadd.f32 %v2698, %v3178
    %v3409 = vadd.f32 %v2699, %v3183
    %v3410 = vadd.f32 %v2700, %v3188
    %v3411 = vadd.f32 %v2701, %v3193
    %v3412 = vadd.f32 %v2702, %v3198
    %v3413 = vadd.f32 %v2703, %v3203
    %v3414 = vadd.f32 %v2704, %v3208
    %v3415 = vadd.f32 %v2705, %v3213
    %v3416 = vadd.f32 %v2706, %v3218
    %v3417 = vadd.f32 %v2707, %v3223
    %v3418 = vadd.f32 %v2708, %v3228
    %v3419 = vadd.f32 %v2709, %v3233
    %v3420 = vadd.f32 %v2710, %v3238
    %v3421 = vadd.f32 %v2711, %v3243
    %v3422 = vadd.f32 %v2712, %v3248
    %v3423 = vadd.f32 %v2713, %v3253
    %v3424 = vadd.f32 %v2714, %v3258
    %v3425 = vadd.f32 %v2715, %v3263
    %v3426 = vadd.f32 %v2716, %v3268
    %v3427 = vadd.f32 %v2717, %v3273
    %v3428 = vadd.f32 %v2718, %v3278
    %v3429 = vadd.f32 %v2719, %v3283
    %v3430 = vadd.f32 %v2720, %v3288
    %v3431 = vadd.f32 %v2721, %v3293
    %v3432 = vadd.f32 %v2722, %v3298
    %v3433 = vadd.f32 %v2723, %v3303
    %v3434 = vadd.f32 %v2724, %v3308
    %v3435 = vadd.f32 %v2725, %v3313
    %v3436 = vadd.f32 %v2726, %v3318
    %v3437 = vadd.f32 %v2727, %v3323
    %v3438 = vadd.f32 %v2728, %v3328
    %v3439 = vadd.f32 %v2729, %v3333
    %v3440 = vadd.f32 %v2730, %v3338
    %v3441 = vadd.f32 %v2731, %v3343
    %v3442 = vadd.f32 %v2732, %v3348
    %v3443 = vadd.f32 %v2733, %v3353
    %v3444 = vadd.f32 %v2734, %v3358
    %v3445 = vadd.f32 %v2735, %v3363
    %v3446 = vadd.f32 %v2736, %v3368
    %v3447 = vadd.f32 %v2737, %v3373
    %v3448 = vadd.f32 %v2738, %v3378
    %v3449 = vadd.f32 %v2739, %v3383
    %v3450 = vld [vmem:[%s2029 + $0x2] sm:$0xff]
    %v3451 = vld [vmem:[%s2029 + $0xa] sm:$0xff]
    %v3452 = vld [vmem:[%s2029 + $0x1a] sm:$0xff]
    %v3453 = vld [vmem:[%s2029 + $0x22] sm:$0xff]
    %v3454 = vld [vmem:[%s2029 + $0x32] sm:$0xff]
    %v3455 = vld [vmem:[%s2029 + $0x3a] sm:$0xff]
    %v3456 = vld [vmem:[%s2029 + $0x4a] sm:$0xff]
    %v3457 = vld [vmem:[%s2029 + $0x52] sm:$0xff]
    %v3458 = vld [vmem:[%s2029 + $0x62] sm:$0xff]
    %v3459 = vld [vmem:[%s2029 + $0x6a] sm:$0xff]
    %v3460 = vld [vmem:[%s2029 + $0x7a] sm:$0xff]
    %v3461 = vld [vmem:[%s2029 + $0x82] sm:$0xff]
    %v3462 = vld [vmem:[%s2029 + $0x92] sm:$0xff]
    %v3463 = vld [vmem:[%s2029 + $0x9a] sm:$0xff]
    %v3464 = vld [vmem:[%s2029 + $0xaa] sm:$0xff]
    %v3465 = vld [vmem:[%s2029 + $0xb2] sm:$0xff]
    %v3466 = vld [vmem:[%s2029 + $0xc2] sm:$0xff]
    %v3467 = vld [vmem:[%s2029 + $0xca] sm:$0xff]
    %v3468 = vld [vmem:[%s2029 + $0xda] sm:$0xff]
    %v3469 = vld [vmem:[%s2029 + $0xe2] sm:$0xff]
    %v3470 = vld [vmem:[%s2029 + $0xf2] sm:$0xff]
    %v3471 = vld [vmem:[%s2029 + $0xfa] sm:$0xff]
    %v3472 = vld [vmem:[%s2029 + $0x10a] sm:$0xff]
    %v3473 = vld [vmem:[%s2029 + $0x112] sm:$0xff]
    %v3474 = vld [vmem:[%s2029 + $0x122] sm:$0xff]
    %v3475 = vld [vmem:[%s2029 + $0x12a] sm:$0xff]
    %v3476 = vld [vmem:[%s2029 + $0x13a] sm:$0xff]
    %v3477 = vld [vmem:[%s2029 + $0x142] sm:$0xff]
    %v3478 = vld [vmem:[%s2029 + $0x152] sm:$0xff]
    %v3479 = vld [vmem:[%s2029 + $0x15a] sm:$0xff]
    %v3480 = vld [vmem:[%s2029 + $0x16a] sm:$0xff]
    %v3481 = vld [vmem:[%s2029 + $0x172] sm:$0xff]
    %v3482 = vld [vmem:[%s2029 + $0x1b2] sm:$0xff]
    %v3483 = vld [vmem:[%s2029 + $0x1ba] sm:$0xff]
    %v3484 = vld [vmem:[%s2029 + $0x1ca] sm:$0xff]
    %v3485 = vld [vmem:[%s2029 + $0x1d2] sm:$0xff]
    %v3486 = vld [vmem:[%s2029 + $0x1e2] sm:$0xff]
    %v3487 = vld [vmem:[%s2029 + $0x1ea] sm:$0xff]
    %v3488 = vld [vmem:[%s2029 + $0x1fa] sm:$0xff]
    %v3489 = vld [vmem:[%s2029 + $0x202] sm:$0xff]
    %v3490 = vld [vmem:[%s2029 + $0x212] sm:$0xff]
    %v3491 = vld [vmem:[%s2029 + $0x21a] sm:$0xff]
    %v3492 = vld [vmem:[%s2029 + $0x22a] sm:$0xff]
    %v3493 = vld [vmem:[%s2029 + $0x232] sm:$0xff]
    %v3494 = vld [vmem:[%s2029 + $0x242] sm:$0xff]
    %v3495 = vld [vmem:[%s2029 + $0x24a] sm:$0xff]
    %v3496 = vld [vmem:[%s2029 + $0x25a] sm:$0xff]
    %v3497 = vld [vmem:[%s2029 + $0x262] sm:$0xff]
    %v3498 = vld [vmem:[%s2029 + $0x272] sm:$0xff]
    %v3499 = vld [vmem:[%s2029 + $0x27a] sm:$0xff]
    %v3500 = vld [vmem:[%s2029 + $0x28a] sm:$0xff]
    %v3501 = vld [vmem:[%s2029 + $0x292] sm:$0xff]
    %v3502 = vld [vmem:[%s2029 + $0x2a2] sm:$0xff]
    %v3503 = vld [vmem:[%s2029 + $0x2aa] sm:$0xff]
    %v3504 = vld [vmem:[%s2029 + $0x2ba] sm:$0xff]
    %v3505 = vld [vmem:[%s2029 + $0x2c2] sm:$0xff]
    %v3506 = vld [vmem:[%s2029 + $0x2d2] sm:$0xff]
    %v3507 = vld [vmem:[%s2029 + $0x2da] sm:$0xff]
    %v3508 = vld [vmem:[%s2029 + $0x2ea] sm:$0xff]
    %v3509 = vld [vmem:[%s2029 + $0x2f2] sm:$0xff]
    %v3510 = vld [vmem:[%s2029 + $0x302] sm:$0xff]
    %v3511 = vld [vmem:[%s2029 + $0x30a] sm:$0xff]
    %v3512 = vld [vmem:[%s2029 + $0x31a] sm:$0xff]
    %v3513 = vld [vmem:[%s2029 + $0x322] sm:$0xff]
    %s3514 = scalar_lea.vmem %s1, 160
    %v3515 = vld [vmem:[%s3514] sm:$0xff]
    %v3516 = vld [vmem:[%s3514 + $0x8] sm:$0xff]
    %v3517 = vld [vmem:[%s3514 + $0x10] sm:$0xff]
    %v3518 = vld [vmem:[%s3514 + $0x18] sm:$0xff]
    %v3520 = vsel %vm164, %v3450, 0
    %v3523 = vsel %vm164, %v3451, 0
    %v3526 = vsel %vm164, %v3452, 0
    %v3529 = vsel %vm164, %v3453, 0
    %v3532 = vsel %vm164, %v3454, 0
    %v3535 = vsel %vm164, %v3455, 0
    %v3538 = vsel %vm164, %v3456, 0
    %v3541 = vsel %vm164, %v3457, 0
    %v3544 = vsel %vm164, %v3458, 0
    %v3547 = vsel %vm164, %v3459, 0
    %v3550 = vsel %vm164, %v3460, 0
    %v3553 = vsel %vm164, %v3461, 0
    %v3556 = vsel %vm164, %v3462, 0
    %v3559 = vsel %vm164, %v3463, 0
    %v3562 = vsel %vm164, %v3464, 0
    %v3565 = vsel %vm164, %v3465, 0
    %v3568 = vsel %vm164, %v3466, 0
    %v3571 = vsel %vm164, %v3467, 0
    %v3574 = vsel %vm164, %v3468, 0
    %v3577 = vsel %vm164, %v3469, 0
    %v3580 = vsel %vm164, %v3470, 0
    %v3583 = vsel %vm164, %v3471, 0
    %v3586 = vsel %vm164, %v3472, 0
    %v3589 = vsel %vm164, %v3473, 0
    %v3592 = vsel %vm164, %v3474, 0
    %v3595 = vsel %vm164, %v3475, 0
    %v3598 = vsel %vm164, %v3476, 0
    %v3601 = vsel %vm164, %v3477, 0
    %v3604 = vsel %vm164, %v3478, 0
    %v3607 = vsel %vm164, %v3479, 0
    %v3610 = vsel %vm164, %v3480, 0
    %v3613 = vsel %vm164, %v3481, 0
    %v3616 = vsel %vm164, %v3482, 0
    %v3619 = vsel %vm164, %v3483, 0
    %v3622 = vsel %vm164, %v3484, 0
    %v3625 = vsel %vm164, %v3485, 0
    %v3628 = vsel %vm164, %v3486, 0
    %v3631 = vsel %vm164, %v3487, 0
    %v3634 = vsel %vm164, %v3488, 0
    %v3637 = vsel %vm164, %v3489, 0
    %v3640 = vsel %vm164, %v3490, 0
    %v3643 = vsel %vm164, %v3491, 0
    %v3646 = vsel %vm164, %v3492, 0
    %v3649 = vsel %vm164, %v3493, 0
    %v3652 = vsel %vm164, %v3494, 0
    %v3655 = vsel %vm164, %v3495, 0
    %v3658 = vsel %vm164, %v3496, 0
    %v3661 = vsel %vm164, %v3497, 0
    %v3664 = vsel %vm164, %v3498, 0
    %v3667 = vsel %vm164, %v3499, 0
    %v3670 = vsel %vm164, %v3500, 0
    %v3673 = vsel %vm164, %v3501, 0
    %v3676 = vsel %vm164, %v3502, 0
    %v3679 = vsel %vm164, %v3503, 0
    %v3682 = vsel %vm164, %v3504, 0
    %v3685 = vsel %vm164, %v3505, 0
    %v3688 = vsel %vm164, %v3506, 0
    %v3691 = vsel %vm164, %v3507, 0
    %v3694 = vsel %vm164, %v3508, 0
    %v3697 = vsel %vm164, %v3509, 0
    %v3700 = vsel %vm164, %v3510, 0
    %v3703 = vsel %vm164, %v3511, 0
    %v3706 = vsel %vm164, %v3512, 0
    %v3709 = vsel %vm164, %v3513, 0
    %3711 = vmatprep.subr.mxu0 0.0
    %3712 = vmatpush1.msra.mxu0 %v3515
    %3713 = vmatprep.subr.mxu0 0.0
    %3714 = vmatpush1.msra.mxu0 %v3516
    %3715 = vmatprep.subr.mxu0 0.0
    %3716 = vmatpush1.msra.mxu0 %v3517
    %3717 = vmatprep.subr.mxu0 0.0
    %3718 = vmatpush1.msra.mxu0 %v3518
    %3719 = vmatprep.subr.mxu0 0.0
    %3720 = vmatpush1.msra.mxu0 0.0
    %3721 = vmatprep.subr.mxu0 0.0
    %3722 = vmatpush1.msra.mxu0 0.0
    %3723 = vmatprep.subr.mxu0 0.0
    %3724 = vmatpush1.msra.mxu0 0.0
    %3725 = vmatprep.subr.mxu0 0.0
    %3726 = vmatpush1.msra.mxu0 0.0
    %3727 = vmatprep.subr.mxu0 0.0
    %3728 = vmatpush1.msra.mxu0 0.0
    %3729 = vmatprep.subr.mxu0 0.0
    %3730 = vmatpush1.msra.mxu0 0.0
    %3731 = vmatprep.subr.mxu0 0.0
    %3732 = vmatpush1.msra.mxu0 0.0
    %3733 = vmatprep.subr.mxu0 0.0
    %3734 = vmatpush1.msra.mxu0 0.0
    %3735 = vmatprep.subr.mxu0 0.0
    %3736 = vmatpush1.msra.mxu0 0.0
    %3737 = vmatprep.subr.mxu0 0.0
    %3738 = vmatpush1.msra.mxu0 0.0
    %3739 = vmatprep.subr.mxu0 0.0
    %3740 = vmatpush1.msra.mxu0 0.0
    %3741 = vmatprep.subr.mxu0 0.0
    %3742 = vmatpush1.msra.mxu0 0.0
    %3743 = vmatprep.subr.mxu0 0.0
    %3744 = vmatpush1.msra.mxu0 0.0
    %3745 = vmatprep.subr.mxu0 0.0
    %3746 = vmatpush1.msra.mxu0 0.0
    %3747 = vmatprep.subr.mxu0 0.0
    %3748 = vmatpush1.msra.mxu0 0.0
    %3749 = vmatprep.subr.mxu0 0.0
    %3750 = vmatpush1.msra.mxu0 0.0
    %3751 = vmatprep.subr.mxu0 0.0
    %3752 = vmatpush1.msra.mxu0 0.0
    %3753 = vmatprep.subr.mxu0 0.0
    %3754 = vmatpush1.msra.mxu0 0.0
    %3755 = vmatprep.subr.mxu0 0.0
    %3756 = vmatpush1.msra.mxu0 0.0
    %3757 = vmatprep.subr.mxu0 0.0
    %3758 = vmatpush1.msra.mxu0 0.0
    %3759 = vmatprep.subr.mxu0 0.0
    %3760 = vmatpush1.msra.mxu0 0.0
    %3761 = vmatprep.subr.mxu0 0.0
    %3762 = vmatpush1.msra.mxu0 0.0
    %3763 = vmatprep.subr.mxu0 0.0
    %3764 = vmatpush1.msra.mxu0 0.0
    %3765 = vmatprep.subr.mxu0 0.0
    %3766 = vmatpush1.msra.mxu0 0.0
    %3767 = vmatprep.subr.mxu0 0.0
    %3768 = vmatpush1.msra.mxu0 0.0
    %3769 = vmatprep.subr.mxu0 0.0
    %3770 = vmatpush1.msra.mxu0 0.0
    %3771 = vmatprep.subr.mxu0 0.0
    %3772 = vmatpush1.msra.mxu0 0.0
    %3773 = vmatprep.subr.mxu0 0.0
    %3774 = vmatpush1.msra.mxu0 0.0
    %3775 = vmatprep.mubr.f32.mxu0 0.0
    %3776 = vmatmul.mubr.f32.gmra.mrb[0].mxu0 %v3520
    %v3777 = vpop.f32.mrb[0].mxu0
    %v3778 = vadd.f32 0.0, %v3777
    %v3779 = vpop.f32.mrb[0].mxu0
    %3780 = vmatprep.mubr.f32.mxu0 0.0
    %3781 = vmatmul.mubr.f32.gmra.mrb[0].mxu0 %v3523
    %v3782 = vpop.f32.mrb[0].mxu0
    %v3783 = vadd.f32 0.0, %v3782
    %v3784 = vpop.f32.mrb[0].mxu0
    %3785 = vmatprep.mubr.f32.mxu0 0.0
    %3786 = vmatmul.mubr.f32.gmra.mrb[0].mxu0 %v3526
    %v3787 = vpop.f32.mrb[0].mxu0
    %v3788 = vadd.f32 0.0, %v3787
    %v3789 = vpop.f32.mrb[0].mxu0
    %3790 = vmatprep.mubr.f32.mxu0 0.0
    %3791 = vmatmul.mubr.f32.gmra.mrb[0].mxu0 %v3529
    %v3792 = vpop.f32.mrb[0].mxu0
    %v3793 = vadd.f32 0.0, %v3792
    %v3794 = vpop.f32.mrb[0].mxu0
    %3795 = vmatprep.mubr.f32.mxu0 0.0
    %3796 = vmatmul.mubr.f32.gmra.mrb[0].mxu0 %v3532
    %v3797 = vpop.f32.mrb[0].mxu0
    %v3798 = vadd.f32 0.0, %v3797
    %v3799 = vpop.f32.mrb[0].mxu0
    %3800 = vmatprep.mubr.f32.mxu0 0.0
    %3801 = vmatmul.mubr.f32.gmra.mrb[0].mxu0 %v3535
    %v3802 = vpop.f32.mrb[0].mxu0
    %v3803 = vadd.f32 0.0, %v3802
    %v3804 = vpop.f32.mrb[0].mxu0
    %3805 = vmatprep.mubr.f32.mxu0 0.0
    %3806 = vmatmul.mubr.f32.gmra.mrb[0].mxu0 %v3538
    %v3807 = vpop.f32.mrb[0].mxu0
    %v3808 = vadd.f32 0.0, %v3807
    %v3809 = vpop.f32.mrb[0].mxu0
    %3810 = vmatprep.mubr.f32.mxu0 0.0
    %3811 = vmatmul.mubr.f32.gmra.mrb[0].mxu0 %v3541
    %v3812 = vpop.f32.mrb[0].mxu0
    %v3813 = vadd.f32 0.0, %v3812
    %v3814 = vpop.f32.mrb[0].mxu0
    %3815 = vmatprep.mubr.f32.mxu0 0.0
    %3816 = vmatmul.mubr.f32.gmra.mrb[0].mxu0 %v3544
    %v3817 = vpop.f32.mrb[0].mxu0
    %v3818 = vadd.f32 0.0, %v3817
    %v3819 = vpop.f32.mrb[0].mxu0
    %3820 = vmatprep.mubr.f32.mxu0 0.0
    %3821 = vmatmul.mubr.f32.gmra.mrb[0].mxu0 %v3547
    %v3822 = vpop.f32.mrb[0].mxu0
    %v3823 = vadd.f32 0.0, %v3822
    %v3824 = vpop.f32.mrb[0].mxu0
    %3825 = vmatprep.mubr.f32.mxu0 0.0
    %3826 = vmatmul.mubr.f32.gmra.mrb[0].mxu0 %v3550
    %v3827 = vpop.f32.mrb[0].mxu0
    %v3828 = vadd.f32 0.0, %v3827
    %v3829 = vpop.f32.mrb[0].mxu0
    %3830 = vmatprep.mubr.f32.mxu0 0.0
    %3831 = vmatmul.mubr.f32.gmra.mrb[0].mxu0 %v3553
    %v3832 = vpop.f32.mrb[0].mxu0
    %v3833 = vadd.f32 0.0, %v3832
    %v3834 = vpop.f32.mrb[0].mxu0
    %3835 = vmatprep.mubr.f32.mxu0 0.0
    %3836 = vmatmul.mubr.f32.gmra.mrb[0].mxu0 %v3556
    %v3837 = vpop.f32.mrb[0].mxu0
    %v3838 = vadd.f32 0.0, %v3837
    %v3839 = vpop.f32.mrb[0].mxu0
    %3840 = vmatprep.mubr.f32.mxu0 0.0
    %3841 = vmatmul.mubr.f32.gmra.mrb[0].mxu0 %v3559
    %v3842 = vpop.f32.mrb[0].mxu0
    %v3843 = vadd.f32 0.0, %v3842
    %v3844 = vpop.f32.mrb[0].mxu0
    %3845 = vmatprep.mubr.f32.mxu0 0.0
    %3846 = vmatmul.mubr.f32.gmra.mrb[0].mxu0 %v3562
    %v3847 = vpop.f32.mrb[0].mxu0
    %v3848 = vadd.f32 0.0, %v3847
    %v3849 = vpop.f32.mrb[0].mxu0
    %3850 = vmatprep.mubr.f32.mxu0 0.0
    %3851 = vmatmul.mubr.f32.gmra.mrb[0].mxu0 %v3565
    %v3852 = vpop.f32.mrb[0].mxu0
    %v3853 = vadd.f32 0.0, %v3852
    %v3854 = vpop.f32.mrb[0].mxu0
    %3855 = vmatprep.mubr.f32.mxu0 0.0
    %3856 = vmatmul.mubr.f32.gmra.mrb[0].mxu0 %v3568
    %v3857 = vpop.f32.mrb[0].mxu0
    %v3858 = vadd.f32 0.0, %v3857
    %v3859 = vpop.f32.mrb[0].mxu0
    %3860 = vmatprep.mubr.f32.mxu0 0.0
    %3861 = vmatmul.mubr.f32.gmra.mrb[0].mxu0 %v3571
    %v3862 = vpop.f32.mrb[0].mxu0
    %v3863 = vadd.f32 0.0, %v3862
    %v3864 = vpop.f32.mrb[0].mxu0
    %3865 = vmatprep.mubr.f32.mxu0 0.0
    %3866 = vmatmul.mubr.f32.gmra.mrb[0].mxu0 %v3574
    %v3867 = vpop.f32.mrb[0].mxu0
    %v3868 = vadd.f32 0.0, %v3867
    %v3869 = vpop.f32.mrb[0].mxu0
    %3870 = vmatprep.mubr.f32.mxu0 0.0
    %3871 = vmatmul.mubr.f32.gmra.mrb[0].mxu0 %v3577
    %v3872 = vpop.f32.mrb[0].mxu0
    %v3873 = vadd.f32 0.0, %v3872
    %v3874 = vpop.f32.mrb[0].mxu0
    %3875 = vmatprep.mubr.f32.mxu0 0.0
    %3876 = vmatmul.mubr.f32.gmra.mrb[0].mxu0 %v3580
    %v3877 = vpop.f32.mrb[0].mxu0
    %v3878 = vadd.f32 0.0, %v3877
    %v3879 = vpop.f32.mrb[0].mxu0
    %3880 = vmatprep.mubr.f32.mxu0 0.0
    %3881 = vmatmul.mubr.f32.gmra.mrb[0].mxu0 %v3583
    %v3882 = vpop.f32.mrb[0].mxu0
    %v3883 = vadd.f32 0.0, %v3882
    %v3884 = vpop.f32.mrb[0].mxu0
    %3885 = vmatprep.mubr.f32.mxu0 0.0
    %3886 = vmatmul.mubr.f32.gmra.mrb[0].mxu0 %v3586
    %v3887 = vpop.f32.mrb[0].mxu0
    %v3888 = vadd.f32 0.0, %v3887
    %v3889 = vpop.f32.mrb[0].mxu0
    %3890 = vmatprep.mubr.f32.mxu0 0.0
    %3891 = vmatmul.mubr.f32.gmra.mrb[0].mxu0 %v3589
    %v3892 = vpop.f32.mrb[0].mxu0
    %v3893 = vadd.f32 0.0, %v3892
    %v3894 = vpop.f32.mrb[0].mxu0
    %3895 = vmatprep.mubr.f32.mxu0 0.0
    %3896 = vmatmul.mubr.f32.gmra.mrb[0].mxu0 %v3592
    %v3897 = vpop.f32.mrb[0].mxu0
    %v3898 = vadd.f32 0.0, %v3897
    %v3899 = vpop.f32.mrb[0].mxu0
    %3900 = vmatprep.mubr.f32.mxu0 0.0
    %3901 = vmatmul.mubr.f32.gmra.mrb[0].mxu0 %v3595
    %v3902 = vpop.f32.mrb[0].mxu0
    %v3903 = vadd.f32 0.0, %v3902
    %v3904 = vpop.f32.mrb[0].mxu0
    %3905 = vmatprep.mubr.f32.mxu0 0.0
    %3906 = vmatmul.mubr.f32.gmra.mrb[0].mxu0 %v3598
    %v3907 = vpop.f32.mrb[0].mxu0
    %v3908 = vadd.f32 0.0, %v3907
    %v3909 = vpop.f32.mrb[0].mxu0
    %3910 = vmatprep.mubr.f32.mxu0 0.0
    %3911 = vmatmul.mubr.f32.gmra.mrb[0].mxu0 %v3601
    %v3912 = vpop.f32.mrb[0].mxu0
    %v3913 = vadd.f32 0.0, %v3912
    %v3914 = vpop.f32.mrb[0].mxu0
    %3915 = vmatprep.mubr.f32.mxu0 0.0
    %3916 = vmatmul.mubr.f32.gmra.mrb[0].mxu0 %v3604
    %v3917 = vpop.f32.mrb[0].mxu0
    %v3918 = vadd.f32 0.0, %v3917
    %v3919 = vpop.f32.mrb[0].mxu0
    %3920 = vmatprep.mubr.f32.mxu0 0.0
    %3921 = vmatmul.mubr.f32.gmra.mrb[0].mxu0 %v3607
    %v3922 = vpop.f32.mrb[0].mxu0
    %v3923 = vadd.f32 0.0, %v3922
    %v3924 = vpop.f32.mrb[0].mxu0
    %3925 = vmatprep.mubr.f32.mxu0 0.0
    %3926 = vmatmul.mubr.f32.gmra.mrb[0].mxu0 %v3610
    %v3927 = vpop.f32.mrb[0].mxu0
    %v3928 = vadd.f32 0.0, %v3927
    %v3929 = vpop.f32.mrb[0].mxu0
    %3930 = vmatprep.mubr.f32.mxu0 0.0
    %3931 = vmatmul.mubr.f32.gmra.mrb[0].mxu0 %v3613
    %v3932 = vpop.f32.mrb[0].mxu0
    %v3933 = vadd.f32 0.0, %v3932
    %v3934 = vpop.f32.mrb[0].mxu0
    %3935 = vmatprep.mubr.f32.mxu0 0.0
    %3936 = vmatmul.mubr.f32.gmra.mrb[0].mxu0 %v3616
    %v3937 = vpop.f32.mrb[0].mxu0
    %v3938 = vadd.f32 0.0, %v3937
    %v3939 = vpop.f32.mrb[0].mxu0
    %3940 = vmatprep.mubr.f32.mxu0 0.0
    %3941 = vmatmul.mubr.f32.gmra.mrb[0].mxu0 %v3619
    %v3942 = vpop.f32.mrb[0].mxu0
    %v3943 = vadd.f32 0.0, %v3942
    %v3944 = vpop.f32.mrb[0].mxu0
    %3945 = vmatprep.mubr.f32.mxu0 0.0
    %3946 = vmatmul.mubr.f32.gmra.mrb[0].mxu0 %v3622
    %v3947 = vpop.f32.mrb[0].mxu0
    %v3948 = vadd.f32 0.0, %v3947
    %v3949 = vpop.f32.mrb[0].mxu0
    %3950 = vmatprep.mubr.f32.mxu0 0.0
    %3951 = vmatmul.mubr.f32.gmra.mrb[0].mxu0 %v3625
    %v3952 = vpop.f32.mrb[0].mxu0
    %v3953 = vadd.f32 0.0, %v3952
    %v3954 = vpop.f32.mrb[0].mxu0
    %3955 = vmatprep.mubr.f32.mxu0 0.0
    %3956 = vmatmul.mubr.f32.gmra.mrb[0].mxu0 %v3628
    %v3957 = vpop.f32.mrb[0].mxu0
    %v3958 = vadd.f32 0.0, %v3957
    %v3959 = vpop.f32.mrb[0].mxu0
    %3960 = vmatprep.mubr.f32.mxu0 0.0
    %3961 = vmatmul.mubr.f32.gmra.mrb[0].mxu0 %v3631
    %v3962 = vpop.f32.mrb[0].mxu0
    %v3963 = vadd.f32 0.0, %v3962
    %v3964 = vpop.f32.mrb[0].mxu0
    %3965 = vmatprep.mubr.f32.mxu0 0.0
    %3966 = vmatmul.mubr.f32.gmra.mrb[0].mxu0 %v3634
    %v3967 = vpop.f32.mrb[0].mxu0
    %v3968 = vadd.f32 0.0, %v3967
    %v3969 = vpop.f32.mrb[0].mxu0
    %3970 = vmatprep.mubr.f32.mxu0 0.0
    %3971 = vmatmul.mubr.f32.gmra.mrb[0].mxu0 %v3637
    %v3972 = vpop.f32.mrb[0].mxu0
    %v3973 = vadd.f32 0.0, %v3972
    %v3974 = vpop.f32.mrb[0].mxu0
    %3975 = vmatprep.mubr.f32.mxu0 0.0
    %3976 = vmatmul.mubr.f32.gmra.mrb[0].mxu0 %v3640
    %v3977 = vpop.f32.mrb[0].mxu0
    %v3978 = vadd.f32 0.0, %v3977
    %v3979 = vpop.f32.mrb[0].mxu0
    %3980 = vmatprep.mubr.f32.mxu0 0.0
    %3981 = vmatmul.mubr.f32.gmra.mrb[0].mxu0 %v3643
    %v3982 = vpop.f32.mrb[0].mxu0
    %v3983 = vadd.f32 0.0, %v3982
    %v3984 = vpop.f32.mrb[0].mxu0
    %3985 = vmatprep.mubr.f32.mxu0 0.0
    %3986 = vmatmul.mubr.f32.gmra.mrb[0].mxu0 %v3646
    %v3987 = vpop.f32.mrb[0].mxu0
    %v3988 = vadd.f32 0.0, %v3987
    %v3989 = vpop.f32.mrb[0].mxu0
    %3990 = vmatprep.mubr.f32.mxu0 0.0
    %3991 = vmatmul.mubr.f32.gmra.mrb[0].mxu0 %v3649
    %v3992 = vpop.f32.mrb[0].mxu0
    %v3993 = vadd.f32 0.0, %v3992
    %v3994 = vpop.f32.mrb[0].mxu0
    %3995 = vmatprep.mubr.f32.mxu0 0.0
    %3996 = vmatmul.mubr.f32.gmra.mrb[0].mxu0 %v3652
    %v3997 = vpop.f32.mrb[0].mxu0
    %v3998 = vadd.f32 0.0, %v3997
    %v3999 = vpop.f32.mrb[0].mxu0
    %4000 = vmatprep.mubr.f32.mxu0 0.0
    %4001 = vmatmul.mubr.f32.gmra.mrb[0].mxu0 %v3655
    %v4002 = vpop.f32.mrb[0].mxu0
    %v4003 = vadd.f32 0.0, %v4002
    %v4004 = vpop.f32.mrb[0].mxu0
    %4005 = vmatprep.mubr.f32.mxu0 0.0
    %4006 = vmatmul.mubr.f32.gmra.mrb[0].mxu0 %v3658
    %v4007 = vpop.f32.mrb[0].mxu0
    %v4008 = vadd.f32 0.0, %v4007
    %v4009 = vpop.f32.mrb[0].mxu0
    %4010 = vmatprep.mubr.f32.mxu0 0.0
    %4011 = vmatmul.mubr.f32.gmra.mrb[0].mxu0 %v3661
    %v4012 = vpop.f32.mrb[0].mxu0
    %v4013 = vadd.f32 0.0, %v4012
    %v4014 = vpop.f32.mrb[0].mxu0
    %4015 = vmatprep.mubr.f32.mxu0 0.0
    %4016 = vmatmul.mubr.f32.gmra.mrb[0].mxu0 %v3664
    %v4017 = vpop.f32.mrb[0].mxu0
    %v4018 = vadd.f32 0.0, %v4017
    %v4019 = vpop.f32.mrb[0].mxu0
    %4020 = vmatprep.mubr.f32.mxu0 0.0
    %4021 = vmatmul.mubr.f32.gmra.mrb[0].mxu0 %v3667
    %v4022 = vpop.f32.mrb[0].mxu0
    %v4023 = vadd.f32 0.0, %v4022
    %v4024 = vpop.f32.mrb[0].mxu0
    %4025 = vmatprep.mubr.f32.mxu0 0.0
    %4026 = vmatmul.mubr.f32.gmra.mrb[0].mxu0 %v3670
    %v4027 = vpop.f32.mrb[0].mxu0
    %v4028 = vadd.f32 0.0, %v4027
    %v4029 = vpop.f32.mrb[0].mxu0
    %4030 = vmatprep.mubr.f32.mxu0 0.0
    %4031 = vmatmul.mubr.f32.gmra.mrb[0].mxu0 %v3673
    %v4032 = vpop.f32.mrb[0].mxu0
    %v4033 = vadd.f32 0.0, %v4032
    %v4034 = vpop.f32.mrb[0].mxu0
    %4035 = vmatprep.mubr.f32.mxu0 0.0
    %4036 = vmatmul.mubr.f32.gmra.mrb[0].mxu0 %v3676
    %v4037 = vpop.f32.mrb[0].mxu0
    %v4038 = vadd.f32 0.0, %v4037
    %v4039 = vpop.f32.mrb[0].mxu0
    %4040 = vmatprep.mubr.f32.mxu0 0.0
    %4041 = vmatmul.mubr.f32.gmra.mrb[0].mxu0 %v3679
    %v4042 = vpop.f32.mrb[0].mxu0
    %v4043 = vadd.f32 0.0, %v4042
    %v4044 = vpop.f32.mrb[0].mxu0
    %4045 = vmatprep.mubr.f32.mxu0 0.0
    %4046 = vmatmul.mubr.f32.gmra.mrb[0].mxu0 %v3682
    %v4047 = vpop.f32.mrb[0].mxu0
    %v4048 = vadd.f32 0.0, %v4047
    %v4049 = vpop.f32.mrb[0].mxu0
    %4050 = vmatprep.mubr.f32.mxu0 0.0
    %4051 = vmatmul.mubr.f32.gmra.mrb[0].mxu0 %v3685
    %v4052 = vpop.f32.mrb[0].mxu0
    %v4053 = vadd.f32 0.0, %v4052
    %v4054 = vpop.f32.mrb[0].mxu0
    %4055 = vmatprep.mubr.f32.mxu0 0.0
    %4056 = vmatmul.mubr.f32.gmra.mrb[0].mxu0 %v3688
    %v4057 = vpop.f32.mrb[0].mxu0
    %v4058 = vadd.f32 0.0, %v4057
    %v4059 = vpop.f32.mrb[0].mxu0
    %4060 = vmatprep.mubr.f32.mxu0 0.0
    %4061 = vmatmul.mubr.f32.gmra.mrb[0].mxu0 %v3691
    %v4062 = vpop.f32.mrb[0].mxu0
    %v4063 = vadd.f32 0.0, %v4062
    %v4064 = vpop.f32.mrb[0].mxu0
    %4065 = vmatprep.mubr.f32.mxu0 0.0
    %4066 = vmatmul.mubr.f32.gmra.mrb[0].mxu0 %v3694
    %v4067 = vpop.f32.mrb[0].mxu0
    %v4068 = vadd.f32 0.0, %v4067
    %v4069 = vpop.f32.mrb[0].mxu0
    %4070 = vmatprep.mubr.f32.mxu0 0.0
    %4071 = vmatmul.mubr.f32.gmra.mrb[0].mxu0 %v3697
    %v4072 = vpop.f32.mrb[0].mxu0
    %v4073 = vadd.f32 0.0, %v4072
    %v4074 = vpop.f32.mrb[0].mxu0
    %4075 = vmatprep.mubr.f32.mxu0 0.0
    %4076 = vmatmul.mubr.f32.gmra.mrb[0].mxu0 %v3700
    %v4077 = vpop.f32.mrb[0].mxu0
    %v4078 = vadd.f32 0.0, %v4077
    %v4079 = vpop.f32.mrb[0].mxu0
    %4080 = vmatprep.mubr.f32.mxu0 0.0
    %4081 = vmatmul.mubr.f32.gmra.mrb[0].mxu0 %v3703
    %v4082 = vpop.f32.mrb[0].mxu0
    %v4083 = vadd.f32 0.0, %v4082
    %v4084 = vpop.f32.mrb[0].mxu0
    %4085 = vmatprep.mubr.f32.mxu0 0.0
    %4086 = vmatmul.mubr.f32.gmra.mrb[0].mxu0 %v3706
    %v4087 = vpop.f32.mrb[0].mxu0
    %v4088 = vadd.f32 0.0, %v4087
    %v4089 = vpop.f32.mrb[0].mxu0
    %4090 = vmatprep.mubr.f32.mxu0 0.0
    %4091 = vmatmul.mubr.f32.gmra.mrb[0].mxu0 %v3709
    %v4092 = vpop.f32.mrb[0].mxu0
    %v4093 = vadd.f32 0.0, %v4092
    %v4094 = vpop.f32.mrb[0].mxu0
    %4095 = vdwg.mxu0
    %v4096 = vadd.f32 %v3386, %v3778
    %v4097 = vadd.f32 %v3387, %v3783
    %v4098 = vadd.f32 %v3388, %v3788
    %v4099 = vadd.f32 %v3389, %v3793
    %v4100 = vadd.f32 %v3390, %v3798
    %v4101 = vadd.f32 %v3391, %v3803
    %v4102 = vadd.f32 %v3392, %v3808
    %v4103 = vadd.f32 %v3393, %v3813
    %v4104 = vadd.f32 %v3394, %v3818
    %v4105 = vadd.f32 %v3395, %v3823
    %v4106 = vadd.f32 %v3396, %v3828
    %v4107 = vadd.f32 %v3397, %v3833
    %v4108 = vadd.f32 %v3398, %v3838
    %v4109 = vadd.f32 %v3399, %v3843
    %v4110 = vadd.f32 %v3400, %v3848
    %v4111 = vadd.f32 %v3401, %v3853
    %v4112 = vadd.f32 %v3402, %v3858
    %v4113 = vadd.f32 %v3403, %v3863
    %v4114 = vadd.f32 %v3404, %v3868
    %v4115 = vadd.f32 %v3405, %v3873
    %v4116 = vadd.f32 %v3406, %v3878
    %v4117 = vadd.f32 %v3407, %v3883
    %v4118 = vadd.f32 %v3408, %v3888
    %v4119 = vadd.f32 %v3409, %v3893
    %v4120 = vadd.f32 %v3410, %v3898
    %v4121 = vadd.f32 %v3411, %v3903
    %v4122 = vadd.f32 %v3412, %v3908
    %v4123 = vadd.f32 %v3413, %v3913
    %v4124 = vadd.f32 %v3414, %v3918
    %v4125 = vadd.f32 %v3415, %v3923
    %v4126 = vadd.f32 %v3416, %v3928
    %v4127 = vadd.f32 %v3417, %v3933
    %v4128 = vadd.f32 %v3418, %v3938
    %v4129 = vadd.f32 %v3419, %v3943
    %v4130 = vadd.f32 %v3420, %v3948
    %v4131 = vadd.f32 %v3421, %v3953
    %v4132 = vadd.f32 %v3422, %v3958
    %v4133 = vadd.f32 %v3423, %v3963
    %v4134 = vadd.f32 %v3424, %v3968
    %v4135 = vadd.f32 %v3425, %v3973
    %v4136 = vadd.f32 %v3426, %v3978
    %v4137 = vadd.f32 %v3427, %v3983
    %v4138 = vadd.f32 %v3428, %v3988
    %v4139 = vadd.f32 %v3429, %v3993
    %v4140 = vadd.f32 %v3430, %v3998
    %v4141 = vadd.f32 %v3431, %v4003
    %v4142 = vadd.f32 %v3432, %v4008
    %v4143 = vadd.f32 %v3433, %v4013
    %v4144 = vadd.f32 %v3434, %v4018
    %v4145 = vadd.f32 %v3435, %v4023
    %v4146 = vadd.f32 %v3436, %v4028
    %v4147 = vadd.f32 %v3437, %v4033
    %v4148 = vadd.f32 %v3438, %v4038
    %v4149 = vadd.f32 %v3439, %v4043
    %v4150 = vadd.f32 %v3440, %v4048
    %v4151 = vadd.f32 %v3441, %v4053
    %v4152 = vadd.f32 %v3442, %v4058
    %v4153 = vadd.f32 %v3443, %v4063
    %v4154 = vadd.f32 %v3444, %v4068
    %v4155 = vadd.f32 %v3445, %v4073
    %v4156 = vadd.f32 %v3446, %v4078
    %v4157 = vadd.f32 %v3447, %v4083
    %v4158 = vadd.f32 %v3448, %v4088
    %v4159 = vadd.f32 %v3449, %v4093
    %s4160 = scalar_lea.vmem %s0, 48
    %v4161 = vld [vmem:[%s4160] sm:$0xff]
    %v4162 = vld [vmem:[%s4160 + $0x8] sm:$0xff]
    %v4163 = vld [vmem:[%s4160 + $0x18] sm:$0xff]
    %v4164 = vld [vmem:[%s4160 + $0x20] sm:$0xff]
    %v4165 = vld [vmem:[%s4160 + $0x30] sm:$0xff]
    %v4166 = vld [vmem:[%s4160 + $0x38] sm:$0xff]
    %v4167 = vld [vmem:[%s4160 + $0x48] sm:$0xff]
    %v4168 = vld [vmem:[%s4160 + $0x50] sm:$0xff]
    %v4169 = vld [vmem:[%s4160 + $0x60] sm:$0xff]
    %v4170 = vld [vmem:[%s4160 + $0x68] sm:$0xff]
    %v4171 = vld [vmem:[%s4160 + $0x78] sm:$0xff]
    %v4172 = vld [vmem:[%s4160 + $0x80] sm:$0xff]
    %v4173 = vld [vmem:[%s4160 + $0x90] sm:$0xff]
    %v4174 = vld [vmem:[%s4160 + $0x98] sm:$0xff]
    %v4175 = vld [vmem:[%s4160 + $0xa8] sm:$0xff]
    %v4176 = vld [vmem:[%s4160 + $0xb0] sm:$0xff]
    %v4177 = vld [vmem:[%s4160 + $0xc0] sm:$0xff]
    %v4178 = vld [vmem:[%s4160 + $0xc8] sm:$0xff]
    %v4179 = vld [vmem:[%s4160 + $0xd8] sm:$0xff]
    %v4180 = vld [vmem:[%s4160 + $0xe0] sm:$0xff]
    %v4181 = vld [vmem:[%s4160 + $0xf0] sm:$0xff]
    %v4182 = vld [vmem:[%s4160 + $0xf8] sm:$0xff]
    %v4183 = vld [vmem:[%s4160 + $0x108] sm:$0xff]
    %v4184 = vld [vmem:[%s4160 + $0x110] sm:$0xff]
    %v4185 = vld [vmem:[%s4160 + $0x120] sm:$0xff]
    %v4186 = vld [vmem:[%s4160 + $0x128] sm:$0xff]
    %v4187 = vld [vmem:[%s4160 + $0x138] sm:$0xff]
    %v4188 = vld [vmem:[%s4160 + $0x140] sm:$0xff]
    %v4189 = vld [vmem:[%s4160 + $0x150] sm:$0xff]
    %v4190 = vld [vmem:[%s4160 + $0x158] sm:$0xff]
    %v4191 = vld [vmem:[%s4160 + $0x168] sm:$0xff]
    %v4192 = vld [vmem:[%s4160 + $0x170] sm:$0xff]
    %v4193 = vld [vmem:[%s4160 + $0x1b0] sm:$0xff]
    %v4194 = vld [vmem:[%s4160 + $0x1b8] sm:$0xff]
    %v4195 = vld [vmem:[%s4160 + $0x1c8] sm:$0xff]
    %v4196 = vld [vmem:[%s4160 + $0x1d0] sm:$0xff]
    %v4197 = vld [vmem:[%s4160 + $0x1e0] sm:$0xff]
    %v4198 = vld [vmem:[%s4160 + $0x1e8] sm:$0xff]
    %v4199 = vld [vmem:[%s4160 + $0x1f8] sm:$0xff]
    %v4200 = vld [vmem:[%s4160 + $0x200] sm:$0xff]
    %v4201 = vld [vmem:[%s4160 + $0x210] sm:$0xff]
    %v4202 = vld [vmem:[%s4160 + $0x218] sm:$0xff]
    %v4203 = vld [vmem:[%s4160 + $0x228] sm:$0xff]
    %v4204 = vld [vmem:[%s4160 + $0x230] sm:$0xff]
    %v4205 = vld [vmem:[%s4160 + $0x240] sm:$0xff]
    %v4206 = vld [vmem:[%s4160 + $0x248] sm:$0xff]
    %v4207 = vld [vmem:[%s4160 + $0x258] sm:$0xff]
    %v4208 = vld [vmem:[%s4160 + $0x260] sm:$0xff]
    %v4209 = vld [vmem:[%s4160 + $0x270] sm:$0xff]
    %v4210 = vld [vmem:[%s4160 + $0x278] sm:$0xff]
    %v4211 = vld [vmem:[%s4160 + $0x288] sm:$0xff]
    %v4212 = vld [vmem:[%s4160 + $0x290] sm:$0xff]
    %v4213 = vld [vmem:[%s4160 + $0x2a0] sm:$0xff]
    %v4214 = vld [vmem:[%s4160 + $0x2a8] sm:$0xff]
    %v4215 = vld [vmem:[%s4160 + $0x2b8] sm:$0xff]
    %v4216 = vld [vmem:[%s4160 + $0x2c0] sm:$0xff]
    %v4217 = vld [vmem:[%s4160 + $0x2d0] sm:$0xff]
    %v4218 = vld [vmem:[%s4160 + $0x2d8] sm:$0xff]
    %v4219 = vld [vmem:[%s4160 + $0x2e8] sm:$0xff]
    %v4220 = vld [vmem:[%s4160 + $0x2f0] sm:$0xff]
    %v4221 = vld [vmem:[%s4160 + $0x300] sm:$0xff]
    %v4222 = vld [vmem:[%s4160 + $0x308] sm:$0xff]
    %v4223 = vld [vmem:[%s4160 + $0x318] sm:$0xff]
    %v4224 = vld [vmem:[%s4160 + $0x320] sm:$0xff]
    %s4225 = scalar_lea.vmem %s1, 192
    %v4226 = vld [vmem:[%s4225] sm:$0xff]
    %v4227 = vld [vmem:[%s4225 + $0x8] sm:$0xff]
    %v4228 = vld [vmem:[%s4225 + $0x10] sm:$0xff]
    %v4229 = vld [vmem:[%s4225 + $0x18] sm:$0xff]
    %v4231 = vsel %vm164, %v4161, 0
    %v4234 = vsel %vm164, %v4162, 0
    %v4237 = vsel %vm164, %v4163, 0
    %v4240 = vsel %vm164, %v4164, 0
    %v4243 = vsel %vm164, %v4165, 0
    %v4246 = vsel %vm164, %v4166, 0
    %v4249 = vsel %vm164, %v4167, 0
    %v4252 = vsel %vm164, %v4168, 0
    %v4255 = vsel %vm164, %v4169, 0
    %v4258 = vsel %vm164, %v4170, 0
    %v4261 = vsel %vm164, %v4171, 0
    %v4264 = vsel %vm164, %v4172, 0
    %v4267 = vsel %vm164, %v4173, 0
    %v4270 = vsel %vm164, %v4174, 0
    %v4273 = vsel %vm164, %v4175, 0
    %v4276 = vsel %vm164, %v4176, 0
    %v4279 = vsel %vm164, %v4177, 0
    %v4282 = vsel %vm164, %v4178, 0
    %v4285 = vsel %vm164, %v4179, 0
    %v4288 = vsel %vm164, %v4180, 0
    %v4291 = vsel %vm164, %v4181, 0
    %v4294 = vsel %vm164, %v4182, 0
    %v4297 = vsel %vm164, %v4183, 0
    %v4300 = vsel %vm164, %v4184, 0
    %v4303 = vsel %vm164, %v4185, 0
    %v4306 = vsel %vm164, %v4186, 0
    %v4309 = vsel %vm164, %v4187, 0
    %v4312 = vsel %vm164, %v4188, 0
    %v4315 = vsel %vm164, %v4189, 0
    %v4318 = vsel %vm164, %v4190, 0
    %v4321 = vsel %vm164, %v4191, 0
    %v4324 = vsel %vm164, %v4192, 0
    %v4327 = vsel %vm164, %v4193, 0
    %v4330 = vsel %vm164, %v4194, 0
    %v4333 = vsel %vm164, %v4195, 0
    %v4336 = vsel %vm164, %v4196, 0
    %v4339 = vsel %vm164, %v4197, 0
    %v4342 = vsel %vm164, %v4198, 0
    %v4345 = vsel %vm164, %v4199, 0
    %v4348 = vsel %vm164, %v4200, 0
    %v4351 = vsel %vm164, %v4201, 0
    %v4354 = vsel %vm164, %v4202, 0
    %v4357 = vsel %vm164, %v4203, 0
    %v4360 = vsel %vm164, %v4204, 0
    %v4363 = vsel %vm164, %v4205, 0
    %v4366 = vsel %vm164, %v4206, 0
    %v4369 = vsel %vm164, %v4207, 0
    %v4372 = vsel %vm164, %v4208, 0
    %v4375 = vsel %vm164, %v4209, 0
    %v4378 = vsel %vm164, %v4210, 0
    %v4381 = vsel %vm164, %v4211, 0
    %v4384 = vsel %vm164, %v4212, 0
    %v4387 = vsel %vm164, %v4213, 0
    %v4390 = vsel %vm164, %v4214, 0
    %v4393 = vsel %vm164, %v4215, 0
    %v4396 = vsel %vm164, %v4216, 0
    %v4399 = vsel %vm164, %v4217, 0
    %v4402 = vsel %vm164, %v4218, 0
    %v4405 = vsel %vm164, %v4219, 0
    %v4408 = vsel %vm164, %v4220, 0
    %v4411 = vsel %vm164, %v4221, 0
    %v4414 = vsel %vm164, %v4222, 0
    %v4417 = vsel %vm164, %v4223, 0
    %v4420 = vsel %vm164, %v4224, 0
    %4422 = vmatprep.subr.mxu0 0.0
    %4423 = vmatpush1.msra.mxu0 %v4226
    %4424 = vmatprep.subr.mxu0 0.0
    %4425 = vmatpush1.msra.mxu0 %v4227
    %4426 = vmatprep.subr.mxu0 0.0
    %4427 = vmatpush1.msra.mxu0 %v4228
    %4428 = vmatprep.subr.mxu0 0.0
    %4429 = vmatpush1.msra.mxu0 %v4229
    %4430 = vmatprep.subr.mxu0 0.0
    %4431 = vmatpush1.msra.mxu0 0.0
    %4432 = vmatprep.subr.mxu0 0.0
    %4433 = vmatpush1.msra.mxu0 0.0
    %4434 = vmatprep.subr.mxu0 0.0
    %4435 = vmatpush1.msra.mxu0 0.0
    %4436 = vmatprep.subr.mxu0 0.0
    %4437 = vmatpush1.msra.mxu0 0.0
    %4438 = vmatprep.subr.mxu0 0.0
    %4439 = vmatpush1.msra.mxu0 0.0
    %4440 = vmatprep.subr.mxu0 0.0
    %4441 = vmatpush1.msra.mxu0 0.0
    %4442 = vmatprep.subr.mxu0 0.0
    %4443 = vmatpush1.msra.mxu0 0.0
    %4444 = vmatprep.subr.mxu0 0.0
    %4445 = vmatpush1.msra.mxu0 0.0
    %4446 = vmatprep.subr.mxu0 0.0
    %4447 = vmatpush1.msra.mxu0 0.0
    %4448 = vmatprep.subr.mxu0 0.0
    %4449 = vmatpush1.msra.mxu0 0.0
    %4450 = vmatprep.subr.mxu0 0.0
    %4451 = vmatpush1.msra.mxu0 0.0
    %4452 = vmatprep.subr.mxu0 0.0
    %4453 = vmatpush1.msra.mxu0 0.0
    %4454 = vmatprep.subr.mxu0 0.0
    %4455 = vmatpush1.msra.mxu0 0.0
    %4456 = vmatprep.subr.mxu0 0.0
    %4457 = vmatpush1.msra.mxu0 0.0
    %4458 = vmatprep.subr.mxu0 0.0
    %4459 = vmatpush1.msra.mxu0 0.0
    %4460 = vmatprep.subr.mxu0 0.0
    %4461 = vmatpush1.msra.mxu0 0.0
    %4462 = vmatprep.subr.mxu0 0.0
    %4463 = vmatpush1.msra.mxu0 0.0
    %4464 = vmatprep.subr.mxu0 0.0
    %4465 = vmatpush1.msra.mxu0 0.0
    %4466 = vmatprep.subr.mxu0 0.0
    %4467 = vmatpush1.msra.mxu0 0.0
    %4468 = vmatprep.subr.mxu0 0.0
    %4469 = vmatpush1.msra.mxu0 0.0
    %4470 = vmatprep.subr.mxu0 0.0
    %4471 = vmatpush1.msra.mxu0 0.0
    %4472 = vmatprep.subr.mxu0 0.0
    %4473 = vmatpush1.msra.mxu0 0.0
    %4474 = vmatprep.subr.mxu0 0.0
    %4475 = vmatpush1.msra.mxu0 0.0
    %4476 = vmatprep.subr.mxu0 0.0
    %4477 = vmatpush1.msra.mxu0 0.0
    %4478 = vmatprep.subr.mxu0 0.0
    %4479 = vmatpush1.msra.mxu0 0.0
    %4480 = vmatprep.subr.mxu0 0.0
    %4481 = vmatpush1.msra.mxu0 0.0
    %4482 = vmatprep.subr.mxu0 0.0
    %4483 = vmatpush1.msra.mxu0 0.0
    %4484 = vmatprep.subr.mxu0 0.0
    %4485 = vmatpush1.msra.mxu0 0.0
    %4486 = vmatprep.mubr.f32.mxu0 0.0
    %4487 = vmatmul.mubr.f32.gmra.mrb[0].mxu0 %v4231
    %v4488 = vpop.f32.mrb[0].mxu0
    %v4489 = vadd.f32 0.0, %v4488
    %v4490 = vpop.f32.mrb[0].mxu0
    %4491 = vmatprep.mubr.f32.mxu0 0.0
    %4492 = vmatmul.mubr.f32.gmra.mrb[0].mxu0 %v4234
    %v4493 = vpop.f32.mrb[0].mxu0
    %v4494 = vadd.f32 0.0, %v4493
    %v4495 = vpop.f32.mrb[0].mxu0
    %4496 = vmatprep.mubr.f32.mxu0 0.0
    %4497 = vmatmul.mubr.f32.gmra.mrb[0].mxu0 %v4237
    %v4498 = vpop.f32.mrb[0].mxu0
    %v4499 = vadd.f32 0.0, %v4498
    %v4500 = vpop.f32.mrb[0].mxu0
    %4501 = vmatprep.mubr.f32.mxu0 0.0
    %4502 = vmatmul.mubr.f32.gmra.mrb[0].mxu0 %v4240
    %v4503 = vpop.f32.mrb[0].mxu0
    %v4504 = vadd.f32 0.0, %v4503
    %v4505 = vpop.f32.mrb[0].mxu0
    %4506 = vmatprep.mubr.f32.mxu0 0.0
    %4507 = vmatmul.mubr.f32.gmra.mrb[0].mxu0 %v4243
    %v4508 = vpop.f32.mrb[0].mxu0
    %v4509 = vadd.f32 0.0, %v4508
    %v4510 = vpop.f32.mrb[0].mxu0
    %4511 = vmatprep.mubr.f32.mxu0 0.0
    %4512 = vmatmul.mubr.f32.gmra.mrb[0].mxu0 %v4246
    %v4513 = vpop.f32.mrb[0].mxu0
    %v4514 = vadd.f32 0.0, %v4513
    %v4515 = vpop.f32.mrb[0].mxu0
    %4516 = vmatprep.mubr.f32.mxu0 0.0
    %4517 = vmatmul.mubr.f32.gmra.mrb[0].mxu0 %v4249
    %v4518 = vpop.f32.mrb[0].mxu0
    %v4519 = vadd.f32 0.0, %v4518
    %v4520 = vpop.f32.mrb[0].mxu0
    %4521 = vmatprep.mubr.f32.mxu0 0.0
    %4522 = vmatmul.mubr.f32.gmra.mrb[0].mxu0 %v4252
    %v4523 = vpop.f32.mrb[0].mxu0
    %v4524 = vadd.f32 0.0, %v4523
    %v4525 = vpop.f32.mrb[0].mxu0
    %4526 = vmatprep.mubr.f32.mxu0 0.0
    %4527 = vmatmul.mubr.f32.gmra.mrb[0].mxu0 %v4255
    %v4528 = vpop.f32.mrb[0].mxu0
    %v4529 = vadd.f32 0.0, %v4528
    %v4530 = vpop.f32.mrb[0].mxu0
    %4531 = vmatprep.mubr.f32.mxu0 0.0
    %4532 = vmatmul.mubr.f32.gmra.mrb[0].mxu0 %v4258
    %v4533 = vpop.f32.mrb[0].mxu0
    %v4534 = vadd.f32 0.0, %v4533
    %v4535 = vpop.f32.mrb[0].mxu0
    %4536 = vmatprep.mubr.f32.mxu0 0.0
    %4537 = vmatmul.mubr.f32.gmra.mrb[0].mxu0 %v4261
    %v4538 = vpop.f32.mrb[0].mxu0
    %v4539 = vadd.f32 0.0, %v4538
    %v4540 = vpop.f32.mrb[0].mxu0
    %4541 = vmatprep.mubr.f32.mxu0 0.0
    %4542 = vmatmul.mubr.f32.gmra.mrb[0].mxu0 %v4264
    %v4543 = vpop.f32.mrb[0].mxu0
    %v4544 = vadd.f32 0.0, %v4543
    %v4545 = vpop.f32.mrb[0].mxu0
    %4546 = vmatprep.mubr.f32.mxu0 0.0
    %4547 = vmatmul.mubr.f32.gmra.mrb[0].mxu0 %v4267
    %v4548 = vpop.f32.mrb[0].mxu0
    %v4549 = vadd.f32 0.0, %v4548
    %v4550 = vpop.f32.mrb[0].mxu0
    %4551 = vmatprep.mubr.f32.mxu0 0.0
    %4552 = vmatmul.mubr.f32.gmra.mrb[0].mxu0 %v4270
    %v4553 = vpop.f32.mrb[0].mxu0
    %v4554 = vadd.f32 0.0, %v4553
    %v4555 = vpop.f32.mrb[0].mxu0
    %4556 = vmatprep.mubr.f32.mxu0 0.0
    %4557 = vmatmul.mubr.f32.gmra.mrb[0].mxu0 %v4273
    %v4558 = vpop.f32.mrb[0].mxu0
    %v4559 = vadd.f32 0.0, %v4558
    %v4560 = vpop.f32.mrb[0].mxu0
    %4561 = vmatprep.mubr.f32.mxu0 0.0
    %4562 = vmatmul.mubr.f32.gmra.mrb[0].mxu0 %v4276
    %v4563 = vpop.f32.mrb[0].mxu0
    %v4564 = vadd.f32 0.0, %v4563
    %v4565 = vpop.f32.mrb[0].mxu0
    %4566 = vmatprep.mubr.f32.mxu0 0.0
    %4567 = vmatmul.mubr.f32.gmra.mrb[0].mxu0 %v4279
    %v4568 = vpop.f32.mrb[0].mxu0
    %v4569 = vadd.f32 0.0, %v4568
    %v4570 = vpop.f32.mrb[0].mxu0
    %4571 = vmatprep.mubr.f32.mxu0 0.0
    %4572 = vmatmul.mubr.f32.gmra.mrb[0].mxu0 %v4282
    %v4573 = vpop.f32.mrb[0].mxu0
    %v4574 = vadd.f32 0.0, %v4573
    %v4575 = vpop.f32.mrb[0].mxu0
    %4576 = vmatprep.mubr.f32.mxu0 0.0
    %4577 = vmatmul.mubr.f32.gmra.mrb[0].mxu0 %v4285
    %v4578 = vpop.f32.mrb[0].mxu0
    %v4579 = vadd.f32 0.0, %v4578
    %v4580 = vpop.f32.mrb[0].mxu0
    %4581 = vmatprep.mubr.f32.mxu0 0.0
    %4582 = vmatmul.mubr.f32.gmra.mrb[0].mxu0 %v4288
    %v4583 = vpop.f32.mrb[0].mxu0
    %v4584 = vadd.f32 0.0, %v4583
    %v4585 = vpop.f32.mrb[0].mxu0
    %4586 = vmatprep.mubr.f32.mxu0 0.0
    %4587 = vmatmul.mubr.f32.gmra.mrb[0].mxu0 %v4291
    %v4588 = vpop.f32.mrb[0].mxu0
    %v4589 = vadd.f32 0.0, %v4588
    %v4590 = vpop.f32.mrb[0].mxu0
    %4591 = vmatprep.mubr.f32.mxu0 0.0
    %4592 = vmatmul.mubr.f32.gmra.mrb[0].mxu0 %v4294
    %v4593 = vpop.f32.mrb[0].mxu0
    %v4594 = vadd.f32 0.0, %v4593
    %v4595 = vpop.f32.mrb[0].mxu0
    %4596 = vmatprep.mubr.f32.mxu0 0.0
    %4597 = vmatmul.mubr.f32.gmra.mrb[0].mxu0 %v4297
    %v4598 = vpop.f32.mrb[0].mxu0
    %v4599 = vadd.f32 0.0, %v4598
    %v4600 = vpop.f32.mrb[0].mxu0
    %4601 = vmatprep.mubr.f32.mxu0 0.0
    %4602 = vmatmul.mubr.f32.gmra.mrb[0].mxu0 %v4300
    %v4603 = vpop.f32.mrb[0].mxu0
    %v4604 = vadd.f32 0.0, %v4603
    %v4605 = vpop.f32.mrb[0].mxu0
    %4606 = vmatprep.mubr.f32.mxu0 0.0
    %4607 = vmatmul.mubr.f32.gmra.mrb[0].mxu0 %v4303
    %v4608 = vpop.f32.mrb[0].mxu0
    %v4609 = vadd.f32 0.0, %v4608
    %v4610 = vpop.f32.mrb[0].mxu0
    %4611 = vmatprep.mubr.f32.mxu0 0.0
    %4612 = vmatmul.mubr.f32.gmra.mrb[0].mxu0 %v4306
    %v4613 = vpop.f32.mrb[0].mxu0
    %v4614 = vadd.f32 0.0, %v4613
    %v4615 = vpop.f32.mrb[0].mxu0
    %4616 = vmatprep.mubr.f32.mxu0 0.0
    %4617 = vmatmul.mubr.f32.gmra.mrb[0].mxu0 %v4309
    %v4618 = vpop.f32.mrb[0].mxu0
    %v4619 = vadd.f32 0.0, %v4618
    %v4620 = vpop.f32.mrb[0].mxu0
    %4621 = vmatprep.mubr.f32.mxu0 0.0
    %4622 = vmatmul.mubr.f32.gmra.mrb[0].mxu0 %v4312
    %v4623 = vpop.f32.mrb[0].mxu0
    %v4624 = vadd.f32 0.0, %v4623
    %v4625 = vpop.f32.mrb[0].mxu0
    %4626 = vmatprep.mubr.f32.mxu0 0.0
    %4627 = vmatmul.mubr.f32.gmra.mrb[0].mxu0 %v4315
    %v4628 = vpop.f32.mrb[0].mxu0
    %v4629 = vadd.f32 0.0, %v4628
    %v4630 = vpop.f32.mrb[0].mxu0
    %4631 = vmatprep.mubr.f32.mxu0 0.0
    %4632 = vmatmul.mubr.f32.gmra.mrb[0].mxu0 %v4318
    %v4633 = vpop.f32.mrb[0].mxu0
    %v4634 = vadd.f32 0.0, %v4633
    %v4635 = vpop.f32.mrb[0].mxu0
    %4636 = vmatprep.mubr.f32.mxu0 0.0
    %4637 = vmatmul.mubr.f32.gmra.mrb[0].mxu0 %v4321
    %v4638 = vpop.f32.mrb[0].mxu0
    %v4639 = vadd.f32 0.0, %v4638
    %v4640 = vpop.f32.mrb[0].mxu0
    %4641 = vmatprep.mubr.f32.mxu0 0.0
    %4642 = vmatmul.mubr.f32.gmra.mrb[0].mxu0 %v4324
    %v4643 = vpop.f32.mrb[0].mxu0
    %v4644 = vadd.f32 0.0, %v4643
    %v4645 = vpop.f32.mrb[0].mxu0
    %4646 = vmatprep.mubr.f32.mxu0 0.0
    %4647 = vmatmul.mubr.f32.gmra.mrb[0].mxu0 %v4327
    %v4648 = vpop.f32.mrb[0].mxu0
    %v4649 = vadd.f32 0.0, %v4648
    %v4650 = vpop.f32.mrb[0].mxu0
    %4651 = vmatprep.mubr.f32.mxu0 0.0
    %4652 = vmatmul.mubr.f32.gmra.mrb[0].mxu0 %v4330
    %v4653 = vpop.f32.mrb[0].mxu0
    %v4654 = vadd.f32 0.0, %v4653
    %v4655 = vpop.f32.mrb[0].mxu0
    %4656 = vmatprep.mubr.f32.mxu0 0.0
    %4657 = vmatmul.mubr.f32.gmra.mrb[0].mxu0 %v4333
    %v4658 = vpop.f32.mrb[0].mxu0
    %v4659 = vadd.f32 0.0, %v4658
    %v4660 = vpop.f32.mrb[0].mxu0
    %4661 = vmatprep.mubr.f32.mxu0 0.0
    %4662 = vmatmul.mubr.f32.gmra.mrb[0].mxu0 %v4336
    %v4663 = vpop.f32.mrb[0].mxu0
    %v4664 = vadd.f32 0.0, %v4663
    %v4665 = vpop.f32.mrb[0].mxu0
    %4666 = vmatprep.mubr.f32.mxu0 0.0
    %4667 = vmatmul.mubr.f32.gmra.mrb[0].mxu0 %v4339
    %v4668 = vpop.f32.mrb[0].mxu0
    %v4669 = vadd.f32 0.0, %v4668
    %v4670 = vpop.f32.mrb[0].mxu0
    %4671 = vmatprep.mubr.f32.mxu0 0.0
    %4672 = vmatmul.mubr.f32.gmra.mrb[0].mxu0 %v4342
    %v4673 = vpop.f32.mrb[0].mxu0
    %v4674 = vadd.f32 0.0, %v4673
    %v4675 = vpop.f32.mrb[0].mxu0
    %4676 = vmatprep.mubr.f32.mxu0 0.0
    %4677 = vmatmul.mubr.f32.gmra.mrb[0].mxu0 %v4345
    %v4678 = vpop.f32.mrb[0].mxu0
    %v4679 = vadd.f32 0.0, %v4678
    %v4680 = vpop.f32.mrb[0].mxu0
    %4681 = vmatprep.mubr.f32.mxu0 0.0
    %4682 = vmatmul.mubr.f32.gmra.mrb[0].mxu0 %v4348
    %v4683 = vpop.f32.mrb[0].mxu0
    %v4684 = vadd.f32 0.0, %v4683
    %v4685 = vpop.f32.mrb[0].mxu0
    %4686 = vmatprep.mubr.f32.mxu0 0.0
    %4687 = vmatmul.mubr.f32.gmra.mrb[0].mxu0 %v4351
    %v4688 = vpop.f32.mrb[0].mxu0
    %v4689 = vadd.f32 0.0, %v4688
    %v4690 = vpop.f32.mrb[0].mxu0
    %4691 = vmatprep.mubr.f32.mxu0 0.0
    %4692 = vmatmul.mubr.f32.gmra.mrb[0].mxu0 %v4354
    %v4693 = vpop.f32.mrb[0].mxu0
    %v4694 = vadd.f32 0.0, %v4693
    %v4695 = vpop.f32.mrb[0].mxu0
    %4696 = vmatprep.mubr.f32.mxu0 0.0
    %4697 = vmatmul.mubr.f32.gmra.mrb[0].mxu0 %v4357
    %v4698 = vpop.f32.mrb[0].mxu0
    %v4699 = vadd.f32 0.0, %v4698
    %v4700 = vpop.f32.mrb[0].mxu0
    %4701 = vmatprep.mubr.f32.mxu0 0.0
    %4702 = vmatmul.mubr.f32.gmra.mrb[0].mxu0 %v4360
    %v4703 = vpop.f32.mrb[0].mxu0
    %v4704 = vadd.f32 0.0, %v4703
    %v4705 = vpop.f32.mrb[0].mxu0
    %4706 = vmatprep.mubr.f32.mxu0 0.0
    %4707 = vmatmul.mubr.f32.gmra.mrb[0].mxu0 %v4363
    %v4708 = vpop.f32.mrb[0].mxu0
    %v4709 = vadd.f32 0.0, %v4708
    %v4710 = vpop.f32.mrb[0].mxu0
    %4711 = vmatprep.mubr.f32.mxu0 0.0
    %4712 = vmatmul.mubr.f32.gmra.mrb[0].mxu0 %v4366
    %v4713 = vpop.f32.mrb[0].mxu0
    %v4714 = vadd.f32 0.0, %v4713
    %v4715 = vpop.f32.mrb[0].mxu0
    %4716 = vmatprep.mubr.f32.mxu0 0.0
    %4717 = vmatmul.mubr.f32.gmra.mrb[0].mxu0 %v4369
    %v4718 = vpop.f32.mrb[0].mxu0
    %v4719 = vadd.f32 0.0, %v4718
    %v4720 = vpop.f32.mrb[0].mxu0
    %4721 = vmatprep.mubr.f32.mxu0 0.0
    %4722 = vmatmul.mubr.f32.gmra.mrb[0].mxu0 %v4372
    %v4723 = vpop.f32.mrb[0].mxu0
    %v4724 = vadd.f32 0.0, %v4723
    %v4725 = vpop.f32.mrb[0].mxu0
    %4726 = vmatprep.mubr.f32.mxu0 0.0
    %4727 = vmatmul.mubr.f32.gmra.mrb[0].mxu0 %v4375
    %v4728 = vpop.f32.mrb[0].mxu0
    %v4729 = vadd.f32 0.0, %v4728
    %v4730 = vpop.f32.mrb[0].mxu0
    %4731 = vmatprep.mubr.f32.mxu0 0.0
    %4732 = vmatmul.mubr.f32.gmra.mrb[0].mxu0 %v4378
    %v4733 = vpop.f32.mrb[0].mxu0
    %v4734 = vadd.f32 0.0, %v4733
    %v4735 = vpop.f32.mrb[0].mxu0
    %4736 = vmatprep.mubr.f32.mxu0 0.0
    %4737 = vmatmul.mubr.f32.gmra.mrb[0].mxu0 %v4381
    %v4738 = vpop.f32.mrb[0].mxu0
    %v4739 = vadd.f32 0.0, %v4738
    %v4740 = vpop.f32.mrb[0].mxu0
    %4741 = vmatprep.mubr.f32.mxu0 0.0
    %4742 = vmatmul.mubr.f32.gmra.mrb[0].mxu0 %v4384
    %v4743 = vpop.f32.mrb[0].mxu0
    %v4744 = vadd.f32 0.0, %v4743
    %v4745 = vpop.f32.mrb[0].mxu0
    %4746 = vmatprep.mubr.f32.mxu0 0.0
    %4747 = vmatmul.mubr.f32.gmra.mrb[0].mxu0 %v4387
    %v4748 = vpop.f32.mrb[0].mxu0
    %v4749 = vadd.f32 0.0, %v4748
    %v4750 = vpop.f32.mrb[0].mxu0
    %4751 = vmatprep.mubr.f32.mxu0 0.0
    %4752 = vmatmul.mubr.f32.gmra.mrb[0].mxu0 %v4390
    %v4753 = vpop.f32.mrb[0].mxu0
    %v4754 = vadd.f32 0.0, %v4753
    %v4755 = vpop.f32.mrb[0].mxu0
    %4756 = vmatprep.mubr.f32.mxu0 0.0
    %4757 = vmatmul.mubr.f32.gmra.mrb[0].mxu0 %v4393
    %v4758 = vpop.f32.mrb[0].mxu0
    %v4759 = vadd.f32 0.0, %v4758
    %v4760 = vpop.f32.mrb[0].mxu0
    %4761 = vmatprep.mubr.f32.mxu0 0.0
    %4762 = vmatmul.mubr.f32.gmra.mrb[0].mxu0 %v4396
    %v4763 = vpop.f32.mrb[0].mxu0
    %v4764 = vadd.f32 0.0, %v4763
    %v4765 = vpop.f32.mrb[0].mxu0
    %4766 = vmatprep.mubr.f32.mxu0 0.0
    %4767 = vmatmul.mubr.f32.gmra.mrb[0].mxu0 %v4399
    %v4768 = vpop.f32.mrb[0].mxu0
    %v4769 = vadd.f32 0.0, %v4768
    %v4770 = vpop.f32.mrb[0].mxu0
    %4771 = vmatprep.mubr.f32.mxu0 0.0
    %4772 = vmatmul.mubr.f32.gmra.mrb[0].mxu0 %v4402
    %v4773 = vpop.f32.mrb[0].mxu0
    %v4774 = vadd.f32 0.0, %v4773
    %v4775 = vpop.f32.mrb[0].mxu0
    %4776 = vmatprep.mubr.f32.mxu0 0.0
    %4777 = vmatmul.mubr.f32.gmra.mrb[0].mxu0 %v4405
    %v4778 = vpop.f32.mrb[0].mxu0
    %v4779 = vadd.f32 0.0, %v4778
    %v4780 = vpop.f32.mrb[0].mxu0
    %4781 = vmatprep.mubr.f32.mxu0 0.0
    %4782 = vmatmul.mubr.f32.gmra.mrb[0].mxu0 %v4408
    %v4783 = vpop.f32.mrb[0].mxu0
    %v4784 = vadd.f32 0.0, %v4783
    %v4785 = vpop.f32.mrb[0].mxu0
    %4786 = vmatprep.mubr.f32.mxu0 0.0
    %4787 = vmatmul.mubr.f32.gmra.mrb[0].mxu0 %v4411
    %v4788 = vpop.f32.mrb[0].mxu0
    %v4789 = vadd.f32 0.0, %v4788
    %v4790 = vpop.f32.mrb[0].mxu0
    %4791 = vmatprep.mubr.f32.mxu0 0.0
    %4792 = vmatmul.mubr.f32.gmra.mrb[0].mxu0 %v4414
    %v4793 = vpop.f32.mrb[0].mxu0
    %v4794 = vadd.f32 0.0, %v4793
    %v4795 = vpop.f32.mrb[0].mxu0
    %4796 = vmatprep.mubr.f32.mxu0 0.0
    %4797 = vmatmul.mubr.f32.gmra.mrb[0].mxu0 %v4417
    %v4798 = vpop.f32.mrb[0].mxu0
    %v4799 = vadd.f32 0.0, %v4798
    %v4800 = vpop.f32.mrb[0].mxu0
    %4801 = vmatprep.mubr.f32.mxu0 0.0
    %4802 = vmatmul.mubr.f32.gmra.mrb[0].mxu0 %v4420
    %v4803 = vpop.f32.mrb[0].mxu0
    %v4804 = vadd.f32 0.0, %v4803
    %v4805 = vpop.f32.mrb[0].mxu0
    %4806 = vdwg.mxu0
    %v4807 = vadd.f32 %v4096, %v4489
    %v4808 = vadd.f32 %v4097, %v4494
    %v4809 = vadd.f32 %v4098, %v4499
    %v4810 = vadd.f32 %v4099, %v4504
    %v4811 = vadd.f32 %v4100, %v4509
    %v4812 = vadd.f32 %v4101, %v4514
    %v4813 = vadd.f32 %v4102, %v4519
    %v4814 = vadd.f32 %v4103, %v4524
    %v4815 = vadd.f32 %v4104, %v4529
    %v4816 = vadd.f32 %v4105, %v4534
    %v4817 = vadd.f32 %v4106, %v4539
    %v4818 = vadd.f32 %v4107, %v4544
    %v4819 = vadd.f32 %v4108, %v4549
    %v4820 = vadd.f32 %v4109, %v4554
    %v4821 = vadd.f32 %v4110, %v4559
    %v4822 = vadd.f32 %v4111, %v4564
    %v4823 = vadd.f32 %v4112, %v4569
    %v4824 = vadd.f32 %v4113, %v4574
    %v4825 = vadd.f32 %v4114, %v4579
    %v4826 = vadd.f32 %v4115, %v4584
    %v4827 = vadd.f32 %v4116, %v4589
    %v4828 = vadd.f32 %v4117, %v4594
    %v4829 = vadd.f32 %v4118, %v4599
    %v4830 = vadd.f32 %v4119, %v4604
    %v4831 = vadd.f32 %v4120, %v4609
    %v4832 = vadd.f32 %v4121, %v4614
    %v4833 = vadd.f32 %v4122, %v4619
    %v4834 = vadd.f32 %v4123, %v4624
    %v4835 = vadd.f32 %v4124, %v4629
    %v4836 = vadd.f32 %v4125, %v4634
    %v4837 = vadd.f32 %v4126, %v4639
    %v4838 = vadd.f32 %v4127, %v4644
    %v4839 = vadd.f32 %v4128, %v4649
    %v4840 = vadd.f32 %v4129, %v4654
    %v4841 = vadd.f32 %v4130, %v4659
    %v4842 = vadd.f32 %v4131, %v4664
    %v4843 = vadd.f32 %v4132, %v4669
    %v4844 = vadd.f32 %v4133, %v4674
    %v4845 = vadd.f32 %v4134, %v4679
    %v4846 = vadd.f32 %v4135, %v4684
    %v4847 = vadd.f32 %v4136, %v4689
    %v4848 = vadd.f32 %v4137, %v4694
    %v4849 = vadd.f32 %v4138, %v4699
    %v4850 = vadd.f32 %v4139, %v4704
    %v4851 = vadd.f32 %v4140, %v4709
    %v4852 = vadd.f32 %v4141, %v4714
    %v4853 = vadd.f32 %v4142, %v4719
    %v4854 = vadd.f32 %v4143, %v4724
    %v4855 = vadd.f32 %v4144, %v4729
    %v4856 = vadd.f32 %v4145, %v4734
    %v4857 = vadd.f32 %v4146, %v4739
    %v4858 = vadd.f32 %v4147, %v4744
    %v4859 = vadd.f32 %v4148, %v4749
    %v4860 = vadd.f32 %v4149, %v4754
    %v4861 = vadd.f32 %v4150, %v4759
    %v4862 = vadd.f32 %v4151, %v4764
    %v4863 = vadd.f32 %v4152, %v4769
    %v4864 = vadd.f32 %v4153, %v4774
    %v4865 = vadd.f32 %v4154, %v4779
    %v4866 = vadd.f32 %v4155, %v4784
    %v4867 = vadd.f32 %v4156, %v4789
    %v4868 = vadd.f32 %v4157, %v4794
    %v4869 = vadd.f32 %v4158, %v4799
    %v4870 = vadd.f32 %v4159, %v4804
    %v4871 = vld [vmem:[%s4160 + $0x1] sm:$0xff]
    %v4872 = vld [vmem:[%s4160 + $0x9] sm:$0xff]
    %v4873 = vld [vmem:[%s4160 + $0x19] sm:$0xff]
    %v4874 = vld [vmem:[%s4160 + $0x21] sm:$0xff]
    %v4875 = vld [vmem:[%s4160 + $0x31] sm:$0xff]
    %v4876 = vld [vmem:[%s4160 + $0x39] sm:$0xff]
    %v4877 = vld [vmem:[%s4160 + $0x49] sm:$0xff]
    %v4878 = vld [vmem:[%s4160 + $0x51] sm:$0xff]
    %v4879 = vld [vmem:[%s4160 + $0x61] sm:$0xff]
    %v4880 = vld [vmem:[%s4160 + $0x69] sm:$0xff]
    %v4881 = vld [vmem:[%s4160 + $0x79] sm:$0xff]
    %v4882 = vld [vmem:[%s4160 + $0x81] sm:$0xff]
    %v4883 = vld [vmem:[%s4160 + $0x91] sm:$0xff]
    %v4884 = vld [vmem:[%s4160 + $0x99] sm:$0xff]
    %v4885 = vld [vmem:[%s4160 + $0xa9] sm:$0xff]
    %v4886 = vld [vmem:[%s4160 + $0xb1] sm:$0xff]
    %v4887 = vld [vmem:[%s4160 + $0xc1] sm:$0xff]
    %v4888 = vld [vmem:[%s4160 + $0xc9] sm:$0xff]
    %v4889 = vld [vmem:[%s4160 + $0xd9] sm:$0xff]
    %v4890 = vld [vmem:[%s4160 + $0xe1] sm:$0xff]
    %v4891 = vld [vmem:[%s4160 + $0xf1] sm:$0xff]
    %v4892 = vld [vmem:[%s4160 + $0xf9] sm:$0xff]
    %v4893 = vld [vmem:[%s4160 + $0x109] sm:$0xff]
    %v4894 = vld [vmem:[%s4160 + $0x111] sm:$0xff]
    %v4895 = vld [vmem:[%s4160 + $0x121] sm:$0xff]
    %v4896 = vld [vmem:[%s4160 + $0x129] sm:$0xff]
    %v4897 = vld [vmem:[%s4160 + $0x139] sm:$0xff]
    %v4898 = vld [vmem:[%s4160 + $0x141] sm:$0xff]
    %v4899 = vld [vmem:[%s4160 + $0x151] sm:$0xff]
    %v4900 = vld [vmem:[%s4160 + $0x159] sm:$0xff]
    %v4901 = vld [vmem:[%s4160 + $0x169] sm:$0xff]
    %v4902 = vld [vmem:[%s4160 + $0x171] sm:$0xff]
    %v4903 = vld [vmem:[%s4160 + $0x1b1] sm:$0xff]
    %v4904 = vld [vmem:[%s4160 + $0x1b9] sm:$0xff]
    %v4905 = vld [vmem:[%s4160 + $0x1c9] sm:$0xff]
    %v4906 = vld [vmem:[%s4160 + $0x1d1] sm:$0xff]
    %v4907 = vld [vmem:[%s4160 + $0x1e1] sm:$0xff]
    %v4908 = vld [vmem:[%s4160 + $0x1e9] sm:$0xff]
    %v4909 = vld [vmem:[%s4160 + $0x1f9] sm:$0xff]
    %v4910 = vld [vmem:[%s4160 + $0x201] sm:$0xff]
    %v4911 = vld [vmem:[%s4160 + $0x211] sm:$0xff]
    %v4912 = vld [vmem:[%s4160 + $0x219] sm:$0xff]
    %v4913 = vld [vmem:[%s4160 + $0x229] sm:$0xff]
    %v4914 = vld [vmem:[%s4160 + $0x231] sm:$0xff]
    %v4915 = vld [vmem:[%s4160 + $0x241] sm:$0xff]
    %v4916 = vld [vmem:[%s4160 + $0x249] sm:$0xff]
    %v4917 = vld [vmem:[%s4160 + $0x259] sm:$0xff]
    %v4918 = vld [vmem:[%s4160 + $0x261] sm:$0xff]
    %v4919 = vld [vmem:[%s4160 + $0x271] sm:$0xff]
    %v4920 = vld [vmem:[%s4160 + $0x279] sm:$0xff]
    %v4921 = vld [vmem:[%s4160 + $0x289] sm:$0xff]
    %v4922 = vld [vmem:[%s4160 + $0x291] sm:$0xff]
    %v4923 = vld [vmem:[%s4160 + $0x2a1] sm:$0xff]
    %v4924 = vld [vmem:[%s4160 + $0x2a9] sm:$0xff]
    %v4925 = vld [vmem:[%s4160 + $0x2b9] sm:$0xff]
    %v4926 = vld [vmem:[%s4160 + $0x2c1] sm:$0xff]
    %v4927 = vld [vmem:[%s4160 + $0x2d1] sm:$0xff]
    %v4928 = vld [vmem:[%s4160 + $0x2d9] sm:$0xff]
    %v4929 = vld [vmem:[%s4160 + $0x2e9] sm:$0xff]
    %v4930 = vld [vmem:[%s4160 + $0x2f1] sm:$0xff]
    %v4931 = vld [vmem:[%s4160 + $0x301] sm:$0xff]
    %v4932 = vld [vmem:[%s4160 + $0x309] sm:$0xff]
    %v4933 = vld [vmem:[%s4160 + $0x319] sm:$0xff]
    %v4934 = vld [vmem:[%s4160 + $0x321] sm:$0xff]
    %s4935 = scalar_lea.vmem %s1, 224
    %v4936 = vld [vmem:[%s4935] sm:$0xff]
    %v4937 = vld [vmem:[%s4935 + $0x8] sm:$0xff]
    %v4938 = vld [vmem:[%s4935 + $0x10] sm:$0xff]
    %v4939 = vld [vmem:[%s4935 + $0x18] sm:$0xff]
    %v4941 = vsel %vm164, %v4871, 0
    %v4944 = vsel %vm164, %v4872, 0
    %v4947 = vsel %vm164, %v4873, 0
    %v4950 = vsel %vm164, %v4874, 0
    %v4953 = vsel %vm164, %v4875, 0
    %v4956 = vsel %vm164, %v4876, 0
    %v4959 = vsel %vm164, %v4877, 0
    %v4962 = vsel %vm164, %v4878, 0
    %v4965 = vsel %vm164, %v4879, 0
    %v4968 = vsel %vm164, %v4880, 0
    %v4971 = vsel %vm164, %v4881, 0
    %v4974 = vsel %vm164, %v4882, 0
    %v4977 = vsel %vm164, %v4883, 0
    %v4980 = vsel %vm164, %v4884, 0
    %v4983 = vsel %vm164, %v4885, 0
    %v4986 = vsel %vm164, %v4886, 0
    %v4989 = vsel %vm164, %v4887, 0
    %v4992 = vsel %vm164, %v4888, 0
    %v4995 = vsel %vm164, %v4889, 0
    %v4998 = vsel %vm164, %v4890, 0
    %v5001 = vsel %vm164, %v4891, 0
    %v5004 = vsel %vm164, %v4892, 0
    %v5007 = vsel %vm164, %v4893, 0
    %v5010 = vsel %vm164, %v4894, 0
    %v5013 = vsel %vm164, %v4895, 0
    %v5016 = vsel %vm164, %v4896, 0
    %v5019 = vsel %vm164, %v4897, 0
    %v5022 = vsel %vm164, %v4898, 0
    %v5025 = vsel %vm164, %v4899, 0
    %v5028 = vsel %vm164, %v4900, 0
    %v5031 = vsel %vm164, %v4901, 0
    %v5034 = vsel %vm164, %v4902, 0
    %v5037 = vsel %vm164, %v4903, 0
    %v5040 = vsel %vm164, %v4904, 0
    %v5043 = vsel %vm164, %v4905, 0
    %v5046 = vsel %vm164, %v4906, 0
    %v5049 = vsel %vm164, %v4907, 0
    %v5052 = vsel %vm164, %v4908, 0
    %v5055 = vsel %vm164, %v4909, 0
    %v5058 = vsel %vm164, %v4910, 0
    %v5061 = vsel %vm164, %v4911, 0
    %v5064 = vsel %vm164, %v4912, 0
    %v5067 = vsel %vm164, %v4913, 0
    %v5070 = vsel %vm164, %v4914, 0
    %v5073 = vsel %vm164, %v4915, 0
    %v5076 = vsel %vm164, %v4916, 0
    %v5079 = vsel %vm164, %v4917, 0
    %v5082 = vsel %vm164, %v4918, 0
    %v5085 = vsel %vm164, %v4919, 0
    %v5088 = vsel %vm164, %v4920, 0
    %v5091 = vsel %vm164, %v4921, 0
    %v5094 = vsel %vm164, %v4922, 0
    %v5097 = vsel %vm164, %v4923, 0
    %v5100 = vsel %vm164, %v4924, 0
    %v5103 = vsel %vm164, %v4925, 0
    %v5106 = vsel %vm164, %v4926, 0
    %v5109 = vsel %vm164, %v4927, 0
    %v5112 = vsel %vm164, %v4928, 0
    %v5115 = vsel %vm164, %v4929, 0
    %v5118 = vsel %vm164, %v4930, 0
    %v5121 = vsel %vm164, %v4931, 0
    %v5124 = vsel %vm164, %v4932, 0
    %v5127 = vsel %vm164, %v4933, 0
    %v5130 = vsel %vm164, %v4934, 0
    %5132 = vmatprep.subr.mxu0 0.0
    %5133 = vmatpush1.msra.mxu0 %v4936
    %5134 = vmatprep.subr.mxu0 0.0
    %5135 = vmatpush1.msra.mxu0 %v4937
    %5136 = vmatprep.subr.mxu0 0.0
    %5137 = vmatpush1.msra.mxu0 %v4938
    %5138 = vmatprep.subr.mxu0 0.0
    %5139 = vmatpush1.msra.mxu0 %v4939
    %5140 = vmatprep.subr.mxu0 0.0
    %5141 = vmatpush1.msra.mxu0 0.0
    %5142 = vmatprep.subr.mxu0 0.0
    %5143 = vmatpush1.msra.mxu0 0.0
    %5144 = vmatprep.subr.mxu0 0.0
    %5145 = vmatpush1.msra.mxu0 0.0
    %5146 = vmatprep.subr.mxu0 0.0
    %5147 = vmatpush1.msra.mxu0 0.0
    %5148 = vmatprep.subr.mxu0 0.0
    %5149 = vmatpush1.msra.mxu0 0.0
    %5150 = vmatprep.subr.mxu0 0.0
    %5151 = vmatpush1.msra.mxu0 0.0
    %5152 = vmatprep.subr.mxu0 0.0
    %5153 = vmatpush1.msra.mxu0 0.0
    %5154 = vmatprep.subr.mxu0 0.0
    %5155 = vmatpush1.msra.mxu0 0.0
    %5156 = vmatprep.subr.mxu0 0.0
    %5157 = vmatpush1.msra.mxu0 0.0
    %5158 = vmatprep.subr.mxu0 0.0
    %5159 = vmatpush1.msra.mxu0 0.0
    %5160 = vmatprep.subr.mxu0 0.0
    %5161 = vmatpush1.msra.mxu0 0.0
    %5162 = vmatprep.subr.mxu0 0.0
    %5163 = vmatpush1.msra.mxu0 0.0
    %5164 = vmatprep.subr.mxu0 0.0
    %5165 = vmatpush1.msra.mxu0 0.0
    %5166 = vmatprep.subr.mxu0 0.0
    %5167 = vmatpush1.msra.mxu0 0.0
    %5168 = vmatprep.subr.mxu0 0.0
    %5169 = vmatpush1.msra.mxu0 0.0
    %5170 = vmatprep.subr.mxu0 0.0
    %5171 = vmatpush1.msra.mxu0 0.0
    %5172 = vmatprep.subr.mxu0 0.0
    %5173 = vmatpush1.msra.mxu0 0.0
    %5174 = vmatprep.subr.mxu0 0.0
    %5175 = vmatpush1.msra.mxu0 0.0
    %5176 = vmatprep.subr.mxu0 0.0
    %5177 = vmatpush1.msra.mxu0 0.0
    %5178 = vmatprep.subr.mxu0 0.0
    %5179 = vmatpush1.msra.mxu0 0.0
    %5180 = vmatprep.subr.mxu0 0.0
    %5181 = vmatpush1.msra.mxu0 0.0
    %5182 = vmatprep.subr.mxu0 0.0
    %5183 = vmatpush1.msra.mxu0 0.0
    %5184 = vmatprep.subr.mxu0 0.0
    %5185 = vmatpush1.msra.mxu0 0.0
    %5186 = vmatprep.subr.mxu0 0.0
    %5187 = vmatpush1.msra.mxu0 0.0
    %5188 = vmatprep.subr.mxu0 0.0
    %5189 = vmatpush1.msra.mxu0 0.0
    %5190 = vmatprep.subr.mxu0 0.0
    %5191 = vmatpush1.msra.mxu0 0.0
    %5192 = vmatprep.subr.mxu0 0.0
    %5193 = vmatpush1.msra.mxu0 0.0
    %5194 = vmatprep.subr.mxu0 0.0
    %5195 = vmatpush1.msra.mxu0 0.0
    %5196 = vmatprep.mubr.f32.mxu0 0.0
    %5197 = vmatmul.mubr.f32.gmra.mrb[0].mxu0 %v4941
    %v5198 = vpop.f32.mrb[0].mxu0
    %v5199 = vadd.f32 0.0, %v5198
    %v5200 = vpop.f32.mrb[0].mxu0
    %5201 = vmatprep.mubr.f32.mxu0 0.0
    %5202 = vmatmul.mubr.f32.gmra.mrb[0].mxu0 %v4944
    %v5203 = vpop.f32.mrb[0].mxu0
    %v5204 = vadd.f32 0.0, %v5203
    %v5205 = vpop.f32.mrb[0].mxu0
    %5206 = vmatprep.mubr.f32.mxu0 0.0
    %5207 = vmatmul.mubr.f32.gmra.mrb[0].mxu0 %v4947
    %v5208 = vpop.f32.mrb[0].mxu0
    %v5209 = vadd.f32 0.0, %v5208
    %v5210 = vpop.f32.mrb[0].mxu0
    %5211 = vmatprep.mubr.f32.mxu0 0.0
    %5212 = vmatmul.mubr.f32.gmra.mrb[0].mxu0 %v4950
    %v5213 = vpop.f32.mrb[0].mxu0
    %v5214 = vadd.f32 0.0, %v5213
    %v5215 = vpop.f32.mrb[0].mxu0
    %5216 = vmatprep.mubr.f32.mxu0 0.0
    %5217 = vmatmul.mubr.f32.gmra.mrb[0].mxu0 %v4953
    %v5218 = vpop.f32.mrb[0].mxu0
    %v5219 = vadd.f32 0.0, %v5218
    %v5220 = vpop.f32.mrb[0].mxu0
    %5221 = vmatprep.mubr.f32.mxu0 0.0
    %5222 = vmatmul.mubr.f32.gmra.mrb[0].mxu0 %v4956
    %v5223 = vpop.f32.mrb[0].mxu0
    %v5224 = vadd.f32 0.0, %v5223
    %v5225 = vpop.f32.mrb[0].mxu0
    %5226 = vmatprep.mubr.f32.mxu0 0.0
    %5227 = vmatmul.mubr.f32.gmra.mrb[0].mxu0 %v4959
    %v5228 = vpop.f32.mrb[0].mxu0
    %v5229 = vadd.f32 0.0, %v5228
    %v5230 = vpop.f32.mrb[0].mxu0
    %5231 = vmatprep.mubr.f32.mxu0 0.0
    %5232 = vmatmul.mubr.f32.gmra.mrb[0].mxu0 %v4962
    %v5233 = vpop.f32.mrb[0].mxu0
    %v5234 = vadd.f32 0.0, %v5233
    %v5235 = vpop.f32.mrb[0].mxu0
    %5236 = vmatprep.mubr.f32.mxu0 0.0
    %5237 = vmatmul.mubr.f32.gmra.mrb[0].mxu0 %v4965
    %v5238 = vpop.f32.mrb[0].mxu0
    %v5239 = vadd.f32 0.0, %v5238
    %v5240 = vpop.f32.mrb[0].mxu0
    %5241 = vmatprep.mubr.f32.mxu0 0.0
    %5242 = vmatmul.mubr.f32.gmra.mrb[0].mxu0 %v4968
    %v5243 = vpop.f32.mrb[0].mxu0
    %v5244 = vadd.f32 0.0, %v5243
    %v5245 = vpop.f32.mrb[0].mxu0
    %5246 = vmatprep.mubr.f32.mxu0 0.0
    %5247 = vmatmul.mubr.f32.gmra.mrb[0].mxu0 %v4971
    %v5248 = vpop.f32.mrb[0].mxu0
    %v5249 = vadd.f32 0.0, %v5248
    %v5250 = vpop.f32.mrb[0].mxu0
    %5251 = vmatprep.mubr.f32.mxu0 0.0
    %5252 = vmatmul.mubr.f32.gmra.mrb[0].mxu0 %v4974
    %v5253 = vpop.f32.mrb[0].mxu0
    %v5254 = vadd.f32 0.0, %v5253
    %v5255 = vpop.f32.mrb[0].mxu0
    %5256 = vmatprep.mubr.f32.mxu0 0.0
    %5257 = vmatmul.mubr.f32.gmra.mrb[0].mxu0 %v4977
    %v5258 = vpop.f32.mrb[0].mxu0
    %v5259 = vadd.f32 0.0, %v5258
    %v5260 = vpop.f32.mrb[0].mxu0
    %5261 = vmatprep.mubr.f32.mxu0 0.0
    %5262 = vmatmul.mubr.f32.gmra.mrb[0].mxu0 %v4980
    %v5263 = vpop.f32.mrb[0].mxu0
    %v5264 = vadd.f32 0.0, %v5263
    %v5265 = vpop.f32.mrb[0].mxu0
    %5266 = vmatprep.mubr.f32.mxu0 0.0
    %5267 = vmatmul.mubr.f32.gmra.mrb[0].mxu0 %v4983
    %v5268 = vpop.f32.mrb[0].mxu0
    %v5269 = vadd.f32 0.0, %v5268
    %v5270 = vpop.f32.mrb[0].mxu0
    %5271 = vmatprep.mubr.f32.mxu0 0.0
    %5272 = vmatmul.mubr.f32.gmra.mrb[0].mxu0 %v4986
    %v5273 = vpop.f32.mrb[0].mxu0
    %v5274 = vadd.f32 0.0, %v5273
    %v5275 = vpop.f32.mrb[0].mxu0
    %5276 = vmatprep.mubr.f32.mxu0 0.0
    %5277 = vmatmul.mubr.f32.gmra.mrb[0].mxu0 %v4989
    %v5278 = vpop.f32.mrb[0].mxu0
    %v5279 = vadd.f32 0.0, %v5278
    %v5280 = vpop.f32.mrb[0].mxu0
    %5281 = vmatprep.mubr.f32.mxu0 0.0
    %5282 = vmatmul.mubr.f32.gmra.mrb[0].mxu0 %v4992
    %v5283 = vpop.f32.mrb[0].mxu0
    %v5284 = vadd.f32 0.0, %v5283
    %v5285 = vpop.f32.mrb[0].mxu0
    %5286 = vmatprep.mubr.f32.mxu0 0.0
    %5287 = vmatmul.mubr.f32.gmra.mrb[0].mxu0 %v4995
    %v5288 = vpop.f32.mrb[0].mxu0
    %v5289 = vadd.f32 0.0, %v5288
    %v5290 = vpop.f32.mrb[0].mxu0
    %5291 = vmatprep.mubr.f32.mxu0 0.0
    %5292 = vmatmul.mubr.f32.gmra.mrb[0].mxu0 %v4998
    %v5293 = vpop.f32.mrb[0].mxu0
    %v5294 = vadd.f32 0.0, %v5293
    %v5295 = vpop.f32.mrb[0].mxu0
    %5296 = vmatprep.mubr.f32.mxu0 0.0
    %5297 = vmatmul.mubr.f32.gmra.mrb[0].mxu0 %v5001
    %v5298 = vpop.f32.mrb[0].mxu0
    %v5299 = vadd.f32 0.0, %v5298
    %v5300 = vpop.f32.mrb[0].mxu0
    %5301 = vmatprep.mubr.f32.mxu0 0.0
    %5302 = vmatmul.mubr.f32.gmra.mrb[0].mxu0 %v5004
    %v5303 = vpop.f32.mrb[0].mxu0
    %v5304 = vadd.f32 0.0, %v5303
    %v5305 = vpop.f32.mrb[0].mxu0
    %5306 = vmatprep.mubr.f32.mxu0 0.0
    %5307 = vmatmul.mubr.f32.gmra.mrb[0].mxu0 %v5007
    %v5308 = vpop.f32.mrb[0].mxu0
    %v5309 = vadd.f32 0.0, %v5308
    %v5310 = vpop.f32.mrb[0].mxu0
    %5311 = vmatprep.mubr.f32.mxu0 0.0
    %5312 = vmatmul.mubr.f32.gmra.mrb[0].mxu0 %v5010
    %v5313 = vpop.f32.mrb[0].mxu0
    %v5314 = vadd.f32 0.0, %v5313
    %v5315 = vpop.f32.mrb[0].mxu0
    %5316 = vmatprep.mubr.f32.mxu0 0.0
    %5317 = vmatmul.mubr.f32.gmra.mrb[0].mxu0 %v5013
    %v5318 = vpop.f32.mrb[0].mxu0
    %v5319 = vadd.f32 0.0, %v5318
    %v5320 = vpop.f32.mrb[0].mxu0
    %5321 = vmatprep.mubr.f32.mxu0 0.0
    %5322 = vmatmul.mubr.f32.gmra.mrb[0].mxu0 %v5016
    %v5323 = vpop.f32.mrb[0].mxu0
    %v5324 = vadd.f32 0.0, %v5323
    %v5325 = vpop.f32.mrb[0].mxu0
    %5326 = vmatprep.mubr.f32.mxu0 0.0
    %5327 = vmatmul.mubr.f32.gmra.mrb[0].mxu0 %v5019
    %v5328 = vpop.f32.mrb[0].mxu0
    %v5329 = vadd.f32 0.0, %v5328
    %v5330 = vpop.f32.mrb[0].mxu0
    %5331 = vmatprep.mubr.f32.mxu0 0.0
    %5332 = vmatmul.mubr.f32.gmra.mrb[0].mxu0 %v5022
    %v5333 = vpop.f32.mrb[0].mxu0
    %v5334 = vadd.f32 0.0, %v5333
    %v5335 = vpop.f32.mrb[0].mxu0
    %5336 = vmatprep.mubr.f32.mxu0 0.0
    %5337 = vmatmul.mubr.f32.gmra.mrb[0].mxu0 %v5025
    %v5338 = vpop.f32.mrb[0].mxu0
    %v5339 = vadd.f32 0.0, %v5338
    %v5340 = vpop.f32.mrb[0].mxu0
    %5341 = vmatprep.mubr.f32.mxu0 0.0
    %5342 = vmatmul.mubr.f32.gmra.mrb[0].mxu0 %v5028
    %v5343 = vpop.f32.mrb[0].mxu0
    %v5344 = vadd.f32 0.0, %v5343
    %v5345 = vpop.f32.mrb[0].mxu0
    %5346 = vmatprep.mubr.f32.mxu0 0.0
    %5347 = vmatmul.mubr.f32.gmra.mrb[0].mxu0 %v5031
    %v5348 = vpop.f32.mrb[0].mxu0
    %v5349 = vadd.f32 0.0, %v5348
    %v5350 = vpop.f32.mrb[0].mxu0
    %5351 = vmatprep.mubr.f32.mxu0 0.0
    %5352 = vmatmul.mubr.f32.gmra.mrb[0].mxu0 %v5034
    %v5353 = vpop.f32.mrb[0].mxu0
    %v5354 = vadd.f32 0.0, %v5353
    %v5355 = vpop.f32.mrb[0].mxu0
    %5356 = vmatprep.mubr.f32.mxu0 0.0
    %5357 = vmatmul.mubr.f32.gmra.mrb[0].mxu0 %v5037
    %v5358 = vpop.f32.mrb[0].mxu0
    %v5359 = vadd.f32 0.0, %v5358
    %v5360 = vpop.f32.mrb[0].mxu0
    %5361 = vmatprep.mubr.f32.mxu0 0.0
    %5362 = vmatmul.mubr.f32.gmra.mrb[0].mxu0 %v5040
    %v5363 = vpop.f32.mrb[0].mxu0
    %v5364 = vadd.f32 0.0, %v5363
    %v5365 = vpop.f32.mrb[0].mxu0
    %5366 = vmatprep.mubr.f32.mxu0 0.0
    %5367 = vmatmul.mubr.f32.gmra.mrb[0].mxu0 %v5043
    %v5368 = vpop.f32.mrb[0].mxu0
    %v5369 = vadd.f32 0.0, %v5368
    %v5370 = vpop.f32.mrb[0].mxu0
    %5371 = vmatprep.mubr.f32.mxu0 0.0
    %5372 = vmatmul.mubr.f32.gmra.mrb[0].mxu0 %v5046
    %v5373 = vpop.f32.mrb[0].mxu0
    %v5374 = vadd.f32 0.0, %v5373
    %v5375 = vpop.f32.mrb[0].mxu0
    %5376 = vmatprep.mubr.f32.mxu0 0.0
    %5377 = vmatmul.mubr.f32.gmra.mrb[0].mxu0 %v5049
    %v5378 = vpop.f32.mrb[0].mxu0
    %v5379 = vadd.f32 0.0, %v5378
    %v5380 = vpop.f32.mrb[0].mxu0
    %5381 = vmatprep.mubr.f32.mxu0 0.0
    %5382 = vmatmul.mubr.f32.gmra.mrb[0].mxu0 %v5052
    %v5383 = vpop.f32.mrb[0].mxu0
    %v5384 = vadd.f32 0.0, %v5383
    %v5385 = vpop.f32.mrb[0].mxu0
    %5386 = vmatprep.mubr.f32.mxu0 0.0
    %5387 = vmatmul.mubr.f32.gmra.mrb[0].mxu0 %v5055
    %v5388 = vpop.f32.mrb[0].mxu0
    %v5389 = vadd.f32 0.0, %v5388
    %v5390 = vpop.f32.mrb[0].mxu0
    %5391 = vmatprep.mubr.f32.mxu0 0.0
    %5392 = vmatmul.mubr.f32.gmra.mrb[0].mxu0 %v5058
    %v5393 = vpop.f32.mrb[0].mxu0
    %v5394 = vadd.f32 0.0, %v5393
    %v5395 = vpop.f32.mrb[0].mxu0
    %5396 = vmatprep.mubr.f32.mxu0 0.0
    %5397 = vmatmul.mubr.f32.gmra.mrb[0].mxu0 %v5061
    %v5398 = vpop.f32.mrb[0].mxu0
    %v5399 = vadd.f32 0.0, %v5398
    %v5400 = vpop.f32.mrb[0].mxu0
    %5401 = vmatprep.mubr.f32.mxu0 0.0
    %5402 = vmatmul.mubr.f32.gmra.mrb[0].mxu0 %v5064
    %v5403 = vpop.f32.mrb[0].mxu0
    %v5404 = vadd.f32 0.0, %v5403
    %v5405 = vpop.f32.mrb[0].mxu0
    %5406 = vmatprep.mubr.f32.mxu0 0.0
    %5407 = vmatmul.mubr.f32.gmra.mrb[0].mxu0 %v5067
    %v5408 = vpop.f32.mrb[0].mxu0
    %v5409 = vadd.f32 0.0, %v5408
    %v5410 = vpop.f32.mrb[0].mxu0
    %5411 = vmatprep.mubr.f32.mxu0 0.0
    %5412 = vmatmul.mubr.f32.gmra.mrb[0].mxu0 %v5070
    %v5413 = vpop.f32.mrb[0].mxu0
    %v5414 = vadd.f32 0.0, %v5413
    %v5415 = vpop.f32.mrb[0].mxu0
    %5416 = vmatprep.mubr.f32.mxu0 0.0
    %5417 = vmatmul.mubr.f32.gmra.mrb[0].mxu0 %v5073
    %v5418 = vpop.f32.mrb[0].mxu0
    %v5419 = vadd.f32 0.0, %v5418
    %v5420 = vpop.f32.mrb[0].mxu0
    %5421 = vmatprep.mubr.f32.mxu0 0.0
    %5422 = vmatmul.mubr.f32.gmra.mrb[0].mxu0 %v5076
    %v5423 = vpop.f32.mrb[0].mxu0
    %v5424 = vadd.f32 0.0, %v5423
    %v5425 = vpop.f32.mrb[0].mxu0
    %5426 = vmatprep.mubr.f32.mxu0 0.0
    %5427 = vmatmul.mubr.f32.gmra.mrb[0].mxu0 %v5079
    %v5428 = vpop.f32.mrb[0].mxu0
    %v5429 = vadd.f32 0.0, %v5428
    %v5430 = vpop.f32.mrb[0].mxu0
    %5431 = vmatprep.mubr.f32.mxu0 0.0
    %5432 = vmatmul.mubr.f32.gmra.mrb[0].mxu0 %v5082
    %v5433 = vpop.f32.mrb[0].mxu0
    %v5434 = vadd.f32 0.0, %v5433
    %v5435 = vpop.f32.mrb[0].mxu0
    %5436 = vmatprep.mubr.f32.mxu0 0.0
    %5437 = vmatmul.mubr.f32.gmra.mrb[0].mxu0 %v5085
    %v5438 = vpop.f32.mrb[0].mxu0
    %v5439 = vadd.f32 0.0, %v5438
    %v5440 = vpop.f32.mrb[0].mxu0
    %5441 = vmatprep.mubr.f32.mxu0 0.0
    %5442 = vmatmul.mubr.f32.gmra.mrb[0].mxu0 %v5088
    %v5443 = vpop.f32.mrb[0].mxu0
    %v5444 = vadd.f32 0.0, %v5443
    %v5445 = vpop.f32.mrb[0].mxu0
    %5446 = vmatprep.mubr.f32.mxu0 0.0
    %5447 = vmatmul.mubr.f32.gmra.mrb[0].mxu0 %v5091
    %v5448 = vpop.f32.mrb[0].mxu0
    %v5449 = vadd.f32 0.0, %v5448
    %v5450 = vpop.f32.mrb[0].mxu0
    %5451 = vmatprep.mubr.f32.mxu0 0.0
    %5452 = vmatmul.mubr.f32.gmra.mrb[0].mxu0 %v5094
    %v5453 = vpop.f32.mrb[0].mxu0
    %v5454 = vadd.f32 0.0, %v5453
    %v5455 = vpop.f32.mrb[0].mxu0
    %5456 = vmatprep.mubr.f32.mxu0 0.0
    %5457 = vmatmul.mubr.f32.gmra.mrb[0].mxu0 %v5097
    %v5458 = vpop.f32.mrb[0].mxu0
    %v5459 = vadd.f32 0.0, %v5458
    %v5460 = vpop.f32.mrb[0].mxu0
    %5461 = vmatprep.mubr.f32.mxu0 0.0
    %5462 = vmatmul.mubr.f32.gmra.mrb[0].mxu0 %v5100
    %v5463 = vpop.f32.mrb[0].mxu0
    %v5464 = vadd.f32 0.0, %v5463
    %v5465 = vpop.f32.mrb[0].mxu0
    %5466 = vmatprep.mubr.f32.mxu0 0.0
    %5467 = vmatmul.mubr.f32.gmra.mrb[0].mxu0 %v5103
    %v5468 = vpop.f32.mrb[0].mxu0
    %v5469 = vadd.f32 0.0, %v5468
    %v5470 = vpop.f32.mrb[0].mxu0
    %5471 = vmatprep.mubr.f32.mxu0 0.0
    %5472 = vmatmul.mubr.f32.gmra.mrb[0].mxu0 %v5106
    %v5473 = vpop.f32.mrb[0].mxu0
    %v5474 = vadd.f32 0.0, %v5473
    %v5475 = vpop.f32.mrb[0].mxu0
    %5476 = vmatprep.mubr.f32.mxu0 0.0
    %5477 = vmatmul.mubr.f32.gmra.mrb[0].mxu0 %v5109
    %v5478 = vpop.f32.mrb[0].mxu0
    %v5479 = vadd.f32 0.0, %v5478
    %v5480 = vpop.f32.mrb[0].mxu0
    %5481 = vmatprep.mubr.f32.mxu0 0.0
    %5482 = vmatmul.mubr.f32.gmra.mrb[0].mxu0 %v5112
    %v5483 = vpop.f32.mrb[0].mxu0
    %v5484 = vadd.f32 0.0, %v5483
    %v5485 = vpop.f32.mrb[0].mxu0
    %5486 = vmatprep.mubr.f32.mxu0 0.0
    %5487 = vmatmul.mubr.f32.gmra.mrb[0].mxu0 %v5115
    %v5488 = vpop.f32.mrb[0].mxu0
    %v5489 = vadd.f32 0.0, %v5488
    %v5490 = vpop.f32.mrb[0].mxu0
    %5491 = vmatprep.mubr.f32.mxu0 0.0
    %5492 = vmatmul.mubr.f32.gmra.mrb[0].mxu0 %v5118
    %v5493 = vpop.f32.mrb[0].mxu0
    %v5494 = vadd.f32 0.0, %v5493
    %v5495 = vpop.f32.mrb[0].mxu0
    %5496 = vmatprep.mubr.f32.mxu0 0.0
    %5497 = vmatmul.mubr.f32.gmra.mrb[0].mxu0 %v5121
    %v5498 = vpop.f32.mrb[0].mxu0
    %v5499 = vadd.f32 0.0, %v5498
    %v5500 = vpop.f32.mrb[0].mxu0
    %5501 = vmatprep.mubr.f32.mxu0 0.0
    %5502 = vmatmul.mubr.f32.gmra.mrb[0].mxu0 %v5124
    %v5503 = vpop.f32.mrb[0].mxu0
    %v5504 = vadd.f32 0.0, %v5503
    %v5505 = vpop.f32.mrb[0].mxu0
    %5506 = vmatprep.mubr.f32.mxu0 0.0
    %5507 = vmatmul.mubr.f32.gmra.mrb[0].mxu0 %v5127
    %v5508 = vpop.f32.mrb[0].mxu0
    %v5509 = vadd.f32 0.0, %v5508
    %v5510 = vpop.f32.mrb[0].mxu0
    %5511 = vmatprep.mubr.f32.mxu0 0.0
    %5512 = vmatmul.mubr.f32.gmra.mrb[0].mxu0 %v5130
    %v5513 = vpop.f32.mrb[0].mxu0
    %v5514 = vadd.f32 0.0, %v5513
    %v5515 = vpop.f32.mrb[0].mxu0
    %5516 = vdwg.mxu0
    %v5517 = vadd.f32 %v4807, %v5199
    %v5518 = vadd.f32 %v4808, %v5204
    %v5519 = vadd.f32 %v4809, %v5209
    %v5520 = vadd.f32 %v4810, %v5214
    %v5521 = vadd.f32 %v4811, %v5219
    %v5522 = vadd.f32 %v4812, %v5224
    %v5523 = vadd.f32 %v4813, %v5229
    %v5524 = vadd.f32 %v4814, %v5234
    %v5525 = vadd.f32 %v4815, %v5239
    %v5526 = vadd.f32 %v4816, %v5244
    %v5527 = vadd.f32 %v4817, %v5249
    %v5528 = vadd.f32 %v4818, %v5254
    %v5529 = vadd.f32 %v4819, %v5259
    %v5530 = vadd.f32 %v4820, %v5264
    %v5531 = vadd.f32 %v4821, %v5269
    %v5532 = vadd.f32 %v4822, %v5274
    %v5533 = vadd.f32 %v4823, %v5279
    %v5534 = vadd.f32 %v4824, %v5284
    %v5535 = vadd.f32 %v4825, %v5289
    %v5536 = vadd.f32 %v4826, %v5294
    %v5537 = vadd.f32 %v4827, %v5299
    %v5538 = vadd.f32 %v4828, %v5304
    %v5539 = vadd.f32 %v4829, %v5309
    %v5540 = vadd.f32 %v4830, %v5314
    %v5541 = vadd.f32 %v4831, %v5319
    %v5542 = vadd.f32 %v4832, %v5324
    %v5543 = vadd.f32 %v4833, %v5329
    %v5544 = vadd.f32 %v4834, %v5334
    %v5545 = vadd.f32 %v4835, %v5339
    %v5546 = vadd.f32 %v4836, %v5344
    %v5547 = vadd.f32 %v4837, %v5349
    %v5548 = vadd.f32 %v4838, %v5354
    %v5549 = vadd.f32 %v4839, %v5359
    %v5550 = vadd.f32 %v4840, %v5364
    %v5551 = vadd.f32 %v4841, %v5369
    %v5552 = vadd.f32 %v4842, %v5374
    %v5553 = vadd.f32 %v4843, %v5379
    %v5554 = vadd.f32 %v4844, %v5384
    %v5555 = vadd.f32 %v4845, %v5389
    %v5556 = vadd.f32 %v4846, %v5394
    %v5557 = vadd.f32 %v4847, %v5399
    %v5558 = vadd.f32 %v4848, %v5404
    %v5559 = vadd.f32 %v4849, %v5409
    %v5560 = vadd.f32 %v4850, %v5414
    %v5561 = vadd.f32 %v4851, %v5419
    %v5562 = vadd.f32 %v4852, %v5424
    %v5563 = vadd.f32 %v4853, %v5429
    %v5564 = vadd.f32 %v4854, %v5434
    %v5565 = vadd.f32 %v4855, %v5439
    %v5566 = vadd.f32 %v4856, %v5444
    %v5567 = vadd.f32 %v4857, %v5449
    %v5568 = vadd.f32 %v4858, %v5454
    %v5569 = vadd.f32 %v4859, %v5459
    %v5570 = vadd.f32 %v4860, %v5464
    %v5571 = vadd.f32 %v4861, %v5469
    %v5572 = vadd.f32 %v4862, %v5474
    %v5573 = vadd.f32 %v4863, %v5479
    %v5574 = vadd.f32 %v4864, %v5484
    %v5575 = vadd.f32 %v4865, %v5489
    %v5576 = vadd.f32 %v4866, %v5494
    %v5577 = vadd.f32 %v4867, %v5499
    %v5578 = vadd.f32 %v4868, %v5504
    %v5579 = vadd.f32 %v4869, %v5509
    %v5580 = vadd.f32 %v4870, %v5514
    %v5581 = vld [vmem:[%s4160 + $0x2] sm:$0xff]
    %v5582 = vld [vmem:[%s4160 + $0xa] sm:$0xff]
    %v5583 = vld [vmem:[%s4160 + $0x1a] sm:$0xff]
    %v5584 = vld [vmem:[%s4160 + $0x22] sm:$0xff]
    %v5585 = vld [vmem:[%s4160 + $0x32] sm:$0xff]
    %v5586 = vld [vmem:[%s4160 + $0x3a] sm:$0xff]
    %v5587 = vld [vmem:[%s4160 + $0x4a] sm:$0xff]
    %v5588 = vld [vmem:[%s4160 + $0x52] sm:$0xff]
    %v5589 = vld [vmem:[%s4160 + $0x62] sm:$0xff]
    %v5590 = vld [vmem:[%s4160 + $0x6a] sm:$0xff]
    %v5591 = vld [vmem:[%s4160 + $0x7a] sm:$0xff]
    %v5592 = vld [vmem:[%s4160 + $0x82] sm:$0xff]
    %v5593 = vld [vmem:[%s4160 + $0x92] sm:$0xff]
    %v5594 = vld [vmem:[%s4160 + $0x9a] sm:$0xff]
    %v5595 = vld [vmem:[%s4160 + $0xaa] sm:$0xff]
    %v5596 = vld [vmem:[%s4160 + $0xb2] sm:$0xff]
    %v5597 = vld [vmem:[%s4160 + $0xc2] sm:$0xff]
    %v5598 = vld [vmem:[%s4160 + $0xca] sm:$0xff]
    %v5599 = vld [vmem:[%s4160 + $0xda] sm:$0xff]
    %v5600 = vld [vmem:[%s4160 + $0xe2] sm:$0xff]
    %v5601 = vld [vmem:[%s4160 + $0xf2] sm:$0xff]
    %v5602 = vld [vmem:[%s4160 + $0xfa] sm:$0xff]
    %v5603 = vld [vmem:[%s4160 + $0x10a] sm:$0xff]
    %v5604 = vld [vmem:[%s4160 + $0x112] sm:$0xff]
    %v5605 = vld [vmem:[%s4160 + $0x122] sm:$0xff]
    %v5606 = vld [vmem:[%s4160 + $0x12a] sm:$0xff]
    %v5607 = vld [vmem:[%s4160 + $0x13a] sm:$0xff]
    %v5608 = vld [vmem:[%s4160 + $0x142] sm:$0xff]
    %v5609 = vld [vmem:[%s4160 + $0x152] sm:$0xff]
    %v5610 = vld [vmem:[%s4160 + $0x15a] sm:$0xff]
    %v5611 = vld [vmem:[%s4160 + $0x16a] sm:$0xff]
    %v5612 = vld [vmem:[%s4160 + $0x172] sm:$0xff]
    %v5613 = vld [vmem:[%s4160 + $0x1b2] sm:$0xff]
    %v5614 = vld [vmem:[%s4160 + $0x1ba] sm:$0xff]
    %v5615 = vld [vmem:[%s4160 + $0x1ca] sm:$0xff]
    %v5616 = vld [vmem:[%s4160 + $0x1d2] sm:$0xff]
    %v5617 = vld [vmem:[%s4160 + $0x1e2] sm:$0xff]
    %v5618 = vld [vmem:[%s4160 + $0x1ea] sm:$0xff]
    %v5619 = vld [vmem:[%s4160 + $0x1fa] sm:$0xff]
    %v5620 = vld [vmem:[%s4160 + $0x202] sm:$0xff]
    %v5621 = vld [vmem:[%s4160 + $0x212] sm:$0xff]
    %v5622 = vld [vmem:[%s4160 + $0x21a] sm:$0xff]
    %v5623 = vld [vmem:[%s4160 + $0x22a] sm:$0xff]
    %v5624 = vld [vmem:[%s4160 + $0x232] sm:$0xff]
    %v5625 = vld [vmem:[%s4160 + $0x242] sm:$0xff]
    %v5626 = vld [vmem:[%s4160 + $0x24a] sm:$0xff]
    %v5627 = vld [vmem:[%s4160 + $0x25a] sm:$0xff]
    %v5628 = vld [vmem:[%s4160 + $0x262] sm:$0xff]
    %v5629 = vld [vmem:[%s4160 + $0x272] sm:$0xff]
    %v5630 = vld [vmem:[%s4160 + $0x27a] sm:$0xff]
    %v5631 = vld [vmem:[%s4160 + $0x28a] sm:$0xff]
    %v5632 = vld [vmem:[%s4160 + $0x292] sm:$0xff]
    %v5633 = vld [vmem:[%s4160 + $0x2a2] sm:$0xff]
    %v5634 = vld [vmem:[%s4160 + $0x2aa] sm:$0xff]
    %v5635 = vld [vmem:[%s4160 + $0x2ba] sm:$0xff]
    %v5636 = vld [vmem:[%s4160 + $0x2c2] sm:$0xff]
    %v5637 = vld [vmem:[%s4160 + $0x2d2] sm:$0xff]
    %v5638 = vld [vmem:[%s4160 + $0x2da] sm:$0xff]
    %v5639 = vld [vmem:[%s4160 + $0x2ea] sm:$0xff]
    %v5640 = vld [vmem:[%s4160 + $0x2f2] sm:$0xff]
    %v5641 = vld [vmem:[%s4160 + $0x302] sm:$0xff]
    %v5642 = vld [vmem:[%s4160 + $0x30a] sm:$0xff]
    %v5643 = vld [vmem:[%s4160 + $0x31a] sm:$0xff]
    %v5644 = vld [vmem:[%s4160 + $0x322] sm:$0xff]
    %s5645 = scalar_lea.vmem %s1, 256
    %v5646 = vld [vmem:[%s5645] sm:$0xff]
    %v5647 = vld [vmem:[%s5645 + $0x8] sm:$0xff]
    %v5648 = vld [vmem:[%s5645 + $0x10] sm:$0xff]
    %v5649 = vld [vmem:[%s5645 + $0x18] sm:$0xff]
    %v5651 = vsel %vm164, %v5581, 0
    %v5654 = vsel %vm164, %v5582, 0
    %v5657 = vsel %vm164, %v5583, 0
    %v5660 = vsel %vm164, %v5584, 0
    %v5663 = vsel %vm164, %v5585, 0
    %v5666 = vsel %vm164, %v5586, 0
    %v5669 = vsel %vm164, %v5587, 0
    %v5672 = vsel %vm164, %v5588, 0
    %v5675 = vsel %vm164, %v5589, 0
    %v5678 = vsel %vm164, %v5590, 0
    %v5681 = vsel %vm164, %v5591, 0
    %v5684 = vsel %vm164, %v5592, 0
    %v5687 = vsel %vm164, %v5593, 0
    %v5690 = vsel %vm164, %v5594, 0
    %v5693 = vsel %vm164, %v5595, 0
    %v5696 = vsel %vm164, %v5596, 0
    %v5699 = vsel %vm164, %v5597, 0
    %v5702 = vsel %vm164, %v5598, 0
    %v5705 = vsel %vm164, %v5599, 0
    %v5708 = vsel %vm164, %v5600, 0
    %v5711 = vsel %vm164, %v5601, 0
    %v5714 = vsel %vm164, %v5602, 0
    %v5717 = vsel %vm164, %v5603, 0
    %v5720 = vsel %vm164, %v5604, 0
    %v5723 = vsel %vm164, %v5605, 0
    %v5726 = vsel %vm164, %v5606, 0
    %v5729 = vsel %vm164, %v5607, 0
    %v5732 = vsel %vm164, %v5608, 0
    %v5735 = vsel %vm164, %v5609, 0
    %v5738 = vsel %vm164, %v5610, 0
    %v5741 = vsel %vm164, %v5611, 0
    %v5744 = vsel %vm164, %v5612, 0
    %v5747 = vsel %vm164, %v5613, 0
    %v5750 = vsel %vm164, %v5614, 0
    %v5753 = vsel %vm164, %v5615, 0
    %v5756 = vsel %vm164, %v5616, 0
    %v5759 = vsel %vm164, %v5617, 0
    %v5762 = vsel %vm164, %v5618, 0
    %v5765 = vsel %vm164, %v5619, 0
    %v5768 = vsel %vm164, %v5620, 0
    %v5771 = vsel %vm164, %v5621, 0
    %v5774 = vsel %vm164, %v5622, 0
    %v5777 = vsel %vm164, %v5623, 0
    %v5780 = vsel %vm164, %v5624, 0
    %v5783 = vsel %vm164, %v5625, 0
    %v5786 = vsel %vm164, %v5626, 0
    %v5789 = vsel %vm164, %v5627, 0
    %v5792 = vsel %vm164, %v5628, 0
    %v5795 = vsel %vm164, %v5629, 0
    %v5798 = vsel %vm164, %v5630, 0
    %v5801 = vsel %vm164, %v5631, 0
    %v5804 = vsel %vm164, %v5632, 0
    %v5807 = vsel %vm164, %v5633, 0
    %v5810 = vsel %vm164, %v5634, 0
    %v5813 = vsel %vm164, %v5635, 0
    %v5816 = vsel %vm164, %v5636, 0
    %v5819 = vsel %vm164, %v5637, 0
    %v5822 = vsel %vm164, %v5638, 0
    %v5825 = vsel %vm164, %v5639, 0
    %v5828 = vsel %vm164, %v5640, 0
    %v5831 = vsel %vm164, %v5641, 0
    %v5834 = vsel %vm164, %v5642, 0
    %v5837 = vsel %vm164, %v5643, 0
    %v5840 = vsel %vm164, %v5644, 0
    %5842 = vmatprep.subr.mxu0 0.0
    %5843 = vmatpush1.msra.mxu0 %v5646
    %5844 = vmatprep.subr.mxu0 0.0
    %5845 = vmatpush1.msra.mxu0 %v5647
    %5846 = vmatprep.subr.mxu0 0.0
    %5847 = vmatpush1.msra.mxu0 %v5648
    %5848 = vmatprep.subr.mxu0 0.0
    %5849 = vmatpush1.msra.mxu0 %v5649
    %5850 = vmatprep.subr.mxu0 0.0
    %5851 = vmatpush1.msra.mxu0 0.0
    %5852 = vmatprep.subr.mxu0 0.0
    %5853 = vmatpush1.msra.mxu0 0.0
    %5854 = vmatprep.subr.mxu0 0.0
    %5855 = vmatpush1.msra.mxu0 0.0
    %5856 = vmatprep.subr.mxu0 0.0
    %5857 = vmatpush1.msra.mxu0 0.0
    %5858 = vmatprep.subr.mxu0 0.0
    %5859 = vmatpush1.msra.mxu0 0.0
    %5860 = vmatprep.subr.mxu0 0.0
    %5861 = vmatpush1.msra.mxu0 0.0
    %5862 = vmatprep.subr.mxu0 0.0
    %5863 = vmatpush1.msra.mxu0 0.0
    %5864 = vmatprep.subr.mxu0 0.0
    %5865 = vmatpush1.msra.mxu0 0.0
    %5866 = vmatprep.subr.mxu0 0.0
    %5867 = vmatpush1.msra.mxu0 0.0
    %5868 = vmatprep.subr.mxu0 0.0
    %5869 = vmatpush1.msra.mxu0 0.0
    %5870 = vmatprep.subr.mxu0 0.0
    %5871 = vmatpush1.msra.mxu0 0.0
    %5872 = vmatprep.subr.mxu0 0.0
    %5873 = vmatpush1.msra.mxu0 0.0
    %5874 = vmatprep.subr.mxu0 0.0
    %5875 = vmatpush1.msra.mxu0 0.0
    %5876 = vmatprep.subr.mxu0 0.0
    %5877 = vmatpush1.msra.mxu0 0.0
    %5878 = vmatprep.subr.mxu0 0.0
    %5879 = vmatpush1.msra.mxu0 0.0
    %5880 = vmatprep.subr.mxu0 0.0
    %5881 = vmatpush1.msra.mxu0 0.0
    %5882 = vmatprep.subr.mxu0 0.0
    %5883 = vmatpush1.msra.mxu0 0.0
    %5884 = vmatprep.subr.mxu0 0.0
    %5885 = vmatpush1.msra.mxu0 0.0
    %5886 = vmatprep.subr.mxu0 0.0
    %5887 = vmatpush1.msra.mxu0 0.0
    %5888 = vmatprep.subr.mxu0 0.0
    %5889 = vmatpush1.msra.mxu0 0.0
    %5890 = vmatprep.subr.mxu0 0.0
    %5891 = vmatpush1.msra.mxu0 0.0
    %5892 = vmatprep.subr.mxu0 0.0
    %5893 = vmatpush1.msra.mxu0 0.0
    %5894 = vmatprep.subr.mxu0 0.0
    %5895 = vmatpush1.msra.mxu0 0.0
    %5896 = vmatprep.subr.mxu0 0.0
    %5897 = vmatpush1.msra.mxu0 0.0
    %5898 = vmatprep.subr.mxu0 0.0
    %5899 = vmatpush1.msra.mxu0 0.0
    %5900 = vmatprep.subr.mxu0 0.0
    %5901 = vmatpush1.msra.mxu0 0.0
    %5902 = vmatprep.subr.mxu0 0.0
    %5903 = vmatpush1.msra.mxu0 0.0
    %5904 = vmatprep.subr.mxu0 0.0
    %5905 = vmatpush1.msra.mxu0 0.0
    %5906 = vmatprep.mubr.f32.mxu0 0.0
    %5907 = vmatmul.mubr.f32.gmra.mrb[0].mxu0 %v5651
    %v5908 = vpop.f32.mrb[0].mxu0
    %v5909 = vadd.f32 0.0, %v5908
    %v5910 = vpop.f32.mrb[0].mxu0
    %5911 = vmatprep.mubr.f32.mxu0 0.0
    %5912 = vmatmul.mubr.f32.gmra.mrb[0].mxu0 %v5654
    %v5913 = vpop.f32.mrb[0].mxu0
    %v5914 = vadd.f32 0.0, %v5913
    %v5915 = vpop.f32.mrb[0].mxu0
    %5916 = vmatprep.mubr.f32.mxu0 0.0
    %5917 = vmatmul.mubr.f32.gmra.mrb[0].mxu0 %v5657
    %v5918 = vpop.f32.mrb[0].mxu0
    %v5919 = vadd.f32 0.0, %v5918
    %v5920 = vpop.f32.mrb[0].mxu0
    %5921 = vmatprep.mubr.f32.mxu0 0.0
    %5922 = vmatmul.mubr.f32.gmra.mrb[0].mxu0 %v5660
    %v5923 = vpop.f32.mrb[0].mxu0
    %v5924 = vadd.f32 0.0, %v5923
    %v5925 = vpop.f32.mrb[0].mxu0
    %5926 = vmatprep.mubr.f32.mxu0 0.0
    %5927 = vmatmul.mubr.f32.gmra.mrb[0].mxu0 %v5663
    %v5928 = vpop.f32.mrb[0].mxu0
    %v5929 = vadd.f32 0.0, %v5928
    %v5930 = vpop.f32.mrb[0].mxu0
    %5931 = vmatprep.mubr.f32.mxu0 0.0
    %5932 = vmatmul.mubr.f32.gmra.mrb[0].mxu0 %v5666
    %v5933 = vpop.f32.mrb[0].mxu0
    %v5934 = vadd.f32 0.0, %v5933
    %v5935 = vpop.f32.mrb[0].mxu0
    %5936 = vmatprep.mubr.f32.mxu0 0.0
    %5937 = vmatmul.mubr.f32.gmra.mrb[0].mxu0 %v5669
    %v5938 = vpop.f32.mrb[0].mxu0
    %v5939 = vadd.f32 0.0, %v5938
    %v5940 = vpop.f32.mrb[0].mxu0
    %5941 = vmatprep.mubr.f32.mxu0 0.0
    %5942 = vmatmul.mubr.f32.gmra.mrb[0].mxu0 %v5672
    %v5943 = vpop.f32.mrb[0].mxu0
    %v5944 = vadd.f32 0.0, %v5943
    %v5945 = vpop.f32.mrb[0].mxu0
    %5946 = vmatprep.mubr.f32.mxu0 0.0
    %5947 = vmatmul.mubr.f32.gmra.mrb[0].mxu0 %v5675
    %v5948 = vpop.f32.mrb[0].mxu0
    %v5949 = vadd.f32 0.0, %v5948
    %v5950 = vpop.f32.mrb[0].mxu0
    %5951 = vmatprep.mubr.f32.mxu0 0.0
    %5952 = vmatmul.mubr.f32.gmra.mrb[0].mxu0 %v5678
    %v5953 = vpop.f32.mrb[0].mxu0
    %v5954 = vadd.f32 0.0, %v5953
    %v5955 = vpop.f32.mrb[0].mxu0
    %5956 = vmatprep.mubr.f32.mxu0 0.0
    %5957 = vmatmul.mubr.f32.gmra.mrb[0].mxu0 %v5681
    %v5958 = vpop.f32.mrb[0].mxu0
    %v5959 = vadd.f32 0.0, %v5958
    %v5960 = vpop.f32.mrb[0].mxu0
    %5961 = vmatprep.mubr.f32.mxu0 0.0
    %5962 = vmatmul.mubr.f32.gmra.mrb[0].mxu0 %v5684
    %v5963 = vpop.f32.mrb[0].mxu0
    %v5964 = vadd.f32 0.0, %v5963
    %v5965 = vpop.f32.mrb[0].mxu0
    %5966 = vmatprep.mubr.f32.mxu0 0.0
    %5967 = vmatmul.mubr.f32.gmra.mrb[0].mxu0 %v5687
    %v5968 = vpop.f32.mrb[0].mxu0
    %v5969 = vadd.f32 0.0, %v5968
    %v5970 = vpop.f32.mrb[0].mxu0
    %5971 = vmatprep.mubr.f32.mxu0 0.0
    %5972 = vmatmul.mubr.f32.gmra.mrb[0].mxu0 %v5690
    %v5973 = vpop.f32.mrb[0].mxu0
    %v5974 = vadd.f32 0.0, %v5973
    %v5975 = vpop.f32.mrb[0].mxu0
    %5976 = vmatprep.mubr.f32.mxu0 0.0
    %5977 = vmatmul.mubr.f32.gmra.mrb[0].mxu0 %v5693
    %v5978 = vpop.f32.mrb[0].mxu0
    %v5979 = vadd.f32 0.0, %v5978
    %v5980 = vpop.f32.mrb[0].mxu0
    %5981 = vmatprep.mubr.f32.mxu0 0.0
    %5982 = vmatmul.mubr.f32.gmra.mrb[0].mxu0 %v5696
    %v5983 = vpop.f32.mrb[0].mxu0
    %v5984 = vadd.f32 0.0, %v5983
    %v5985 = vpop.f32.mrb[0].mxu0
    %5986 = vmatprep.mubr.f32.mxu0 0.0
    %5987 = vmatmul.mubr.f32.gmra.mrb[0].mxu0 %v5699
    %v5988 = vpop.f32.mrb[0].mxu0
    %v5989 = vadd.f32 0.0, %v5988
    %v5990 = vpop.f32.mrb[0].mxu0
    %5991 = vmatprep.mubr.f32.mxu0 0.0
    %5992 = vmatmul.mubr.f32.gmra.mrb[0].mxu0 %v5702
    %v5993 = vpop.f32.mrb[0].mxu0
    %v5994 = vadd.f32 0.0, %v5993
    %v5995 = vpop.f32.mrb[0].mxu0
    %5996 = vmatprep.mubr.f32.mxu0 0.0
    %5997 = vmatmul.mubr.f32.gmra.mrb[0].mxu0 %v5705
    %v5998 = vpop.f32.mrb[0].mxu0
    %v5999 = vadd.f32 0.0, %v5998
    %v6000 = vpop.f32.mrb[0].mxu0
    %6001 = vmatprep.mubr.f32.mxu0 0.0
    %6002 = vmatmul.mubr.f32.gmra.mrb[0].mxu0 %v5708
    %v6003 = vpop.f32.mrb[0].mxu0
    %v6004 = vadd.f32 0.0, %v6003
    %v6005 = vpop.f32.mrb[0].mxu0
    %6006 = vmatprep.mubr.f32.mxu0 0.0
    %6007 = vmatmul.mubr.f32.gmra.mrb[0].mxu0 %v5711
    %v6008 = vpop.f32.mrb[0].mxu0
    %v6009 = vadd.f32 0.0, %v6008
    %v6010 = vpop.f32.mrb[0].mxu0
    %6011 = vmatprep.mubr.f32.mxu0 0.0
    %6012 = vmatmul.mubr.f32.gmra.mrb[0].mxu0 %v5714
    %v6013 = vpop.f32.mrb[0].mxu0
    %v6014 = vadd.f32 0.0, %v6013
    %v6015 = vpop.f32.mrb[0].mxu0
    %6016 = vmatprep.mubr.f32.mxu0 0.0
    %6017 = vmatmul.mubr.f32.gmra.mrb[0].mxu0 %v5717
    %v6018 = vpop.f32.mrb[0].mxu0
    %v6019 = vadd.f32 0.0, %v6018
    %v6020 = vpop.f32.mrb[0].mxu0
    %6021 = vmatprep.mubr.f32.mxu0 0.0
    %6022 = vmatmul.mubr.f32.gmra.mrb[0].mxu0 %v5720
    %v6023 = vpop.f32.mrb[0].mxu0
    %v6024 = vadd.f32 0.0, %v6023
    %v6025 = vpop.f32.mrb[0].mxu0
    %6026 = vmatprep.mubr.f32.mxu0 0.0
    %6027 = vmatmul.mubr.f32.gmra.mrb[0].mxu0 %v5723
    %v6028 = vpop.f32.mrb[0].mxu0
    %v6029 = vadd.f32 0.0, %v6028
    %v6030 = vpop.f32.mrb[0].mxu0
    %6031 = vmatprep.mubr.f32.mxu0 0.0
    %6032 = vmatmul.mubr.f32.gmra.mrb[0].mxu0 %v5726
    %v6033 = vpop.f32.mrb[0].mxu0
    %v6034 = vadd.f32 0.0, %v6033
    %v6035 = vpop.f32.mrb[0].mxu0
    %6036 = vmatprep.mubr.f32.mxu0 0.0
    %6037 = vmatmul.mubr.f32.gmra.mrb[0].mxu0 %v5729
    %v6038 = vpop.f32.mrb[0].mxu0
    %v6039 = vadd.f32 0.0, %v6038
    %v6040 = vpop.f32.mrb[0].mxu0
    %6041 = vmatprep.mubr.f32.mxu0 0.0
    %6042 = vmatmul.mubr.f32.gmra.mrb[0].mxu0 %v5732
    %v6043 = vpop.f32.mrb[0].mxu0
    %v6044 = vadd.f32 0.0, %v6043
    %v6045 = vpop.f32.mrb[0].mxu0
    %6046 = vmatprep.mubr.f32.mxu0 0.0
    %6047 = vmatmul.mubr.f32.gmra.mrb[0].mxu0 %v5735
    %v6048 = vpop.f32.mrb[0].mxu0
    %v6049 = vadd.f32 0.0, %v6048
    %v6050 = vpop.f32.mrb[0].mxu0
    %6051 = vmatprep.mubr.f32.mxu0 0.0
    %6052 = vmatmul.mubr.f32.gmra.mrb[0].mxu0 %v5738
    %v6053 = vpop.f32.mrb[0].mxu0
    %v6054 = vadd.f32 0.0, %v6053
    %v6055 = vpop.f32.mrb[0].mxu0
    %6056 = vmatprep.mubr.f32.mxu0 0.0
    %6057 = vmatmul.mubr.f32.gmra.mrb[0].mxu0 %v5741
    %v6058 = vpop.f32.mrb[0].mxu0
    %v6059 = vadd.f32 0.0, %v6058
    %v6060 = vpop.f32.mrb[0].mxu0
    %6061 = vmatprep.mubr.f32.mxu0 0.0
    %6062 = vmatmul.mubr.f32.gmra.mrb[0].mxu0 %v5744
    %v6063 = vpop.f32.mrb[0].mxu0
    %v6064 = vadd.f32 0.0, %v6063
    %v6065 = vpop.f32.mrb[0].mxu0
    %6066 = vmatprep.mubr.f32.mxu0 0.0
    %6067 = vmatmul.mubr.f32.gmra.mrb[0].mxu0 %v5747
    %v6068 = vpop.f32.mrb[0].mxu0
    %v6069 = vadd.f32 0.0, %v6068
    %v6070 = vpop.f32.mrb[0].mxu0
    %6071 = vmatprep.mubr.f32.mxu0 0.0
    %6072 = vmatmul.mubr.f32.gmra.mrb[0].mxu0 %v5750
    %v6073 = vpop.f32.mrb[0].mxu0
    %v6074 = vadd.f32 0.0, %v6073
    %v6075 = vpop.f32.mrb[0].mxu0
    %6076 = vmatprep.mubr.f32.mxu0 0.0
    %6077 = vmatmul.mubr.f32.gmra.mrb[0].mxu0 %v5753
    %v6078 = vpop.f32.mrb[0].mxu0
    %v6079 = vadd.f32 0.0, %v6078
    %v6080 = vpop.f32.mrb[0].mxu0
    %6081 = vmatprep.mubr.f32.mxu0 0.0
    %6082 = vmatmul.mubr.f32.gmra.mrb[0].mxu0 %v5756
    %v6083 = vpop.f32.mrb[0].mxu0
    %v6084 = vadd.f32 0.0, %v6083
    %v6085 = vpop.f32.mrb[0].mxu0
    %6086 = vmatprep.mubr.f32.mxu0 0.0
    %6087 = vmatmul.mubr.f32.gmra.mrb[0].mxu0 %v5759
    %v6088 = vpop.f32.mrb[0].mxu0
    %v6089 = vadd.f32 0.0, %v6088
    %v6090 = vpop.f32.mrb[0].mxu0
    %6091 = vmatprep.mubr.f32.mxu0 0.0
    %6092 = vmatmul.mubr.f32.gmra.mrb[0].mxu0 %v5762
    %v6093 = vpop.f32.mrb[0].mxu0
    %v6094 = vadd.f32 0.0, %v6093
    %v6095 = vpop.f32.mrb[0].mxu0
    %6096 = vmatprep.mubr.f32.mxu0 0.0
    %6097 = vmatmul.mubr.f32.gmra.mrb[0].mxu0 %v5765
    %v6098 = vpop.f32.mrb[0].mxu0
    %v6099 = vadd.f32 0.0, %v6098
    %v6100 = vpop.f32.mrb[0].mxu0
    %6101 = vmatprep.mubr.f32.mxu0 0.0
    %6102 = vmatmul.mubr.f32.gmra.mrb[0].mxu0 %v5768
    %v6103 = vpop.f32.mrb[0].mxu0
    %v6104 = vadd.f32 0.0, %v6103
    %v6105 = vpop.f32.mrb[0].mxu0
    %6106 = vmatprep.mubr.f32.mxu0 0.0
    %6107 = vmatmul.mubr.f32.gmra.mrb[0].mxu0 %v5771
    %v6108 = vpop.f32.mrb[0].mxu0
    %v6109 = vadd.f32 0.0, %v6108
    %v6110 = vpop.f32.mrb[0].mxu0
    %6111 = vmatprep.mubr.f32.mxu0 0.0
    %6112 = vmatmul.mubr.f32.gmra.mrb[0].mxu0 %v5774
    %v6113 = vpop.f32.mrb[0].mxu0
    %v6114 = vadd.f32 0.0, %v6113
    %v6115 = vpop.f32.mrb[0].mxu0
    %6116 = vmatprep.mubr.f32.mxu0 0.0
    %6117 = vmatmul.mubr.f32.gmra.mrb[0].mxu0 %v5777
    %v6118 = vpop.f32.mrb[0].mxu0
    %v6119 = vadd.f32 0.0, %v6118
    %v6120 = vpop.f32.mrb[0].mxu0
    %6121 = vmatprep.mubr.f32.mxu0 0.0
    %6122 = vmatmul.mubr.f32.gmra.mrb[0].mxu0 %v5780
    %v6123 = vpop.f32.mrb[0].mxu0
    %v6124 = vadd.f32 0.0, %v6123
    %v6125 = vpop.f32.mrb[0].mxu0
    %6126 = vmatprep.mubr.f32.mxu0 0.0
    %6127 = vmatmul.mubr.f32.gmra.mrb[0].mxu0 %v5783
    %v6128 = vpop.f32.mrb[0].mxu0
    %v6129 = vadd.f32 0.0, %v6128
    %v6130 = vpop.f32.mrb[0].mxu0
    %6131 = vmatprep.mubr.f32.mxu0 0.0
    %6132 = vmatmul.mubr.f32.gmra.mrb[0].mxu0 %v5786
    %v6133 = vpop.f32.mrb[0].mxu0
    %v6134 = vadd.f32 0.0, %v6133
    %v6135 = vpop.f32.mrb[0].mxu0
    %6136 = vmatprep.mubr.f32.mxu0 0.0
    %6137 = vmatmul.mubr.f32.gmra.mrb[0].mxu0 %v5789
    %v6138 = vpop.f32.mrb[0].mxu0
    %v6139 = vadd.f32 0.0, %v6138
    %v6140 = vpop.f32.mrb[0].mxu0
    %6141 = vmatprep.mubr.f32.mxu0 0.0
    %6142 = vmatmul.mubr.f32.gmra.mrb[0].mxu0 %v5792
    %v6143 = vpop.f32.mrb[0].mxu0
    %v6144 = vadd.f32 0.0, %v6143
    %v6145 = vpop.f32.mrb[0].mxu0
    %6146 = vmatprep.mubr.f32.mxu0 0.0
    %6147 = vmatmul.mubr.f32.gmra.mrb[0].mxu0 %v5795
    %v6148 = vpop.f32.mrb[0].mxu0
    %v6149 = vadd.f32 0.0, %v6148
    %v6150 = vpop.f32.mrb[0].mxu0
    %6151 = vmatprep.mubr.f32.mxu0 0.0
    %6152 = vmatmul.mubr.f32.gmra.mrb[0].mxu0 %v5798
    %v6153 = vpop.f32.mrb[0].mxu0
    %v6154 = vadd.f32 0.0, %v6153
    %v6155 = vpop.f32.mrb[0].mxu0
    %6156 = vmatprep.mubr.f32.mxu0 0.0
    %6157 = vmatmul.mubr.f32.gmra.mrb[0].mxu0 %v5801
    %v6158 = vpop.f32.mrb[0].mxu0
    %v6159 = vadd.f32 0.0, %v6158
    %v6160 = vpop.f32.mrb[0].mxu0
    %6161 = vmatprep.mubr.f32.mxu0 0.0
    %6162 = vmatmul.mubr.f32.gmra.mrb[0].mxu0 %v5804
    %v6163 = vpop.f32.mrb[0].mxu0
    %v6164 = vadd.f32 0.0, %v6163
    %v6165 = vpop.f32.mrb[0].mxu0
    %6166 = vmatprep.mubr.f32.mxu0 0.0
    %6167 = vmatmul.mubr.f32.gmra.mrb[0].mxu0 %v5807
    %v6168 = vpop.f32.mrb[0].mxu0
    %v6169 = vadd.f32 0.0, %v6168
    %v6170 = vpop.f32.mrb[0].mxu0
    %6171 = vmatprep.mubr.f32.mxu0 0.0
    %6172 = vmatmul.mubr.f32.gmra.mrb[0].mxu0 %v5810
    %v6173 = vpop.f32.mrb[0].mxu0
    %v6174 = vadd.f32 0.0, %v6173
    %v6175 = vpop.f32.mrb[0].mxu0
    %6176 = vmatprep.mubr.f32.mxu0 0.0
    %6177 = vmatmul.mubr.f32.gmra.mrb[0].mxu0 %v5813
    %v6178 = vpop.f32.mrb[0].mxu0
    %v6179 = vadd.f32 0.0, %v6178
    %v6180 = vpop.f32.mrb[0].mxu0
    %6181 = vmatprep.mubr.f32.mxu0 0.0
    %6182 = vmatmul.mubr.f32.gmra.mrb[0].mxu0 %v5816
    %v6183 = vpop.f32.mrb[0].mxu0
    %v6184 = vadd.f32 0.0, %v6183
    %v6185 = vpop.f32.mrb[0].mxu0
    %6186 = vmatprep.mubr.f32.mxu0 0.0
    %6187 = vmatmul.mubr.f32.gmra.mrb[0].mxu0 %v5819
    %v6188 = vpop.f32.mrb[0].mxu0
    %v6189 = vadd.f32 0.0, %v6188
    %v6190 = vpop.f32.mrb[0].mxu0
    %6191 = vmatprep.mubr.f32.mxu0 0.0
    %6192 = vmatmul.mubr.f32.gmra.mrb[0].mxu0 %v5822
    %v6193 = vpop.f32.mrb[0].mxu0
    %v6194 = vadd.f32 0.0, %v6193
    %v6195 = vpop.f32.mrb[0].mxu0
    %6196 = vmatprep.mubr.f32.mxu0 0.0
    %6197 = vmatmul.mubr.f32.gmra.mrb[0].mxu0 %v5825
    %v6198 = vpop.f32.mrb[0].mxu0
    %v6199 = vadd.f32 0.0, %v6198
    %v6200 = vpop.f32.mrb[0].mxu0
    %6201 = vmatprep.mubr.f32.mxu0 0.0
    %6202 = vmatmul.mubr.f32.gmra.mrb[0].mxu0 %v5828
    %v6203 = vpop.f32.mrb[0].mxu0
    %v6204 = vadd.f32 0.0, %v6203
    %v6205 = vpop.f32.mrb[0].mxu0
    %6206 = vmatprep.mubr.f32.mxu0 0.0
    %6207 = vmatmul.mubr.f32.gmra.mrb[0].mxu0 %v5831
    %v6208 = vpop.f32.mrb[0].mxu0
    %v6209 = vadd.f32 0.0, %v6208
    %v6210 = vpop.f32.mrb[0].mxu0
    %6211 = vmatprep.mubr.f32.mxu0 0.0
    %6212 = vmatmul.mubr.f32.gmra.mrb[0].mxu0 %v5834
    %v6213 = vpop.f32.mrb[0].mxu0
    %v6214 = vadd.f32 0.0, %v6213
    %v6215 = vpop.f32.mrb[0].mxu0
    %6216 = vmatprep.mubr.f32.mxu0 0.0
    %6217 = vmatmul.mubr.f32.gmra.mrb[0].mxu0 %v5837
    %v6218 = vpop.f32.mrb[0].mxu0
    %v6219 = vadd.f32 0.0, %v6218
    %v6220 = vpop.f32.mrb[0].mxu0
    %6221 = vmatprep.mubr.f32.mxu0 0.0
    %6222 = vmatmul.mubr.f32.gmra.mrb[0].mxu0 %v5840
    %v6223 = vpop.f32.mrb[0].mxu0
    %v6224 = vadd.f32 0.0, %v6223
    %v6225 = vpop.f32.mrb[0].mxu0
    %6226 = vdwg.mxu0
    %v6227 = vadd.f32 %v5517, %v5909
    %v6228 = vadd.f32 %v5518, %v5914
    %v6229 = vadd.f32 %v5519, %v5919
    %v6230 = vadd.f32 %v5520, %v5924
    %v6231 = vadd.f32 %v5521, %v5929
    %v6232 = vadd.f32 %v5522, %v5934
    %v6233 = vadd.f32 %v5523, %v5939
    %v6234 = vadd.f32 %v5524, %v5944
    %v6235 = vadd.f32 %v5525, %v5949
    %v6236 = vadd.f32 %v5526, %v5954
    %v6237 = vadd.f32 %v5527, %v5959
    %v6238 = vadd.f32 %v5528, %v5964
    %v6239 = vadd.f32 %v5529, %v5969
    %v6240 = vadd.f32 %v5530, %v5974
    %v6241 = vadd.f32 %v5531, %v5979
    %v6242 = vadd.f32 %v5532, %v5984
    %v6243 = vadd.f32 %v5533, %v5989
    %v6244 = vadd.f32 %v5534, %v5994
    %v6245 = vadd.f32 %v5535, %v5999
    %v6246 = vadd.f32 %v5536, %v6004
    %v6247 = vadd.f32 %v5537, %v6009
    %v6248 = vadd.f32 %v5538, %v6014
    %v6249 = vadd.f32 %v5539, %v6019
    %v6250 = vadd.f32 %v5540, %v6024
    %v6251 = vadd.f32 %v5541, %v6029
    %v6252 = vadd.f32 %v5542, %v6034
    %v6253 = vadd.f32 %v5543, %v6039
    %v6254 = vadd.f32 %v5544, %v6044
    %v6255 = vadd.f32 %v5545, %v6049
    %v6256 = vadd.f32 %v5546, %v6054
    %v6257 = vadd.f32 %v5547, %v6059
    %v6258 = vadd.f32 %v5548, %v6064
    %v6259 = vadd.f32 %v5549, %v6069
    %v6260 = vadd.f32 %v5550, %v6074
    %v6261 = vadd.f32 %v5551, %v6079
    %v6262 = vadd.f32 %v5552, %v6084
    %v6263 = vadd.f32 %v5553, %v6089
    %v6264 = vadd.f32 %v5554, %v6094
    %v6265 = vadd.f32 %v5555, %v6099
    %v6266 = vadd.f32 %v5556, %v6104
    %v6267 = vadd.f32 %v5557, %v6109
    %v6268 = vadd.f32 %v5558, %v6114
    %v6269 = vadd.f32 %v5559, %v6119
    %v6270 = vadd.f32 %v5560, %v6124
    %v6271 = vadd.f32 %v5561, %v6129
    %v6272 = vadd.f32 %v5562, %v6134
    %v6273 = vadd.f32 %v5563, %v6139
    %v6274 = vadd.f32 %v5564, %v6144
    %v6275 = vadd.f32 %v5565, %v6149
    %v6276 = vadd.f32 %v5566, %v6154
    %v6277 = vadd.f32 %v5567, %v6159
    %v6278 = vadd.f32 %v5568, %v6164
    %v6279 = vadd.f32 %v5569, %v6169
    %v6280 = vadd.f32 %v5570, %v6174
    %v6281 = vadd.f32 %v5571, %v6179
    %v6282 = vadd.f32 %v5572, %v6184
    %v6283 = vadd.f32 %v5573, %v6189
    %v6284 = vadd.f32 %v5574, %v6194
    %v6285 = vadd.f32 %v5575, %v6199
    %v6286 = vadd.f32 %v5576, %v6204
    %v6287 = vadd.f32 %v5577, %v6209
    %v6288 = vadd.f32 %v5578, %v6214
    %v6289 = vadd.f32 %v5579, %v6219
    %v6290 = vadd.f32 %v5580, %v6224
    %v6291 = vld [vmem:[%s2] sm:$0x1]
    %v6293 = vlaneseq
    %v6294 = vshrl.u32 %v6293, 7
    %v6295 = vsub.s32 0, %v6294
    %v6296 = vrot.slane %v6291, %v6295
    %v6298 = vmul.f32 %v6227, %v6296
    %v6299 = vmul.f32 %v6228, %v6296
    %v6300 = vmul.f32 %v6229, %v6296
    %v6301 = vmul.f32 %v6230, %v6296
    %v6302 = vmul.f32 %v6231, %v6296
    %v6303 = vmul.f32 %v6232, %v6296
    %v6304 = vmul.f32 %v6233, %v6296
    %v6305 = vmul.f32 %v6234, %v6296
    %v6306 = vmul.f32 %v6235, %v6296
    %v6307 = vmul.f32 %v6236, %v6296
    %v6308 = vmul.f32 %v6237, %v6296
    %v6309 = vmul.f32 %v6238, %v6296
    %v6310 = vmul.f32 %v6239, %v6296
    %v6311 = vmul.f32 %v6240, %v6296
    %v6312 = vmul.f32 %v6241, %v6296
    %v6313 = vmul.f32 %v6242, %v6296
    %v6314 = vmul.f32 %v6243, %v6296
    %v6315 = vmul.f32 %v6244, %v6296
    %v6316 = vmul.f32 %v6245, %v6296
    %v6317 = vmul.f32 %v6246, %v6296
    %v6318 = vmul.f32 %v6247, %v6296
    %v6319 = vmul.f32 %v6248, %v6296
    %v6320 = vmul.f32 %v6249, %v6296
    %v6321 = vmul.f32 %v6250, %v6296
    %v6322 = vmul.f32 %v6251, %v6296
    %v6323 = vmul.f32 %v6252, %v6296
    %v6324 = vmul.f32 %v6253, %v6296
    %v6325 = vmul.f32 %v6254, %v6296
    %v6326 = vmul.f32 %v6255, %v6296
    %v6327 = vmul.f32 %v6256, %v6296
    %v6328 = vmul.f32 %v6257, %v6296
    %v6329 = vmul.f32 %v6258, %v6296
    %v6330 = vmul.f32 %v6259, %v6296
    %v6331 = vmul.f32 %v6260, %v6296
    %v6332 = vmul.f32 %v6261, %v6296
    %v6333 = vmul.f32 %v6262, %v6296
    %v6334 = vmul.f32 %v6263, %v6296
    %v6335 = vmul.f32 %v6264, %v6296
    %v6336 = vmul.f32 %v6265, %v6296
    %v6337 = vmul.f32 %v6266, %v6296
    %v6338 = vmul.f32 %v6267, %v6296
    %v6339 = vmul.f32 %v6268, %v6296
    %v6340 = vmul.f32 %v6269, %v6296
    %v6341 = vmul.f32 %v6270, %v6296
    %v6342 = vmul.f32 %v6271, %v6296
    %v6343 = vmul.f32 %v6272, %v6296
    %v6344 = vmul.f32 %v6273, %v6296
    %v6345 = vmul.f32 %v6274, %v6296
    %v6346 = vmul.f32 %v6275, %v6296
    %v6347 = vmul.f32 %v6276, %v6296
    %v6348 = vmul.f32 %v6277, %v6296
    %v6349 = vmul.f32 %v6278, %v6296
    %v6350 = vmul.f32 %v6279, %v6296
    %v6351 = vmul.f32 %v6280, %v6296
    %v6352 = vmul.f32 %v6281, %v6296
    %v6353 = vmul.f32 %v6282, %v6296
    %v6354 = vmul.f32 %v6283, %v6296
    %v6355 = vmul.f32 %v6284, %v6296
    %v6356 = vmul.f32 %v6285, %v6296
    %v6357 = vmul.f32 %v6286, %v6296
    %v6358 = vmul.f32 %v6287, %v6296
    %v6359 = vmul.f32 %v6288, %v6296
    %v6360 = vmul.f32 %v6289, %v6296
    %v6361 = vmul.f32 %v6290, %v6296
    %v6362 = vld [vmem:[%s3] sm:$0x1]
    %v6364 = vlaneseq
    %v6365 = vshrl.u32 %v6364, 7
    %v6366 = vsub.s32 0, %v6365
    %v6367 = vrot.slane %v6362, %v6366
    %v6369 = vadd.f32 %v6298, %v6367
    %v6370 = vadd.f32 %v6299, %v6367
    %v6371 = vadd.f32 %v6300, %v6367
    %v6372 = vadd.f32 %v6301, %v6367
    %v6373 = vadd.f32 %v6302, %v6367
    %v6374 = vadd.f32 %v6303, %v6367
    %v6375 = vadd.f32 %v6304, %v6367
    %v6376 = vadd.f32 %v6305, %v6367
    %v6377 = vadd.f32 %v6306, %v6367
    %v6378 = vadd.f32 %v6307, %v6367
    %v6379 = vadd.f32 %v6308, %v6367
    %v6380 = vadd.f32 %v6309, %v6367
    %v6381 = vadd.f32 %v6310, %v6367
    %v6382 = vadd.f32 %v6311, %v6367
    %v6383 = vadd.f32 %v6312, %v6367
    %v6384 = vadd.f32 %v6313, %v6367
    %v6385 = vadd.f32 %v6314, %v6367
    %v6386 = vadd.f32 %v6315, %v6367
    %v6387 = vadd.f32 %v6316, %v6367
    %v6388 = vadd.f32 %v6317, %v6367
    %v6389 = vadd.f32 %v6318, %v6367
    %v6390 = vadd.f32 %v6319, %v6367
    %v6391 = vadd.f32 %v6320, %v6367
    %v6392 = vadd.f32 %v6321, %v6367
    %v6393 = vadd.f32 %v6322, %v6367
    %v6394 = vadd.f32 %v6323, %v6367
    %v6395 = vadd.f32 %v6324, %v6367
    %v6396 = vadd.f32 %v6325, %v6367
    %v6397 = vadd.f32 %v6326, %v6367
    %v6398 = vadd.f32 %v6327, %v6367
    %v6399 = vadd.f32 %v6328, %v6367
    %v6400 = vadd.f32 %v6329, %v6367
    %v6401 = vadd.f32 %v6330, %v6367
    %v6402 = vadd.f32 %v6331, %v6367
    %v6403 = vadd.f32 %v6332, %v6367
    %v6404 = vadd.f32 %v6333, %v6367
    %v6405 = vadd.f32 %v6334, %v6367
    %v6406 = vadd.f32 %v6335, %v6367
    %v6407 = vadd.f32 %v6336, %v6367
    %v6408 = vadd.f32 %v6337, %v6367
    %v6409 = vadd.f32 %v6338, %v6367
    %v6410 = vadd.f32 %v6339, %v6367
    %v6411 = vadd.f32 %v6340, %v6367
    %v6412 = vadd.f32 %v6341, %v6367
    %v6413 = vadd.f32 %v6342, %v6367
    %v6414 = vadd.f32 %v6343, %v6367
    %v6415 = vadd.f32 %v6344, %v6367
    %v6416 = vadd.f32 %v6345, %v6367
    %v6417 = vadd.f32 %v6346, %v6367
    %v6418 = vadd.f32 %v6347, %v6367
    %v6419 = vadd.f32 %v6348, %v6367
    %v6420 = vadd.f32 %v6349, %v6367
    %v6421 = vadd.f32 %v6350, %v6367
    %v6422 = vadd.f32 %v6351, %v6367
    %v6423 = vadd.f32 %v6352, %v6367
    %v6424 = vadd.f32 %v6353, %v6367
    %v6425 = vadd.f32 %v6354, %v6367
    %v6426 = vadd.f32 %v6355, %v6367
    %v6427 = vadd.f32 %v6356, %v6367
    %v6428 = vadd.f32 %v6357, %v6367
    %v6429 = vadd.f32 %v6358, %v6367
    %v6430 = vadd.f32 %v6359, %v6367
    %v6431 = vadd.f32 %v6360, %v6367
    %v6432 = vadd.f32 %v6361, %v6367
    %v6433 = vmax.f32 %v6369, 0.0
    %v6434 = vmax.f32 %v6370, 0.0
    %v6435 = vmax.f32 %v6371, 0.0
    %v6436 = vmax.f32 %v6372, 0.0
    %v6437 = vmax.f32 %v6373, 0.0
    %v6438 = vmax.f32 %v6374, 0.0
    %v6439 = vmax.f32 %v6375, 0.0
    %v6440 = vmax.f32 %v6376, 0.0
    %v6441 = vmax.f32 %v6377, 0.0
    %v6442 = vmax.f32 %v6378, 0.0
    %v6443 = vmax.f32 %v6379, 0.0
    %v6444 = vmax.f32 %v6380, 0.0
    %v6445 = vmax.f32 %v6381, 0.0
    %v6446 = vmax.f32 %v6382, 0.0
    %v6447 = vmax.f32 %v6383, 0.0
    %v6448 = vmax.f32 %v6384, 0.0
    %v6449 = vmax.f32 %v6385, 0.0
    %v6450 = vmax.f32 %v6386, 0.0
    %v6451 = vmax.f32 %v6387, 0.0
    %v6452 = vmax.f32 %v6388, 0.0
    %v6453 = vmax.f32 %v6389, 0.0
    %v6454 = vmax.f32 %v6390, 0.0
    %v6455 = vmax.f32 %v6391, 0.0
    %v6456 = vmax.f32 %v6392, 0.0
    %v6457 = vmax.f32 %v6393, 0.0
    %v6458 = vmax.f32 %v6394, 0.0
    %v6459 = vmax.f32 %v6395, 0.0
    %v6460 = vmax.f32 %v6396, 0.0
    %v6461 = vmax.f32 %v6397, 0.0
    %v6462 = vmax.f32 %v6398, 0.0
    %v6463 = vmax.f32 %v6399, 0.0
    %v6464 = vmax.f32 %v6400, 0.0
    %v6465 = vmax.f32 %v6401, 0.0
    %v6466 = vmax.f32 %v6402, 0.0
    %v6467 = vmax.f32 %v6403, 0.0
    %v6468 = vmax.f32 %v6404, 0.0
    %v6469 = vmax.f32 %v6405, 0.0
    %v6470 = vmax.f32 %v6406, 0.0
    %v6471 = vmax.f32 %v6407, 0.0
    %v6472 = vmax.f32 %v6408, 0.0
    %v6473 = vmax.f32 %v6409, 0.0
    %v6474 = vmax.f32 %v6410, 0.0
    %v6475 = vmax.f32 %v6411, 0.0
    %v6476 = vmax.f32 %v6412, 0.0
    %v6477 = vmax.f32 %v6413, 0.0
    %v6478 = vmax.f32 %v6414, 0.0
    %v6479 = vmax.f32 %v6415, 0.0
    %v6480 = vmax.f32 %v6416, 0.0
    %v6481 = vmax.f32 %v6417, 0.0
    %v6482 = vmax.f32 %v6418, 0.0
    %v6483 = vmax.f32 %v6419, 0.0
    %v6484 = vmax.f32 %v6420, 0.0
    %v6485 = vmax.f32 %v6421, 0.0
    %v6486 = vmax.f32 %v6422, 0.0
    %v6487 = vmax.f32 %v6423, 0.0
    %v6488 = vmax.f32 %v6424, 0.0
    %v6489 = vmax.f32 %v6425, 0.0
    %v6490 = vmax.f32 %v6426, 0.0
    %v6491 = vmax.f32 %v6427, 0.0
    %v6492 = vmax.f32 %v6428, 0.0
    %v6493 = vmax.f32 %v6429, 0.0
    %v6494 = vmax.f32 %v6430, 0.0
    %v6495 = vmax.f32 %v6431, 0.0
    %v6496 = vmax.f32 %v6432, 0.0
    %6497 = vst.msk [vmem:[#allocation2] sm:$0xff] %vm164, 0.0
    %6498 = vst.msk [vmem:[#allocation2 + $0x8] sm:$0xff] %vm164, 0.0
    %vm6499 = vcmask 254976
    %6500 = vst.msk [vmem:[#allocation2 + $0x10] sm:$0x3] %vm6499, 0.0
    %6501 = vst.msk [vmem:[#allocation2 + $0x1b0] sm:$0xff] %vm164, 0.0
    %6502 = vst.msk [vmem:[#allocation2 + $0x1b8] sm:$0xff] %vm164, 0.0
    %6503 = vst.msk [vmem:[#allocation2 + $0x1c0] sm:$0x3] %vm6499, 0.0
    %s6504 = scalar_lea.vmem [#allocation2], 408
    %6505 = vst.msk [vmem:[%s6504] sm:$0xff] %vm164, 0.0
    %6506 = vst.msk [vmem:[%s6504 + $0x8] sm:$0xff] %vm164, 0.0
    %6507 = vst.msk [vmem:[%s6504 + $0x10] sm:$0x3] %vm6499, 0.0
    %6508 = vst.msk [vmem:[%s6504 + $0x1b0] sm:$0xff] %vm164, 0.0
    %6509 = vst.msk [vmem:[%s6504 + $0x1b8] sm:$0xff] %vm164, 0.0
    %6510 = vst.msk [vmem:[%s6504 + $0x1c0] sm:$0x3] %vm6499, 0.0
    %vm6511 = vcmask 253952
    %6512 = vst.msk [vmem:[#allocation2] sm:$0x1] %vm6511, 0.0
    %6513 = vst.msk [vmem:[#allocation2 + $0x18] sm:$0x1] %vm6511, 0.0
    %6514 = vst.msk [vmem:[#allocation2 + $0x30] sm:$0x1] %vm6511, 0.0
    %6515 = vst.msk [vmem:[#allocation2 + $0x48] sm:$0x1] %vm6511, 0.0
    %6516 = vst.msk [vmem:[#allocation2 + $0x60] sm:$0x1] %vm6511, 0.0
    %6517 = vst.msk [vmem:[#allocation2 + $0x78] sm:$0x1] %vm6511, 0.0
    %6518 = vst.msk [vmem:[#allocation2 + $0x90] sm:$0x1] %vm6511, 0.0
    %6519 = vst.msk [vmem:[#allocation2 + $0xa8] sm:$0x1] %vm6511, 0.0
    %6520 = vst.msk [vmem:[#allocation2 + $0xc0] sm:$0x1] %vm6511, 0.0
    %6521 = vst.msk [vmem:[#allocation2 + $0xd8] sm:$0x1] %vm6511, 0.0
    %6522 = vst.msk [vmem:[#allocation2 + $0xf0] sm:$0x1] %vm6511, 0.0
    %6523 = vst.msk [vmem:[#allocation2 + $0x108] sm:$0x1] %vm6511, 0.0
    %6524 = vst.msk [vmem:[#allocation2 + $0x120] sm:$0x1] %vm6511, 0.0
    %6525 = vst.msk [vmem:[#allocation2 + $0x138] sm:$0x1] %vm6511, 0.0
    %6526 = vst.msk [vmem:[#allocation2 + $0x150] sm:$0x1] %vm6511, 0.0
    %6527 = vst.msk [vmem:[#allocation2 + $0x168] sm:$0x1] %vm6511, 0.0
    %6528 = vst.msk [vmem:[#allocation2 + $0x180] sm:$0x1] %vm6511, 0.0
    %6529 = vst.msk [vmem:[#allocation2 + $0x198] sm:$0x1] %vm6511, 0.0
    %6530 = vst.msk [vmem:[#allocation2 + $0x1b0] sm:$0x1] %vm6511, 0.0
    %6531 = vst.msk [vmem:[#allocation2 + $0x1c8] sm:$0x1] %vm6511, 0.0
    %6532 = vst.msk [vmem:[#allocation2 + $0x1e0] sm:$0x1] %vm6511, 0.0
    %6533 = vst.msk [vmem:[#allocation2 + $0x1f8] sm:$0x1] %vm6511, 0.0
    %6534 = vst.msk [vmem:[#allocation2 + $0x210] sm:$0x1] %vm6511, 0.0
    %6535 = vst.msk [vmem:[#allocation2 + $0x228] sm:$0x1] %vm6511, 0.0
    %6536 = vst.msk [vmem:[#allocation2 + $0x240] sm:$0x1] %vm6511, 0.0
    %6537 = vst.msk [vmem:[#allocation2 + $0x258] sm:$0x1] %vm6511, 0.0
    %6538 = vst.msk [vmem:[#allocation2 + $0x270] sm:$0x1] %vm6511, 0.0
    %6539 = vst.msk [vmem:[#allocation2 + $0x288] sm:$0x1] %vm6511, 0.0
    %6540 = vst.msk [vmem:[#allocation2 + $0x2a0] sm:$0x1] %vm6511, 0.0
    %6541 = vst.msk [vmem:[#allocation2 + $0x2b8] sm:$0x1] %vm6511, 0.0
    %6542 = vst.msk [vmem:[#allocation2 + $0x2d0] sm:$0x1] %vm6511, 0.0
    %6543 = vst.msk [vmem:[#allocation2 + $0x2e8] sm:$0x1] %vm6511, 0.0
    %6544 = vst.msk [vmem:[#allocation2 + $0x300] sm:$0x1] %vm6511, 0.0
    %6545 = vst.msk [vmem:[#allocation2 + $0x318] sm:$0x1] %vm6511, 0.0
    %6546 = vst.msk [vmem:[#allocation2 + $0x330] sm:$0x1] %vm6511, 0.0
    %6547 = vst.msk [vmem:[#allocation2 + $0x348] sm:$0x1] %vm6511, 0.0
    %6548 = vst.msk [vmem:[#allocation2 + $0x11] sm:$0x1] %vm6511, 0.0
    %6549 = vst.msk [vmem:[#allocation2 + $0x29] sm:$0x1] %vm6511, 0.0
    %6550 = vst.msk [vmem:[#allocation2 + $0x41] sm:$0x1] %vm6511, 0.0
    %6551 = vst.msk [vmem:[#allocation2 + $0x59] sm:$0x1] %vm6511, 0.0
    %6552 = vst.msk [vmem:[#allocation2 + $0x71] sm:$0x1] %vm6511, 0.0
    %6553 = vst.msk [vmem:[#allocation2 + $0x89] sm:$0x1] %vm6511, 0.0
    %6554 = vst.msk [vmem:[#allocation2 + $0xa1] sm:$0x1] %vm6511, 0.0
    %6555 = vst.msk [vmem:[#allocation2 + $0xb9] sm:$0x1] %vm6511, 0.0
    %6556 = vst.msk [vmem:[#allocation2 + $0xd1] sm:$0x1] %vm6511, 0.0
    %6557 = vst.msk [vmem:[#allocation2 + $0xe9] sm:$0x1] %vm6511, 0.0
    %6558 = vst.msk [vmem:[#allocation2 + $0x101] sm:$0x1] %vm6511, 0.0
    %6559 = vst.msk [vmem:[#allocation2 + $0x119] sm:$0x1] %vm6511, 0.0
    %6560 = vst.msk [vmem:[#allocation2 + $0x131] sm:$0x1] %vm6511, 0.0
    %6561 = vst.msk [vmem:[#allocation2 + $0x149] sm:$0x1] %vm6511, 0.0
    %6562 = vst.msk [vmem:[#allocation2 + $0x161] sm:$0x1] %vm6511, 0.0
    %6563 = vst.msk [vmem:[#allocation2 + $0x179] sm:$0x1] %vm6511, 0.0
    %6564 = vst.msk [vmem:[#allocation2 + $0x191] sm:$0x1] %vm6511, 0.0
    %6565 = vst.msk [vmem:[#allocation2 + $0x1a9] sm:$0x1] %vm6511, 0.0
    %6566 = vst.msk [vmem:[#allocation2 + $0x1c1] sm:$0x1] %vm6511, 0.0
    %6567 = vst.msk [vmem:[#allocation2 + $0x1d9] sm:$0x1] %vm6511, 0.0
    %6568 = vst.msk [vmem:[#allocation2 + $0x1f1] sm:$0x1] %vm6511, 0.0
    %6569 = vst.msk [vmem:[#allocation2 + $0x209] sm:$0x1] %vm6511, 0.0
    %6570 = vst.msk [vmem:[#allocation2 + $0x221] sm:$0x1] %vm6511, 0.0
    %6571 = vst.msk [vmem:[#allocation2 + $0x239] sm:$0x1] %vm6511, 0.0
    %6572 = vst.msk [vmem:[#allocation2 + $0x251] sm:$0x1] %vm6511, 0.0
    %6573 = vst.msk [vmem:[#allocation2 + $0x269] sm:$0x1] %vm6511, 0.0
    %6574 = vst.msk [vmem:[#allocation2 + $0x281] sm:$0x1] %vm6511, 0.0
    %6575 = vst.msk [vmem:[#allocation2 + $0x299] sm:$0x1] %vm6511, 0.0
    %6576 = vst.msk [vmem:[#allocation2 + $0x2b1] sm:$0x1] %vm6511, 0.0
    %6577 = vst.msk [vmem:[#allocation2 + $0x2c9] sm:$0x1] %vm6511, 0.0
    %6578 = vst.msk [vmem:[#allocation2 + $0x2e1] sm:$0x1] %vm6511, 0.0
    %6579 = vst.msk [vmem:[#allocation2 + $0x2f9] sm:$0x1] %vm6511, 0.0
    %6580 = vst.msk [vmem:[#allocation2 + $0x311] sm:$0x1] %vm6511, 0.0
    %6581 = vst.msk [vmem:[#allocation2 + $0x329] sm:$0x1] %vm6511, 0.0
    %6582 = vst.msk [vmem:[#allocation2 + $0x341] sm:$0x1] %vm6511, 0.0
    %6583 = vst.msk [vmem:[#allocation2 + $0x359] sm:$0x1] %vm6511, 0.0
    %s6584 = scalar_lea.vmem [#allocation2], 24
    %6585 = vst.msk [vmem:[%s6584 + $0x1] sm:$0xff] %vm164, %v6433
    %6586 = vst.msk [vmem:[%s6584 + $0x9] sm:$0xff] %vm164, %v6434
    %6587 = vst.msk [vmem:[%s6584 + $0x19] sm:$0xff] %vm164, %v6435
    %6588 = vst.msk [vmem:[%s6584 + $0x21] sm:$0xff] %vm164, %v6436
    %6589 = vst.msk [vmem:[%s6584 + $0x31] sm:$0xff] %vm164, %v6437
    %6590 = vst.msk [vmem:[%s6584 + $0x39] sm:$0xff] %vm164, %v6438
    %6591 = vst.msk [vmem:[%s6584 + $0x49] sm:$0xff] %vm164, %v6439
    %6592 = vst.msk [vmem:[%s6584 + $0x51] sm:$0xff] %vm164, %v6440
    %6593 = vst.msk [vmem:[%s6584 + $0x61] sm:$0xff] %vm164, %v6441
    %6594 = vst.msk [vmem:[%s6584 + $0x69] sm:$0xff] %vm164, %v6442
    %6595 = vst.msk [vmem:[%s6584 + $0x79] sm:$0xff] %vm164, %v6443
    %6596 = vst.msk [vmem:[%s6584 + $0x81] sm:$0xff] %vm164, %v6444
    %6597 = vst.msk [vmem:[%s6584 + $0x91] sm:$0xff] %vm164, %v6445
    %6598 = vst.msk [vmem:[%s6584 + $0x99] sm:$0xff] %vm164, %v6446
    %6599 = vst.msk [vmem:[%s6584 + $0xa9] sm:$0xff] %vm164, %v6447
    %6600 = vst.msk [vmem:[%s6584 + $0xb1] sm:$0xff] %vm164, %v6448
    %6601 = vst.msk [vmem:[%s6584 + $0xc1] sm:$0xff] %vm164, %v6449
    %6602 = vst.msk [vmem:[%s6584 + $0xc9] sm:$0xff] %vm164, %v6450
    %6603 = vst.msk [vmem:[%s6584 + $0xd9] sm:$0xff] %vm164, %v6451
    %6604 = vst.msk [vmem:[%s6584 + $0xe1] sm:$0xff] %vm164, %v6452
    %6605 = vst.msk [vmem:[%s6584 + $0xf1] sm:$0xff] %vm164, %v6453
    %6606 = vst.msk [vmem:[%s6584 + $0xf9] sm:$0xff] %vm164, %v6454
    %6607 = vst.msk [vmem:[%s6584 + $0x109] sm:$0xff] %vm164, %v6455
    %6608 = vst.msk [vmem:[%s6584 + $0x111] sm:$0xff] %vm164, %v6456
    %6609 = vst.msk [vmem:[%s6584 + $0x121] sm:$0xff] %vm164, %v6457
    %6610 = vst.msk [vmem:[%s6584 + $0x129] sm:$0xff] %vm164, %v6458
    %6611 = vst.msk [vmem:[%s6584 + $0x139] sm:$0xff] %vm164, %v6459
    %6612 = vst.msk [vmem:[%s6584 + $0x141] sm:$0xff] %vm164, %v6460
    %6613 = vst.msk [vmem:[%s6584 + $0x151] sm:$0xff] %vm164, %v6461
    %6614 = vst.msk [vmem:[%s6584 + $0x159] sm:$0xff] %vm164, %v6462
    %6615 = vst.msk [vmem:[%s6584 + $0x169] sm:$0xff] %vm164, %v6463
    %6616 = vst.msk [vmem:[%s6584 + $0x171] sm:$0xff] %vm164, %v6464
    %6617 = vst.msk [vmem:[%s6584 + $0x1b1] sm:$0xff] %vm164, %v6465
    %6618 = vst.msk [vmem:[%s6584 + $0x1b9] sm:$0xff] %vm164, %v6466
    %6619 = vst.msk [vmem:[%s6584 + $0x1c9] sm:$0xff] %vm164, %v6467
    %6620 = vst.msk [vmem:[%s6584 + $0x1d1] sm:$0xff] %vm164, %v6468
    %6621 = vst.msk [vmem:[%s6584 + $0x1e1] sm:$0xff] %vm164, %v6469
    %6622 = vst.msk [vmem:[%s6584 + $0x1e9] sm:$0xff] %vm164, %v6470
    %6623 = vst.msk [vmem:[%s6584 + $0x1f9] sm:$0xff] %vm164, %v6471
    %6624 = vst.msk [vmem:[%s6584 + $0x201] sm:$0xff] %vm164, %v6472
    %6625 = vst.msk [vmem:[%s6584 + $0x211] sm:$0xff] %vm164, %v6473
    %6626 = vst.msk [vmem:[%s6584 + $0x219] sm:$0xff] %vm164, %v6474
    %6627 = vst.msk [vmem:[%s6584 + $0x229] sm:$0xff] %vm164, %v6475
    %6628 = vst.msk [vmem:[%s6584 + $0x231] sm:$0xff] %vm164, %v6476
    %6629 = vst.msk [vmem:[%s6584 + $0x241] sm:$0xff] %vm164, %v6477
    %6630 = vst.msk [vmem:[%s6584 + $0x249] sm:$0xff] %vm164, %v6478
    %6631 = vst.msk [vmem:[%s6584 + $0x259] sm:$0xff] %vm164, %v6479
    %6632 = vst.msk [vmem:[%s6584 + $0x261] sm:$0xff] %vm164, %v6480
    %6633 = vst.msk [vmem:[%s6584 + $0x271] sm:$0xff] %vm164, %v6481
    %6634 = vst.msk [vmem:[%s6584 + $0x279] sm:$0xff] %vm164, %v6482
    %6635 = vst.msk [vmem:[%s6584 + $0x289] sm:$0xff] %vm164, %v6483
    %6636 = vst.msk [vmem:[%s6584 + $0x291] sm:$0xff] %vm164, %v6484
    %6637 = vst.msk [vmem:[%s6584 + $0x2a1] sm:$0xff] %vm164, %v6485
    %6638 = vst.msk [vmem:[%s6584 + $0x2a9] sm:$0xff] %vm164, %v6486
    %6639 = vst.msk [vmem:[%s6584 + $0x2b9] sm:$0xff] %vm164, %v6487
    %6640 = vst.msk [vmem:[%s6584 + $0x2c1] sm:$0xff] %vm164, %v6488
    %6641 = vst.msk [vmem:[%s6584 + $0x2d1] sm:$0xff] %vm164, %v6489
    %6642 = vst.msk [vmem:[%s6584 + $0x2d9] sm:$0xff] %vm164, %v6490
    %6643 = vst.msk [vmem:[%s6584 + $0x2e9] sm:$0xff] %vm164, %v6491
    %6644 = vst.msk [vmem:[%s6584 + $0x2f1] sm:$0xff] %vm164, %v6492
    %6645 = vst.msk [vmem:[%s6584 + $0x301] sm:$0xff] %vm164, %v6493
    %6646 = vst.msk [vmem:[%s6584 + $0x309] sm:$0xff] %vm164, %v6494
    %6647 = vst.msk [vmem:[%s6584 + $0x319] sm:$0xff] %vm164, %v6495
    %6648 = vst.msk [vmem:[%s6584 + $0x321] sm:$0xff] %vm164, %v6496
    %v6649 = vld [vmem:[%s4] sm:$0x1]
    %v6650 = vld [vmem:[#allocation2] sm:$0xff]
    %v6651 = vld [vmem:[#allocation2 + $0x8] sm:$0xff]
    %v6652 = vld [vmem:[#allocation2 + $0x18] sm:$0xff]
    %v6653 = vld [vmem:[#allocation2 + $0x20] sm:$0xff]
    %v6654 = vld [vmem:[#allocation2 + $0x30] sm:$0xff]
    %v6655 = vld [vmem:[#allocation2 + $0x38] sm:$0xff]
    %v6656 = vld [vmem:[#allocation2 + $0x48] sm:$0xff]
    %v6657 = vld [vmem:[#allocation2 + $0x50] sm:$0xff]
    %v6658 = vld [vmem:[#allocation2 + $0x60] sm:$0xff]
    %v6659 = vld [vmem:[#allocation2 + $0x68] sm:$0xff]
    %v6660 = vld [vmem:[#allocation2 + $0x78] sm:$0xff]
    %v6661 = vld [vmem:[#allocation2 + $0x80] sm:$0xff]
    %v6662 = vld [vmem:[#allocation2 + $0x90] sm:$0xff]
    %v6663 = vld [vmem:[#allocation2 + $0x98] sm:$0xff]
    %v6664 = vld [vmem:[#allocation2 + $0xa8] sm:$0xff]
    %v6665 = vld [vmem:[#allocation2 + $0xb0] sm:$0xff]
    %v6666 = vld [vmem:[#allocation2 + $0xc0] sm:$0xff]
    %v6667 = vld [vmem:[#allocation2 + $0xc8] sm:$0xff]
    %v6668 = vld [vmem:[#allocation2 + $0xd8] sm:$0xff]
    %v6669 = vld [vmem:[#allocation2 + $0xe0] sm:$0xff]
    %v6670 = vld [vmem:[#allocation2 + $0xf0] sm:$0xff]
    %v6671 = vld [vmem:[#allocation2 + $0xf8] sm:$0xff]
    %v6672 = vld [vmem:[#allocation2 + $0x108] sm:$0xff]
    %v6673 = vld [vmem:[#allocation2 + $0x110] sm:$0xff]
    %v6674 = vld [vmem:[#allocation2 + $0x120] sm:$0xff]
    %v6675 = vld [vmem:[#allocation2 + $0x128] sm:$0xff]
    %v6676 = vld [vmem:[#allocation2 + $0x138] sm:$0xff]
    %v6677 = vld [vmem:[#allocation2 + $0x140] sm:$0xff]
    %v6678 = vld [vmem:[#allocation2 + $0x150] sm:$0xff]
    %v6679 = vld [vmem:[#allocation2 + $0x158] sm:$0xff]
    %v6680 = vld [vmem:[#allocation2 + $0x168] sm:$0xff]
    %v6681 = vld [vmem:[#allocation2 + $0x170] sm:$0xff]
    %v6682 = vld [vmem:[#allocation2 + $0x1b0] sm:$0xff]
    %v6683 = vld [vmem:[#allocation2 + $0x1b8] sm:$0xff]
    %v6684 = vld [vmem:[#allocation2 + $0x1c8] sm:$0xff]
    %v6685 = vld [vmem:[#allocation2 + $0x1d0] sm:$0xff]
    %v6686 = vld [vmem:[#allocation2 + $0x1e0] sm:$0xff]
    %v6687 = vld [vmem:[#allocation2 + $0x1e8] sm:$0xff]
    %v6688 = vld [vmem:[#allocation2 + $0x1f8] sm:$0xff]
    %v6689 = vld [vmem:[#allocation2 + $0x200] sm:$0xff]
    %v6690 = vld [vmem:[#allocation2 + $0x210] sm:$0xff]
    %v6691 = vld [vmem:[#allocation2 + $0x218] sm:$0xff]
    %v6692 = vld [vmem:[#allocation2 + $0x228] sm:$0xff]
    %v6693 = vld [vmem:[#allocation2 + $0x230] sm:$0xff]
    %v6694 = vld [vmem:[#allocation2 + $0x240] sm:$0xff]
    %v6695 = vld [vmem:[#allocation2 + $0x248] sm:$0xff]
    %v6696 = vld [vmem:[#allocation2 + $0x258] sm:$0xff]
    %v6697 = vld [vmem:[#allocation2 + $0x260] sm:$0xff]
    %v6698 = vld [vmem:[#allocation2 + $0x270] sm:$0xff]
    %v6699 = vld [vmem:[#allocation2 + $0x278] sm:$0xff]
    %v6700 = vld [vmem:[#allocation2 + $0x288] sm:$0xff]
    %v6701 = vld [vmem:[#allocation2 + $0x290] sm:$0xff]
    %v6702 = vld [vmem:[#allocation2 + $0x2a0] sm:$0xff]
    %v6703 = vld [vmem:[#allocation2 + $0x2a8] sm:$0xff]
    %v6704 = vld [vmem:[#allocation2 + $0x2b8] sm:$0xff]
    %v6705 = vld [vmem:[#allocation2 + $0x2c0] sm:$0xff]
    %v6706 = vld [vmem:[#allocation2 + $0x2d0] sm:$0xff]
    %v6707 = vld [vmem:[#allocation2 + $0x2d8] sm:$0xff]
    %v6708 = vld [vmem:[#allocation2 + $0x2e8] sm:$0xff]
    %v6709 = vld [vmem:[#allocation2 + $0x2f0] sm:$0xff]
    %v6710 = vld [vmem:[#allocation2 + $0x300] sm:$0xff]
    %v6711 = vld [vmem:[#allocation2 + $0x308] sm:$0xff]
    %v6712 = vld [vmem:[#allocation2 + $0x318] sm:$0xff]
    %v6713 = vld [vmem:[#allocation2 + $0x320] sm:$0xff]
    %v6714 = vlaneseq
    %v6715 = vshrl.u32 %v6714, 7
    %v6716 = vsub.s32 0, %v6715
    %v6717 = vrot.slane %v6649, %v6716
    %v6718 = vmul.f32 %v6650, %v6717
    %v6719 = vmul.f32 %v6651, %v6717
    %v6720 = vmul.f32 %v6652, %v6717
    %v6721 = vmul.f32 %v6653, %v6717
    %v6722 = vmul.f32 %v6654, %v6717
    %v6723 = vmul.f32 %v6655, %v6717
    %v6724 = vmul.f32 %v6656, %v6717
    %v6725 = vmul.f32 %v6657, %v6717
    %v6726 = vmul.f32 %v6658, %v6717
    %v6727 = vmul.f32 %v6659, %v6717
    %v6728 = vmul.f32 %v6660, %v6717
    %v6729 = vmul.f32 %v6661, %v6717
    %v6730 = vmul.f32 %v6662, %v6717
    %v6731 = vmul.f32 %v6663, %v6717
    %v6732 = vmul.f32 %v6664, %v6717
    %v6733 = vmul.f32 %v6665, %v6717
    %v6734 = vmul.f32 %v6666, %v6717
    %v6735 = vmul.f32 %v6667, %v6717
    %v6736 = vmul.f32 %v6668, %v6717
    %v6737 = vmul.f32 %v6669, %v6717
    %v6738 = vmul.f32 %v6670, %v6717
    %v6739 = vmul.f32 %v6671, %v6717
    %v6740 = vmul.f32 %v6672, %v6717
    %v6741 = vmul.f32 %v6673, %v6717
    %v6742 = vmul.f32 %v6674, %v6717
    %v6743 = vmul.f32 %v6675, %v6717
    %v6744 = vmul.f32 %v6676, %v6717
    %v6745 = vmul.f32 %v6677, %v6717
    %v6746 = vmul.f32 %v6678, %v6717
    %v6747 = vmul.f32 %v6679, %v6717
    %v6748 = vmul.f32 %v6680, %v6717
    %v6749 = vmul.f32 %v6681, %v6717
    %v6750 = vmul.f32 %v6682, %v6717
    %v6751 = vmul.f32 %v6683, %v6717
    %v6752 = vmul.f32 %v6684, %v6717
    %v6753 = vmul.f32 %v6685, %v6717
    %v6754 = vmul.f32 %v6686, %v6717
    %v6755 = vmul.f32 %v6687, %v6717
    %v6756 = vmul.f32 %v6688, %v6717
    %v6757 = vmul.f32 %v6689, %v6717
    %v6758 = vmul.f32 %v6690, %v6717
    %v6759 = vmul.f32 %v6691, %v6717
    %v6760 = vmul.f32 %v6692, %v6717
    %v6761 = vmul.f32 %v6693, %v6717
    %v6762 = vmul.f32 %v6694, %v6717
    %v6763 = vmul.f32 %v6695, %v6717
    %v6764 = vmul.f32 %v6696, %v6717
    %v6765 = vmul.f32 %v6697, %v6717
    %v6766 = vmul.f32 %v6698, %v6717
    %v6767 = vmul.f32 %v6699, %v6717
    %v6768 = vmul.f32 %v6700, %v6717
    %v6769 = vmul.f32 %v6701, %v6717
    %v6770 = vmul.f32 %v6702, %v6717
    %v6771 = vmul.f32 %v6703, %v6717
    %v6772 = vmul.f32 %v6704, %v6717
    %v6773 = vmul.f32 %v6705, %v6717
    %v6774 = vmul.f32 %v6706, %v6717
    %v6775 = vmul.f32 %v6707, %v6717
    %v6776 = vmul.f32 %v6708, %v6717
    %v6777 = vmul.f32 %v6709, %v6717
    %v6778 = vmul.f32 %v6710, %v6717
    %v6779 = vmul.f32 %v6711, %v6717
    %v6780 = vmul.f32 %v6712, %v6717
    %v6781 = vmul.f32 %v6713, %v6717
    %v6782 = vadd.f32 %v6718, 0.0
    %v6783 = vadd.f32 %v6719, 0.0
    %v6784 = vadd.f32 %v6720, 0.0
    %v6785 = vadd.f32 %v6721, 0.0
    %v6786 = vadd.f32 %v6722, 0.0
    %v6787 = vadd.f32 %v6723, 0.0
    %v6788 = vadd.f32 %v6724, 0.0
    %v6789 = vadd.f32 %v6725, 0.0
    %v6790 = vadd.f32 %v6726, 0.0
    %v6791 = vadd.f32 %v6727, 0.0
    %v6792 = vadd.f32 %v6728, 0.0
    %v6793 = vadd.f32 %v6729, 0.0
    %v6794 = vadd.f32 %v6730, 0.0
    %v6795 = vadd.f32 %v6731, 0.0
    %v6796 = vadd.f32 %v6732, 0.0
    %v6797 = vadd.f32 %v6733, 0.0
    %v6798 = vadd.f32 %v6734, 0.0
    %v6799 = vadd.f32 %v6735, 0.0
    %v6800 = vadd.f32 %v6736, 0.0
    %v6801 = vadd.f32 %v6737, 0.0
    %v6802 = vadd.f32 %v6738, 0.0
    %v6803 = vadd.f32 %v6739, 0.0
    %v6804 = vadd.f32 %v6740, 0.0
    %v6805 = vadd.f32 %v6741, 0.0
    %v6806 = vadd.f32 %v6742, 0.0
    %v6807 = vadd.f32 %v6743, 0.0
    %v6808 = vadd.f32 %v6744, 0.0
    %v6809 = vadd.f32 %v6745, 0.0
    %v6810 = vadd.f32 %v6746, 0.0
    %v6811 = vadd.f32 %v6747, 0.0
    %v6812 = vadd.f32 %v6748, 0.0
    %v6813 = vadd.f32 %v6749, 0.0
    %v6814 = vadd.f32 %v6750, 0.0
    %v6815 = vadd.f32 %v6751, 0.0
    %v6816 = vadd.f32 %v6752, 0.0
    %v6817 = vadd.f32 %v6753, 0.0
    %v6818 = vadd.f32 %v6754, 0.0
    %v6819 = vadd.f32 %v6755, 0.0
    %v6820 = vadd.f32 %v6756, 0.0
    %v6821 = vadd.f32 %v6757, 0.0
    %v6822 = vadd.f32 %v6758, 0.0
    %v6823 = vadd.f32 %v6759, 0.0
    %v6824 = vadd.f32 %v6760, 0.0
    %v6825 = vadd.f32 %v6761, 0.0
    %v6826 = vadd.f32 %v6762, 0.0
    %v6827 = vadd.f32 %v6763, 0.0
    %v6828 = vadd.f32 %v6764, 0.0
    %v6829 = vadd.f32 %v6765, 0.0
    %v6830 = vadd.f32 %v6766, 0.0
    %v6831 = vadd.f32 %v6767, 0.0
    %v6832 = vadd.f32 %v6768, 0.0
    %v6833 = vadd.f32 %v6769, 0.0
    %v6834 = vadd.f32 %v6770, 0.0
    %v6835 = vadd.f32 %v6771, 0.0
    %v6836 = vadd.f32 %v6772, 0.0
    %v6837 = vadd.f32 %v6773, 0.0
    %v6838 = vadd.f32 %v6774, 0.0
    %v6839 = vadd.f32 %v6775, 0.0
    %v6840 = vadd.f32 %v6776, 0.0
    %v6841 = vadd.f32 %v6777, 0.0
    %v6842 = vadd.f32 %v6778, 0.0
    %v6843 = vadd.f32 %v6779, 0.0
    %v6844 = vadd.f32 %v6780, 0.0
    %v6845 = vadd.f32 %v6781, 0.0
    %v6846 = vld [vmem:[%s4 + $0x1] sm:$0x1]
    %v6847 = vld [vmem:[#allocation2 + $0x1] sm:$0xff]
    %v6848 = vld [vmem:[#allocation2 + $0x9] sm:$0xff]
    %v6849 = vld [vmem:[#allocation2 + $0x19] sm:$0xff]
    %v6850 = vld [vmem:[#allocation2 + $0x21] sm:$0xff]
    %v6851 = vld [vmem:[#allocation2 + $0x31] sm:$0xff]
    %v6852 = vld [vmem:[#allocation2 + $0x39] sm:$0xff]
    %v6853 = vld [vmem:[#allocation2 + $0x49] sm:$0xff]
    %v6854 = vld [vmem:[#allocation2 + $0x51] sm:$0xff]
    %v6855 = vld [vmem:[#allocation2 + $0x61] sm:$0xff]
    %v6856 = vld [vmem:[#allocation2 + $0x69] sm:$0xff]
    %v6857 = vld [vmem:[#allocation2 + $0x79] sm:$0xff]
    %v6858 = vld [vmem:[#allocation2 + $0x81] sm:$0xff]
    %v6859 = vld [vmem:[#allocation2 + $0x91] sm:$0xff]
    %v6860 = vld [vmem:[#allocation2 + $0x99] sm:$0xff]
    %v6861 = vld [vmem:[#allocation2 + $0xa9] sm:$0xff]
    %v6862 = vld [vmem:[#allocation2 + $0xb1] sm:$0xff]
    %v6863 = vld [vmem:[#allocation2 + $0xc1] sm:$0xff]
    %v6864 = vld [vmem:[#allocation2 + $0xc9] sm:$0xff]
    %v6865 = vld [vmem:[#allocation2 + $0xd9] sm:$0xff]
    %v6866 = vld [vmem:[#allocation2 + $0xe1] sm:$0xff]
    %v6867 = vld [vmem:[#allocation2 + $0xf1] sm:$0xff]
    %v6868 = vld [vmem:[#allocation2 + $0xf9] sm:$0xff]
    %v6869 = vld [vmem:[#allocation2 + $0x109] sm:$0xff]
    %v6870 = vld [vmem:[#allocation2 + $0x111] sm:$0xff]
    %v6871 = vld [vmem:[#allocation2 + $0x121] sm:$0xff]
    %v6872 = vld [vmem:[#allocation2 + $0x129] sm:$0xff]
    %v6873 = vld [vmem:[#allocation2 + $0x139] sm:$0xff]
    %v6874 = vld [vmem:[#allocation2 + $0x141] sm:$0xff]
    %v6875 = vld [vmem:[#allocation2 + $0x151] sm:$0xff]
    %v6876 = vld [vmem:[#allocation2 + $0x159] sm:$0xff]
    %v6877 = vld [vmem:[#allocation2 + $0x169] sm:$0xff]
    %v6878 = vld [vmem:[#allocation2 + $0x171] sm:$0xff]
    %v6879 = vld [vmem:[#allocation2 + $0x1b1] sm:$0xff]
    %v6880 = vld [vmem:[#allocation2 + $0x1b9] sm:$0xff]
    %v6881 = vld [vmem:[#allocation2 + $0x1c9] sm:$0xff]
    %v6882 = vld [vmem:[#allocation2 + $0x1d1] sm:$0xff]
    %v6883 = vld [vmem:[#allocation2 + $0x1e1] sm:$0xff]
    %v6884 = vld [vmem:[#allocation2 + $0x1e9] sm:$0xff]
    %v6885 = vld [vmem:[#allocation2 + $0x1f9] sm:$0xff]
    %v6886 = vld [vmem:[#allocation2 + $0x201] sm:$0xff]
    %v6887 = vld [vmem:[#allocation2 + $0x211] sm:$0xff]
    %v6888 = vld [vmem:[#allocation2 + $0x219] sm:$0xff]
    %v6889 = vld [vmem:[#allocation2 + $0x229] sm:$0xff]
    %v6890 = vld [vmem:[#allocation2 + $0x231] sm:$0xff]
    %v6891 = vld [vmem:[#allocation2 + $0x241] sm:$0xff]
    %v6892 = vld [vmem:[#allocation2 + $0x249] sm:$0xff]
    %v6893 = vld [vmem:[#allocation2 + $0x259] sm:$0xff]
    %v6894 = vld [vmem:[#allocation2 + $0x261] sm:$0xff]
    %v6895 = vld [vmem:[#allocation2 + $0x271] sm:$0xff]
    %v6896 = vld [vmem:[#allocation2 + $0x279] sm:$0xff]
    %v6897 = vld [vmem:[#allocation2 + $0x289] sm:$0xff]
    %v6898 = vld [vmem:[#allocation2 + $0x291] sm:$0xff]
    %v6899 = vld [vmem:[#allocation2 + $0x2a1] sm:$0xff]
    %v6900 = vld [vmem:[#allocation2 + $0x2a9] sm:$0xff]
    %v6901 = vld [vmem:[#allocation2 + $0x2b9] sm:$0xff]
    %v6902 = vld [vmem:[#allocation2 + $0x2c1] sm:$0xff]
    %v6903 = vld [vmem:[#allocation2 + $0x2d1] sm:$0xff]
    %v6904 = vld [vmem:[#allocation2 + $0x2d9] sm:$0xff]
    %v6905 = vld [vmem:[#allocation2 + $0x2e9] sm:$0xff]
    %v6906 = vld [vmem:[#allocation2 + $0x2f1] sm:$0xff]
    %v6907 = vld [vmem:[#allocation2 + $0x301] sm:$0xff]
    %v6908 = vld [vmem:[#allocation2 + $0x309] sm:$0xff]
    %v6909 = vld [vmem:[#allocation2 + $0x319] sm:$0xff]
    %v6910 = vld [vmem:[#allocation2 + $0x321] sm:$0xff]
    %v6911 = vlaneseq
    %v6912 = vshrl.u32 %v6911, 7
    %v6913 = vsub.s32 0, %v6912
    %v6914 = vrot.slane %v6846, %v6913
    %v6915 = vmul.f32 %v6847, %v6914
    %v6916 = vmul.f32 %v6848, %v6914
    %v6917 = vmul.f32 %v6849, %v6914
    %v6918 = vmul.f32 %v6850, %v6914
    %v6919 = vmul.f32 %v6851, %v6914
    %v6920 = vmul.f32 %v6852, %v6914
    %v6921 = vmul.f32 %v6853, %v6914
    %v6922 = vmul.f32 %v6854, %v6914
    %v6923 = vmul.f32 %v6855, %v6914
    %v6924 = vmul.f32 %v6856, %v6914
    %v6925 = vmul.f32 %v6857, %v6914
    %v6926 = vmul.f32 %v6858, %v6914
    %v6927 = vmul.f32 %v6859, %v6914
    %v6928 = vmul.f32 %v6860, %v6914
    %v6929 = vmul.f32 %v6861, %v6914
    %v6930 = vmul.f32 %v6862, %v6914
    %v6931 = vmul.f32 %v6863, %v6914
    %v6932 = vmul.f32 %v6864, %v6914
    %v6933 = vmul.f32 %v6865, %v6914
    %v6934 = vmul.f32 %v6866, %v6914
    %v6935 = vmul.f32 %v6867, %v6914
    %v6936 = vmul.f32 %v6868, %v6914
    %v6937 = vmul.f32 %v6869, %v6914
    %v6938 = vmul.f32 %v6870, %v6914
    %v6939 = vmul.f32 %v6871, %v6914
    %v6940 = vmul.f32 %v6872, %v6914
    %v6941 = vmul.f32 %v6873, %v6914
    %v6942 = vmul.f32 %v6874, %v6914
    %v6943 = vmul.f32 %v6875, %v6914
    %v6944 = vmul.f32 %v6876, %v6914
    %v6945 = vmul.f32 %v6877, %v6914
    %v6946 = vmul.f32 %v6878, %v6914
    %v6947 = vmul.f32 %v6879, %v6914
    %v6948 = vmul.f32 %v6880, %v6914
    %v6949 = vmul.f32 %v6881, %v6914
    %v6950 = vmul.f32 %v6882, %v6914
    %v6951 = vmul.f32 %v6883, %v6914
    %v6952 = vmul.f32 %v6884, %v6914
    %v6953 = vmul.f32 %v6885, %v6914
    %v6954 = vmul.f32 %v6886, %v6914
    %v6955 = vmul.f32 %v6887, %v6914
    %v6956 = vmul.f32 %v6888, %v6914
    %v6957 = vmul.f32 %v6889, %v6914
    %v6958 = vmul.f32 %v6890, %v6914
    %v6959 = vmul.f32 %v6891, %v6914
    %v6960 = vmul.f32 %v6892, %v6914
    %v6961 = vmul.f32 %v6893, %v6914
    %v6962 = vmul.f32 %v6894, %v6914
    %v6963 = vmul.f32 %v6895, %v6914
    %v6964 = vmul.f32 %v6896, %v6914
    %v6965 = vmul.f32 %v6897, %v6914
    %v6966 = vmul.f32 %v6898, %v6914
    %v6967 = vmul.f32 %v6899, %v6914
    %v6968 = vmul.f32 %v6900, %v6914
    %v6969 = vmul.f32 %v6901, %v6914
    %v6970 = vmul.f32 %v6902, %v6914
    %v6971 = vmul.f32 %v6903, %v6914
    %v6972 = vmul.f32 %v6904, %v6914
    %v6973 = vmul.f32 %v6905, %v6914
    %v6974 = vmul.f32 %v6906, %v6914
    %v6975 = vmul.f32 %v6907, %v6914
    %v6976 = vmul.f32 %v6908, %v6914
    %v6977 = vmul.f32 %v6909, %v6914
    %v6978 = vmul.f32 %v6910, %v6914
    %v6979 = vadd.f32 %v6782, %v6915
    %v6980 = vadd.f32 %v6783, %v6916
    %v6981 = vadd.f32 %v6784, %v6917
    %v6982 = vadd.f32 %v6785, %v6918
    %v6983 = vadd.f32 %v6786, %v6919
    %v6984 = vadd.f32 %v6787, %v6920
    %v6985 = vadd.f32 %v6788, %v6921
    %v6986 = vadd.f32 %v6789, %v6922
    %v6987 = vadd.f32 %v6790, %v6923
    %v6988 = vadd.f32 %v6791, %v6924
    %v6989 = vadd.f32 %v6792, %v6925
    %v6990 = vadd.f32 %v6793, %v6926
    %v6991 = vadd.f32 %v6794, %v6927
    %v6992 = vadd.f32 %v6795, %v6928
    %v6993 = vadd.f32 %v6796, %v6929
    %v6994 = vadd.f32 %v6797, %v6930
    %v6995 = vadd.f32 %v6798, %v6931
    %v6996 = vadd.f32 %v6799, %v6932
    %v6997 = vadd.f32 %v6800, %v6933
    %v6998 = vadd.f32 %v6801, %v6934
    %v6999 = vadd.f32 %v6802, %v6935
    %v7000 = vadd.f32 %v6803, %v6936
    %v7001 = vadd.f32 %v6804, %v6937
    %v7002 = vadd.f32 %v6805, %v6938
    %v7003 = vadd.f32 %v6806, %v6939
    %v7004 = vadd.f32 %v6807, %v6940
    %v7005 = vadd.f32 %v6808, %v6941
    %v7006 = vadd.f32 %v6809, %v6942
    %v7007 = vadd.f32 %v6810, %v6943
    %v7008 = vadd.f32 %v6811, %v6944
    %v7009 = vadd.f32 %v6812, %v6945
    %v7010 = vadd.f32 %v6813, %v6946
    %v7011 = vadd.f32 %v6814, %v6947
    %v7012 = vadd.f32 %v6815, %v6948
    %v7013 = vadd.f32 %v6816, %v6949
    %v7014 = vadd.f32 %v6817, %v6950
    %v7015 = vadd.f32 %v6818, %v6951
    %v7016 = vadd.f32 %v6819, %v6952
    %v7017 = vadd.f32 %v6820, %v6953
    %v7018 = vadd.f32 %v6821, %v6954
    %v7019 = vadd.f32 %v6822, %v6955
    %v7020 = vadd.f32 %v6823, %v6956
    %v7021 = vadd.f32 %v6824, %v6957
    %v7022 = vadd.f32 %v6825, %v6958
    %v7023 = vadd.f32 %v6826, %v6959
    %v7024 = vadd.f32 %v6827, %v6960
    %v7025 = vadd.f32 %v6828, %v6961
    %v7026 = vadd.f32 %v6829, %v6962
    %v7027 = vadd.f32 %v6830, %v6963
    %v7028 = vadd.f32 %v6831, %v6964
    %v7029 = vadd.f32 %v6832, %v6965
    %v7030 = vadd.f32 %v6833, %v6966
    %v7031 = vadd.f32 %v6834, %v6967
    %v7032 = vadd.f32 %v6835, %v6968
    %v7033 = vadd.f32 %v6836, %v6969
    %v7034 = vadd.f32 %v6837, %v6970
    %v7035 = vadd.f32 %v6838, %v6971
    %v7036 = vadd.f32 %v6839, %v6972
    %v7037 = vadd.f32 %v6840, %v6973
    %v7038 = vadd.f32 %v6841, %v6974
    %v7039 = vadd.f32 %v6842, %v6975
    %v7040 = vadd.f32 %v6843, %v6976
    %v7041 = vadd.f32 %v6844, %v6977
    %v7042 = vadd.f32 %v6845, %v6978
    %v7043 = vld [vmem:[%s4 + $0x2] sm:$0x1]
    %v7044 = vld [vmem:[#allocation2 + $0x2] sm:$0xff]
    %v7045 = vld [vmem:[#allocation2 + $0xa] sm:$0xff]
    %v7046 = vld [vmem:[#allocation2 + $0x1a] sm:$0xff]
    %v7047 = vld [vmem:[#allocation2 + $0x22] sm:$0xff]
    %v7048 = vld [vmem:[#allocation2 + $0x32] sm:$0xff]
    %v7049 = vld [vmem:[#allocation2 + $0x3a] sm:$0xff]
    %v7050 = vld [vmem:[#allocation2 + $0x4a] sm:$0xff]
    %v7051 = vld [vmem:[#allocation2 + $0x52] sm:$0xff]
    %v7052 = vld [vmem:[#allocation2 + $0x62] sm:$0xff]
    %v7053 = vld [vmem:[#allocation2 + $0x6a] sm:$0xff]
    %v7054 = vld [vmem:[#allocation2 + $0x7a] sm:$0xff]
    %v7055 = vld [vmem:[#allocation2 + $0x82] sm:$0xff]
    %v7056 = vld [vmem:[#allocation2 + $0x92] sm:$0xff]
    %v7057 = vld [vmem:[#allocation2 + $0x9a] sm:$0xff]
    %v7058 = vld [vmem:[#allocation2 + $0xaa] sm:$0xff]
    %v7059 = vld [vmem:[#allocation2 + $0xb2] sm:$0xff]
    %v7060 = vld [vmem:[#allocation2 + $0xc2] sm:$0xff]
    %v7061 = vld [vmem:[#allocation2 + $0xca] sm:$0xff]
    %v7062 = vld [vmem:[#allocation2 + $0xda] sm:$0xff]
    %v7063 = vld [vmem:[#allocation2 + $0xe2] sm:$0xff]
    %v7064 = vld [vmem:[#allocation2 + $0xf2] sm:$0xff]
    %v7065 = vld [vmem:[#allocation2 + $0xfa] sm:$0xff]
    %v7066 = vld [vmem:[#allocation2 + $0x10a] sm:$0xff]
    %v7067 = vld [vmem:[#allocation2 + $0x112] sm:$0xff]
    %v7068 = vld [vmem:[#allocation2 + $0x122] sm:$0xff]
    %v7069 = vld [vmem:[#allocation2 + $0x12a] sm:$0xff]
    %v7070 = vld [vmem:[#allocation2 + $0x13a] sm:$0xff]
    %v7071 = vld [vmem:[#allocation2 + $0x142] sm:$0xff]
    %v7072 = vld [vmem:[#allocation2 + $0x152] sm:$0xff]
    %v7073 = vld [vmem:[#allocation2 + $0x15a] sm:$0xff]
    %v7074 = vld [vmem:[#allocation2 + $0x16a] sm:$0xff]
    %v7075 = vld [vmem:[#allocation2 + $0x172] sm:$0xff]
    %v7076 = vld [vmem:[#allocation2 + $0x1b2] sm:$0xff]
    %v7077 = vld [vmem:[#allocation2 + $0x1ba] sm:$0xff]
    %v7078 = vld [vmem:[#allocation2 + $0x1ca] sm:$0xff]
    %v7079 = vld [vmem:[#allocation2 + $0x1d2] sm:$0xff]
    %v7080 = vld [vmem:[#allocation2 + $0x1e2] sm:$0xff]
    %v7081 = vld [vmem:[#allocation2 + $0x1ea] sm:$0xff]
    %v7082 = vld [vmem:[#allocation2 + $0x1fa] sm:$0xff]
    %v7083 = vld [vmem:[#allocation2 + $0x202] sm:$0xff]
    %v7084 = vld [vmem:[#allocation2 + $0x212] sm:$0xff]
    %v7085 = vld [vmem:[#allocation2 + $0x21a] sm:$0xff]
    %v7086 = vld [vmem:[#allocation2 + $0x22a] sm:$0xff]
    %v7087 = vld [vmem:[#allocation2 + $0x232] sm:$0xff]
    %v7088 = vld [vmem:[#allocation2 + $0x242] sm:$0xff]
    %v7089 = vld [vmem:[#allocation2 + $0x24a] sm:$0xff]
    %v7090 = vld [vmem:[#allocation2 + $0x25a] sm:$0xff]
    %v7091 = vld [vmem:[#allocation2 + $0x262] sm:$0xff]
    %v7092 = vld [vmem:[#allocation2 + $0x272] sm:$0xff]
    %v7093 = vld [vmem:[#allocation2 + $0x27a] sm:$0xff]
    %v7094 = vld [vmem:[#allocation2 + $0x28a] sm:$0xff]
    %v7095 = vld [vmem:[#allocation2 + $0x292] sm:$0xff]
    %v7096 = vld [vmem:[#allocation2 + $0x2a2] sm:$0xff]
    %v7097 = vld [vmem:[#allocation2 + $0x2aa] sm:$0xff]
    %v7098 = vld [vmem:[#allocation2 + $0x2ba] sm:$0xff]
    %v7099 = vld [vmem:[#allocation2 + $0x2c2] sm:$0xff]
    %v7100 = vld [vmem:[#allocation2 + $0x2d2] sm:$0xff]
    %v7101 = vld [vmem:[#allocation2 + $0x2da] sm:$0xff]
    %v7102 = vld [vmem:[#allocation2 + $0x2ea] sm:$0xff]
    %v7103 = vld [vmem:[#allocation2 + $0x2f2] sm:$0xff]
    %v7104 = vld [vmem:[#allocation2 + $0x302] sm:$0xff]
    %v7105 = vld [vmem:[#allocation2 + $0x30a] sm:$0xff]
    %v7106 = vld [vmem:[#allocation2 + $0x31a] sm:$0xff]
    %v7107 = vld [vmem:[#allocation2 + $0x322] sm:$0xff]
    %v7108 = vlaneseq
    %v7109 = vshrl.u32 %v7108, 7
    %v7110 = vsub.s32 0, %v7109
    %v7111 = vrot.slane %v7043, %v7110
    %v7112 = vmul.f32 %v7044, %v7111
    %v7113 = vmul.f32 %v7045, %v7111
    %v7114 = vmul.f32 %v7046, %v7111
    %v7115 = vmul.f32 %v7047, %v7111
    %v7116 = vmul.f32 %v7048, %v7111
    %v7117 = vmul.f32 %v7049, %v7111
    %v7118 = vmul.f32 %v7050, %v7111
    %v7119 = vmul.f32 %v7051, %v7111
    %v7120 = vmul.f32 %v7052, %v7111
    %v7121 = vmul.f32 %v7053, %v7111
    %v7122 = vmul.f32 %v7054, %v7111
    %v7123 = vmul.f32 %v7055, %v7111
    %v7124 = vmul.f32 %v7056, %v7111
    %v7125 = vmul.f32 %v7057, %v7111
    %v7126 = vmul.f32 %v7058, %v7111
    %v7127 = vmul.f32 %v7059, %v7111
    %v7128 = vmul.f32 %v7060, %v7111
    %v7129 = vmul.f32 %v7061, %v7111
    %v7130 = vmul.f32 %v7062, %v7111
    %v7131 = vmul.f32 %v7063, %v7111
    %v7132 = vmul.f32 %v7064, %v7111
    %v7133 = vmul.f32 %v7065, %v7111
    %v7134 = vmul.f32 %v7066, %v7111
    %v7135 = vmul.f32 %v7067, %v7111
    %v7136 = vmul.f32 %v7068, %v7111
    %v7137 = vmul.f32 %v7069, %v7111
    %v7138 = vmul.f32 %v7070, %v7111
    %v7139 = vmul.f32 %v7071, %v7111
    %v7140 = vmul.f32 %v7072, %v7111
    %v7141 = vmul.f32 %v7073, %v7111
    %v7142 = vmul.f32 %v7074, %v7111
    %v7143 = vmul.f32 %v7075, %v7111
    %v7144 = vmul.f32 %v7076, %v7111
    %v7145 = vmul.f32 %v7077, %v7111
    %v7146 = vmul.f32 %v7078, %v7111
    %v7147 = vmul.f32 %v7079, %v7111
    %v7148 = vmul.f32 %v7080, %v7111
    %v7149 = vmul.f32 %v7081, %v7111
    %v7150 = vmul.f32 %v7082, %v7111
    %v7151 = vmul.f32 %v7083, %v7111
    %v7152 = vmul.f32 %v7084, %v7111
    %v7153 = vmul.f32 %v7085, %v7111
    %v7154 = vmul.f32 %v7086, %v7111
    %v7155 = vmul.f32 %v7087, %v7111
    %v7156 = vmul.f32 %v7088, %v7111
    %v7157 = vmul.f32 %v7089, %v7111
    %v7158 = vmul.f32 %v7090, %v7111
    %v7159 = vmul.f32 %v7091, %v7111
    %v7160 = vmul.f32 %v7092, %v7111
    %v7161 = vmul.f32 %v7093, %v7111
    %v7162 = vmul.f32 %v7094, %v7111
    %v7163 = vmul.f32 %v7095, %v7111
    %v7164 = vmul.f32 %v7096, %v7111
    %v7165 = vmul.f32 %v7097, %v7111
    %v7166 = vmul.f32 %v7098, %v7111
    %v7167 = vmul.f32 %v7099, %v7111
    %v7168 = vmul.f32 %v7100, %v7111
    %v7169 = vmul.f32 %v7101, %v7111
    %v7170 = vmul.f32 %v7102, %v7111
    %v7171 = vmul.f32 %v7103, %v7111
    %v7172 = vmul.f32 %v7104, %v7111
    %v7173 = vmul.f32 %v7105, %v7111
    %v7174 = vmul.f32 %v7106, %v7111
    %v7175 = vmul.f32 %v7107, %v7111
    %v7176 = vadd.f32 %v6979, %v7112
    %v7177 = vadd.f32 %v6980, %v7113
    %v7178 = vadd.f32 %v6981, %v7114
    %v7179 = vadd.f32 %v6982, %v7115
    %v7180 = vadd.f32 %v6983, %v7116
    %v7181 = vadd.f32 %v6984, %v7117
    %v7182 = vadd.f32 %v6985, %v7118
    %v7183 = vadd.f32 %v6986, %v7119
    %v7184 = vadd.f32 %v6987, %v7120
    %v7185 = vadd.f32 %v6988, %v7121
    %v7186 = vadd.f32 %v6989, %v7122
    %v7187 = vadd.f32 %v6990, %v7123
    %v7188 = vadd.f32 %v6991, %v7124
    %v7189 = vadd.f32 %v6992, %v7125
    %v7190 = vadd.f32 %v6993, %v7126
    %v7191 = vadd.f32 %v6994, %v7127
    %v7192 = vadd.f32 %v6995, %v7128
    %v7193 = vadd.f32 %v6996, %v7129
    %v7194 = vadd.f32 %v6997, %v7130
    %v7195 = vadd.f32 %v6998, %v7131
    %v7196 = vadd.f32 %v6999, %v7132
    %v7197 = vadd.f32 %v7000, %v7133
    %v7198 = vadd.f32 %v7001, %v7134
    %v7199 = vadd.f32 %v7002, %v7135
    %v7200 = vadd.f32 %v7003, %v7136
    %v7201 = vadd.f32 %v7004, %v7137
    %v7202 = vadd.f32 %v7005, %v7138
    %v7203 = vadd.f32 %v7006, %v7139
    %v7204 = vadd.f32 %v7007, %v7140
    %v7205 = vadd.f32 %v7008, %v7141
    %v7206 = vadd.f32 %v7009, %v7142
    %v7207 = vadd.f32 %v7010, %v7143
    %v7208 = vadd.f32 %v7011, %v7144
    %v7209 = vadd.f32 %v7012, %v7145
    %v7210 = vadd.f32 %v7013, %v7146
    %v7211 = vadd.f32 %v7014, %v7147
    %v7212 = vadd.f32 %v7015, %v7148
    %v7213 = vadd.f32 %v7016, %v7149
    %v7214 = vadd.f32 %v7017, %v7150
    %v7215 = vadd.f32 %v7018, %v7151
    %v7216 = vadd.f32 %v7019, %v7152
    %v7217 = vadd.f32 %v7020, %v7153
    %v7218 = vadd.f32 %v7021, %v7154
    %v7219 = vadd.f32 %v7022, %v7155
    %v7220 = vadd.f32 %v7023, %v7156
    %v7221 = vadd.f32 %v7024, %v7157
    %v7222 = vadd.f32 %v7025, %v7158
    %v7223 = vadd.f32 %v7026, %v7159
    %v7224 = vadd.f32 %v7027, %v7160
    %v7225 = vadd.f32 %v7028, %v7161
    %v7226 = vadd.f32 %v7029, %v7162
    %v7227 = vadd.f32 %v7030, %v7163
    %v7228 = vadd.f32 %v7031, %v7164
    %v7229 = vadd.f32 %v7032, %v7165
    %v7230 = vadd.f32 %v7033, %v7166
    %v7231 = vadd.f32 %v7034, %v7167
    %v7232 = vadd.f32 %v7035, %v7168
    %v7233 = vadd.f32 %v7036, %v7169
    %v7234 = vadd.f32 %v7037, %v7170
    %v7235 = vadd.f32 %v7038, %v7171
    %v7236 = vadd.f32 %v7039, %v7172
    %v7237 = vadd.f32 %v7040, %v7173
    %v7238 = vadd.f32 %v7041, %v7174
    %v7239 = vadd.f32 %v7042, %v7175
    %v7240 = vld [vmem:[%s4 + $0x3] sm:$0x1]
    %v7241 = vld [vmem:[%s6584] sm:$0xff]
    %v7242 = vld [vmem:[%s6584 + $0x8] sm:$0xff]
    %v7243 = vld [vmem:[%s6584 + $0x18] sm:$0xff]
    %v7244 = vld [vmem:[%s6584 + $0x20] sm:$0xff]
    %v7245 = vld [vmem:[%s6584 + $0x30] sm:$0xff]
    %v7246 = vld [vmem:[%s6584 + $0x38] sm:$0xff]
    %v7247 = vld [vmem:[%s6584 + $0x48] sm:$0xff]
    %v7248 = vld [vmem:[%s6584 + $0x50] sm:$0xff]
    %v7249 = vld [vmem:[%s6584 + $0x60] sm:$0xff]
    %v7250 = vld [vmem:[%s6584 + $0x68] sm:$0xff]
    %v7251 = vld [vmem:[%s6584 + $0x78] sm:$0xff]
    %v7252 = vld [vmem:[%s6584 + $0x80] sm:$0xff]
    %v7253 = vld [vmem:[%s6584 + $0x90] sm:$0xff]
    %v7254 = vld [vmem:[%s6584 + $0x98] sm:$0xff]
    %v7255 = vld [vmem:[%s6584 + $0xa8] sm:$0xff]
    %v7256 = vld [vmem:[%s6584 + $0xb0] sm:$0xff]
    %v7257 = vld [vmem:[%s6584 + $0xc0] sm:$0xff]
    %v7258 = vld [vmem:[%s6584 + $0xc8] sm:$0xff]
    %v7259 = vld [vmem:[%s6584 + $0xd8] sm:$0xff]
    %v7260 = vld [vmem:[%s6584 + $0xe0] sm:$0xff]
    %v7261 = vld [vmem:[%s6584 + $0xf0] sm:$0xff]
    %v7262 = vld [vmem:[%s6584 + $0xf8] sm:$0xff]
    %v7263 = vld [vmem:[%s6584 + $0x108] sm:$0xff]
    %v7264 = vld [vmem:[%s6584 + $0x110] sm:$0xff]
    %v7265 = vld [vmem:[%s6584 + $0x120] sm:$0xff]
    %v7266 = vld [vmem:[%s6584 + $0x128] sm:$0xff]
    %v7267 = vld [vmem:[%s6584 + $0x138] sm:$0xff]
    %v7268 = vld [vmem:[%s6584 + $0x140] sm:$0xff]
    %v7269 = vld [vmem:[%s6584 + $0x150] sm:$0xff]
    %v7270 = vld [vmem:[%s6584 + $0x158] sm:$0xff]
    %v7271 = vld [vmem:[%s6584 + $0x168] sm:$0xff]
    %v7272 = vld [vmem:[%s6584 + $0x170] sm:$0xff]
    %v7273 = vld [vmem:[%s6584 + $0x1b0] sm:$0xff]
    %v7274 = vld [vmem:[%s6584 + $0x1b8] sm:$0xff]
    %v7275 = vld [vmem:[%s6584 + $0x1c8] sm:$0xff]
    %v7276 = vld [vmem:[%s6584 + $0x1d0] sm:$0xff]
    %v7277 = vld [vmem:[%s6584 + $0x1e0] sm:$0xff]
    %v7278 = vld [vmem:[%s6584 + $0x1e8] sm:$0xff]
    %v7279 = vld [vmem:[%s6584 + $0x1f8] sm:$0xff]
    %v7280 = vld [vmem:[%s6584 + $0x200] sm:$0xff]
    %v7281 = vld [vmem:[%s6584 + $0x210] sm:$0xff]
    %v7282 = vld [vmem:[%s6584 + $0x218] sm:$0xff]
    %v7283 = vld [vmem:[%s6584 + $0x228] sm:$0xff]
    %v7284 = vld [vmem:[%s6584 + $0x230] sm:$0xff]
    %v7285 = vld [vmem:[%s6584 + $0x240] sm:$0xff]
    %v7286 = vld [vmem:[%s6584 + $0x248] sm:$0xff]
    %v7287 = vld [vmem:[%s6584 + $0x258] sm:$0xff]
    %v7288 = vld [vmem:[%s6584 + $0x260] sm:$0xff]
    %v7289 = vld [vmem:[%s6584 + $0x270] sm:$0xff]
    %v7290 = vld [vmem:[%s6584 + $0x278] sm:$0xff]
    %v7291 = vld [vmem:[%s6584 + $0x288] sm:$0xff]
    %v7292 = vld [vmem:[%s6584 + $0x290] sm:$0xff]
    %v7293 = vld [vmem:[%s6584 + $0x2a0] sm:$0xff]
    %v7294 = vld [vmem:[%s6584 + $0x2a8] sm:$0xff]
    %v7295 = vld [vmem:[%s6584 + $0x2b8] sm:$0xff]
    %v7296 = vld [vmem:[%s6584 + $0x2c0] sm:$0xff]
    %v7297 = vld [vmem:[%s6584 + $0x2d0] sm:$0xff]
    %v7298 = vld [vmem:[%s6584 + $0x2d8] sm:$0xff]
    %v7299 = vld [vmem:[%s6584 + $0x2e8] sm:$0xff]
    %v7300 = vld [vmem:[%s6584 + $0x2f0] sm:$0xff]
    %v7301 = vld [vmem:[%s6584 + $0x300] sm:$0xff]
    %v7302 = vld [vmem:[%s6584 + $0x308] sm:$0xff]
    %v7303 = vld [vmem:[%s6584 + $0x318] sm:$0xff]
    %v7304 = vld [vmem:[%s6584 + $0x320] sm:$0xff]
    %v7305 = vlaneseq
    %v7306 = vshrl.u32 %v7305, 7
    %v7307 = vsub.s32 0, %v7306
    %v7308 = vrot.slane %v7240, %v7307
    %v7309 = vmul.f32 %v7241, %v7308
    %v7310 = vmul.f32 %v7242, %v7308
    %v7311 = vmul.f32 %v7243, %v7308
    %v7312 = vmul.f32 %v7244, %v7308
    %v7313 = vmul.f32 %v7245, %v7308
    %v7314 = vmul.f32 %v7246, %v7308
    %v7315 = vmul.f32 %v7247, %v7308
    %v7316 = vmul.f32 %v7248, %v7308
    %v7317 = vmul.f32 %v7249, %v7308
    %v7318 = vmul.f32 %v7250, %v7308
    %v7319 = vmul.f32 %v7251, %v7308
    %v7320 = vmul.f32 %v7252, %v7308
    %v7321 = vmul.f32 %v7253, %v7308
    %v7322 = vmul.f32 %v7254, %v7308
    %v7323 = vmul.f32 %v7255, %v7308
    %v7324 = vmul.f32 %v7256, %v7308
    %v7325 = vmul.f32 %v7257, %v7308
    %v7326 = vmul.f32 %v7258, %v7308
    %v7327 = vmul.f32 %v7259, %v7308
    %v7328 = vmul.f32 %v7260, %v7308
    %v7329 = vmul.f32 %v7261, %v7308
    %v7330 = vmul.f32 %v7262, %v7308
    %v7331 = vmul.f32 %v7263, %v7308
    %v7332 = vmul.f32 %v7264, %v7308
    %v7333 = vmul.f32 %v7265, %v7308
    %v7334 = vmul.f32 %v7266, %v7308
    %v7335 = vmul.f32 %v7267, %v7308
    %v7336 = vmul.f32 %v7268, %v7308
    %v7337 = vmul.f32 %v7269, %v7308
    %v7338 = vmul.f32 %v7270, %v7308
    %v7339 = vmul.f32 %v7271, %v7308
    %v7340 = vmul.f32 %v7272, %v7308
    %v7341 = vmul.f32 %v7273, %v7308
    %v7342 = vmul.f32 %v7274, %v7308
    %v7343 = vmul.f32 %v7275, %v7308
    %v7344 = vmul.f32 %v7276, %v7308
    %v7345 = vmul.f32 %v7277, %v7308
    %v7346 = vmul.f32 %v7278, %v7308
    %v7347 = vmul.f32 %v7279, %v7308
    %v7348 = vmul.f32 %v7280, %v7308
    %v7349 = vmul.f32 %v7281, %v7308
    %v7350 = vmul.f32 %v7282, %v7308
    %v7351 = vmul.f32 %v7283, %v7308
    %v7352 = vmul.f32 %v7284, %v7308
    %v7353 = vmul.f32 %v7285, %v7308
    %v7354 = vmul.f32 %v7286, %v7308
    %v7355 = vmul.f32 %v7287, %v7308
    %v7356 = vmul.f32 %v7288, %v7308
    %v7357 = vmul.f32 %v7289, %v7308
    %v7358 = vmul.f32 %v7290, %v7308
    %v7359 = vmul.f32 %v7291, %v7308
    %v7360 = vmul.f32 %v7292, %v7308
    %v7361 = vmul.f32 %v7293, %v7308
    %v7362 = vmul.f32 %v7294, %v7308
    %v7363 = vmul.f32 %v7295, %v7308
    %v7364 = vmul.f32 %v7296, %v7308
    %v7365 = vmul.f32 %v7297, %v7308
    %v7366 = vmul.f32 %v7298, %v7308
    %v7367 = vmul.f32 %v7299, %v7308
    %v7368 = vmul.f32 %v7300, %v7308
    %v7369 = vmul.f32 %v7301, %v7308
    %v7370 = vmul.f32 %v7302, %v7308
    %v7371 = vmul.f32 %v7303, %v7308
    %v7372 = vmul.f32 %v7304, %v7308
    %v7373 = vadd.f32 %v7176, %v7309
    %v7374 = vadd.f32 %v7177, %v7310
    %v7375 = vadd.f32 %v7178, %v7311
    %v7376 = vadd.f32 %v7179, %v7312
    %v7377 = vadd.f32 %v7180, %v7313
    %v7378 = vadd.f32 %v7181, %v7314
    %v7379 = vadd.f32 %v7182, %v7315
    %v7380 = vadd.f32 %v7183, %v7316
    %v7381 = vadd.f32 %v7184, %v7317
    %v7382 = vadd.f32 %v7185, %v7318
    %v7383 = vadd.f32 %v7186, %v7319
    %v7384 = vadd.f32 %v7187, %v7320
    %v7385 = vadd.f32 %v7188, %v7321
    %v7386 = vadd.f32 %v7189, %v7322
    %v7387 = vadd.f32 %v7190, %v7323
    %v7388 = vadd.f32 %v7191, %v7324
    %v7389 = vadd.f32 %v7192, %v7325
    %v7390 = vadd.f32 %v7193, %v7326
    %v7391 = vadd.f32 %v7194, %v7327
    %v7392 = vadd.f32 %v7195, %v7328
    %v7393 = vadd.f32 %v7196, %v7329
    %v7394 = vadd.f32 %v7197, %v7330
    %v7395 = vadd.f32 %v7198, %v7331
    %v7396 = vadd.f32 %v7199, %v7332
    %v7397 = vadd.f32 %v7200, %v7333
    %v7398 = vadd.f32 %v7201, %v7334
    %v7399 = vadd.f32 %v7202, %v7335
    %v7400 = vadd.f32 %v7203, %v7336
    %v7401 = vadd.f32 %v7204, %v7337
    %v7402 = vadd.f32 %v7205, %v7338
    %v7403 = vadd.f32 %v7206, %v7339
    %v7404 = vadd.f32 %v7207, %v7340
    %v7405 = vadd.f32 %v7208, %v7341
    %v7406 = vadd.f32 %v7209, %v7342
    %v7407 = vadd.f32 %v7210, %v7343
    %v7408 = vadd.f32 %v7211, %v7344
    %v7409 = vadd.f32 %v7212, %v7345
    %v7410 = vadd.f32 %v7213, %v7346
    %v7411 = vadd.f32 %v7214, %v7347
    %v7412 = vadd.f32 %v7215, %v7348
    %v7413 = vadd.f32 %v7216, %v7349
    %v7414 = vadd.f32 %v7217, %v7350
    %v7415 = vadd.f32 %v7218, %v7351
    %v7416 = vadd.f32 %v7219, %v7352
    %v7417 = vadd.f32 %v7220, %v7353
    %v7418 = vadd.f32 %v7221, %v7354
    %v7419 = vadd.f32 %v7222, %v7355
    %v7420 = vadd.f32 %v7223, %v7356
    %v7421 = vadd.f32 %v7224, %v7357
    %v7422 = vadd.f32 %v7225, %v7358
    %v7423 = vadd.f32 %v7226, %v7359
    %v7424 = vadd.f32 %v7227, %v7360
    %v7425 = vadd.f32 %v7228, %v7361
    %v7426 = vadd.f32 %v7229, %v7362
    %v7427 = vadd.f32 %v7230, %v7363
    %v7428 = vadd.f32 %v7231, %v7364
    %v7429 = vadd.f32 %v7232, %v7365
    %v7430 = vadd.f32 %v7233, %v7366
    %v7431 = vadd.f32 %v7234, %v7367
    %v7432 = vadd.f32 %v7235, %v7368
    %v7433 = vadd.f32 %v7236, %v7369
    %v7434 = vadd.f32 %v7237, %v7370
    %v7435 = vadd.f32 %v7238, %v7371
    %v7436 = vadd.f32 %v7239, %v7372
    %v7437 = vld [vmem:[%s4 + $0x4] sm:$0x1]
    %v7438 = vld [vmem:[%s6584 + $0x1] sm:$0xff]
    %v7439 = vld [vmem:[%s6584 + $0x9] sm:$0xff]
    %v7440 = vld [vmem:[%s6584 + $0x19] sm:$0xff]
    %v7441 = vld [vmem:[%s6584 + $0x21] sm:$0xff]
    %v7442 = vld [vmem:[%s6584 + $0x31] sm:$0xff]
    %v7443 = vld [vmem:[%s6584 + $0x39] sm:$0xff]
    %v7444 = vld [vmem:[%s6584 + $0x49] sm:$0xff]
    %v7445 = vld [vmem:[%s6584 + $0x51] sm:$0xff]
    %v7446 = vld [vmem:[%s6584 + $0x61] sm:$0xff]
    %v7447 = vld [vmem:[%s6584 + $0x69] sm:$0xff]
    %v7448 = vld [vmem:[%s6584 + $0x79] sm:$0xff]
    %v7449 = vld [vmem:[%s6584 + $0x81] sm:$0xff]
    %v7450 = vld [vmem:[%s6584 + $0x91] sm:$0xff]
    %v7451 = vld [vmem:[%s6584 + $0x99] sm:$0xff]
    %v7452 = vld [vmem:[%s6584 + $0xa9] sm:$0xff]
    %v7453 = vld [vmem:[%s6584 + $0xb1] sm:$0xff]
    %v7454 = vld [vmem:[%s6584 + $0xc1] sm:$0xff]
    %v7455 = vld [vmem:[%s6584 + $0xc9] sm:$0xff]
    %v7456 = vld [vmem:[%s6584 + $0xd9] sm:$0xff]
    %v7457 = vld [vmem:[%s6584 + $0xe1] sm:$0xff]
    %v7458 = vld [vmem:[%s6584 + $0xf1] sm:$0xff]
    %v7459 = vld [vmem:[%s6584 + $0xf9] sm:$0xff]
    %v7460 = vld [vmem:[%s6584 + $0x109] sm:$0xff]
    %v7461 = vld [vmem:[%s6584 + $0x111] sm:$0xff]
    %v7462 = vld [vmem:[%s6584 + $0x121] sm:$0xff]
    %v7463 = vld [vmem:[%s6584 + $0x129] sm:$0xff]
    %v7464 = vld [vmem:[%s6584 + $0x139] sm:$0xff]
    %v7465 = vld [vmem:[%s6584 + $0x141] sm:$0xff]
    %v7466 = vld [vmem:[%s6584 + $0x151] sm:$0xff]
    %v7467 = vld [vmem:[%s6584 + $0x159] sm:$0xff]
    %v7468 = vld [vmem:[%s6584 + $0x169] sm:$0xff]
    %v7469 = vld [vmem:[%s6584 + $0x171] sm:$0xff]
    %v7470 = vld [vmem:[%s6584 + $0x1b1] sm:$0xff]
    %v7471 = vld [vmem:[%s6584 + $0x1b9] sm:$0xff]
    %v7472 = vld [vmem:[%s6584 + $0x1c9] sm:$0xff]
    %v7473 = vld [vmem:[%s6584 + $0x1d1] sm:$0xff]
    %v7474 = vld [vmem:[%s6584 + $0x1e1] sm:$0xff]
    %v7475 = vld [vmem:[%s6584 + $0x1e9] sm:$0xff]
    %v7476 = vld [vmem:[%s6584 + $0x1f9] sm:$0xff]
    %v7477 = vld [vmem:[%s6584 + $0x201] sm:$0xff]
    %v7478 = vld [vmem:[%s6584 + $0x211] sm:$0xff]
    %v7479 = vld [vmem:[%s6584 + $0x219] sm:$0xff]
    %v7480 = vld [vmem:[%s6584 + $0x229] sm:$0xff]
    %v7481 = vld [vmem:[%s6584 + $0x231] sm:$0xff]
    %v7482 = vld [vmem:[%s6584 + $0x241] sm:$0xff]
    %v7483 = vld [vmem:[%s6584 + $0x249] sm:$0xff]
    %v7484 = vld [vmem:[%s6584 + $0x259] sm:$0xff]
    %v7485 = vld [vmem:[%s6584 + $0x261] sm:$0xff]
    %v7486 = vld [vmem:[%s6584 + $0x271] sm:$0xff]
    %v7487 = vld [vmem:[%s6584 + $0x279] sm:$0xff]
    %v7488 = vld [vmem:[%s6584 + $0x289] sm:$0xff]
    %v7489 = vld [vmem:[%s6584 + $0x291] sm:$0xff]
    %v7490 = vld [vmem:[%s6584 + $0x2a1] sm:$0xff]
    %v7491 = vld [vmem:[%s6584 + $0x2a9] sm:$0xff]
    %v7492 = vld [vmem:[%s6584 + $0x2b9] sm:$0xff]
    %v7493 = vld [vmem:[%s6584 + $0x2c1] sm:$0xff]
    %v7494 = vld [vmem:[%s6584 + $0x2d1] sm:$0xff]
    %v7495 = vld [vmem:[%s6584 + $0x2d9] sm:$0xff]
    %v7496 = vld [vmem:[%s6584 + $0x2e9] sm:$0xff]
    %v7497 = vld [vmem:[%s6584 + $0x2f1] sm:$0xff]
    %v7498 = vld [vmem:[%s6584 + $0x301] sm:$0xff]
    %v7499 = vld [vmem:[%s6584 + $0x309] sm:$0xff]
    %v7500 = vld [vmem:[%s6584 + $0x319] sm:$0xff]
    %v7501 = vld [vmem:[%s6584 + $0x321] sm:$0xff]
    %v7502 = vlaneseq
    %v7503 = vshrl.u32 %v7502, 7
    %v7504 = vsub.s32 0, %v7503
    %v7505 = vrot.slane %v7437, %v7504
    %v7506 = vmul.f32 %v7438, %v7505
    %v7507 = vmul.f32 %v7439, %v7505
    %v7508 = vmul.f32 %v7440, %v7505
    %v7509 = vmul.f32 %v7441, %v7505
    %v7510 = vmul.f32 %v7442, %v7505
    %v7511 = vmul.f32 %v7443, %v7505
    %v7512 = vmul.f32 %v7444, %v7505
    %v7513 = vmul.f32 %v7445, %v7505
    %v7514 = vmul.f32 %v7446, %v7505
    %v7515 = vmul.f32 %v7447, %v7505
    %v7516 = vmul.f32 %v7448, %v7505
    %v7517 = vmul.f32 %v7449, %v7505
    %v7518 = vmul.f32 %v7450, %v7505
    %v7519 = vmul.f32 %v7451, %v7505
    %v7520 = vmul.f32 %v7452, %v7505
    %v7521 = vmul.f32 %v7453, %v7505
    %v7522 = vmul.f32 %v7454, %v7505
    %v7523 = vmul.f32 %v7455, %v7505
    %v7524 = vmul.f32 %v7456, %v7505
    %v7525 = vmul.f32 %v7457, %v7505
    %v7526 = vmul.f32 %v7458, %v7505
    %v7527 = vmul.f32 %v7459, %v7505
    %v7528 = vmul.f32 %v7460, %v7505
    %v7529 = vmul.f32 %v7461, %v7505
    %v7530 = vmul.f32 %v7462, %v7505
    %v7531 = vmul.f32 %v7463, %v7505
    %v7532 = vmul.f32 %v7464, %v7505
    %v7533 = vmul.f32 %v7465, %v7505
    %v7534 = vmul.f32 %v7466, %v7505
    %v7535 = vmul.f32 %v7467, %v7505
    %v7536 = vmul.f32 %v7468, %v7505
    %v7537 = vmul.f32 %v7469, %v7505
    %v7538 = vmul.f32 %v7470, %v7505
    %v7539 = vmul.f32 %v7471, %v7505
    %v7540 = vmul.f32 %v7472, %v7505
    %v7541 = vmul.f32 %v7473, %v7505
    %v7542 = vmul.f32 %v7474, %v7505
    %v7543 = vmul.f32 %v7475, %v7505
    %v7544 = vmul.f32 %v7476, %v7505
    %v7545 = vmul.f32 %v7477, %v7505
    %v7546 = vmul.f32 %v7478, %v7505
    %v7547 = vmul.f32 %v7479, %v7505
    %v7548 = vmul.f32 %v7480, %v7505
    %v7549 = vmul.f32 %v7481, %v7505
    %v7550 = vmul.f32 %v7482, %v7505
    %v7551 = vmul.f32 %v7483, %v7505
    %v7552 = vmul.f32 %v7484, %v7505
    %v7553 = vmul.f32 %v7485, %v7505
    %v7554 = vmul.f32 %v7486, %v7505
    %v7555 = vmul.f32 %v7487, %v7505
    %v7556 = vmul.f32 %v7488, %v7505
    %v7557 = vmul.f32 %v7489, %v7505
    %v7558 = vmul.f32 %v7490, %v7505
    %v7559 = vmul.f32 %v7491, %v7505
    %v7560 = vmul.f32 %v7492, %v7505
    %v7561 = vmul.f32 %v7493, %v7505
    %v7562 = vmul.f32 %v7494, %v7505
    %v7563 = vmul.f32 %v7495, %v7505
    %v7564 = vmul.f32 %v7496, %v7505
    %v7565 = vmul.f32 %v7497, %v7505
    %v7566 = vmul.f32 %v7498, %v7505
    %v7567 = vmul.f32 %v7499, %v7505
    %v7568 = vmul.f32 %v7500, %v7505
    %v7569 = vmul.f32 %v7501, %v7505
    %v7570 = vadd.f32 %v7373, %v7506
    %v7571 = vadd.f32 %v7374, %v7507
    %v7572 = vadd.f32 %v7375, %v7508
    %v7573 = vadd.f32 %v7376, %v7509
    %v7574 = vadd.f32 %v7377, %v7510
    %v7575 = vadd.f32 %v7378, %v7511
    %v7576 = vadd.f32 %v7379, %v7512
    %v7577 = vadd.f32 %v7380, %v7513
    %v7578 = vadd.f32 %v7381, %v7514
    %v7579 = vadd.f32 %v7382, %v7515
    %v7580 = vadd.f32 %v7383, %v7516
    %v7581 = vadd.f32 %v7384, %v7517
    %v7582 = vadd.f32 %v7385, %v7518
    %v7583 = vadd.f32 %v7386, %v7519
    %v7584 = vadd.f32 %v7387, %v7520
    %v7585 = vadd.f32 %v7388, %v7521
    %v7586 = vadd.f32 %v7389, %v7522
    %v7587 = vadd.f32 %v7390, %v7523
    %v7588 = vadd.f32 %v7391, %v7524
    %v7589 = vadd.f32 %v7392, %v7525
    %v7590 = vadd.f32 %v7393, %v7526
    %v7591 = vadd.f32 %v7394, %v7527
    %v7592 = vadd.f32 %v7395, %v7528
    %v7593 = vadd.f32 %v7396, %v7529
    %v7594 = vadd.f32 %v7397, %v7530
    %v7595 = vadd.f32 %v7398, %v7531
    %v7596 = vadd.f32 %v7399, %v7532
    %v7597 = vadd.f32 %v7400, %v7533
    %v7598 = vadd.f32 %v7401, %v7534
    %v7599 = vadd.f32 %v7402, %v7535
    %v7600 = vadd.f32 %v7403, %v7536
    %v7601 = vadd.f32 %v7404, %v7537
    %v7602 = vadd.f32 %v7405, %v7538
    %v7603 = vadd.f32 %v7406, %v7539
    %v7604 = vadd.f32 %v7407, %v7540
    %v7605 = vadd.f32 %v7408, %v7541
    %v7606 = vadd.f32 %v7409, %v7542
    %v7607 = vadd.f32 %v7410, %v7543
    %v7608 = vadd.f32 %v7411, %v7544
    %v7609 = vadd.f32 %v7412, %v7545
    %v7610 = vadd.f32 %v7413, %v7546
    %v7611 = vadd.f32 %v7414, %v7547
    %v7612 = vadd.f32 %v7415, %v7548
    %v7613 = vadd.f32 %v7416, %v7549
    %v7614 = vadd.f32 %v7417, %v7550
    %v7615 = vadd.f32 %v7418, %v7551
    %v7616 = vadd.f32 %v7419, %v7552
    %v7617 = vadd.f32 %v7420, %v7553
    %v7618 = vadd.f32 %v7421, %v7554
    %v7619 = vadd.f32 %v7422, %v7555
    %v7620 = vadd.f32 %v7423, %v7556
    %v7621 = vadd.f32 %v7424, %v7557
    %v7622 = vadd.f32 %v7425, %v7558
    %v7623 = vadd.f32 %v7426, %v7559
    %v7624 = vadd.f32 %v7427, %v7560
    %v7625 = vadd.f32 %v7428, %v7561
    %v7626 = vadd.f32 %v7429, %v7562
    %v7627 = vadd.f32 %v7430, %v7563
    %v7628 = vadd.f32 %v7431, %v7564
    %v7629 = vadd.f32 %v7432, %v7565
    %v7630 = vadd.f32 %v7433, %v7566
    %v7631 = vadd.f32 %v7434, %v7567
    %v7632 = vadd.f32 %v7435, %v7568
    %v7633 = vadd.f32 %v7436, %v7569
    %v7634 = vld [vmem:[%s4 + $0x5] sm:$0x1]
    %v7635 = vld [vmem:[%s6584 + $0x2] sm:$0xff]
    %v7636 = vld [vmem:[%s6584 + $0xa] sm:$0xff]
    %v7637 = vld [vmem:[%s6584 + $0x1a] sm:$0xff]
    %v7638 = vld [vmem:[%s6584 + $0x22] sm:$0xff]
    %v7639 = vld [vmem:[%s6584 + $0x32] sm:$0xff]
    %v7640 = vld [vmem:[%s6584 + $0x3a] sm:$0xff]
    %v7641 = vld [vmem:[%s6584 + $0x4a] sm:$0xff]
    %v7642 = vld [vmem:[%s6584 + $0x52] sm:$0xff]
    %v7643 = vld [vmem:[%s6584 + $0x62] sm:$0xff]
    %v7644 = vld [vmem:[%s6584 + $0x6a] sm:$0xff]
    %v7645 = vld [vmem:[%s6584 + $0x7a] sm:$0xff]
    %v7646 = vld [vmem:[%s6584 + $0x82] sm:$0xff]
    %v7647 = vld [vmem:[%s6584 + $0x92] sm:$0xff]
    %v7648 = vld [vmem:[%s6584 + $0x9a] sm:$0xff]
    %v7649 = vld [vmem:[%s6584 + $0xaa] sm:$0xff]
    %v7650 = vld [vmem:[%s6584 + $0xb2] sm:$0xff]
    %v7651 = vld [vmem:[%s6584 + $0xc2] sm:$0xff]
    %v7652 = vld [vmem:[%s6584 + $0xca] sm:$0xff]
    %v7653 = vld [vmem:[%s6584 + $0xda] sm:$0xff]
    %v7654 = vld [vmem:[%s6584 + $0xe2] sm:$0xff]
    %v7655 = vld [vmem:[%s6584 + $0xf2] sm:$0xff]
    %v7656 = vld [vmem:[%s6584 + $0xfa] sm:$0xff]
    %v7657 = vld [vmem:[%s6584 + $0x10a] sm:$0xff]
    %v7658 = vld [vmem:[%s6584 + $0x112] sm:$0xff]
    %v7659 = vld [vmem:[%s6584 + $0x122] sm:$0xff]
    %v7660 = vld [vmem:[%s6584 + $0x12a] sm:$0xff]
    %v7661 = vld [vmem:[%s6584 + $0x13a] sm:$0xff]
    %v7662 = vld [vmem:[%s6584 + $0x142] sm:$0xff]
    %v7663 = vld [vmem:[%s6584 + $0x152] sm:$0xff]
    %v7664 = vld [vmem:[%s6584 + $0x15a] sm:$0xff]
    %v7665 = vld [vmem:[%s6584 + $0x16a] sm:$0xff]
    %v7666 = vld [vmem:[%s6584 + $0x172] sm:$0xff]
    %v7667 = vld [vmem:[%s6584 + $0x1b2] sm:$0xff]
    %v7668 = vld [vmem:[%s6584 + $0x1ba] sm:$0xff]
    %v7669 = vld [vmem:[%s6584 + $0x1ca] sm:$0xff]
    %v7670 = vld [vmem:[%s6584 + $0x1d2] sm:$0xff]
    %v7671 = vld [vmem:[%s6584 + $0x1e2] sm:$0xff]
    %v7672 = vld [vmem:[%s6584 + $0x1ea] sm:$0xff]
    %v7673 = vld [vmem:[%s6584 + $0x1fa] sm:$0xff]
    %v7674 = vld [vmem:[%s6584 + $0x202] sm:$0xff]
    %v7675 = vld [vmem:[%s6584 + $0x212] sm:$0xff]
    %v7676 = vld [vmem:[%s6584 + $0x21a] sm:$0xff]
    %v7677 = vld [vmem:[%s6584 + $0x22a] sm:$0xff]
    %v7678 = vld [vmem:[%s6584 + $0x232] sm:$0xff]
    %v7679 = vld [vmem:[%s6584 + $0x242] sm:$0xff]
    %v7680 = vld [vmem:[%s6584 + $0x24a] sm:$0xff]
    %v7681 = vld [vmem:[%s6584 + $0x25a] sm:$0xff]
    %v7682 = vld [vmem:[%s6584 + $0x262] sm:$0xff]
    %v7683 = vld [vmem:[%s6584 + $0x272] sm:$0xff]
    %v7684 = vld [vmem:[%s6584 + $0x27a] sm:$0xff]
    %v7685 = vld [vmem:[%s6584 + $0x28a] sm:$0xff]
    %v7686 = vld [vmem:[%s6584 + $0x292] sm:$0xff]
    %v7687 = vld [vmem:[%s6584 + $0x2a2] sm:$0xff]
    %v7688 = vld [vmem:[%s6584 + $0x2aa] sm:$0xff]
    %v7689 = vld [vmem:[%s6584 + $0x2ba] sm:$0xff]
    %v7690 = vld [vmem:[%s6584 + $0x2c2] sm:$0xff]
    %v7691 = vld [vmem:[%s6584 + $0x2d2] sm:$0xff]
    %v7692 = vld [vmem:[%s6584 + $0x2da] sm:$0xff]
    %v7693 = vld [vmem:[%s6584 + $0x2ea] sm:$0xff]
    %v7694 = vld [vmem:[%s6584 + $0x2f2] sm:$0xff]
    %v7695 = vld [vmem:[%s6584 + $0x302] sm:$0xff]
    %v7696 = vld [vmem:[%s6584 + $0x30a] sm:$0xff]
    %v7697 = vld [vmem:[%s6584 + $0x31a] sm:$0xff]
    %v7698 = vld [vmem:[%s6584 + $0x322] sm:$0xff]
    %v7699 = vlaneseq
    %v7700 = vshrl.u32 %v7699, 7
    %v7701 = vsub.s32 0, %v7700
    %v7702 = vrot.slane %v7634, %v7701
    %v7703 = vmul.f32 %v7635, %v7702
    %v7704 = vmul.f32 %v7636, %v7702
    %v7705 = vmul.f32 %v7637, %v7702
    %v7706 = vmul.f32 %v7638, %v7702
    %v7707 = vmul.f32 %v7639, %v7702
    %v7708 = vmul.f32 %v7640, %v7702
    %v7709 = vmul.f32 %v7641, %v7702
    %v7710 = vmul.f32 %v7642, %v7702
    %v7711 = vmul.f32 %v7643, %v7702
    %v7712 = vmul.f32 %v7644, %v7702
    %v7713 = vmul.f32 %v7645, %v7702
    %v7714 = vmul.f32 %v7646, %v7702
    %v7715 = vmul.f32 %v7647, %v7702
    %v7716 = vmul.f32 %v7648, %v7702
    %v7717 = vmul.f32 %v7649, %v7702
    %v7718 = vmul.f32 %v7650, %v7702
    %v7719 = vmul.f32 %v7651, %v7702
    %v7720 = vmul.f32 %v7652, %v7702
    %v7721 = vmul.f32 %v7653, %v7702
    %v7722 = vmul.f32 %v7654, %v7702
    %v7723 = vmul.f32 %v7655, %v7702
    %v7724 = vmul.f32 %v7656, %v7702
    %v7725 = vmul.f32 %v7657, %v7702
    %v7726 = vmul.f32 %v7658, %v7702
    %v7727 = vmul.f32 %v7659, %v7702
    %v7728 = vmul.f32 %v7660, %v7702
    %v7729 = vmul.f32 %v7661, %v7702
    %v7730 = vmul.f32 %v7662, %v7702
    %v7731 = vmul.f32 %v7663, %v7702
    %v7732 = vmul.f32 %v7664, %v7702
    %v7733 = vmul.f32 %v7665, %v7702
    %v7734 = vmul.f32 %v7666, %v7702
    %v7735 = vmul.f32 %v7667, %v7702
    %v7736 = vmul.f32 %v7668, %v7702
    %v7737 = vmul.f32 %v7669, %v7702
    %v7738 = vmul.f32 %v7670, %v7702
    %v7739 = vmul.f32 %v7671, %v7702
    %v7740 = vmul.f32 %v7672, %v7702
    %v7741 = vmul.f32 %v7673, %v7702
    %v7742 = vmul.f32 %v7674, %v7702
    %v7743 = vmul.f32 %v7675, %v7702
    %v7744 = vmul.f32 %v7676, %v7702
    %v7745 = vmul.f32 %v7677, %v7702
    %v7746 = vmul.f32 %v7678, %v7702
    %v7747 = vmul.f32 %v7679, %v7702
    %v7748 = vmul.f32 %v7680, %v7702
    %v7749 = vmul.f32 %v7681, %v7702
    %v7750 = vmul.f32 %v7682, %v7702
    %v7751 = vmul.f32 %v7683, %v7702
    %v7752 = vmul.f32 %v7684, %v7702
    %v7753 = vmul.f32 %v7685, %v7702
    %v7754 = vmul.f32 %v7686, %v7702
    %v7755 = vmul.f32 %v7687, %v7702
    %v7756 = vmul.f32 %v7688, %v7702
    %v7757 = vmul.f32 %v7689, %v7702
    %v7758 = vmul.f32 %v7690, %v7702
    %v7759 = vmul.f32 %v7691, %v7702
    %v7760 = vmul.f32 %v7692, %v7702
    %v7761 = vmul.f32 %v7693, %v7702
    %v7762 = vmul.f32 %v7694, %v7702
    %v7763 = vmul.f32 %v7695, %v7702
    %v7764 = vmul.f32 %v7696, %v7702
    %v7765 = vmul.f32 %v7697, %v7702
    %v7766 = vmul.f32 %v7698, %v7702
    %v7767 = vadd.f32 %v7570, %v7703
    %v7768 = vadd.f32 %v7571, %v7704
    %v7769 = vadd.f32 %v7572, %v7705
    %v7770 = vadd.f32 %v7573, %v7706
    %v7771 = vadd.f32 %v7574, %v7707
    %v7772 = vadd.f32 %v7575, %v7708
    %v7773 = vadd.f32 %v7576, %v7709
    %v7774 = vadd.f32 %v7577, %v7710
    %v7775 = vadd.f32 %v7578, %v7711
    %v7776 = vadd.f32 %v7579, %v7712
    %v7777 = vadd.f32 %v7580, %v7713
    %v7778 = vadd.f32 %v7581, %v7714
    %v7779 = vadd.f32 %v7582, %v7715
    %v7780 = vadd.f32 %v7583, %v7716
    %v7781 = vadd.f32 %v7584, %v7717
    %v7782 = vadd.f32 %v7585, %v7718
    %v7783 = vadd.f32 %v7586, %v7719
    %v7784 = vadd.f32 %v7587, %v7720
    %v7785 = vadd.f32 %v7588, %v7721
    %v7786 = vadd.f32 %v7589, %v7722
    %v7787 = vadd.f32 %v7590, %v7723
    %v7788 = vadd.f32 %v7591, %v7724
    %v7789 = vadd.f32 %v7592, %v7725
    %v7790 = vadd.f32 %v7593, %v7726
    %v7791 = vadd.f32 %v7594, %v7727
    %v7792 = vadd.f32 %v7595, %v7728
    %v7793 = vadd.f32 %v7596, %v7729
    %v7794 = vadd.f32 %v7597, %v7730
    %v7795 = vadd.f32 %v7598, %v7731
    %v7796 = vadd.f32 %v7599, %v7732
    %v7797 = vadd.f32 %v7600, %v7733
    %v7798 = vadd.f32 %v7601, %v7734
    %v7799 = vadd.f32 %v7602, %v7735
    %v7800 = vadd.f32 %v7603, %v7736
    %v7801 = vadd.f32 %v7604, %v7737
    %v7802 = vadd.f32 %v7605, %v7738
    %v7803 = vadd.f32 %v7606, %v7739
    %v7804 = vadd.f32 %v7607, %v7740
    %v7805 = vadd.f32 %v7608, %v7741
    %v7806 = vadd.f32 %v7609, %v7742
    %v7807 = vadd.f32 %v7610, %v7743
    %v7808 = vadd.f32 %v7611, %v7744
    %v7809 = vadd.f32 %v7612, %v7745
    %v7810 = vadd.f32 %v7613, %v7746
    %v7811 = vadd.f32 %v7614, %v7747
    %v7812 = vadd.f32 %v7615, %v7748
    %v7813 = vadd.f32 %v7616, %v7749
    %v7814 = vadd.f32 %v7617, %v7750
    %v7815 = vadd.f32 %v7618, %v7751
    %v7816 = vadd.f32 %v7619, %v7752
    %v7817 = vadd.f32 %v7620, %v7753
    %v7818 = vadd.f32 %v7621, %v7754
    %v7819 = vadd.f32 %v7622, %v7755
    %v7820 = vadd.f32 %v7623, %v7756
    %v7821 = vadd.f32 %v7624, %v7757
    %v7822 = vadd.f32 %v7625, %v7758
    %v7823 = vadd.f32 %v7626, %v7759
    %v7824 = vadd.f32 %v7627, %v7760
    %v7825 = vadd.f32 %v7628, %v7761
    %v7826 = vadd.f32 %v7629, %v7762
    %v7827 = vadd.f32 %v7630, %v7763
    %v7828 = vadd.f32 %v7631, %v7764
    %v7829 = vadd.f32 %v7632, %v7765
    %v7830 = vadd.f32 %v7633, %v7766
    %v7831 = vld [vmem:[%s4 + $0x6] sm:$0x1]
    %s7832 = scalar_lea.vmem [#allocation2], 48
    %v7833 = vld [vmem:[%s7832] sm:$0xff]
    %v7834 = vld [vmem:[%s7832 + $0x8] sm:$0xff]
    %v7835 = vld [vmem:[%s7832 + $0x18] sm:$0xff]
    %v7836 = vld [vmem:[%s7832 + $0x20] sm:$0xff]
    %v7837 = vld [vmem:[%s7832 + $0x30] sm:$0xff]
    %v7838 = vld [vmem:[%s7832 + $0x38] sm:$0xff]
    %v7839 = vld [vmem:[%s7832 + $0x48] sm:$0xff]
    %v7840 = vld [vmem:[%s7832 + $0x50] sm:$0xff]
    %v7841 = vld [vmem:[%s7832 + $0x60] sm:$0xff]
    %v7842 = vld [vmem:[%s7832 + $0x68] sm:$0xff]
    %v7843 = vld [vmem:[%s7832 + $0x78] sm:$0xff]
    %v7844 = vld [vmem:[%s7832 + $0x80] sm:$0xff]
    %v7845 = vld [vmem:[%s7832 + $0x90] sm:$0xff]
    %v7846 = vld [vmem:[%s7832 + $0x98] sm:$0xff]
    %v7847 = vld [vmem:[%s7832 + $0xa8] sm:$0xff]
    %v7848 = vld [vmem:[%s7832 + $0xb0] sm:$0xff]
    %v7849 = vld [vmem:[%s7832 + $0xc0] sm:$0xff]
    %v7850 = vld [vmem:[%s7832 + $0xc8] sm:$0xff]
    %v7851 = vld [vmem:[%s7832 + $0xd8] sm:$0xff]
    %v7852 = vld [vmem:[%s7832 + $0xe0] sm:$0xff]
    %v7853 = vld [vmem:[%s7832 + $0xf0] sm:$0xff]
    %v7854 = vld [vmem:[%s7832 + $0xf8] sm:$0xff]
    %v7855 = vld [vmem:[%s7832 + $0x108] sm:$0xff]
    %v7856 = vld [vmem:[%s7832 + $0x110] sm:$0xff]
    %v7857 = vld [vmem:[%s7832 + $0x120] sm:$0xff]
    %v7858 = vld [vmem:[%s7832 + $0x128] sm:$0xff]
    %v7859 = vld [vmem:[%s7832 + $0x138] sm:$0xff]
    %v7860 = vld [vmem:[%s7832 + $0x140] sm:$0xff]
    %v7861 = vld [vmem:[%s7832 + $0x150] sm:$0xff]
    %v7862 = vld [vmem:[%s7832 + $0x158] sm:$0xff]
    %v7863 = vld [vmem:[%s7832 + $0x168] sm:$0xff]
    %v7864 = vld [vmem:[%s7832 + $0x170] sm:$0xff]
    %v7865 = vld [vmem:[%s7832 + $0x1b0] sm:$0xff]
    %v7866 = vld [vmem:[%s7832 + $0x1b8] sm:$0xff]
    %v7867 = vld [vmem:[%s7832 + $0x1c8] sm:$0xff]
    %v7868 = vld [vmem:[%s7832 + $0x1d0] sm:$0xff]
    %v7869 = vld [vmem:[%s7832 + $0x1e0] sm:$0xff]
    %v7870 = vld [vmem:[%s7832 + $0x1e8] sm:$0xff]
    %v7871 = vld [vmem:[%s7832 + $0x1f8] sm:$0xff]
    %v7872 = vld [vmem:[%s7832 + $0x200] sm:$0xff]
    %v7873 = vld [vmem:[%s7832 + $0x210] sm:$0xff]
    %v7874 = vld [vmem:[%s7832 + $0x218] sm:$0xff]
    %v7875 = vld [vmem:[%s7832 + $0x228] sm:$0xff]
    %v7876 = vld [vmem:[%s7832 + $0x230] sm:$0xff]
    %v7877 = vld [vmem:[%s7832 + $0x240] sm:$0xff]
    %v7878 = vld [vmem:[%s7832 + $0x248] sm:$0xff]
    %v7879 = vld [vmem:[%s7832 + $0x258] sm:$0xff]
    %v7880 = vld [vmem:[%s7832 + $0x260] sm:$0xff]
    %v7881 = vld [vmem:[%s7832 + $0x270] sm:$0xff]
    %v7882 = vld [vmem:[%s7832 + $0x278] sm:$0xff]
    %v7883 = vld [vmem:[%s7832 + $0x288] sm:$0xff]
    %v7884 = vld [vmem:[%s7832 + $0x290] sm:$0xff]
    %v7885 = vld [vmem:[%s7832 + $0x2a0] sm:$0xff]
    %v7886 = vld [vmem:[%s7832 + $0x2a8] sm:$0xff]
    %v7887 = vld [vmem:[%s7832 + $0x2b8] sm:$0xff]
    %v7888 = vld [vmem:[%s7832 + $0x2c0] sm:$0xff]
    %v7889 = vld [vmem:[%s7832 + $0x2d0] sm:$0xff]
    %v7890 = vld [vmem:[%s7832 + $0x2d8] sm:$0xff]
    %v7891 = vld [vmem:[%s7832 + $0x2e8] sm:$0xff]
    %v7892 = vld [vmem:[%s7832 + $0x2f0] sm:$0xff]
    %v7893 = vld [vmem:[%s7832 + $0x300] sm:$0xff]
    %v7894 = vld [vmem:[%s7832 + $0x308] sm:$0xff]
    %v7895 = vld [vmem:[%s7832 + $0x318] sm:$0xff]
    %v7896 = vld [vmem:[%s7832 + $0x320] sm:$0xff]
    %v7897 = vlaneseq
    %v7898 = vshrl.u32 %v7897, 7
    %v7899 = vsub.s32 0, %v7898
    %v7900 = vrot.slane %v7831, %v7899
    %v7901 = vmul.f32 %v7833, %v7900
    %v7902 = vmul.f32 %v7834, %v7900
    %v7903 = vmul.f32 %v7835, %v7900
    %v7904 = vmul.f32 %v7836, %v7900
    %v7905 = vmul.f32 %v7837, %v7900
    %v7906 = vmul.f32 %v7838, %v7900
    %v7907 = vmul.f32 %v7839, %v7900
    %v7908 = vmul.f32 %v7840, %v7900
    %v7909 = vmul.f32 %v7841, %v7900
    %v7910 = vmul.f32 %v7842, %v7900
    %v7911 = vmul.f32 %v7843, %v7900
    %v7912 = vmul.f32 %v7844, %v7900
    %v7913 = vmul.f32 %v7845, %v7900
    %v7914 = vmul.f32 %v7846, %v7900
    %v7915 = vmul.f32 %v7847, %v7900
    %v7916 = vmul.f32 %v7848, %v7900
    %v7917 = vmul.f32 %v7849, %v7900
    %v7918 = vmul.f32 %v7850, %v7900
    %v7919 = vmul.f32 %v7851, %v7900
    %v7920 = vmul.f32 %v7852, %v7900
    %v7921 = vmul.f32 %v7853, %v7900
    %v7922 = vmul.f32 %v7854, %v7900
    %v7923 = vmul.f32 %v7855, %v7900
    %v7924 = vmul.f32 %v7856, %v7900
    %v7925 = vmul.f32 %v7857, %v7900
    %v7926 = vmul.f32 %v7858, %v7900
    %v7927 = vmul.f32 %v7859, %v7900
    %v7928 = vmul.f32 %v7860, %v7900
    %v7929 = vmul.f32 %v7861, %v7900
    %v7930 = vmul.f32 %v7862, %v7900
    %v7931 = vmul.f32 %v7863, %v7900
    %v7932 = vmul.f32 %v7864, %v7900
    %v7933 = vmul.f32 %v7865, %v7900
    %v7934 = vmul.f32 %v7866, %v7900
    %v7935 = vmul.f32 %v7867, %v7900
    %v7936 = vmul.f32 %v7868, %v7900
    %v7937 = vmul.f32 %v7869, %v7900
    %v7938 = vmul.f32 %v7870, %v7900
    %v7939 = vmul.f32 %v7871, %v7900
    %v7940 = vmul.f32 %v7872, %v7900
    %v7941 = vmul.f32 %v7873, %v7900
    %v7942 = vmul.f32 %v7874, %v7900
    %v7943 = vmul.f32 %v7875, %v7900
    %v7944 = vmul.f32 %v7876, %v7900
    %v7945 = vmul.f32 %v7877, %v7900
    %v7946 = vmul.f32 %v7878, %v7900
    %v7947 = vmul.f32 %v7879, %v7900
    %v7948 = vmul.f32 %v7880, %v7900
    %v7949 = vmul.f32 %v7881, %v7900
    %v7950 = vmul.f32 %v7882, %v7900
    %v7951 = vmul.f32 %v7883, %v7900
    %v7952 = vmul.f32 %v7884, %v7900
    %v7953 = vmul.f32 %v7885, %v7900
    %v7954 = vmul.f32 %v7886, %v7900
    %v7955 = vmul.f32 %v7887, %v7900
    %v7956 = vmul.f32 %v7888, %v7900
    %v7957 = vmul.f32 %v7889, %v7900
    %v7958 = vmul.f32 %v7890, %v7900
    %v7959 = vmul.f32 %v7891, %v7900
    %v7960 = vmul.f32 %v7892, %v7900
    %v7961 = vmul.f32 %v7893, %v7900
    %v7962 = vmul.f32 %v7894, %v7900
    %v7963 = vmul.f32 %v7895, %v7900
    %v7964 = vmul.f32 %v7896, %v7900
    %v7965 = vadd.f32 %v7767, %v7901
    %v7966 = vadd.f32 %v7768, %v7902
    %v7967 = vadd.f32 %v7769, %v7903
    %v7968 = vadd.f32 %v7770, %v7904
    %v7969 = vadd.f32 %v7771, %v7905
    %v7970 = vadd.f32 %v7772, %v7906
    %v7971 = vadd.f32 %v7773, %v7907
    %v7972 = vadd.f32 %v7774, %v7908
    %v7973 = vadd.f32 %v7775, %v7909
    %v7974 = vadd.f32 %v7776, %v7910
    %v7975 = vadd.f32 %v7777, %v7911
    %v7976 = vadd.f32 %v7778, %v7912
    %v7977 = vadd.f32 %v7779, %v7913
    %v7978 = vadd.f32 %v7780, %v7914
    %v7979 = vadd.f32 %v7781, %v7915
    %v7980 = vadd.f32 %v7782, %v7916
    %v7981 = vadd.f32 %v7783, %v7917
    %v7982 = vadd.f32 %v7784, %v7918
    %v7983 = vadd.f32 %v7785, %v7919
    %v7984 = vadd.f32 %v7786, %v7920
    %v7985 = vadd.f32 %v7787, %v7921
    %v7986 = vadd.f32 %v7788, %v7922
    %v7987 = vadd.f32 %v7789, %v7923
    %v7988 = vadd.f32 %v7790, %v7924
    %v7989 = vadd.f32 %v7791, %v7925
    %v7990 = vadd.f32 %v7792, %v7926
    %v7991 = vadd.f32 %v7793, %v7927
    %v7992 = vadd.f32 %v7794, %v7928
    %v7993 = vadd.f32 %v7795, %v7929
    %v7994 = vadd.f32 %v7796, %v7930
    %v7995 = vadd.f32 %v7797, %v7931
    %v7996 = vadd.f32 %v7798, %v7932
    %v7997 = vadd.f32 %v7799, %v7933
    %v7998 = vadd.f32 %v7800, %v7934
    %v7999 = vadd.f32 %v7801, %v7935
    %v8000 = vadd.f32 %v7802, %v7936
    %v8001 = vadd.f32 %v7803, %v7937
    %v8002 = vadd.f32 %v7804, %v7938
    %v8003 = vadd.f32 %v7805, %v7939
    %v8004 = vadd.f32 %v7806, %v7940
    %v8005 = vadd.f32 %v7807, %v7941
    %v8006 = vadd.f32 %v7808, %v7942
    %v8007 = vadd.f32 %v7809, %v7943
    %v8008 = vadd.f32 %v7810, %v7944
    %v8009 = vadd.f32 %v7811, %v7945
    %v8010 = vadd.f32 %v7812, %v7946
    %v8011 = vadd.f32 %v7813, %v7947
    %v8012 = vadd.f32 %v7814, %v7948
    %v8013 = vadd.f32 %v7815, %v7949
    %v8014 = vadd.f32 %v7816, %v7950
    %v8015 = vadd.f32 %v7817, %v7951
    %v8016 = vadd.f32 %v7818, %v7952
    %v8017 = vadd.f32 %v7819, %v7953
    %v8018 = vadd.f32 %v7820, %v7954
    %v8019 = vadd.f32 %v7821, %v7955
    %v8020 = vadd.f32 %v7822, %v7956
    %v8021 = vadd.f32 %v7823, %v7957
    %v8022 = vadd.f32 %v7824, %v7958
    %v8023 = vadd.f32 %v7825, %v7959
    %v8024 = vadd.f32 %v7826, %v7960
    %v8025 = vadd.f32 %v7827, %v7961
    %v8026 = vadd.f32 %v7828, %v7962
    %v8027 = vadd.f32 %v7829, %v7963
    %v8028 = vadd.f32 %v7830, %v7964
    %v8029 = vld [vmem:[%s4 + $0x7] sm:$0x1]
    %v8030 = vld [vmem:[%s7832 + $0x1] sm:$0xff]
    %v8031 = vld [vmem:[%s7832 + $0x9] sm:$0xff]
    %v8032 = vld [vmem:[%s7832 + $0x19] sm:$0xff]
    %v8033 = vld [vmem:[%s7832 + $0x21] sm:$0xff]
    %v8034 = vld [vmem:[%s7832 + $0x31] sm:$0xff]
    %v8035 = vld [vmem:[%s7832 + $0x39] sm:$0xff]
    %v8036 = vld [vmem:[%s7832 + $0x49] sm:$0xff]
    %v8037 = vld [vmem:[%s7832 + $0x51] sm:$0xff]
    %v8038 = vld [vmem:[%s7832 + $0x61] sm:$0xff]
    %v8039 = vld [vmem:[%s7832 + $0x69] sm:$0xff]
    %v8040 = vld [vmem:[%s7832 + $0x79] sm:$0xff]
    %v8041 = vld [vmem:[%s7832 + $0x81] sm:$0xff]
    %v8042 = vld [vmem:[%s7832 + $0x91] sm:$0xff]
    %v8043 = vld [vmem:[%s7832 + $0x99] sm:$0xff]
    %v8044 = vld [vmem:[%s7832 + $0xa9] sm:$0xff]
    %v8045 = vld [vmem:[%s7832 + $0xb1] sm:$0xff]
    %v8046 = vld [vmem:[%s7832 + $0xc1] sm:$0xff]
    %v8047 = vld [vmem:[%s7832 + $0xc9] sm:$0xff]
    %v8048 = vld [vmem:[%s7832 + $0xd9] sm:$0xff]
    %v8049 = vld [vmem:[%s7832 + $0xe1] sm:$0xff]
    %v8050 = vld [vmem:[%s7832 + $0xf1] sm:$0xff]
    %v8051 = vld [vmem:[%s7832 + $0xf9] sm:$0xff]
    %v8052 = vld [vmem:[%s7832 + $0x109] sm:$0xff]
    %v8053 = vld [vmem:[%s7832 + $0x111] sm:$0xff]
    %v8054 = vld [vmem:[%s7832 + $0x121] sm:$0xff]
    %v8055 = vld [vmem:[%s7832 + $0x129] sm:$0xff]
    %v8056 = vld [vmem:[%s7832 + $0x139] sm:$0xff]
    %v8057 = vld [vmem:[%s7832 + $0x141] sm:$0xff]
    %v8058 = vld [vmem:[%s7832 + $0x151] sm:$0xff]
    %v8059 = vld [vmem:[%s7832 + $0x159] sm:$0xff]
    %v8060 = vld [vmem:[%s7832 + $0x169] sm:$0xff]
    %v8061 = vld [vmem:[%s7832 + $0x171] sm:$0xff]
    %v8062 = vld [vmem:[%s7832 + $0x1b1] sm:$0xff]
    %v8063 = vld [vmem:[%s7832 + $0x1b9] sm:$0xff]
    %v8064 = vld [vmem:[%s7832 + $0x1c9] sm:$0xff]
    %v8065 = vld [vmem:[%s7832 + $0x1d1] sm:$0xff]
    %v8066 = vld [vmem:[%s7832 + $0x1e1] sm:$0xff]
    %v8067 = vld [vmem:[%s7832 + $0x1e9] sm:$0xff]
    %v8068 = vld [vmem:[%s7832 + $0x1f9] sm:$0xff]
    %v8069 = vld [vmem:[%s7832 + $0x201] sm:$0xff]
    %v8070 = vld [vmem:[%s7832 + $0x211] sm:$0xff]
    %v8071 = vld [vmem:[%s7832 + $0x219] sm:$0xff]
    %v8072 = vld [vmem:[%s7832 + $0x229] sm:$0xff]
    %v8073 = vld [vmem:[%s7832 + $0x231] sm:$0xff]
    %v8074 = vld [vmem:[%s7832 + $0x241] sm:$0xff]
    %v8075 = vld [vmem:[%s7832 + $0x249] sm:$0xff]
    %v8076 = vld [vmem:[%s7832 + $0x259] sm:$0xff]
    %v8077 = vld [vmem:[%s7832 + $0x261] sm:$0xff]
    %v8078 = vld [vmem:[%s7832 + $0x271] sm:$0xff]
    %v8079 = vld [vmem:[%s7832 + $0x279] sm:$0xff]
    %v8080 = vld [vmem:[%s7832 + $0x289] sm:$0xff]
    %v8081 = vld [vmem:[%s7832 + $0x291] sm:$0xff]
    %v8082 = vld [vmem:[%s7832 + $0x2a1] sm:$0xff]
    %v8083 = vld [vmem:[%s7832 + $0x2a9] sm:$0xff]
    %v8084 = vld [vmem:[%s7832 + $0x2b9] sm:$0xff]
    %v8085 = vld [vmem:[%s7832 + $0x2c1] sm:$0xff]
    %v8086 = vld [vmem:[%s7832 + $0x2d1] sm:$0xff]
    %v8087 = vld [vmem:[%s7832 + $0x2d9] sm:$0xff]
    %v8088 = vld [vmem:[%s7832 + $0x2e9] sm:$0xff]
    %v8089 = vld [vmem:[%s7832 + $0x2f1] sm:$0xff]
    %v8090 = vld [vmem:[%s7832 + $0x301] sm:$0xff]
    %v8091 = vld [vmem:[%s7832 + $0x309] sm:$0xff]
    %v8092 = vld [vmem:[%s7832 + $0x319] sm:$0xff]
    %v8093 = vld [vmem:[%s7832 + $0x321] sm:$0xff]
    %v8094 = vlaneseq
    %v8095 = vshrl.u32 %v8094, 7
    %v8096 = vsub.s32 0, %v8095
    %v8097 = vrot.slane %v8029, %v8096
    %v8098 = vmul.f32 %v8030, %v8097
    %v8099 = vmul.f32 %v8031, %v8097
    %v8100 = vmul.f32 %v8032, %v8097
    %v8101 = vmul.f32 %v8033, %v8097
    %v8102 = vmul.f32 %v8034, %v8097
    %v8103 = vmul.f32 %v8035, %v8097
    %v8104 = vmul.f32 %v8036, %v8097
    %v8105 = vmul.f32 %v8037, %v8097
    %v8106 = vmul.f32 %v8038, %v8097
    %v8107 = vmul.f32 %v8039, %v8097
    %v8108 = vmul.f32 %v8040, %v8097
    %v8109 = vmul.f32 %v8041, %v8097
    %v8110 = vmul.f32 %v8042, %v8097
    %v8111 = vmul.f32 %v8043, %v8097
    %v8112 = vmul.f32 %v8044, %v8097
    %v8113 = vmul.f32 %v8045, %v8097
    %v8114 = vmul.f32 %v8046, %v8097
    %v8115 = vmul.f32 %v8047, %v8097
    %v8116 = vmul.f32 %v8048, %v8097
    %v8117 = vmul.f32 %v8049, %v8097
    %v8118 = vmul.f32 %v8050, %v8097
    %v8119 = vmul.f32 %v8051, %v8097
    %v8120 = vmul.f32 %v8052, %v8097
    %v8121 = vmul.f32 %v8053, %v8097
    %v8122 = vmul.f32 %v8054, %v8097
    %v8123 = vmul.f32 %v8055, %v8097
    %v8124 = vmul.f32 %v8056, %v8097
    %v8125 = vmul.f32 %v8057, %v8097
    %v8126 = vmul.f32 %v8058, %v8097
    %v8127 = vmul.f32 %v8059, %v8097
    %v8128 = vmul.f32 %v8060, %v8097
    %v8129 = vmul.f32 %v8061, %v8097
    %v8130 = vmul.f32 %v8062, %v8097
    %v8131 = vmul.f32 %v8063, %v8097
    %v8132 = vmul.f32 %v8064, %v8097
    %v8133 = vmul.f32 %v8065, %v8097
    %v8134 = vmul.f32 %v8066, %v8097
    %v8135 = vmul.f32 %v8067, %v8097
    %v8136 = vmul.f32 %v8068, %v8097
    %v8137 = vmul.f32 %v8069, %v8097
    %v8138 = vmul.f32 %v8070, %v8097
    %v8139 = vmul.f32 %v8071, %v8097
    %v8140 = vmul.f32 %v8072, %v8097
    %v8141 = vmul.f32 %v8073, %v8097
    %v8142 = vmul.f32 %v8074, %v8097
    %v8143 = vmul.f32 %v8075, %v8097
    %v8144 = vmul.f32 %v8076, %v8097
    %v8145 = vmul.f32 %v8077, %v8097
    %v8146 = vmul.f32 %v8078, %v8097
    %v8147 = vmul.f32 %v8079, %v8097
    %v8148 = vmul.f32 %v8080, %v8097
    %v8149 = vmul.f32 %v8081, %v8097
    %v8150 = vmul.f32 %v8082, %v8097
    %v8151 = vmul.f32 %v8083, %v8097
    %v8152 = vmul.f32 %v8084, %v8097
    %v8153 = vmul.f32 %v8085, %v8097
    %v8154 = vmul.f32 %v8086, %v8097
    %v8155 = vmul.f32 %v8087, %v8097
    %v8156 = vmul.f32 %v8088, %v8097
    %v8157 = vmul.f32 %v8089, %v8097
    %v8158 = vmul.f32 %v8090, %v8097
    %v8159 = vmul.f32 %v8091, %v8097
    %v8160 = vmul.f32 %v8092, %v8097
    %v8161 = vmul.f32 %v8093, %v8097
    %v8162 = vadd.f32 %v7965, %v8098
    %v8163 = vadd.f32 %v7966, %v8099
    %v8164 = vadd.f32 %v7967, %v8100
    %v8165 = vadd.f32 %v7968, %v8101
    %v8166 = vadd.f32 %v7969, %v8102
    %v8167 = vadd.f32 %v7970, %v8103
    %v8168 = vadd.f32 %v7971, %v8104
    %v8169 = vadd.f32 %v7972, %v8105
    %v8170 = vadd.f32 %v7973, %v8106
    %v8171 = vadd.f32 %v7974, %v8107
    %v8172 = vadd.f32 %v7975, %v8108
    %v8173 = vadd.f32 %v7976, %v8109
    %v8174 = vadd.f32 %v7977, %v8110
    %v8175 = vadd.f32 %v7978, %v8111
    %v8176 = vadd.f32 %v7979, %v8112
    %v8177 = vadd.f32 %v7980, %v8113
    %v8178 = vadd.f32 %v7981, %v8114
    %v8179 = vadd.f32 %v7982, %v8115
    %v8180 = vadd.f32 %v7983, %v8116
    %v8181 = vadd.f32 %v7984, %v8117
    %v8182 = vadd.f32 %v7985, %v8118
    %v8183 = vadd.f32 %v7986, %v8119
    %v8184 = vadd.f32 %v7987, %v8120
    %v8185 = vadd.f32 %v7988, %v8121
    %v8186 = vadd.f32 %v7989, %v8122
    %v8187 = vadd.f32 %v7990, %v8123
    %v8188 = vadd.f32 %v7991, %v8124
    %v8189 = vadd.f32 %v7992, %v8125
    %v8190 = vadd.f32 %v7993, %v8126
    %v8191 = vadd.f32 %v7994, %v8127
    %v8192 = vadd.f32 %v7995, %v8128
    %v8193 = vadd.f32 %v7996, %v8129
    %v8194 = vadd.f32 %v7997, %v8130
    %v8195 = vadd.f32 %v7998, %v8131
    %v8196 = vadd.f32 %v7999, %v8132
    %v8197 = vadd.f32 %v8000, %v8133
    %v8198 = vadd.f32 %v8001, %v8134
    %v8199 = vadd.f32 %v8002, %v8135
    %v8200 = vadd.f32 %v8003, %v8136
    %v8201 = vadd.f32 %v8004, %v8137
    %v8202 = vadd.f32 %v8005, %v8138
    %v8203 = vadd.f32 %v8006, %v8139
    %v8204 = vadd.f32 %v8007, %v8140
    %v8205 = vadd.f32 %v8008, %v8141
    %v8206 = vadd.f32 %v8009, %v8142
    %v8207 = vadd.f32 %v8010, %v8143
    %v8208 = vadd.f32 %v8011, %v8144
    %v8209 = vadd.f32 %v8012, %v8145
    %v8210 = vadd.f32 %v8013, %v8146
    %v8211 = vadd.f32 %v8014, %v8147
    %v8212 = vadd.f32 %v8015, %v8148
    %v8213 = vadd.f32 %v8016, %v8149
    %v8214 = vadd.f32 %v8017, %v8150
    %v8215 = vadd.f32 %v8018, %v8151
    %v8216 = vadd.f32 %v8019, %v8152
    %v8217 = vadd.f32 %v8020, %v8153
    %v8218 = vadd.f32 %v8021, %v8154
    %v8219 = vadd.f32 %v8022, %v8155
    %v8220 = vadd.f32 %v8023, %v8156
    %v8221 = vadd.f32 %v8024, %v8157
    %v8222 = vadd.f32 %v8025, %v8158
    %v8223 = vadd.f32 %v8026, %v8159
    %v8224 = vadd.f32 %v8027, %v8160
    %v8225 = vadd.f32 %v8028, %v8161
    %v8226 = vld [vmem:[%s4 + $0x8] sm:$0x1]
    %v8227 = vld [vmem:[%s7832 + $0x2] sm:$0xff]
    %v8228 = vld [vmem:[%s7832 + $0xa] sm:$0xff]
    %v8229 = vld [vmem:[%s7832 + $0x1a] sm:$0xff]
    %v8230 = vld [vmem:[%s7832 + $0x22] sm:$0xff]
    %v8231 = vld [vmem:[%s7832 + $0x32] sm:$0xff]
    %v8232 = vld [vmem:[%s7832 + $0x3a] sm:$0xff]
    %v8233 = vld [vmem:[%s7832 + $0x4a] sm:$0xff]
    %v8234 = vld [vmem:[%s7832 + $0x52] sm:$0xff]
    %v8235 = vld [vmem:[%s7832 + $0x62] sm:$0xff]
    %v8236 = vld [vmem:[%s7832 + $0x6a] sm:$0xff]
    %v8237 = vld [vmem:[%s7832 + $0x7a] sm:$0xff]
    %v8238 = vld [vmem:[%s7832 + $0x82] sm:$0xff]
    %v8239 = vld [vmem:[%s7832 + $0x92] sm:$0xff]
    %v8240 = vld [vmem:[%s7832 + $0x9a] sm:$0xff]
    %v8241 = vld [vmem:[%s7832 + $0xaa] sm:$0xff]
    %v8242 = vld [vmem:[%s7832 + $0xb2] sm:$0xff]
    %v8243 = vld [vmem:[%s7832 + $0xc2] sm:$0xff]
    %v8244 = vld [vmem:[%s7832 + $0xca] sm:$0xff]
    %v8245 = vld [vmem:[%s7832 + $0xda] sm:$0xff]
    %v8246 = vld [vmem:[%s7832 + $0xe2] sm:$0xff]
    %v8247 = vld [vmem:[%s7832 + $0xf2] sm:$0xff]
    %v8248 = vld [vmem:[%s7832 + $0xfa] sm:$0xff]
    %v8249 = vld [vmem:[%s7832 + $0x10a] sm:$0xff]
    %v8250 = vld [vmem:[%s7832 + $0x112] sm:$0xff]
    %v8251 = vld [vmem:[%s7832 + $0x122] sm:$0xff]
    %v8252 = vld [vmem:[%s7832 + $0x12a] sm:$0xff]
    %v8253 = vld [vmem:[%s7832 + $0x13a] sm:$0xff]
    %v8254 = vld [vmem:[%s7832 + $0x142] sm:$0xff]
    %v8255 = vld [vmem:[%s7832 + $0x152] sm:$0xff]
    %v8256 = vld [vmem:[%s7832 + $0x15a] sm:$0xff]
    %v8257 = vld [vmem:[%s7832 + $0x16a] sm:$0xff]
    %v8258 = vld [vmem:[%s7832 + $0x172] sm:$0xff]
    %v8259 = vld [vmem:[%s7832 + $0x1b2] sm:$0xff]
    %v8260 = vld [vmem:[%s7832 + $0x1ba] sm:$0xff]
    %v8261 = vld [vmem:[%s7832 + $0x1ca] sm:$0xff]
    %v8262 = vld [vmem:[%s7832 + $0x1d2] sm:$0xff]
    %v8263 = vld [vmem:[%s7832 + $0x1e2] sm:$0xff]
    %v8264 = vld [vmem:[%s7832 + $0x1ea] sm:$0xff]
    %v8265 = vld [vmem:[%s7832 + $0x1fa] sm:$0xff]
    %v8266 = vld [vmem:[%s7832 + $0x202] sm:$0xff]
    %v8267 = vld [vmem:[%s7832 + $0x212] sm:$0xff]
    %v8268 = vld [vmem:[%s7832 + $0x21a] sm:$0xff]
    %v8269 = vld [vmem:[%s7832 + $0x22a] sm:$0xff]
    %v8270 = vld [vmem:[%s7832 + $0x232] sm:$0xff]
    %v8271 = vld [vmem:[%s7832 + $0x242] sm:$0xff]
    %v8272 = vld [vmem:[%s7832 + $0x24a] sm:$0xff]
    %v8273 = vld [vmem:[%s7832 + $0x25a] sm:$0xff]
    %v8274 = vld [vmem:[%s7832 + $0x262] sm:$0xff]
    %v8275 = vld [vmem:[%s7832 + $0x272] sm:$0xff]
    %v8276 = vld [vmem:[%s7832 + $0x27a] sm:$0xff]
    %v8277 = vld [vmem:[%s7832 + $0x28a] sm:$0xff]
    %v8278 = vld [vmem:[%s7832 + $0x292] sm:$0xff]
    %v8279 = vld [vmem:[%s7832 + $0x2a2] sm:$0xff]
    %v8280 = vld [vmem:[%s7832 + $0x2aa] sm:$0xff]
    %v8281 = vld [vmem:[%s7832 + $0x2ba] sm:$0xff]
    %v8282 = vld [vmem:[%s7832 + $0x2c2] sm:$0xff]
    %v8283 = vld [vmem:[%s7832 + $0x2d2] sm:$0xff]
    %v8284 = vld [vmem:[%s7832 + $0x2da] sm:$0xff]
    %v8285 = vld [vmem:[%s7832 + $0x2ea] sm:$0xff]
    %v8286 = vld [vmem:[%s7832 + $0x2f2] sm:$0xff]
    %v8287 = vld [vmem:[%s7832 + $0x302] sm:$0xff]
    %v8288 = vld [vmem:[%s7832 + $0x30a] sm:$0xff]
    %v8289 = vld [vmem:[%s7832 + $0x31a] sm:$0xff]
    %v8290 = vld [vmem:[%s7832 + $0x322] sm:$0xff]
    %v8291 = vlaneseq
    %v8292 = vshrl.u32 %v8291, 7
    %v8293 = vsub.s32 0, %v8292
    %v8294 = vrot.slane %v8226, %v8293
    %v8295 = vmul.f32 %v8227, %v8294
    %v8296 = vmul.f32 %v8228, %v8294
    %v8297 = vmul.f32 %v8229, %v8294
    %v8298 = vmul.f32 %v8230, %v8294
    %v8299 = vmul.f32 %v8231, %v8294
    %v8300 = vmul.f32 %v8232, %v8294
    %v8301 = vmul.f32 %v8233, %v8294
    %v8302 = vmul.f32 %v8234, %v8294
    %v8303 = vmul.f32 %v8235, %v8294
    %v8304 = vmul.f32 %v8236, %v8294
    %v8305 = vmul.f32 %v8237, %v8294
    %v8306 = vmul.f32 %v8238, %v8294
    %v8307 = vmul.f32 %v8239, %v8294
    %v8308 = vmul.f32 %v8240, %v8294
    %v8309 = vmul.f32 %v8241, %v8294
    %v8310 = vmul.f32 %v8242, %v8294
    %v8311 = vmul.f32 %v8243, %v8294
    %v8312 = vmul.f32 %v8244, %v8294
    %v8313 = vmul.f32 %v8245, %v8294
    %v8314 = vmul.f32 %v8246, %v8294
    %v8315 = vmul.f32 %v8247, %v8294
    %v8316 = vmul.f32 %v8248, %v8294
    %v8317 = vmul.f32 %v8249, %v8294
    %v8318 = vmul.f32 %v8250, %v8294
    %v8319 = vmul.f32 %v8251, %v8294
    %v8320 = vmul.f32 %v8252, %v8294
    %v8321 = vmul.f32 %v8253, %v8294
    %v8322 = vmul.f32 %v8254, %v8294
    %v8323 = vmul.f32 %v8255, %v8294
    %v8324 = vmul.f32 %v8256, %v8294
    %v8325 = vmul.f32 %v8257, %v8294
    %v8326 = vmul.f32 %v8258, %v8294
    %v8327 = vmul.f32 %v8259, %v8294
    %v8328 = vmul.f32 %v8260, %v8294
    %v8329 = vmul.f32 %v8261, %v8294
    %v8330 = vmul.f32 %v8262, %v8294
    %v8331 = vmul.f32 %v8263, %v8294
    %v8332 = vmul.f32 %v8264, %v8294
    %v8333 = vmul.f32 %v8265, %v8294
    %v8334 = vmul.f32 %v8266, %v8294
    %v8335 = vmul.f32 %v8267, %v8294
    %v8336 = vmul.f32 %v8268, %v8294
    %v8337 = vmul.f32 %v8269, %v8294
    %v8338 = vmul.f32 %v8270, %v8294
    %v8339 = vmul.f32 %v8271, %v8294
    %v8340 = vmul.f32 %v8272, %v8294
    %v8341 = vmul.f32 %v8273, %v8294
    %v8342 = vmul.f32 %v8274, %v8294
    %v8343 = vmul.f32 %v8275, %v8294
    %v8344 = vmul.f32 %v8276, %v8294
    %v8345 = vmul.f32 %v8277, %v8294
    %v8346 = vmul.f32 %v8278, %v8294
    %v8347 = vmul.f32 %v8279, %v8294
    %v8348 = vmul.f32 %v8280, %v8294
    %v8349 = vmul.f32 %v8281, %v8294
    %v8350 = vmul.f32 %v8282, %v8294
    %v8351 = vmul.f32 %v8283, %v8294
    %v8352 = vmul.f32 %v8284, %v8294
    %v8353 = vmul.f32 %v8285, %v8294
    %v8354 = vmul.f32 %v8286, %v8294
    %v8355 = vmul.f32 %v8287, %v8294
    %v8356 = vmul.f32 %v8288, %v8294
    %v8357 = vmul.f32 %v8289, %v8294
    %v8358 = vmul.f32 %v8290, %v8294
    %v8359 = vadd.f32 %v8162, %v8295
    %v8360 = vadd.f32 %v8163, %v8296
    %v8361 = vadd.f32 %v8164, %v8297
    %v8362 = vadd.f32 %v8165, %v8298
    %v8363 = vadd.f32 %v8166, %v8299
    %v8364 = vadd.f32 %v8167, %v8300
    %v8365 = vadd.f32 %v8168, %v8301
    %v8366 = vadd.f32 %v8169, %v8302
    %v8367 = vadd.f32 %v8170, %v8303
    %v8368 = vadd.f32 %v8171, %v8304
    %v8369 = vadd.f32 %v8172, %v8305
    %v8370 = vadd.f32 %v8173, %v8306
    %v8371 = vadd.f32 %v8174, %v8307
    %v8372 = vadd.f32 %v8175, %v8308
    %v8373 = vadd.f32 %v8176, %v8309
    %v8374 = vadd.f32 %v8177, %v8310
    %v8375 = vadd.f32 %v8178, %v8311
    %v8376 = vadd.f32 %v8179, %v8312
    %v8377 = vadd.f32 %v8180, %v8313
    %v8378 = vadd.f32 %v8181, %v8314
    %v8379 = vadd.f32 %v8182, %v8315
    %v8380 = vadd.f32 %v8183, %v8316
    %v8381 = vadd.f32 %v8184, %v8317
    %v8382 = vadd.f32 %v8185, %v8318
    %v8383 = vadd.f32 %v8186, %v8319
    %v8384 = vadd.f32 %v8187, %v8320
    %v8385 = vadd.f32 %v8188, %v8321
    %v8386 = vadd.f32 %v8189, %v8322
    %v8387 = vadd.f32 %v8190, %v8323
    %v8388 = vadd.f32 %v8191, %v8324
    %v8389 = vadd.f32 %v8192, %v8325
    %v8390 = vadd.f32 %v8193, %v8326
    %v8391 = vadd.f32 %v8194, %v8327
    %v8392 = vadd.f32 %v8195, %v8328
    %v8393 = vadd.f32 %v8196, %v8329
    %v8394 = vadd.f32 %v8197, %v8330
    %v8395 = vadd.f32 %v8198, %v8331
    %v8396 = vadd.f32 %v8199, %v8332
    %v8397 = vadd.f32 %v8200, %v8333
    %v8398 = vadd.f32 %v8201, %v8334
    %v8399 = vadd.f32 %v8202, %v8335
    %v8400 = vadd.f32 %v8203, %v8336
    %v8401 = vadd.f32 %v8204, %v8337
    %v8402 = vadd.f32 %v8205, %v8338
    %v8403 = vadd.f32 %v8206, %v8339
    %v8404 = vadd.f32 %v8207, %v8340
    %v8405 = vadd.f32 %v8208, %v8341
    %v8406 = vadd.f32 %v8209, %v8342
    %v8407 = vadd.f32 %v8210, %v8343
    %v8408 = vadd.f32 %v8211, %v8344
    %v8409 = vadd.f32 %v8212, %v8345
    %v8410 = vadd.f32 %v8213, %v8346
    %v8411 = vadd.f32 %v8214, %v8347
    %v8412 = vadd.f32 %v8215, %v8348
    %v8413 = vadd.f32 %v8216, %v8349
    %v8414 = vadd.f32 %v8217, %v8350
    %v8415 = vadd.f32 %v8218, %v8351
    %v8416 = vadd.f32 %v8219, %v8352
    %v8417 = vadd.f32 %v8220, %v8353
    %v8418 = vadd.f32 %v8221, %v8354
    %v8419 = vadd.f32 %v8222, %v8355
    %v8420 = vadd.f32 %v8223, %v8356
    %v8421 = vadd.f32 %v8224, %v8357
    %v8422 = vadd.f32 %v8225, %v8358
    %v8423 = vld [vmem:[%s2029 + $0x1] sm:$0xff]
    %v8424 = vld [vmem:[%s2029 + $0x9] sm:$0xff]
    %v8425 = vld [vmem:[%s2029 + $0x19] sm:$0xff]
    %v8426 = vld [vmem:[%s2029 + $0x21] sm:$0xff]
    %v8427 = vld [vmem:[%s2029 + $0x31] sm:$0xff]
    %v8428 = vld [vmem:[%s2029 + $0x39] sm:$0xff]
    %v8429 = vld [vmem:[%s2029 + $0x49] sm:$0xff]
    %v8430 = vld [vmem:[%s2029 + $0x51] sm:$0xff]
    %v8431 = vld [vmem:[%s2029 + $0x61] sm:$0xff]
    %v8432 = vld [vmem:[%s2029 + $0x69] sm:$0xff]
    %v8433 = vld [vmem:[%s2029 + $0x79] sm:$0xff]
    %v8434 = vld [vmem:[%s2029 + $0x81] sm:$0xff]
    %v8435 = vld [vmem:[%s2029 + $0x91] sm:$0xff]
    %v8436 = vld [vmem:[%s2029 + $0x99] sm:$0xff]
    %v8437 = vld [vmem:[%s2029 + $0xa9] sm:$0xff]
    %v8438 = vld [vmem:[%s2029 + $0xb1] sm:$0xff]
    %v8439 = vld [vmem:[%s2029 + $0xc1] sm:$0xff]
    %v8440 = vld [vmem:[%s2029 + $0xc9] sm:$0xff]
    %v8441 = vld [vmem:[%s2029 + $0xd9] sm:$0xff]
    %v8442 = vld [vmem:[%s2029 + $0xe1] sm:$0xff]
    %v8443 = vld [vmem:[%s2029 + $0xf1] sm:$0xff]
    %v8444 = vld [vmem:[%s2029 + $0xf9] sm:$0xff]
    %v8445 = vld [vmem:[%s2029 + $0x109] sm:$0xff]
    %v8446 = vld [vmem:[%s2029 + $0x111] sm:$0xff]
    %v8447 = vld [vmem:[%s2029 + $0x121] sm:$0xff]
    %v8448 = vld [vmem:[%s2029 + $0x129] sm:$0xff]
    %v8449 = vld [vmem:[%s2029 + $0x139] sm:$0xff]
    %v8450 = vld [vmem:[%s2029 + $0x141] sm:$0xff]
    %v8451 = vld [vmem:[%s2029 + $0x151] sm:$0xff]
    %v8452 = vld [vmem:[%s2029 + $0x159] sm:$0xff]
    %v8453 = vld [vmem:[%s2029 + $0x169] sm:$0xff]
    %v8454 = vld [vmem:[%s2029 + $0x171] sm:$0xff]
    %v8455 = vld [vmem:[%s2029 + $0x1b1] sm:$0xff]
    %v8456 = vld [vmem:[%s2029 + $0x1b9] sm:$0xff]
    %v8457 = vld [vmem:[%s2029 + $0x1c9] sm:$0xff]
    %v8458 = vld [vmem:[%s2029 + $0x1d1] sm:$0xff]
    %v8459 = vld [vmem:[%s2029 + $0x1e1] sm:$0xff]
    %v8460 = vld [vmem:[%s2029 + $0x1e9] sm:$0xff]
    %v8461 = vld [vmem:[%s2029 + $0x1f9] sm:$0xff]
    %v8462 = vld [vmem:[%s2029 + $0x201] sm:$0xff]
    %v8463 = vld [vmem:[%s2029 + $0x211] sm:$0xff]
    %v8464 = vld [vmem:[%s2029 + $0x219] sm:$0xff]
    %v8465 = vld [vmem:[%s2029 + $0x229] sm:$0xff]
    %v8466 = vld [vmem:[%s2029 + $0x231] sm:$0xff]
    %v8467 = vld [vmem:[%s2029 + $0x241] sm:$0xff]
    %v8468 = vld [vmem:[%s2029 + $0x249] sm:$0xff]
    %v8469 = vld [vmem:[%s2029 + $0x259] sm:$0xff]
    %v8470 = vld [vmem:[%s2029 + $0x261] sm:$0xff]
    %v8471 = vld [vmem:[%s2029 + $0x271] sm:$0xff]
    %v8472 = vld [vmem:[%s2029 + $0x279] sm:$0xff]
    %v8473 = vld [vmem:[%s2029 + $0x289] sm:$0xff]
    %v8474 = vld [vmem:[%s2029 + $0x291] sm:$0xff]
    %v8475 = vld [vmem:[%s2029 + $0x2a1] sm:$0xff]
    %v8476 = vld [vmem:[%s2029 + $0x2a9] sm:$0xff]
    %v8477 = vld [vmem:[%s2029 + $0x2b9] sm:$0xff]
    %v8478 = vld [vmem:[%s2029 + $0x2c1] sm:$0xff]
    %v8479 = vld [vmem:[%s2029 + $0x2d1] sm:$0xff]
    %v8480 = vld [vmem:[%s2029 + $0x2d9] sm:$0xff]
    %v8481 = vld [vmem:[%s2029 + $0x2e9] sm:$0xff]
    %v8482 = vld [vmem:[%s2029 + $0x2f1] sm:$0xff]
    %v8483 = vld [vmem:[%s2029 + $0x301] sm:$0xff]
    %v8484 = vld [vmem:[%s2029 + $0x309] sm:$0xff]
    %v8485 = vld [vmem:[%s2029 + $0x319] sm:$0xff]
    %v8486 = vld [vmem:[%s2029 + $0x321] sm:$0xff]
    %v8487 = vld [vmem:[%s5] sm:$0x1]
    %v8488 = vld [vmem:[%s6] sm:$0x1]
    %v8490 = vlaneseq
    %v8491 = vshrl.u32 %v8490, 7
    %v8492 = vsub.s32 0, %v8491
    %v8493 = vrot.slane %v8487, %v8492
    %v8495 = vmul.f32 %v8359, %v8493
    %v8496 = vmul.f32 %v8360, %v8493
    %v8497 = vmul.f32 %v8361, %v8493
    %v8498 = vmul.f32 %v8362, %v8493
    %v8499 = vmul.f32 %v8363, %v8493
    %v8500 = vmul.f32 %v8364, %v8493
    %v8501 = vmul.f32 %v8365, %v8493
    %v8502 = vmul.f32 %v8366, %v8493
    %v8503 = vmul.f32 %v8367, %v8493
    %v8504 = vmul.f32 %v8368, %v8493
    %v8505 = vmul.f32 %v8369, %v8493
    %v8506 = vmul.f32 %v8370, %v8493
    %v8507 = vmul.f32 %v8371, %v8493
    %v8508 = vmul.f32 %v8372, %v8493
    %v8509 = vmul.f32 %v8373, %v8493
    %v8510 = vmul.f32 %v8374, %v8493
    %v8511 = vmul.f32 %v8375, %v8493
    %v8512 = vmul.f32 %v8376, %v8493
    %v8513 = vmul.f32 %v8377, %v8493
    %v8514 = vmul.f32 %v8378, %v8493
    %v8515 = vmul.f32 %v8379, %v8493
    %v8516 = vmul.f32 %v8380, %v8493
    %v8517 = vmul.f32 %v8381, %v8493
    %v8518 = vmul.f32 %v8382, %v8493
    %v8519 = vmul.f32 %v8383, %v8493
    %v8520 = vmul.f32 %v8384, %v8493
    %v8521 = vmul.f32 %v8385, %v8493
    %v8522 = vmul.f32 %v8386, %v8493
    %v8523 = vmul.f32 %v8387, %v8493
    %v8524 = vmul.f32 %v8388, %v8493
    %v8525 = vmul.f32 %v8389, %v8493
    %v8526 = vmul.f32 %v8390, %v8493
    %v8527 = vmul.f32 %v8391, %v8493
    %v8528 = vmul.f32 %v8392, %v8493
    %v8529 = vmul.f32 %v8393, %v8493
    %v8530 = vmul.f32 %v8394, %v8493
    %v8531 = vmul.f32 %v8395, %v8493
    %v8532 = vmul.f32 %v8396, %v8493
    %v8533 = vmul.f32 %v8397, %v8493
    %v8534 = vmul.f32 %v8398, %v8493
    %v8535 = vmul.f32 %v8399, %v8493
    %v8536 = vmul.f32 %v8400, %v8493
    %v8537 = vmul.f32 %v8401, %v8493
    %v8538 = vmul.f32 %v8402, %v8493
    %v8539 = vmul.f32 %v8403, %v8493
    %v8540 = vmul.f32 %v8404, %v8493
    %v8541 = vmul.f32 %v8405, %v8493
    %v8542 = vmul.f32 %v8406, %v8493
    %v8543 = vmul.f32 %v8407, %v8493
    %v8544 = vmul.f32 %v8408, %v8493
    %v8545 = vmul.f32 %v8409, %v8493
    %v8546 = vmul.f32 %v8410, %v8493
    %v8547 = vmul.f32 %v8411, %v8493
    %v8548 = vmul.f32 %v8412, %v8493
    %v8549 = vmul.f32 %v8413, %v8493
    %v8550 = vmul.f32 %v8414, %v8493
    %v8551 = vmul.f32 %v8415, %v8493
    %v8552 = vmul.f32 %v8416, %v8493
    %v8553 = vmul.f32 %v8417, %v8493
    %v8554 = vmul.f32 %v8418, %v8493
    %v8555 = vmul.f32 %v8419, %v8493
    %v8556 = vmul.f32 %v8420, %v8493
    %v8557 = vmul.f32 %v8421, %v8493
    %v8558 = vmul.f32 %v8422, %v8493
    %v8560 = vlaneseq
    %v8561 = vshrl.u32 %v8560, 7
    %v8562 = vsub.s32 0, %v8561
    %v8563 = vrot.slane %v8488, %v8562
    %v8565 = vadd.f32 %v8495, %v8563
    %v8566 = vadd.f32 %v8496, %v8563
    %v8567 = vadd.f32 %v8497, %v8563
    %v8568 = vadd.f32 %v8498, %v8563
    %v8569 = vadd.f32 %v8499, %v8563
    %v8570 = vadd.f32 %v8500, %v8563
    %v8571 = vadd.f32 %v8501, %v8563
    %v8572 = vadd.f32 %v8502, %v8563
    %v8573 = vadd.f32 %v8503, %v8563
    %v8574 = vadd.f32 %v8504, %v8563
    %v8575 = vadd.f32 %v8505, %v8563
    %v8576 = vadd.f32 %v8506, %v8563
    %v8577 = vadd.f32 %v8507, %v8563
    %v8578 = vadd.f32 %v8508, %v8563
    %v8579 = vadd.f32 %v8509, %v8563
    %v8580 = vadd.f32 %v8510, %v8563
    %v8581 = vadd.f32 %v8511, %v8563
    %v8582 = vadd.f32 %v8512, %v8563
    %v8583 = vadd.f32 %v8513, %v8563
    %v8584 = vadd.f32 %v8514, %v8563
    %v8585 = vadd.f32 %v8515, %v8563
    %v8586 = vadd.f32 %v8516, %v8563
    %v8587 = vadd.f32 %v8517, %v8563
    %v8588 = vadd.f32 %v8518, %v8563
    %v8589 = vadd.f32 %v8519, %v8563
    %v8590 = vadd.f32 %v8520, %v8563
    %v8591 = vadd.f32 %v8521, %v8563
    %v8592 = vadd.f32 %v8522, %v8563
    %v8593 = vadd.f32 %v8523, %v8563
    %v8594 = vadd.f32 %v8524, %v8563
    %v8595 = vadd.f32 %v8525, %v8563
    %v8596 = vadd.f32 %v8526, %v8563
    %v8597 = vadd.f32 %v8527, %v8563
    %v8598 = vadd.f32 %v8528, %v8563
    %v8599 = vadd.f32 %v8529, %v8563
    %v8600 = vadd.f32 %v8530, %v8563
    %v8601 = vadd.f32 %v8531, %v8563
    %v8602 = vadd.f32 %v8532, %v8563
    %v8603 = vadd.f32 %v8533, %v8563
    %v8604 = vadd.f32 %v8534, %v8563
    %v8605 = vadd.f32 %v8535, %v8563
    %v8606 = vadd.f32 %v8536, %v8563
    %v8607 = vadd.f32 %v8537, %v8563
    %v8608 = vadd.f32 %v8538, %v8563
    %v8609 = vadd.f32 %v8539, %v8563
    %v8610 = vadd.f32 %v8540, %v8563
    %v8611 = vadd.f32 %v8541, %v8563
    %v8612 = vadd.f32 %v8542, %v8563
    %v8613 = vadd.f32 %v8543, %v8563
    %v8614 = vadd.f32 %v8544, %v8563
    %v8615 = vadd.f32 %v8545, %v8563
    %v8616 = vadd.f32 %v8546, %v8563
    %v8617 = vadd.f32 %v8547, %v8563
    %v8618 = vadd.f32 %v8548, %v8563
    %v8619 = vadd.f32 %v8549, %v8563
    %v8620 = vadd.f32 %v8550, %v8563
    %v8621 = vadd.f32 %v8551, %v8563
    %v8622 = vadd.f32 %v8552, %v8563
    %v8623 = vadd.f32 %v8553, %v8563
    %v8624 = vadd.f32 %v8554, %v8563
    %v8625 = vadd.f32 %v8555, %v8563
    %v8626 = vadd.f32 %v8556, %v8563
    %v8627 = vadd.f32 %v8557, %v8563
    %v8628 = vadd.f32 %v8558, %v8563
    %v8629 = vadd.f32 %v8565, %v8423
    %v8630 = vadd.f32 %v8566, %v8424
    %v8631 = vadd.f32 %v8567, %v8425
    %v8632 = vadd.f32 %v8568, %v8426
    %v8633 = vadd.f32 %v8569, %v8427
    %v8634 = vadd.f32 %v8570, %v8428
    %v8635 = vadd.f32 %v8571, %v8429
    %v8636 = vadd.f32 %v8572, %v8430
    %v8637 = vadd.f32 %v8573, %v8431
    %v8638 = vadd.f32 %v8574, %v8432
    %v8639 = vadd.f32 %v8575, %v8433
    %v8640 = vadd.f32 %v8576, %v8434
    %v8641 = vadd.f32 %v8577, %v8435
    %v8642 = vadd.f32 %v8578, %v8436
    %v8643 = vadd.f32 %v8579, %v8437
    %v8644 = vadd.f32 %v8580, %v8438
    %v8645 = vadd.f32 %v8581, %v8439
    %v8646 = vadd.f32 %v8582, %v8440
    %v8647 = vadd.f32 %v8583, %v8441
    %v8648 = vadd.f32 %v8584, %v8442
    %v8649 = vadd.f32 %v8585, %v8443
    %v8650 = vadd.f32 %v8586, %v8444
    %v8651 = vadd.f32 %v8587, %v8445
    %v8652 = vadd.f32 %v8588, %v8446
    %v8653 = vadd.f32 %v8589, %v8447
    %v8654 = vadd.f32 %v8590, %v8448
    %v8655 = vadd.f32 %v8591, %v8449
    %v8656 = vadd.f32 %v8592, %v8450
    %v8657 = vadd.f32 %v8593, %v8451
    %v8658 = vadd.f32 %v8594, %v8452
    %v8659 = vadd.f32 %v8595, %v8453
    %v8660 = vadd.f32 %v8596, %v8454
    %v8661 = vadd.f32 %v8597, %v8455
    %v8662 = vadd.f32 %v8598, %v8456
    %v8663 = vadd.f32 %v8599, %v8457
    %v8664 = vadd.f32 %v8600, %v8458
    %v8665 = vadd.f32 %v8601, %v8459
    %v8666 = vadd.f32 %v8602, %v8460
    %v8667 = vadd.f32 %v8603, %v8461
    %v8668 = vadd.f32 %v8604, %v8462
    %v8669 = vadd.f32 %v8605, %v8463
    %v8670 = vadd.f32 %v8606, %v8464
    %v8671 = vadd.f32 %v8607, %v8465
    %v8672 = vadd.f32 %v8608, %v8466
    %v8673 = vadd.f32 %v8609, %v8467
    %v8674 = vadd.f32 %v8610, %v8468
    %v8675 = vadd.f32 %v8611, %v8469
    %v8676 = vadd.f32 %v8612, %v8470
    %v8677 = vadd.f32 %v8613, %v8471
    %v8678 = vadd.f32 %v8614, %v8472
    %v8679 = vadd.f32 %v8615, %v8473
    %v8680 = vadd.f32 %v8616, %v8474
    %v8681 = vadd.f32 %v8617, %v8475
    %v8682 = vadd.f32 %v8618, %v8476
    %v8683 = vadd.f32 %v8619, %v8477
    %v8684 = vadd.f32 %v8620, %v8478
    %v8685 = vadd.f32 %v8621, %v8479
    %v8686 = vadd.f32 %v8622, %v8480
    %v8687 = vadd.f32 %v8623, %v8481
    %v8688 = vadd.f32 %v8624, %v8482
    %v8689 = vadd.f32 %v8625, %v8483
    %v8690 = vadd.f32 %v8626, %v8484
    %v8691 = vadd.f32 %v8627, %v8485
    %v8692 = vadd.f32 %v8628, %v8486
    %v8693 = vmax.f32 %v8629, 0.0
    %v8694 = vmax.f32 %v8630, 0.0
    %v8695 = vmax.f32 %v8631, 0.0
    %v8696 = vmax.f32 %v8632, 0.0
    %v8697 = vmax.f32 %v8633, 0.0
    %v8698 = vmax.f32 %v8634, 0.0
    %v8699 = vmax.f32 %v8635, 0.0
    %v8700 = vmax.f32 %v8636, 0.0
    %v8701 = vmax.f32 %v8637, 0.0
    %v8702 = vmax.f32 %v8638, 0.0
    %v8703 = vmax.f32 %v8639, 0.0
    %v8704 = vmax.f32 %v8640, 0.0
    %v8705 = vmax.f32 %v8641, 0.0
    %v8706 = vmax.f32 %v8642, 0.0
    %v8707 = vmax.f32 %v8643, 0.0
    %v8708 = vmax.f32 %v8644, 0.0
    %v8709 = vmax.f32 %v8645, 0.0
    %v8710 = vmax.f32 %v8646, 0.0
    %v8711 = vmax.f32 %v8647, 0.0
    %v8712 = vmax.f32 %v8648, 0.0
    %v8713 = vmax.f32 %v8649, 0.0
    %v8714 = vmax.f32 %v8650, 0.0
    %v8715 = vmax.f32 %v8651, 0.0
    %v8716 = vmax.f32 %v8652, 0.0
    %v8717 = vmax.f32 %v8653, 0.0
    %v8718 = vmax.f32 %v8654, 0.0
    %v8719 = vmax.f32 %v8655, 0.0
    %v8720 = vmax.f32 %v8656, 0.0
    %v8721 = vmax.f32 %v8657, 0.0
    %v8722 = vmax.f32 %v8658, 0.0
    %v8723 = vmax.f32 %v8659, 0.0
    %v8724 = vmax.f32 %v8660, 0.0
    %v8725 = vmax.f32 %v8661, 0.0
    %v8726 = vmax.f32 %v8662, 0.0
    %v8727 = vmax.f32 %v8663, 0.0
    %v8728 = vmax.f32 %v8664, 0.0
    %v8729 = vmax.f32 %v8665, 0.0
    %v8730 = vmax.f32 %v8666, 0.0
    %v8731 = vmax.f32 %v8667, 0.0
    %v8732 = vmax.f32 %v8668, 0.0
    %v8733 = vmax.f32 %v8669, 0.0
    %v8734 = vmax.f32 %v8670, 0.0
    %v8735 = vmax.f32 %v8671, 0.0
    %v8736 = vmax.f32 %v8672, 0.0
    %v8737 = vmax.f32 %v8673, 0.0
    %v8738 = vmax.f32 %v8674, 0.0
    %v8739 = vmax.f32 %v8675, 0.0
    %v8740 = vmax.f32 %v8676, 0.0
    %v8741 = vmax.f32 %v8677, 0.0
    %v8742 = vmax.f32 %v8678, 0.0
    %v8743 = vmax.f32 %v8679, 0.0
    %v8744 = vmax.f32 %v8680, 0.0
    %v8745 = vmax.f32 %v8681, 0.0
    %v8746 = vmax.f32 %v8682, 0.0
    %v8747 = vmax.f32 %v8683, 0.0
    %v8748 = vmax.f32 %v8684, 0.0
    %v8749 = vmax.f32 %v8685, 0.0
    %v8750 = vmax.f32 %v8686, 0.0
    %v8751 = vmax.f32 %v8687, 0.0
    %v8752 = vmax.f32 %v8688, 0.0
    %v8753 = vmax.f32 %v8689, 0.0
    %v8754 = vmax.f32 %v8690, 0.0
    %v8755 = vmax.f32 %v8691, 0.0
    %v8756 = vmax.f32 %v8692, 0.0
    %8757 = vst.msk [vmem:[#allocation3] sm:$0xff] %vm164, %v8693
    %8758 = vst.msk [vmem:[#allocation3 + $0x8] sm:$0xff] %vm164, %v8694
    %8759 = vst.msk [vmem:[#allocation3 + $0x10] sm:$0xff] %vm164, %v8695
    %8760 = vst.msk [vmem:[#allocation3 + $0x18] sm:$0xff] %vm164, %v8696
    %8761 = vst.msk [vmem:[#allocation3 + $0x20] sm:$0xff] %vm164, %v8697
    %8762 = vst.msk [vmem:[#allocation3 + $0x28] sm:$0xff] %vm164, %v8698
    %8763 = vst.msk [vmem:[#allocation3 + $0x30] sm:$0xff] %vm164, %v8699
    %8764 = vst.msk [vmem:[#allocation3 + $0x38] sm:$0xff] %vm164, %v8700
    %8765 = vst.msk [vmem:[#allocation3 + $0x40] sm:$0xff] %vm164, %v8701
    %8766 = vst.msk [vmem:[#allocation3 + $0x48] sm:$0xff] %vm164, %v8702
    %8767 = vst.msk [vmem:[#allocation3 + $0x50] sm:$0xff] %vm164, %v8703
    %8768 = vst.msk [vmem:[#allocation3 + $0x58] sm:$0xff] %vm164, %v8704
    %8769 = vst.msk [vmem:[#allocation3 + $0x60] sm:$0xff] %vm164, %v8705
    %8770 = vst.msk [vmem:[#allocation3 + $0x68] sm:$0xff] %vm164, %v8706
    %8771 = vst.msk [vmem:[#allocation3 + $0x70] sm:$0xff] %vm164, %v8707
    %8772 = vst.msk [vmem:[#allocation3 + $0x78] sm:$0xff] %vm164, %v8708
    %8773 = vst.msk [vmem:[#allocation3 + $0x80] sm:$0xff] %vm164, %v8709
    %8774 = vst.msk [vmem:[#allocation3 + $0x88] sm:$0xff] %vm164, %v8710
    %8775 = vst.msk [vmem:[#allocation3 + $0x90] sm:$0xff] %vm164, %v8711
    %8776 = vst.msk [vmem:[#allocation3 + $0x98] sm:$0xff] %vm164, %v8712
    %8777 = vst.msk [vmem:[#allocation3 + $0xa0] sm:$0xff] %vm164, %v8713
    %8778 = vst.msk [vmem:[#allocation3 + $0xa8] sm:$0xff] %vm164, %v8714
    %8779 = vst.msk [vmem:[#allocation3 + $0xb0] sm:$0xff] %vm164, %v8715
    %8780 = vst.msk [vmem:[#allocation3 + $0xb8] sm:$0xff] %vm164, %v8716
    %8781 = vst.msk [vmem:[#allocation3 + $0xc0] sm:$0xff] %vm164, %v8717
    %8782 = vst.msk [vmem:[#allocation3 + $0xc8] sm:$0xff] %vm164, %v8718
    %8783 = vst.msk [vmem:[#allocation3 + $0xd0] sm:$0xff] %vm164, %v8719
    %8784 = vst.msk [vmem:[#allocation3 + $0xd8] sm:$0xff] %vm164, %v8720
    %8785 = vst.msk [vmem:[#allocation3 + $0xe0] sm:$0xff] %vm164, %v8721
    %8786 = vst.msk [vmem:[#allocation3 + $0xe8] sm:$0xff] %vm164, %v8722
    %8787 = vst.msk [vmem:[#allocation3 + $0xf0] sm:$0xff] %vm164, %v8723
    %8788 = vst.msk [vmem:[#allocation3 + $0xf8] sm:$0xff] %vm164, %v8724
    %8789 = vst.msk [vmem:[#allocation3 + $0x100] sm:$0xff] %vm164, %v8725
    %8790 = vst.msk [vmem:[#allocation3 + $0x108] sm:$0xff] %vm164, %v8726
    %8791 = vst.msk [vmem:[#allocation3 + $0x110] sm:$0xff] %vm164, %v8727
    %8792 = vst.msk [vmem:[#allocation3 + $0x118] sm:$0xff] %vm164, %v8728
    %8793 = vst.msk [vmem:[#allocation3 + $0x120] sm:$0xff] %vm164, %v8729
    %8794 = vst.msk [vmem:[#allocation3 + $0x128] sm:$0xff] %vm164, %v8730
    %8795 = vst.msk [vmem:[#allocation3 + $0x130] sm:$0xff] %vm164, %v8731
    %8796 = vst.msk [vmem:[#allocation3 + $0x138] sm:$0xff] %vm164, %v8732
    %8797 = vst.msk [vmem:[#allocation3 + $0x140] sm:$0xff] %vm164, %v8733
    %8798 = vst.msk [vmem:[#allocation3 + $0x148] sm:$0xff] %vm164, %v8734
    %8799 = vst.msk [vmem:[#allocation3 + $0x150] sm:$0xff] %vm164, %v8735
    %8800 = vst.msk [vmem:[#allocation3 + $0x158] sm:$0xff] %vm164, %v8736
    %8801 = vst.msk [vmem:[#allocation3 + $0x160] sm:$0xff] %vm164, %v8737
    %8802 = vst.msk [vmem:[#allocation3 + $0x168] sm:$0xff] %vm164, %v8738
    %8803 = vst.msk [vmem:[#allocation3 + $0x170] sm:$0xff] %vm164, %v8739
    %8804 = vst.msk [vmem:[#allocation3 + $0x178] sm:$0xff] %vm164, %v8740
    %8805 = vst.msk [vmem:[#allocation3 + $0x180] sm:$0xff] %vm164, %v8741
    %8806 = vst.msk [vmem:[#allocation3 + $0x188] sm:$0xff] %vm164, %v8742
    %8807 = vst.msk [vmem:[#allocation3 + $0x190] sm:$0xff] %vm164, %v8743
    %8808 = vst.msk [vmem:[#allocation3 + $0x198] sm:$0xff] %vm164, %v8744
    %8809 = vst.msk [vmem:[#allocation3 + $0x1a0] sm:$0xff] %vm164, %v8745
    %8810 = vst.msk [vmem:[#allocation3 + $0x1a8] sm:$0xff] %vm164, %v8746
    %8811 = vst.msk [vmem:[#allocation3 + $0x1b0] sm:$0xff] %vm164, %v8747
    %8812 = vst.msk [vmem:[#allocation3 + $0x1b8] sm:$0xff] %vm164, %v8748
    %8813 = vst.msk [vmem:[#allocation3 + $0x1c0] sm:$0xff] %vm164, %v8749
    %8814 = vst.msk [vmem:[#allocation3 + $0x1c8] sm:$0xff] %vm164, %v8750
    %8815 = vst.msk [vmem:[#allocation3 + $0x1d0] sm:$0xff] %vm164, %v8751
    %8816 = vst.msk [vmem:[#allocation3 + $0x1d8] sm:$0xff] %vm164, %v8752
    %8817 = vst.msk [vmem:[#allocation3 + $0x1e0] sm:$0xff] %vm164, %v8753
    %8818 = vst.msk [vmem:[#allocation3 + $0x1e8] sm:$0xff] %vm164, %v8754
    %8819 = vst.msk [vmem:[#allocation3 + $0x1f0] sm:$0xff] %vm164, %v8755
    %8820 = vst.msk [vmem:[#allocation3 + $0x1f8] sm:$0xff] %vm164, %v8756
    // Predicated region
    $region30: #{basic_block_forward.1} parent=1 // pred_check
      _
    $region31: #{basic_block_forward.1} parent=1 // pred_check_branch
      %8822 = sbr.rel (0) target = $region33
    $region32: #{basic_block_forward.1} parent=1 // pred_region
      %s8824 = ssub.s32 8192, 8192
      %8825 = vsyncadd [#allocation4], %s8824
      %s8826 = sshll.u32 [#allocation3], 4
      %s8827 = int_to_ptr.vmem [resolvable:$true] %s8826
      %8832 = dma.vmem_to_hbm [thread:$0]  %s8827, 8192, %s7, [#allocation4], 128, 128, 8
    $region33: #{basic_block_forward.1} parent=1 // pred_fallthru
      _
    // Predicated region
    $region34: #{basic_block_forward.1} parent=1 // pred_check
      _
    $region35: #{basic_block_forward.1} parent=1 // pred_check_branch
      %8834 = sbr.rel (0) target = $region37
    $region36: #{basic_block_forward.1} parent=1 // pred_region
      %8835 = dma.done [#allocation4], 8192
    $region37: #{basic_block_forward.1} parent=1 // pred_fallthru
      _
    %8836 = vsyncpa [#allocation4], 1

</llo_original>
